<compile_context>
chip_gen: v7x
topology: tpu7x:2x2x1
jax: 0.10.0
libtpu: 0.0.40
codegen_flags: <defaults>
</compile_context>

<pallas_src>
import functools
import math

import numpy as np
import jax
import jax.numpy as jnp
from jax.experimental import pallas as pl
from jax.experimental.pallas import tpu as pltpu

# ---------------- configuration (small synthetic shapes) ----------------
BATCH = 2
IN_CHANNEL = 4
IMG = 16
N_FLOW = 2
N_BLOCK = 2
N_COND = 32          # stands in for the module's default n_cond=512
MPN_DEPTH = 5
N_ATOMS = 8
F_IN = 16            # atom feature size for the (simplified) MPN
FILT = 32            # coupling-net hidden filter size

_LOG_2PI = math.log(2.0 * math.pi)


# ---------------- Pallas kernels ----------------
def _mpn_kernel(x_ref, a_ref, mread_ref, w_in_ref, b_in_ref, w_h_ref,
                w_ox_ref, w_oh_ref, b_o_ref, w_lin_ref, b_lin_ref, o_ref,
                *, depth, n_atoms):
    """Fused MPN: message passing (depth-1 rounds) + readout + Linear.

    x_ref : (B*N, F) atom features, a_ref : (B, N, N) per-molecule adjacency.
    Adjacency matmuls loop over the (static) batch in-kernel -- no dense
    block-diagonal adjacency is built.  All MXU operands are bf16.
    """
    bf = jnp.bfloat16
    x = x_ref[...]
    xb = x.astype(bf)
    B = a_ref.shape[0]
    N = n_atoms

    h0 = jnp.maximum(
        jnp.dot(xb, w_in_ref[...], preferred_element_type=jnp.float32)
        + b_in_ref[...], 0.0)
    h = h0
    for _ in range(depth - 1):
        hb = h.astype(bf)
        msgs = []
        for b in range(B):                       # static loop, N=8 sublane-aligned
            msgs.append(jnp.dot(a_ref[b].astype(bf), hb[b * N:(b + 1) * N, :],
                                preferred_element_type=jnp.float32))
        m = jnp.concatenate(msgs, axis=0)
        h = jnp.maximum(
            h0 + jnp.dot(m.astype(bf), w_h_ref[...],
                         preferred_element_type=jnp.float32), 0.0)
    # concat([x, h]) @ W_o  ==  x @ W_o_x + h @ W_o_h  (split to avoid concat)
    h_atom = jnp.maximum(
        jnp.dot(xb, w_ox_ref[...], preferred_element_type=jnp.float32)
        + jnp.dot(h.astype(bf), w_oh_ref[...], preferred_element_type=jnp.float32)
        + b_o_ref[...], 0.0)
    mol = jnp.dot(mread_ref[...], h_atom.astype(bf),
                  preferred_element_type=jnp.float32)            # mean readout
    o_ref[...] = (jnp.dot(mol.astype(bf), w_lin_ref[...],
                          preferred_element_type=jnp.float32) + b_lin_ref[...])


def _block_kernel(diff_ref, avg_ref, condt_ref, tapmask_ref, onehot_ref,
                  pwa_ref, pwc_ref, pb_ref, *rest, n_flow, w_half):
    """One CondProBlock: all flows + conditional prior + gaussian log_p.

    Layout: (channels, B*M) -- pixels (batch-merged) on the 128-lane axis.
    """
    flow_refs = rest[:9 * n_flow]
    z_ref, ld_ref, lp_ref = rest[9 * n_flow:]

    bf = jnp.bfloat16
    C3, L = diff_ref.shape
    ca = C3 // 2
    cb = C3 - ca
    C6 = 2 * C3

    tm = tapmask_ref[...]                  # (9, L) {0,1} tap-in-bounds masks
    tm_bf = tm.astype(bf)

    def im2col3x3(x_bf):
        """(Cin, L) -> (9*Cin, L): lane-roll neighbor gather + boundary mask.

        Cross-sample / out-of-image wrap columns are exactly the masked ones,
        so zero-padded 3x3 conv semantics are preserved on the merged lanes.
        """
        cols = []
        t = 0
        for dy in (-1, 0, 1):
            for dx in (-1, 0, 1):
                s = dy * w_half + dx
                sh = x_bf if (s % L) == 0 else jnp.roll(x_bf, -s, axis=1)
                cols.append(sh * tm_bf[t:t + 1, :])
                t += 1
        return jnp.concatenate(cols, axis=0)

    x = diff_ref[...]                      # (C3, L) f32
    ld_rows = jnp.zeros((1, L), jnp.float32)

    for f in range(n_flow):
        an_s, an_b, inv_w, w1, b1, w2c, b2, w3, b3 = flow_refs[9 * f:9 * (f + 1)]
        # ActNorm (f32, VPU)
        x = an_s[...] * (x + an_b[...])
        # Invertible 1x1 conv; logdet term is weight-only -> hoisted.
        x = jnp.dot(inv_w[...], x.astype(bf), preferred_element_type=jnp.float32)
        in_a = x[:ca, :]
        in_b = x[ca:, :]
        # Coupling net: 3x3 conv -> ReLU -> 1x1 conv -> ReLU -> 3x3 conv,
        # each conv is ONE fused matmul against an im2col slab.
        h = jnp.dot(w1[...], im2col3x3(in_a.astype(bf)),
                    preferred_element_type=jnp.float32) + b1[...]
        h = jnp.maximum(h, 0.0)
        h = jnp.dot(w2c[...], h.astype(bf),
                    preferred_element_type=jnp.float32) + b2[...]
        h = jnp.maximum(h, 0.0)
        h = jnp.dot(w3[...], im2col3x3(h.astype(bf)),
                    preferred_element_type=jnp.float32) + b3[...]
        log_s = h[:cb, :]
        t_sh = h[cb:, :]
        a = log_s + 2.0
        s = jax.nn.sigmoid(a)
        # stable log(sigmoid(a)) = min(a, 0) - log(1 + exp(-|a|))
        log_sig = jnp.minimum(a, 0.0) - jnp.log(1.0 + jnp.exp(-jnp.abs(a)))
        out_b = (in_b + t_sh) * s
        ld_rows = ld_rows + jnp.sum(log_sig, axis=0, keepdims=True)
        # Reassemble in registers; z is written once after the last flow.
        x = jnp.concatenate([in_a, out_b], axis=0)

    # Conditional prior: 3x3 conv over concat(avg, cond).  The avg path is a
    # fused im2col matmul; the spatially-constant cond path is computed once
    # per sample (all 9 taps stacked into K) and broadcast to pixels.
    pa = jnp.dot(pwa_ref[...], im2col3x3(avg_ref[...].astype(bf)),
                 preferred_element_type=jnp.float32)                    # (6C, L)
    cp = jnp.dot(pwc_ref[...], condt_ref[...].astype(bf),
                 preferred_element_type=jnp.float32)                    # (9*6C, B)
    cpb = jnp.dot(cp.astype(bf), onehot_ref[...].astype(bf),
                  preferred_element_type=jnp.float32)                   # (9*6C, L)
    pc = jnp.zeros((C6, L), jnp.float32)
    for t in range(9):                     # 6C=24 rows -> 8-aligned sublane slices
        pc = pc + cpb[t * C6:(t + 1) * C6, :] * tm[t:t + 1, :]
    pout = pa + pc + pb_ref[...]
    mean = pout[:C3, :]
    log_sd = pout[C3:, :]

    d = x - mean
    lp = -0.5 * _LOG_2PI - log_sd - 0.5 * d * d * jnp.exp(-2.0 * log_sd)

    z_ref[...] = x                                        # (C3, L) lane-dense
    ld_ref[...] = ld_rows                                 # per-pixel coupling logdet
    lp_ref[...] = jnp.sum(lp, axis=0, keepdims=True)      # per-pixel log_p


# ---------------- wrappers ----------------
def mpn_embed(node_feats, adj, mpk):
    """Simplified dense-graph MPN + Linear(n_cond, n_cond), one pallas_call.

    TODO(synk): chemprop's get_MPN uses bond-indexed sparse message passing on
    a featurized molecule batch; a dense node/adjacency approximation is used.
    """
    B, N, F = node_feats.shape
    H = mpk['W_in'].shape[1]
    node2 = node_feats.reshape(B * N, F)
    return pl.pallas_call(
        functools.partial(_mpn_kernel, depth=MPN_DEPTH, n_atoms=N),
        out_shape=jax.ShapeDtypeStruct((B, H), jnp.float32),
    )(node2, adj, mpk['m_read'], mpk['W_in'], mpk['b_in'], mpk['W_h'],
      mpk['W_o_x'], mpk['W_o_h'], mpk['b_o'], mpk['W_lin'], mpk['b_lin'])


def cond_pro_block(x_nhwc, cond, blk):
    """CondProBlock.forward: squeeze(avg/diff) -> fused [flows + prior + log_p]."""
    B, H, W, C = x_nhwc.shape
    h2, w2 = H // 2, W // 2
    M = h2 * w2
    L = B * M
    C3 = 3 * C

    # SqueezeAvgDiff (cheap strided slicing in plain JAX).
    # TODO(synk): fuse into the block kernel at real sizes to avoid the HBM
    # round trip of avg/diff.
    x00 = x_nhwc[:, 0::2, 0::2, :]
    x01 = x_nhwc[:, 0::2, 1::2, :]
    x10 = x_nhwc[:, 1::2, 0::2, :]
    x11 = x_nhwc[:, 1::2, 1::2, :]
    avg = 0.25 * (x00 + x01 + x10 + x11)
    diff = jnp.concatenate([x01 - avg, x10 - avg, x11 - avg], axis=-1)

    # Lane-dense "pixels on lanes" layout: (channels, B*M).
    diff_t = jnp.transpose(diff.reshape(B, M, C3), (2, 0, 1)).reshape(C3, L)
    avg_t = jnp.transpose(avg.reshape(B, M, C), (2, 0, 1)).reshape(C, L)
    cond_t = jnp.transpose(cond, (1, 0))                   # (NC, B)

    flow_arrays = []
    for fw in blk['flows']:
        flow_arrays += [fw['an_scale'], fw['an_bias'], fw['inv_w'],
                        fw['w1'], fw['b1'], fw['w2'], fw['b2'], fw['w3'], fw['b3']]
    n_flow = len(blk['flows'])

    z_t, ld_rows, lp_rows = pl.pallas_call(
        functools.partial(_block_kernel, n_flow=n_flow, w_half=w2),
        out_shape=(jax.ShapeDtypeStruct((C3, L), jnp.float32),
                   jax.ShapeDtypeStruct((1, L), jnp.float32),
                   jax.ShapeDtypeStruct((1, L), jnp.float32)),
    )(diff_t, avg_t, cond_t, blk['tapmask'], blk['onehot'],
      blk['pwa'], blk['pwc'], blk['pb'], *flow_arrays)

    # Per-sample reductions + hoisted weight-only logdet constants.
    logdet = ld_rows.reshape(B, M).sum(axis=1) + blk['ld_const']
    log_p = lp_rows.reshape(B, M).sum(axis=1)
    z_new = jnp.transpose(z_t.reshape(C3, B, h2, w2), (1, 2, 3, 0))
    return avg, logdet, log_p, z_new


def cond_proglow_mpn_forward(x_nhwc, node_feats, adj, prepared):
    cond = mpn_embed(node_feats, adj, prepared['mpn'])     # self.cond_embedding(cond)
    B = x_nhwc.shape[0]
    log_p_sum = jnp.zeros((B,), jnp.float32)
    logdet = jnp.zeros((B,), jnp.float32)
    out = x_nhwc
    z_outs = []
    for blk in prepared['blocks']:
        out, det, log_p, z_new = cond_pro_block(out, cond, blk)
        z_outs.append(z_new)
        logdet = logdet + det
        log_p_sum = log_p_sum + log_p
    return log_p_sum, logdet, z_outs


# ---------------- static precompute (masks, hoisted logdets, bf16 weights) ----
def _tap_masks(h2, w2, batch):
    """(9, B*M) validity mask: tap t of pixel (i,j) is inside the image."""
    M = h2 * w2
    tm = np.zeros((9, batch * M), np.float32)
    t = 0
    for dy in (-1, 0, 1):
        for dx in (-1, 0, 1):
            for i in range(h2):
                for j in range(w2):
                    if 0 <= i + dy < h2 and 0 <= j + dx < w2:
                        for b in range(batch):
                            tm[t, b * M + i * w2 + j] = 1.0
            t += 1
    return jnp.asarray(tm)


def _sample_onehot(batch, M):
    oh = np.zeros((batch, batch * M), np.float32)
    for b in range(batch):
        oh[b, b * M:(b + 1) * M] = 1.0
    return jnp.asarray(oh)


def prepare(params, batch, img=IMG):
    """Kernel-ready parameter pytree: bf16 MXU weights, masks, hoisted logdets."""
    bf = jnp.bfloat16
    mp = params['mpn']
    m_read = jnp.asarray(np.kron(np.eye(batch, dtype=np.float32),
                                 np.full((1, N_ATOMS), 1.0 / N_ATOMS, np.float32))
                         ).astype(bf)
    mpn_k = dict(
        m_read=m_read,
        W_in=mp['W_in'].astype(bf), b_in=mp['b_in'],
        W_h=mp['W_h'].astype(bf),
        W_o_x=mp['W_o_x'].astype(bf), W_o_h=mp['W_o_h'].astype(bf), b_o=mp['b_o'],
        W_lin=mp['W_lin'].astype(bf), b_lin=mp['b_lin'])

    C = IN_CHANNEL
    blocks = []
    for i, bp in enumerate(params['blocks']):
        h2 = img // (2 ** (i + 1))
        w2 = h2
        M = h2 * w2
        # |det| of the (x00,x01,x10,x11)->(avg,d01,d10,d11) map is 1/4 per group.
        # TODO(synk): SqueezeAvgDiff logdet constant is a reconstruction; also
        # assumes actnorm/invconv logdets carry the usual h*w multiplier.
        ld_const = C * M * math.log(0.25)
        flows = []
        for fp in bp['flows']:
            ld_const = ld_const + M * (jnp.sum(jnp.log(jnp.abs(fp['an_scale'])))
                                       + jnp.linalg.slogdet(fp['inv_w'])[1])
            flows.append(dict(
                an_scale=fp['an_scale'], an_bias=fp['an_bias'],
                inv_w=fp['inv_w'].astype(bf),
                w1=fp['w1'].astype(bf), b1=fp['b1'],
                w2=fp['w2'].astype(bf), b2=fp['b2'],
                w3=fp['w3'].astype(bf), b3=fp['b3']))
        blocks.append(dict(
            flows=flows,
            pwa=bp['prior']['w_avg'].astype(bf),
            pwc=bp['prior']['w_cond'].astype(bf),
            pb=bp['prior']['b'],
            tapmask=_tap_masks(h2, w2, batch),
            onehot=_sample_onehot(batch, M),
            ld_const=jnp.float32(ld_const)))
    return dict(mpn=mpn_k, blocks=blocks)


# ---------------- deterministic parameter init ----------------
def init_params(key):
    C, NC = IN_CHANNEL, N_COND
    C3 = 3 * C
    ca = C3 // 2
    cb = C3 - ca
    keys = iter(jax.random.split(key, 256))

    def rnd(shape, scale=0.05):
        return scale * jax.random.normal(next(keys), shape, jnp.float32)

    params = {
        'mpn': dict(
            W_in=rnd((F_IN, NC)), b_in=jnp.zeros((1, NC), jnp.float32),
            W_h=rnd((NC, NC)),
            W_o_x=rnd((F_IN, NC)), W_o_h=rnd((NC, NC)),
            b_o=jnp.zeros((1, NC), jnp.float32),
            W_lin=rnd((NC, NC)), b_lin=jnp.zeros((1, NC), jnp.float32),
        )
    }
    blocks = []
    for _ in range(N_BLOCK):
        flows = []
        for _ in range(N_FLOW):
            flows.append(dict(
                an_scale=1.0 + rnd((C3, 1), 0.01),
                an_bias=rnd((C3, 1), 0.01),
                inv_w=jnp.eye(C3, dtype=jnp.float32) + rnd((C3, C3), 0.05),
                # TODO(synk): converting real PyTorch (Cout, Cin, 3, 3) conv
                # weights requires reshaping to (Cout, 9*Cin) with tap index
                # t = (dy+1)*3 + (dx+1) (cross-correlation, no kernel flip).
                w1=rnd((FILT, 9 * ca)), b1=jnp.zeros((FILT, 1), jnp.float32),
                w2=rnd((FILT, FILT)), b2=jnp.zeros((FILT, 1), jnp.float32),
                w3=rnd((2 * cb, 9 * FILT), 0.02),
                b3=jnp.zeros((2 * cb, 1), jnp.float32)))
        # TODO(synk): CondPrior def not provided; plain 3x3 conv stands in for it.
        prior = dict(w_avg=rnd((6 * C, 9 * C), 0.02),
                     w_cond=rnd((9 * 6 * C, NC), 0.02),
                     b=jnp.zeros((6 * C, 1), jnp.float32))
        blocks.append(dict(flows=flows, prior=prior))
    params['blocks'] = blocks
    return params


# ---------------- main ----------------
if __name__ == "__main__":
    key = jax.random.PRNGKey(0)
    k_x, k_nf, k_adj, k_p = jax.random.split(key, 4)

    # PyTorch-convention NCHW input, transposed to NHWC for the kernels.
    x_nchw = jax.random.normal(k_x, (BATCH, IN_CHANNEL, IMG, IMG), jnp.float32)
    x = jnp.transpose(x_nchw, (0, 2, 3, 1))

    node_feats = jax.random.normal(k_nf, (BATCH, N_ATOMS, F_IN), jnp.float32)
    adj_raw = jax.random.uniform(k_adj, (BATCH, N_ATOMS, N_ATOMS))
    adj = ((adj_raw + jnp.transpose(adj_raw, (0, 2, 1))) * 0.5 > 0.5).astype(jnp.float32)

    params = init_params(k_p)
    prepared = prepare(params, BATCH)

    fwd = jax.jit(cond_proglow_mpn_forward)
    log_p_sum, logdet, z_outs = fwd(x, node_feats, adj, prepared)
    jax.block_until_ready((log_p_sum, logdet, z_outs))

    assert log_p_sum.shape == (BATCH,)
    assert logdet.shape == (BATCH,)
    assert len(z_outs) == N_BLOCK
    assert z_outs[0].shape == (BATCH, IMG // 2, IMG // 2, 3 * IN_CHANNEL)
    assert z_outs[1].shape == (BATCH, IMG // 4, IMG // 4, 3 * IN_CHANNEL)
    assert bool(jnp.all(jnp.isfinite(log_p_sum))) and bool(jnp.all(jnp.isfinite(logdet)))
    assert all(bool(jnp.all(jnp.isfinite(z))) for z in z_outs)

    print("KERNEL_OK")
</pallas_src>

<mosaic_0001>
module attributes {stable_mosaic.version = 11 : i64} {
  func.func @_mpn_kernel(%arg0: memref<16x16xf32, #tpu.memory_space<vmem>>, %arg1: memref<2x8x8xf32, #tpu.memory_space<vmem>>, %arg2: memref<2x16xbf16, #tpu.memory_space<vmem>>, %arg3: memref<16x32xbf16, #tpu.memory_space<vmem>>, %arg4: memref<1x32xf32, #tpu.memory_space<vmem>>, %arg5: memref<32x32xbf16, #tpu.memory_space<vmem>>, %arg6: memref<16x32xbf16, #tpu.memory_space<vmem>>, %arg7: memref<32x32xbf16, #tpu.memory_space<vmem>>, %arg8: memref<1x32xf32, #tpu.memory_space<vmem>>, %arg9: memref<32x32xbf16, #tpu.memory_space<vmem>>, %arg10: memref<1x32xf32, #tpu.memory_space<vmem>>, %arg11: memref<2x32xf32, #tpu.memory_space<vmem>>) attributes {dimension_semantics = [], scalar_prefetch = 0 : i64, scratch_operands = 0 : i64, tpu.core_type = #tpu.core_type<tc>} {
    %c0 = arith.constant 0 : index
    %c0_0 = arith.constant 0 : index
    %0 = vector.load %arg0[%c0, %c0_0] : memref<16x16xf32, #tpu.memory_space<vmem>>, vector<16x16xf32>
    %1 = arith.truncf %0 : vector<16x16xf32> to vector<16x16xbf16>
    %c0_1 = arith.constant 0 : index
    %c0_2 = arith.constant 0 : index
    %2 = vector.load %arg3[%c0_1, %c0_2] : memref<16x32xbf16, #tpu.memory_space<vmem>>, vector<16x32xbf16>
    %cst = arith.constant dense<0.000000e+00> : vector<16x32xf32>
    %3 = tpu.matmul %1, %2, %cst {dimension_numbers = #tpu.dot_dimension_numbers<[1], [0], [0], [1], [0, 0, 1, 1], [], []>} : vector<16x16xbf16>, vector<16x32xbf16>, vector<16x32xf32> -> vector<16x32xf32>
    %c0_3 = arith.constant 0 : index
    %c0_4 = arith.constant 0 : index
    %4 = vector.load %arg4[%c0_3, %c0_4] : memref<1x32xf32, #tpu.memory_space<vmem>>, vector<1x32xf32>
    %5 = vector.broadcast %4 : vector<1x32xf32> to vector<16x32xf32>
    %6 = arith.addf %3, %5 : vector<16x32xf32>
    %cst_5 = arith.constant 0.000000e+00 : f32
    %7 = vector.broadcast %cst_5 : f32 to vector<16x32xf32>
    %8 = arith.maximumf %6, %7 : vector<16x32xf32>
    %9 = arith.truncf %8 : vector<16x32xf32> to vector<16x32xbf16>
    %c0_6 = arith.constant 0 : index
    %c0_7 = arith.constant 0 : index
    %c0_8 = arith.constant 0 : index
    %10 = vector.load %arg1[%c0_6, %c0_7, %c0_8] : memref<2x8x8xf32, #tpu.memory_space<vmem>>, vector<1x8x8xf32>
    %11 = vector.shape_cast %10 : vector<1x8x8xf32> to vector<8x8xf32>
    %12 = arith.truncf %11 : vector<8x8xf32> to vector<8x8xbf16>
    %13 = vector.extract_strided_slice %9 {offsets = [0, 0], sizes = [8, 32], strides = [1, 1]} : vector<16x32xbf16> to vector<8x32xbf16>
    %cst_9 = arith.constant dense<0.000000e+00> : vector<8x32xf32>
    %14 = tpu.matmul %12, %13, %cst_9 {dimension_numbers = #tpu.dot_dimension_numbers<[1], [0], [0], [1], [0, 0, 1, 1], [], []>} : vector<8x8xbf16>, vector<8x32xbf16>, vector<8x32xf32> -> vector<8x32xf32>
    %c1 = arith.constant 1 : index
    %c0_10 = arith.constant 0 : index
    %c0_11 = arith.constant 0 : index
    %15 = vector.load %arg1[%c1, %c0_10, %c0_11] : memref<2x8x8xf32, #tpu.memory_space<vmem>>, vector<1x8x8xf32>
    %16 = vector.shape_cast %15 : vector<1x8x8xf32> to vector<8x8xf32>
    %17 = arith.truncf %16 : vector<8x8xf32> to vector<8x8xbf16>
    %18 = vector.extract_strided_slice %9 {offsets = [8, 0], sizes = [8, 32], strides = [1, 1]} : vector<16x32xbf16> to vector<8x32xbf16>
    %cst_12 = arith.constant dense<0.000000e+00> : vector<8x32xf32>
    %19 = tpu.matmul %17, %18, %cst_12 {dimension_numbers = #tpu.dot_dimension_numbers<[1], [0], [0], [1], [0, 0, 1, 1], [], []>} : vector<8x8xbf16>, vector<8x32xbf16>, vector<8x32xf32> -> vector<8x32xf32>
    %20 = tpu.concatenate %14, %19 in 0 : vector<8x32xf32>, vector<8x32xf32> -> vector<16x32xf32>
    %21 = arith.truncf %20 : vector<16x32xf32> to vector<16x32xbf16>
    %c0_13 = arith.constant 0 : index
    %c0_14 = arith.constant 0 : index
    %22 = vector.load %arg5[%c0_13, %c0_14] : memref<32x32xbf16, #tpu.memory_space<vmem>>, vector<32x32xbf16>
    %cst_15 = arith.constant dense<0.000000e+00> : vector<16x32xf32>
    %23 = tpu.matmul %21, %22, %cst_15 {dimension_numbers = #tpu.dot_dimension_numbers<[1], [0], [0], [1], [0, 0, 1, 1], [], []>} : vector<16x32xbf16>, vector<32x32xbf16>, vector<16x32xf32> -> vector<16x32xf32>
    %24 = arith.addf %8, %23 : vector<16x32xf32>
    %cst_16 = arith.constant 0.000000e+00 : f32
    %25 = vector.broadcast %cst_16 : f32 to vector<16x32xf32>
    %26 = arith.maximumf %24, %25 : vector<16x32xf32>
    %27 = arith.truncf %26 : vector<16x32xf32> to vector<16x32xbf16>
    %c0_17 = arith.constant 0 : index
    %c0_18 = arith.constant 0 : index
    %c0_19 = arith.constant 0 : index
    %28 = vector.load %arg1[%c0_17, %c0_18, %c0_19] : memref<2x8x8xf32, #tpu.memory_space<vmem>>, vector<1x8x8xf32>
    %29 = vector.shape_cast %28 : vector<1x8x8xf32> to vector<8x8xf32>
    %30 = arith.truncf %29 : vector<8x8xf32> to vector<8x8xbf16>
    %31 = vector.extract_strided_slice %27 {offsets = [0, 0], sizes = [8, 32], strides = [1, 1]} : vector<16x32xbf16> to vector<8x32xbf16>
    %cst_20 = arith.constant dense<0.000000e+00> : vector<8x32xf32>
    %32 = tpu.matmul %30, %31, %cst_20 {dimension_numbers = #tpu.dot_dimension_numbers<[1], [0], [0], [1], [0, 0, 1, 1], [], []>} : vector<8x8xbf16>, vector<8x32xbf16>, vector<8x32xf32> -> vector<8x32xf32>
    %c1_21 = arith.constant 1 : index
    %c0_22 = arith.constant 0 : index
    %c0_23 = arith.constant 0 : index
    %33 = vector.load %arg1[%c1_21, %c0_22, %c0_23] : memref<2x8x8xf32, #tpu.memory_space<vmem>>, vector<1x8x8xf32>
    %34 = vector.shape_cast %33 : vector<1x8x8xf32> to vector<8x8xf32>
    %35 = arith.truncf %34 : vector<8x8xf32> to vector<8x8xbf16>
    %36 = vector.extract_strided_slice %27 {offsets = [8, 0], sizes = [8, 32], strides = [1, 1]} : vector<16x32xbf16> to vector<8x32xbf16>
    %cst_24 = arith.constant dense<0.000000e+00> : vector<8x32xf32>
    %37 = tpu.matmul %35, %36, %cst_24 {dimension_numbers = #tpu.dot_dimension_numbers<[1], [0], [0], [1], [0, 0, 1, 1], [], []>} : vector<8x8xbf16>, vector<8x32xbf16>, vector<8x32xf32> -> vector<8x32xf32>
    %38 = tpu.concatenate %32, %37 in 0 : vector<8x32xf32>, vector<8x32xf32> -> vector<16x32xf32>
    %39 = arith.truncf %38 : vector<16x32xf32> to vector<16x32xbf16>
    %c0_25 = arith.constant 0 : index
    %c0_26 = arith.constant 0 : index
    %40 = vector.load %arg5[%c0_25, %c0_26] : memref<32x32xbf16, #tpu.memory_space<vmem>>, vector<32x32xbf16>
    %cst_27 = arith.constant dense<0.000000e+00> : vector<16x32xf32>
    %41 = tpu.matmul %39, %40, %cst_27 {dimension_numbers = #tpu.dot_dimension_numbers<[1], [0], [0], [1], [0, 0, 1, 1], [], []>} : vector<16x32xbf16>, vector<32x32xbf16>, vector<16x32xf32> -> vector<16x32xf32>
    %42 = arith.addf %8, %41 : vector<16x32xf32>
    %cst_28 = arith.constant 0.000000e+00 : f32
    %43 = vector.broadcast %cst_28 : f32 to vector<16x32xf32>
    %44 = arith.maximumf %42, %43 : vector<16x32xf32>
    %45 = arith.truncf %44 : vector<16x32xf32> to vector<16x32xbf16>
    %c0_29 = arith.constant 0 : index
    %c0_30 = arith.constant 0 : index
    %c0_31 = arith.constant 0 : index
    %46 = vector.load %arg1[%c0_29, %c0_30, %c0_31] : memref<2x8x8xf32, #tpu.memory_space<vmem>>, vector<1x8x8xf32>
    %47 = vector.shape_cast %46 : vector<1x8x8xf32> to vector<8x8xf32>
    %48 = arith.truncf %47 : vector<8x8xf32> to vector<8x8xbf16>
    %49 = vector.extract_strided_slice %45 {offsets = [0, 0], sizes = [8, 32], strides = [1, 1]} : vector<16x32xbf16> to vector<8x32xbf16>
    %cst_32 = arith.constant dense<0.000000e+00> : vector<8x32xf32>
    %50 = tpu.matmul %48, %49, %cst_32 {dimension_numbers = #tpu.dot_dimension_numbers<[1], [0], [0], [1], [0, 0, 1, 1], [], []>} : vector<8x8xbf16>, vector<8x32xbf16>, vector<8x32xf32> -> vector<8x32xf32>
    %c1_33 = arith.constant 1 : index
    %c0_34 = arith.constant 0 : index
    %c0_35 = arith.constant 0 : index
    %51 = vector.load %arg1[%c1_33, %c0_34, %c0_35] : memref<2x8x8xf32, #tpu.memory_space<vmem>>, vector<1x8x8xf32>
    %52 = vector.shape_cast %51 : vector<1x8x8xf32> to vector<8x8xf32>
    %53 = arith.truncf %52 : vector<8x8xf32> to vector<8x8xbf16>
    %54 = vector.extract_strided_slice %45 {offsets = [8, 0], sizes = [8, 32], strides = [1, 1]} : vector<16x32xbf16> to vector<8x32xbf16>
    %cst_36 = arith.constant dense<0.000000e+00> : vector<8x32xf32>
    %55 = tpu.matmul %53, %54, %cst_36 {dimension_numbers = #tpu.dot_dimension_numbers<[1], [0], [0], [1], [0, 0, 1, 1], [], []>} : vector<8x8xbf16>, vector<8x32xbf16>, vector<8x32xf32> -> vector<8x32xf32>
    %56 = tpu.concatenate %50, %55 in 0 : vector<8x32xf32>, vector<8x32xf32> -> vector<16x32xf32>
    %57 = arith.truncf %56 : vector<16x32xf32> to vector<16x32xbf16>
    %c0_37 = arith.constant 0 : index
    %c0_38 = arith.constant 0 : index
    %58 = vector.load %arg5[%c0_37, %c0_38] : memref<32x32xbf16, #tpu.memory_space<vmem>>, vector<32x32xbf16>
    %cst_39 = arith.constant dense<0.000000e+00> : vector<16x32xf32>
    %59 = tpu.matmul %57, %58, %cst_39 {dimension_numbers = #tpu.dot_dimension_numbers<[1], [0], [0], [1], [0, 0, 1, 1], [], []>} : vector<16x32xbf16>, vector<32x32xbf16>, vector<16x32xf32> -> vector<16x32xf32>
    %60 = arith.addf %8, %59 : vector<16x32xf32>
    %cst_40 = arith.constant 0.000000e+00 : f32
    %61 = vector.broadcast %cst_40 : f32 to vector<16x32xf32>
    %62 = arith.maximumf %60, %61 : vector<16x32xf32>
    %63 = arith.truncf %62 : vector<16x32xf32> to vector<16x32xbf16>
    %c0_41 = arith.constant 0 : index
    %c0_42 = arith.constant 0 : index
    %c0_43 = arith.constant 0 : index
    %64 = vector.load %arg1[%c0_41, %c0_42, %c0_43] : memref<2x8x8xf32, #tpu.memory_space<vmem>>, vector<1x8x8xf32>
    %65 = vector.shape_cast %64 : vector<1x8x8xf32> to vector<8x8xf32>
    %66 = arith.truncf %65 : vector<8x8xf32> to vector<8x8xbf16>
    %67 = vector.extract_strided_slice %63 {offsets = [0, 0], sizes = [8, 32], strides = [1, 1]} : vector<16x32xbf16> to vector<8x32xbf16>
    %cst_44 = arith.constant dense<0.000000e+00> : vector<8x32xf32>
    %68 = tpu.matmul %66, %67, %cst_44 {dimension_numbers = #tpu.dot_dimension_numbers<[1], [0], [0], [1], [0, 0, 1, 1], [], []>} : vector<8x8xbf16>, vector<8x32xbf16>, vector<8x32xf32> -> vector<8x32xf32>
    %c1_45 = arith.constant 1 : index
    %c0_46 = arith.constant 0 : index
    %c0_47 = arith.constant 0 : index
    %69 = vector.load %arg1[%c1_45, %c0_46, %c0_47] : memref<2x8x8xf32, #tpu.memory_space<vmem>>, vector<1x8x8xf32>
    %70 = vector.shape_cast %69 : vector<1x8x8xf32> to vector<8x8xf32>
    %71 = arith.truncf %70 : vector<8x8xf32> to vector<8x8xbf16>
    %72 = vector.extract_strided_slice %63 {offsets = [8, 0], sizes = [8, 32], strides = [1, 1]} : vector<16x32xbf16> to vector<8x32xbf16>
    %cst_48 = arith.constant dense<0.000000e+00> : vector<8x32xf32>
    %73 = tpu.matmul %71, %72, %cst_48 {dimension_numbers = #tpu.dot_dimension_numbers<[1], [0], [0], [1], [0, 0, 1, 1], [], []>} : vector<8x8xbf16>, vector<8x32xbf16>, vector<8x32xf32> -> vector<8x32xf32>
    %74 = tpu.concatenate %68, %73 in 0 : vector<8x32xf32>, vector<8x32xf32> -> vector<16x32xf32>
    %75 = arith.truncf %74 : vector<16x32xf32> to vector<16x32xbf16>
    %c0_49 = arith.constant 0 : index
    %c0_50 = arith.constant 0 : index
    %76 = vector.load %arg5[%c0_49, %c0_50] : memref<32x32xbf16, #tpu.memory_space<vmem>>, vector<32x32xbf16>
    %cst_51 = arith.constant dense<0.000000e+00> : vector<16x32xf32>
    %77 = tpu.matmul %75, %76, %cst_51 {dimension_numbers = #tpu.dot_dimension_numbers<[1], [0], [0], [1], [0, 0, 1, 1], [], []>} : vector<16x32xbf16>, vector<32x32xbf16>, vector<16x32xf32> -> vector<16x32xf32>
    %78 = arith.addf %8, %77 : vector<16x32xf32>
    %cst_52 = arith.constant 0.000000e+00 : f32
    %79 = vector.broadcast %cst_52 : f32 to vector<16x32xf32>
    %80 = arith.maximumf %78, %79 : vector<16x32xf32>
    %c0_53 = arith.constant 0 : index
    %c0_54 = arith.constant 0 : index
    %81 = vector.load %arg6[%c0_53, %c0_54] : memref<16x32xbf16, #tpu.memory_space<vmem>>, vector<16x32xbf16>
    %cst_55 = arith.constant dense<0.000000e+00> : vector<16x32xf32>
    %82 = tpu.matmul %1, %81, %cst_55 {dimension_numbers = #tpu.dot_dimension_numbers<[1], [0], [0], [1], [0, 0, 1, 1], [], []>} : vector<16x16xbf16>, vector<16x32xbf16>, vector<16x32xf32> -> vector<16x32xf32>
    %83 = arith.truncf %80 : vector<16x32xf32> to vector<16x32xbf16>
    %c0_56 = arith.constant 0 : index
    %c0_57 = arith.constant 0 : index
    %84 = vector.load %arg7[%c0_56, %c0_57] : memref<32x32xbf16, #tpu.memory_space<vmem>>, vector<32x32xbf16>
    %cst_58 = arith.constant dense<0.000000e+00> : vector<16x32xf32>
    %85 = tpu.matmul %83, %84, %cst_58 {dimension_numbers = #tpu.dot_dimension_numbers<[1], [0], [0], [1], [0, 0, 1, 1], [], []>} : vector<16x32xbf16>, vector<32x32xbf16>, vector<16x32xf32> -> vector<16x32xf32>
    %86 = arith.addf %82, %85 : vector<16x32xf32>
    %c0_59 = arith.constant 0 : index
    %c0_60 = arith.constant 0 : index
    %87 = vector.load %arg8[%c0_59, %c0_60] : memref<1x32xf32, #tpu.memory_space<vmem>>, vector<1x32xf32>
    %88 = vector.broadcast %87 : vector<1x32xf32> to vector<16x32xf32>
    %89 = arith.addf %86, %88 : vector<16x32xf32>
    %cst_61 = arith.constant 0.000000e+00 : f32
    %90 = vector.broadcast %cst_61 : f32 to vector<16x32xf32>
    %91 = arith.maximumf %89, %90 : vector<16x32xf32>
    %c0_62 = arith.constant 0 : index
    %c0_63 = arith.constant 0 : index
    %92 = vector.load %arg2[%c0_62, %c0_63] : memref<2x16xbf16, #tpu.memory_space<vmem>>, vector<2x16xbf16>
    %93 = arith.truncf %91 : vector<16x32xf32> to vector<16x32xbf16>
    %cst_64 = arith.constant dense<0.000000e+00> : vector<2x32xf32>
    %94 = tpu.matmul %92, %93, %cst_64 {dimension_numbers = #tpu.dot_dimension_numbers<[1], [0], [0], [1], [0, 0, 1, 1], [], []>} : vector<2x16xbf16>, vector<16x32xbf16>, vector<2x32xf32> -> vector<2x32xf32>
    %95 = arith.truncf %94 : vector<2x32xf32> to vector<2x32xbf16>
    %c0_65 = arith.constant 0 : index
    %c0_66 = arith.constant 0 : index
    %96 = vector.load %arg9[%c0_65, %c0_66] : memref<32x32xbf16, #tpu.memory_space<vmem>>, vector<32x32xbf16>
    %cst_67 = arith.constant dense<0.000000e+00> : vector<2x32xf32>
    %97 = tpu.matmul %95, %96, %cst_67 {dimension_numbers = #tpu.dot_dimension_numbers<[1], [0], [0], [1], [0, 0, 1, 1], [], []>} : vector<2x32xbf16>, vector<32x32xbf16>, vector<2x32xf32> -> vector<2x32xf32>
    %c0_68 = arith.constant 0 : index
    %c0_69 = arith.constant 0 : index
    %98 = vector.load %arg10[%c0_68, %c0_69] : memref<1x32xf32, #tpu.memory_space<vmem>>, vector<1x32xf32>
    %99 = vector.broadcast %98 : vector<1x32xf32> to vector<2x32xf32>
    %100 = arith.addf %97, %99 : vector<2x32xf32>
    %c0_70 = arith.constant 0 : index
    %c0_71 = arith.constant 0 : index
    %101 = vector.load %arg11[%c0_70, %c0_71] : memref<2x32xf32, #tpu.memory_space<vmem>>, vector<2x32xf32>
    tpu.vector_store %arg11[%c0_70, %c0_71], %100 {strides = array<i32>} : memref<2x32xf32, #tpu.memory_space<vmem>>, vector<2x32xf32>,
    return
  }
}

module attributes {stable_mosaic.version = 11 : i64} {
  func.func @_block_kernel(%arg0: memref<12x128xf32, #tpu.memory_space<vmem>>, %arg1: memref<4x128xf32, #tpu.memory_space<vmem>>, %arg2: memref<32x2xf32, #tpu.memory_space<vmem>>, %arg3: memref<9x128xf32, #tpu.memory_space<vmem>>, %arg4: memref<2x128xf32, #tpu.memory_space<vmem>>, %arg5: memref<24x36xbf16, #tpu.memory_space<vmem>>, %arg6: memref<216x32xbf16, #tpu.memory_space<vmem>>, %arg7: memref<24x1xf32, #tpu.memory_space<vmem>>, %arg8: memref<12x1xf32, #tpu.memory_space<vmem>>, %arg9: memref<12x1xf32, #tpu.memory_space<vmem>>, %arg10: memref<12x12xbf16, #tpu.memory_space<vmem>>, %arg11: memref<32x54xbf16, #tpu.memory_space<vmem>>, %arg12: memref<32x1xf32, #tpu.memory_space<vmem>>, %arg13: memref<32x32xbf16, #tpu.memory_space<vmem>>, %arg14: memref<32x1xf32, #tpu.memory_space<vmem>>, %arg15: memref<12x288xbf16, #tpu.memory_space<vmem>>, %arg16: memref<12x1xf32, #tpu.memory_space<vmem>>, %arg17: memref<12x1xf32, #tpu.memory_space<vmem>>, %arg18: memref<12x1xf32, #tpu.memory_space<vmem>>, %arg19: memref<12x12xbf16, #tpu.memory_space<vmem>>, %arg20: memref<32x54xbf16, #tpu.memory_space<vmem>>, %arg21: memref<32x1xf32, #tpu.memory_space<vmem>>, %arg22: memref<32x32xbf16, #tpu.memory_space<vmem>>, %arg23: memref<32x1xf32, #tpu.memory_space<vmem>>, %arg24: memref<12x288xbf16, #tpu.memory_space<vmem>>, %arg25: memref<12x1xf32, #tpu.memory_space<vmem>>, %arg26: memref<12x128xf32, #tpu.memory_space<vmem>>, %arg27: memref<1x128xf32, #tpu.memory_space<vmem>>, %arg28: memref<1x128xf32, #tpu.memory_space<vmem>>) attributes {dimension_semantics = [], scalar_prefetch = 0 : i64, scratch_operands = 0 : i64, tpu.core_type = #tpu.core_type<tc>} {
    %c0 = arith.constant 0 : index
    %c0_0 = arith.constant 0 : index
    %0 = vector.load %arg3[%c0, %c0_0] : memref<9x128xf32, #tpu.memory_space<vmem>>, vector<9x128xf32>
    %1 = arith.truncf %0 : vector<9x128xf32> to vector<9x128xbf16>
    %c0_1 = arith.constant 0 : index
    %c0_2 = arith.constant 0 : index
    %2 = vector.load %arg0[%c0_1, %c0_2] : memref<12x128xf32, #tpu.memory_space<vmem>>, vector<12x128xf32>
    %cst = arith.constant 0.000000e+00 : f32
    %3 = vector.broadcast %cst : f32 to vector<1x128xf32>
    %c0_3 = arith.constant 0 : index
    %c0_4 = arith.constant 0 : index
    %4 = vector.load %arg8[%c0_3, %c0_4] : memref<12x1xf32, #tpu.memory_space<vmem>>, vector<12x1xf32>
    %c0_5 = arith.constant 0 : index
    %c0_6 = arith.constant 0 : index
    %5 = vector.load %arg9[%c0_5, %c0_6] : memref<12x1xf32, #tpu.memory_space<vmem>>, vector<12x1xf32>
    %6 = vector.broadcast %5 : vector<12x1xf32> to vector<12x128xf32>
    %7 = arith.addf %2, %6 : vector<12x128xf32>
    %8 = vector.broadcast %4 : vector<12x1xf32> to vector<12x128xf32>
    %9 = arith.mulf %8, %7 : vector<12x128xf32>
    %c0_7 = arith.constant 0 : index
    %c0_8 = arith.constant 0 : index
    %10 = vector.load %arg10[%c0_7, %c0_8] : memref<12x12xbf16, #tpu.memory_space<vmem>>, vector<12x12xbf16>
    %11 = arith.truncf %9 : vector<12x128xf32> to vector<12x128xbf16>
    %cst_9 = arith.constant dense<0.000000e+00> : vector<12x128xf32>
    %12 = tpu.matmul %10, %11, %cst_9 {dimension_numbers = #tpu.dot_dimension_numbers<[1], [0], [0], [1], [0, 0, 1, 1], [], []>} : vector<12x12xbf16>, vector<12x128xbf16>, vector<12x128xf32> -> vector<12x128xf32>
    %13 = vector.extract_strided_slice %12 {offsets = [0, 0], sizes = [6, 128], strides = [1, 1]} : vector<12x128xf32> to vector<6x128xf32>
    %14 = vector.extract_strided_slice %12 {offsets = [6, 0], sizes = [6, 128], strides = [1, 1]} : vector<12x128xf32> to vector<6x128xf32>
    %c0_10 = arith.constant 0 : index
    %c0_11 = arith.constant 0 : index
    %15 = vector.load %arg11[%c0_10, %c0_11] : memref<32x54xbf16, #tpu.memory_space<vmem>>, vector<32x54xbf16>
    %16 = arith.truncf %13 : vector<6x128xf32> to vector<6x128xbf16>
    %17 = vector.extract_strided_slice %16 {offsets = [0, 119], sizes = [6, 9], strides = [1, 1]} : vector<6x128xbf16> to vector<6x9xbf16>
    %18 = vector.extract_strided_slice %16 {offsets = [0, 0], sizes = [6, 119], strides = [1, 1]} : vector<6x128xbf16> to vector<6x119xbf16>
    %19 = tpu.concatenate %17, %18 in 1 : vector<6x9xbf16>, vector<6x119xbf16> -> vector<6x128xbf16>
    %20 = vector.extract_strided_slice %1 {offsets = [0, 0], sizes = [1, 128], strides = [1, 1]} : vector<9x128xbf16> to vector<1x128xbf16>
    %21 = vector.broadcast %20 : vector<1x128xbf16> to vector<6x128xbf16>
    %22 = arith.mulf %19, %21 : vector<6x128xbf16>
    %23 = vector.extract_strided_slice %16 {offsets = [0, 120], sizes = [6, 8], strides = [1, 1]} : vector<6x128xbf16> to vector<6x8xbf16>
    %24 = vector.extract_strided_slice %16 {offsets = [0, 0], sizes = [6, 120], strides = [1, 1]} : vector<6x128xbf16> to vector<6x120xbf16>
    %25 = tpu.concatenate %23, %24 in 1 : vector<6x8xbf16>, vector<6x120xbf16> -> vector<6x128xbf16>
    %26 = vector.extract_strided_slice %1 {offsets = [1, 0], sizes = [1, 128], strides = [1, 1]} : vector<9x128xbf16> to vector<1x128xbf16>
    %27 = vector.broadcast %26 : vector<1x128xbf16> to vector<6x128xbf16>
    %28 = arith.mulf %25, %27 : vector<6x128xbf16>
    %29 = vector.extract_strided_slice %16 {offsets = [0, 121], sizes = [6, 7], strides = [1, 1]} : vector<6x128xbf16> to vector<6x7xbf16>
    %30 = vector.extract_strided_slice %16 {offsets = [0, 0], sizes = [6, 121], strides = [1, 1]} : vector<6x128xbf16> to vector<6x121xbf16>
    %31 = tpu.concatenate %29, %30 in 1 : vector<6x7xbf16>, vector<6x121xbf16> -> vector<6x128xbf16>
    %32 = vector.extract_strided_slice %1 {offsets = [2, 0], sizes = [1, 128], strides = [1, 1]} : vector<9x128xbf16> to vector<1x128xbf16>
    %33 = vector.broadcast %32 : vector<1x128xbf16> to vector<6x128xbf16>
    %34 = arith.mulf %31, %33 : vector<6x128xbf16>
    %35 = vector.extract_strided_slice %16 {offsets = [0, 127], sizes = [6, 1], strides = [1, 1]} : vector<6x128xbf16> to vector<6x1xbf16>
    %36 = vector.extract_strided_slice %16 {offsets = [0, 0], sizes = [6, 127], strides = [1, 1]} : vector<6x128xbf16> to vector<6x127xbf16>
    %37 = tpu.concatenate %35, %36 in 1 : vector<6x1xbf16>, vector<6x127xbf16> -> vector<6x128xbf16>
    %38 = vector.extract_strided_slice %1 {offsets = [3, 0], sizes = [1, 128], strides = [1, 1]} : vector<9x128xbf16> to vector<1x128xbf16>
    %39 = vector.broadcast %38 : vector<1x128xbf16> to vector<6x128xbf16>
    %40 = arith.mulf %37, %39 : vector<6x128xbf16>
    %41 = vector.extract_strided_slice %1 {offsets = [4, 0], sizes = [1, 128], strides = [1, 1]} : vector<9x128xbf16> to vector<1x128xbf16>
    %42 = vector.broadcast %41 : vector<1x128xbf16> to vector<6x128xbf16>
    %43 = arith.mulf %16, %42 : vector<6x128xbf16>
    %44 = vector.extract_strided_slice %16 {offsets = [0, 1], sizes = [6, 127], strides = [1, 1]} : vector<6x128xbf16> to vector<6x127xbf16>
    %45 = vector.extract_strided_slice %16 {offsets = [0, 0], sizes = [6, 1], strides = [1, 1]} : vector<6x128xbf16> to vector<6x1xbf16>
    %46 = tpu.concatenate %44, %45 in 1 : vector<6x127xbf16>, vector<6x1xbf16> -> vector<6x128xbf16>
    %47 = vector.extract_strided_slice %1 {offsets = [5, 0], sizes = [1, 128], strides = [1, 1]} : vector<9x128xbf16> to vector<1x128xbf16>
    %48 = vector.broadcast %47 : vector<1x128xbf16> to vector<6x128xbf16>
    %49 = arith.mulf %46, %48 : vector<6x128xbf16>
    %50 = vector.extract_strided_slice %16 {offsets = [0, 7], sizes = [6, 121], strides = [1, 1]} : vector<6x128xbf16> to vector<6x121xbf16>
    %51 = vector.extract_strided_slice %16 {offsets = [0, 0], sizes = [6, 7], strides = [1, 1]} : vector<6x128xbf16> to vector<6x7xbf16>
    %52 = tpu.concatenate %50, %51 in 1 : vector<6x121xbf16>, vector<6x7xbf16> -> vector<6x128xbf16>
    %53 = vector.extract_strided_slice %1 {offsets = [6, 0], sizes = [1, 128], strides = [1, 1]} : vector<9x128xbf16> to vector<1x128xbf16>
    %54 = vector.broadcast %53 : vector<1x128xbf16> to vector<6x128xbf16>
    %55 = arith.mulf %52, %54 : vector<6x128xbf16>
    %56 = vector.extract_strided_slice %16 {offsets = [0, 8], sizes = [6, 120], strides = [1, 1]} : vector<6x128xbf16> to vector<6x120xbf16>
    %57 = vector.extract_strided_slice %16 {offsets = [0, 0], sizes = [6, 8], strides = [1, 1]} : vector<6x128xbf16> to vector<6x8xbf16>
    %58 = tpu.concatenate %56, %57 in 1 : vector<6x120xbf16>, vector<6x8xbf16> -> vector<6x128xbf16>
    %59 = vector.extract_strided_slice %1 {offsets = [7, 0], sizes = [1, 128], strides = [1, 1]} : vector<9x128xbf16> to vector<1x128xbf16>
    %60 = vector.broadcast %59 : vector<1x128xbf16> to vector<6x128xbf16>
    %61 = arith.mulf %58, %60 : vector<6x128xbf16>
    %62 = vector.extract_strided_slice %16 {offsets = [0, 9], sizes = [6, 119], strides = [1, 1]} : vector<6x128xbf16> to vector<6x119xbf16>
    %63 = vector.extract_strided_slice %16 {offsets = [0, 0], sizes = [6, 9], strides = [1, 1]} : vector<6x128xbf16> to vector<6x9xbf16>
    %64 = tpu.concatenate %62, %63 in 1 : vector<6x119xbf16>, vector<6x9xbf16> -> vector<6x128xbf16>
    %65 = vector.extract_strided_slice %1 {offsets = [8, 0], sizes = [1, 128], strides = [1, 1]} : vector<9x128xbf16> to vector<1x128xbf16>
    %66 = vector.broadcast %65 : vector<1x128xbf16> to vector<6x128xbf16>
    %67 = arith.mulf %64, %66 : vector<6x128xbf16>
    %68 = tpu.concatenate %22, %28, %34, %40, %43, %49, %55, %61, %67 in 0 : vector<6x128xbf16>, vector<6x128xbf16>, vector<6x128xbf16>, vector<6x128xbf16>, vector<6x128xbf16>, vector<6x128xbf16>, vector<6x128xbf16>, vector<6x128xbf16>, vector<6x128xbf16> -> vector<54x128xbf16>
    %cst_12 = arith.constant dense<0.000000e+00> : vector<32x128xf32>
    %69 = tpu.matmul %15, %68, %cst_12 {dimension_numbers = #tpu.dot_dimension_numbers<[1], [0], [0], [1], [0, 0, 1, 1], [], []>} : vector<32x54xbf16>, vector<54x128xbf16>, vector<32x128xf32> -> vector<32x128xf32>
    %c0_13 = arith.constant 0 : index
    %c0_14 = arith.constant 0 : index
    %70 = vector.load %arg12[%c0_13, %c0_14] : memref<32x1xf32, #tpu.memory_space<vmem>>, vector<32x1xf32>
    %71 = vector.broadcast %70 : vector<32x1xf32> to vector<32x128xf32>
    %72 = arith.addf %69, %71 : vector<32x128xf32>
    %cst_15 = arith.constant 0.000000e+00 : f32
    %73 = vector.broadcast %cst_15 : f32 to vector<32x128xf32>
    %74 = arith.maximumf %72, %73 : vector<32x128xf32>
    %c0_16 = arith.constant 0 : index
    %c0_17 = arith.constant 0 : index
    %75 = vector.load %arg13[%c0_16, %c0_17] : memref<32x32xbf16, #tpu.memory_space<vmem>>, vector<32x32xbf16>
    %76 = arith.truncf %74 : vector<32x128xf32> to vector<32x128xbf16>
    %cst_18 = arith.constant dense<0.000000e+00> : vector<32x128xf32>
    %77 = tpu.matmul %75, %76, %cst_18 {dimension_numbers = #tpu.dot_dimension_numbers<[1], [0], [0], [1], [0, 0, 1, 1], [], []>} : vector<32x32xbf16>, vector<32x128xbf16>, vector<32x128xf32> -> vector<32x128xf32>
    %c0_19 = arith.constant 0 : index
    %c0_20 = arith.constant 0 : index
    %78 = vector.load %arg14[%c0_19, %c0_20] : memref<32x1xf32, #tpu.memory_space<vmem>>, vector<32x1xf32>
    %79 = vector.broadcast %78 : vector<32x1xf32> to vector<32x128xf32>
    %80 = arith.addf %77, %79 : vector<32x128xf32>
    %cst_21 = arith.constant 0.000000e+00 : f32
    %81 = vector.broadcast %cst_21 : f32 to vector<32x128xf32>
    %82 = arith.maximumf %80, %81 : vector<32x128xf32>
    %c0_22 = arith.constant 0 : index
    %c0_23 = arith.constant 0 : index
    %83 = vector.load %arg15[%c0_22, %c0_23] : memref<12x288xbf16, #tpu.memory_space<vmem>>, vector<12x288xbf16>
    %84 = arith.truncf %82 : vector<32x128xf32> to vector<32x128xbf16>
    %85 = vector.extract_strided_slice %84 {offsets = [0, 119], sizes = [32, 9], strides = [1, 1]} : vector<32x128xbf16> to vector<32x9xbf16>
    %86 = vector.extract_strided_slice %84 {offsets = [0, 0], sizes = [32, 119], strides = [1, 1]} : vector<32x128xbf16> to vector<32x119xbf16>
    %87 = tpu.concatenate %85, %86 in 1 : vector<32x9xbf16>, vector<32x119xbf16> -> vector<32x128xbf16>
    %88 = vector.extract_strided_slice %1 {offsets = [0, 0], sizes = [1, 128], strides = [1, 1]} : vector<9x128xbf16> to vector<1x128xbf16>
    %89 = vector.broadcast %88 : vector<1x128xbf16> to vector<32x128xbf16>
    %90 = arith.mulf %87, %89 : vector<32x128xbf16>
    %91 = vector.extract_strided_slice %84 {offsets = [0, 120], sizes = [32, 8], strides = [1, 1]} : vector<32x128xbf16> to vector<32x8xbf16>
    %92 = vector.extract_strided_slice %84 {offsets = [0, 0], sizes = [32, 120], strides = [1, 1]} : vector<32x128xbf16> to vector<32x120xbf16>
    %93 = tpu.concatenate %91, %92 in 1 : vector<32x8xbf16>, vector<32x120xbf16> -> vector<32x128xbf16>
    %94 = vector.extract_strided_slice %1 {offsets = [1, 0], sizes = [1, 128], strides = [1, 1]} : vector<9x128xbf16> to vector<1x128xbf16>
    %95 = vector.broadcast %94 : vector<1x128xbf16> to vector<32x128xbf16>
    %96 = arith.mulf %93, %95 : vector<32x128xbf16>
    %97 = vector.extract_strided_slice %84 {offsets = [0, 121], sizes = [32, 7], strides = [1, 1]} : vector<32x128xbf16> to vector<32x7xbf16>
    %98 = vector.extract_strided_slice %84 {offsets = [0, 0], sizes = [32, 121], strides = [1, 1]} : vector<32x128xbf16> to vector<32x121xbf16>
    %99 = tpu.concatenate %97, %98 in 1 : vector<32x7xbf16>, vector<32x121xbf16> -> vector<32x128xbf16>
    %100 = vector.extract_strided_slice %1 {offsets = [2, 0], sizes = [1, 128], strides = [1, 1]} : vector<9x128xbf16> to vector<1x128xbf16>
    %101 = vector.broadcast %100 : vector<1x128xbf16> to vector<32x128xbf16>
    %102 = arith.mulf %99, %101 : vector<32x128xbf16>
    %103 = vector.extract_strided_slice %84 {offsets = [0, 127], sizes = [32, 1], strides = [1, 1]} : vector<32x128xbf16> to vector<32x1xbf16>
    %104 = vector.extract_strided_slice %84 {offsets = [0, 0], sizes = [32, 127], strides = [1, 1]} : vector<32x128xbf16> to vector<32x127xbf16>
    %105 = tpu.concatenate %103, %104 in 1 : vector<32x1xbf16>, vector<32x127xbf16> -> vector<32x128xbf16>
    %106 = vector.extract_strided_slice %1 {offsets = [3, 0], sizes = [1, 128], strides = [1, 1]} : vector<9x128xbf16> to vector<1x128xbf16>
    %107 = vector.broadcast %106 : vector<1x128xbf16> to vector<32x128xbf16>
    %108 = arith.mulf %105, %107 : vector<32x128xbf16>
    %109 = vector.extract_strided_slice %1 {offsets = [4, 0], sizes = [1, 128], strides = [1, 1]} : vector<9x128xbf16> to vector<1x128xbf16>
    %110 = vector.broadcast %109 : vector<1x128xbf16> to vector<32x128xbf16>
    %111 = arith.mulf %84, %110 : vector<32x128xbf16>
    %112 = vector.extract_strided_slice %84 {offsets = [0, 1], sizes = [32, 127], strides = [1, 1]} : vector<32x128xbf16> to vector<32x127xbf16>
    %113 = vector.extract_strided_slice %84 {offsets = [0, 0], sizes = [32, 1], strides = [1, 1]} : vector<32x128xbf16> to vector<32x1xbf16>
    %114 = tpu.concatenate %112, %113 in 1 : vector<32x127xbf16>, vector<32x1xbf16> -> vector<32x128xbf16>
    %115 = vector.extract_strided_slice %1 {offsets = [5, 0], sizes = [1, 128], strides = [1, 1]} : vector<9x128xbf16> to vector<1x128xbf16>
    %116 = vector.broadcast %115 : vector<1x128xbf16> to vector<32x128xbf16>
    %117 = arith.mulf %114, %116 : vector<32x128xbf16>
    %118 = vector.extract_strided_slice %84 {offsets = [0, 7], sizes = [32, 121], strides = [1, 1]} : vector<32x128xbf16> to vector<32x121xbf16>
    %119 = vector.extract_strided_slice %84 {offsets = [0, 0], sizes = [32, 7], strides = [1, 1]} : vector<32x128xbf16> to vector<32x7xbf16>
    %120 = tpu.concatenate %118, %119 in 1 : vector<32x121xbf16>, vector<32x7xbf16> -> vector<32x128xbf16>
    %121 = vector.extract_strided_slice %1 {offsets = [6, 0], sizes = [1, 128], strides = [1, 1]} : vector<9x128xbf16> to vector<1x128xbf16>
    %122 = vector.broadcast %121 : vector<1x128xbf16> to vector<32x128xbf16>
    %123 = arith.mulf %120, %122 : vector<32x128xbf16>
    %124 = vector.extract_strided_slice %84 {offsets = [0, 8], sizes = [32, 120], strides = [1, 1]} : vector<32x128xbf16> to vector<32x120xbf16>
    %125 = vector.extract_strided_slice %84 {offsets = [0, 0], sizes = [32, 8], strides = [1, 1]} : vector<32x128xbf16> to vector<32x8xbf16>
    %126 = tpu.concatenate %124, %125 in 1 : vector<32x120xbf16>, vector<32x8xbf16> -> vector<32x128xbf16>
    %127 = vector.extract_strided_slice %1 {offsets = [7, 0], sizes = [1, 128], strides = [1, 1]} : vector<9x128xbf16> to vector<1x128xbf16>
    %128 = vector.broadcast %127 : vector<1x128xbf16> to vector<32x128xbf16>
    %129 = arith.mulf %126, %128 : vector<32x128xbf16>
    %130 = vector.extract_strided_slice %84 {offsets = [0, 9], sizes = [32, 119], strides = [1, 1]} : vector<32x128xbf16> to vector<32x119xbf16>
    %131 = vector.extract_strided_slice %84 {offsets = [0, 0], sizes = [32, 9], strides = [1, 1]} : vector<32x128xbf16> to vector<32x9xbf16>
    %132 = tpu.concatenate %130, %131 in 1 : vector<32x119xbf16>, vector<32x9xbf16> -> vector<32x128xbf16>
    %133 = vector.extract_strided_slice %1 {offsets = [8, 0], sizes = [1, 128], strides = [1, 1]} : vector<9x128xbf16> to vector<1x128xbf16>
    %134 = vector.broadcast %133 : vector<1x128xbf16> to vector<32x128xbf16>
    %135 = arith.mulf %132, %134 : vector<32x128xbf16>
    %136 = tpu.concatenate %90, %96, %102, %108, %111, %117, %123, %129, %135 in 0 : vector<32x128xbf16>, vector<32x128xbf16>, vector<32x128xbf16>, vector<32x128xbf16>, vector<32x128xbf16>, vector<32x128xbf16>, vector<32x128xbf16>, vector<32x128xbf16>, vector<32x128xbf16> -> vector<288x128xbf16>
    %cst_24 = arith.constant dense<0.000000e+00> : vector<12x128xf32>
    %137 = tpu.matmul %83, %136, %cst_24 {dimension_numbers = #tpu.dot_dimension_numbers<[1], [0], [0], [1], [0, 0, 1, 1], [], []>} : vector<12x288xbf16>, vector<288x128xbf16>, vector<12x128xf32> -> vector<12x128xf32>
    %c0_25 = arith.constant 0 : index
    %c0_26 = arith.constant 0 : index
    %138 = vector.load %arg16[%c0_25, %c0_26] : memref<12x1xf32, #tpu.memory_space<vmem>>, vector<12x1xf32>
    %139 = vector.broadcast %138 : vector<12x1xf32> to vector<12x128xf32>
    %140 = arith.addf %137, %139 : vector<12x128xf32>
    %141 = vector.extract_strided_slice %140 {offsets = [0, 0], sizes = [6, 128], strides = [1, 1]} : vector<12x128xf32> to vector<6x128xf32>
    %142 = vector.extract_strided_slice %140 {offsets = [6, 0], sizes = [6, 128], strides = [1, 1]} : vector<12x128xf32> to vector<6x128xf32>
    %cst_27 = arith.constant 2.000000e+00 : f32
    %143 = vector.broadcast %cst_27 : f32 to vector<6x128xf32>
    %144 = arith.addf %141, %143 : vector<6x128xf32>
    %145 = arith.negf %144 : vector<6x128xf32>
    %146 = math.exp %145 : vector<6x128xf32>
    %cst_28 = arith.constant 1.000000e+00 : f32
    %147 = vector.broadcast %cst_28 : f32 to vector<6x128xf32>
    %148 = arith.addf %147, %146 : vector<6x128xf32>
    %149 = arith.divf %147, %148 : vector<6x128xf32>
    %cst_29 = arith.constant 0.000000e+00 : f32
    %150 = vector.broadcast %cst_29 : f32 to vector<6x128xf32>
    %151 = arith.minimumf %144, %150 : vector<6x128xf32>
    %152 = math.absf %144 : vector<6x128xf32>
    %cst_30 = arith.constant 0.000000e+00 : f32
    %153 = vector.broadcast %cst_30 : f32 to vector<6x128xf32>
    %154 = arith.subf %153, %152 : vector<6x128xf32>
    %155 = math.exp %154 : vector<6x128xf32>
    %cst_31 = arith.constant 1.000000e+00 : f32
    %156 = vector.broadcast %cst_31 : f32 to vector<6x128xf32>
    %157 = arith.addf %156, %155 : vector<6x128xf32>
    %158 = math.log %157 : vector<6x128xf32>
    %159 = arith.subf %151, %158 : vector<6x128xf32>
    %160 = arith.addf %14, %142 : vector<6x128xf32>
    %161 = arith.mulf %160, %149 : vector<6x128xf32>
    %cst_32 = arith.constant dense<0.000000e+00> : vector<128xf32>
    %162 = vector.multi_reduction <add>, %159, %cst_32 [0] : vector<6x128xf32> to vector<128xf32>
    %163 = vector.shape_cast %162 : vector<128xf32> to vector<1x128xf32>
    %164 = arith.addf %3, %163 : vector<1x128xf32>
    %165 = tpu.concatenate %13, %161 in 0 : vector<6x128xf32>, vector<6x128xf32> -> vector<12x128xf32>
    %c0_33 = arith.constant 0 : index
    %c0_34 = arith.constant 0 : index
    %166 = vector.load %arg17[%c0_33, %c0_34] : memref<12x1xf32, #tpu.memory_space<vmem>>, vector<12x1xf32>
    %c0_35 = arith.constant 0 : index
    %c0_36 = arith.constant 0 : index
    %167 = vector.load %arg18[%c0_35, %c0_36] : memref<12x1xf32, #tpu.memory_space<vmem>>, vector<12x1xf32>
    %168 = vector.broadcast %167 : vector<12x1xf32> to vector<12x128xf32>
    %169 = arith.addf %165, %168 : vector<12x128xf32>
    %170 = vector.broadcast %166 : vector<12x1xf32> to vector<12x128xf32>
    %171 = arith.mulf %170, %169 : vector<12x128xf32>
    %c0_37 = arith.constant 0 : index
    %c0_38 = arith.constant 0 : index
    %172 = vector.load %arg19[%c0_37, %c0_38] : memref<12x12xbf16, #tpu.memory_space<vmem>>, vector<12x12xbf16>
    %173 = arith.truncf %171 : vector<12x128xf32> to vector<12x128xbf16>
    %cst_39 = arith.constant dense<0.000000e+00> : vector<12x128xf32>
    %174 = tpu.matmul %172, %173, %cst_39 {dimension_numbers = #tpu.dot_dimension_numbers<[1], [0], [0], [1], [0, 0, 1, 1], [], []>} : vector<12x12xbf16>, vector<12x128xbf16>, vector<12x128xf32> -> vector<12x128xf32>
    %175 = vector.extract_strided_slice %174 {offsets = [0, 0], sizes = [6, 128], strides = [1, 1]} : vector<12x128xf32> to vector<6x128xf32>
    %176 = vector.extract_strided_slice %174 {offsets = [6, 0], sizes = [6, 128], strides = [1, 1]} : vector<12x128xf32> to vector<6x128xf32>
    %c0_40 = arith.constant 0 : index
    %c0_41 = arith.constant 0 : index
    %177 = vector.load %arg20[%c0_40, %c0_41] : memref<32x54xbf16, #tpu.memory_space<vmem>>, vector<32x54xbf16>
    %178 = arith.truncf %175 : vector<6x128xf32> to vector<6x128xbf16>
    %179 = vector.extract_strided_slice %178 {offsets = [0, 119], sizes = [6, 9], strides = [1, 1]} : vector<6x128xbf16> to vector<6x9xbf16>
    %180 = vector.extract_strided_slice %178 {offsets = [0, 0], sizes = [6, 119], strides = [1, 1]} : vector<6x128xbf16> to vector<6x119xbf16>
    %181 = tpu.concatenate %179, %180 in 1 : vector<6x9xbf16>, vector<6x119xbf16> -> vector<6x128xbf16>
    %182 = vector.extract_strided_slice %1 {offsets = [0, 0], sizes = [1, 128], strides = [1, 1]} : vector<9x128xbf16> to vector<1x128xbf16>
    %183 = vector.broadcast %182 : vector<1x128xbf16> to vector<6x128xbf16>
    %184 = arith.mulf %181, %183 : vector<6x128xbf16>
    %185 = vector.extract_strided_slice %178 {offsets = [0, 120], sizes = [6, 8], strides = [1, 1]} : vector<6x128xbf16> to vector<6x8xbf16>
    %186 = vector.extract_strided_slice %178 {offsets = [0, 0], sizes = [6, 120], strides = [1, 1]} : vector<6x128xbf16> to vector<6x120xbf16>
    %187 = tpu.concatenate %185, %186 in 1 : vector<6x8xbf16>, vector<6x120xbf16> -> vector<6x128xbf16>
    %188 = vector.extract_strided_slice %1 {offsets = [1, 0], sizes = [1, 128], strides = [1, 1]} : vector<9x128xbf16> to vector<1x128xbf16>
    %189 = vector.broadcast %188 : vector<1x128xbf16> to vector<6x128xbf16>
    %190 = arith.mulf %187, %189 : vector<6x128xbf16>
    %191 = vector.extract_strided_slice %178 {offsets = [0, 121], sizes = [6, 7], strides = [1, 1]} : vector<6x128xbf16> to vector<6x7xbf16>
    %192 = vector.extract_strided_slice %178 {offsets = [0, 0], sizes = [6, 121], strides = [1, 1]} : vector<6x128xbf16> to vector<6x121xbf16>
    %193 = tpu.concatenate %191, %192 in 1 : vector<6x7xbf16>, vector<6x121xbf16> -> vector<6x128xbf16>
    %194 = vector.extract_strided_slice %1 {offsets = [2, 0], sizes = [1, 128], strides = [1, 1]} : vector<9x128xbf16> to vector<1x128xbf16>
    %195 = vector.broadcast %194 : vector<1x128xbf16> to vector<6x128xbf16>
    %196 = arith.mulf %193, %195 : vector<6x128xbf16>
    %197 = vector.extract_strided_slice %178 {offsets = [0, 127], sizes = [6, 1], strides = [1, 1]} : vector<6x128xbf16> to vector<6x1xbf16>
    %198 = vector.extract_strided_slice %178 {offsets = [0, 0], sizes = [6, 127], strides = [1, 1]} : vector<6x128xbf16> to vector<6x127xbf16>
    %199 = tpu.concatenate %197, %198 in 1 : vector<6x1xbf16>, vector<6x127xbf16> -> vector<6x128xbf16>
    %200 = vector.extract_strided_slice %1 {offsets = [3, 0], sizes = [1, 128], strides = [1, 1]} : vector<9x128xbf16> to vector<1x128xbf16>
    %201 = vector.broadcast %200 : vector<1x128xbf16> to vector<6x128xbf16>
    %202 = arith.mulf %199, %201 : vector<6x128xbf16>
    %203 = vector.extract_strided_slice %1 {offsets = [4, 0], sizes = [1, 128], strides = [1, 1]} : vector<9x128xbf16> to vector<1x128xbf16>
    %204 = vector.broadcast %203 : vector<1x128xbf16> to vector<6x128xbf16>
    %205 = arith.mulf %178, %204 : vector<6x128xbf16>
    %206 = vector.extract_strided_slice %178 {offsets = [0, 1], sizes = [6, 127], strides = [1, 1]} : vector<6x128xbf16> to vector<6x127xbf16>
    %207 = vector.extract_strided_slice %178 {offsets = [0, 0], sizes = [6, 1], strides = [1, 1]} : vector<6x128xbf16> to vector<6x1xbf16>
    %208 = tpu.concatenate %206, %207 in 1 : vector<6x127xbf16>, vector<6x1xbf16> -> vector<6x128xbf16>
    %209 = vector.extract_strided_slice %1 {offsets = [5, 0], sizes = [1, 128], strides = [1, 1]} : vector<9x128xbf16> to vector<1x128xbf16>
    %210 = vector.broadcast %209 : vector<1x128xbf16> to vector<6x128xbf16>
    %211 = arith.mulf %208, %210 : vector<6x128xbf16>
    %212 = vector.extract_strided_slice %178 {offsets = [0, 7], sizes = [6, 121], strides = [1, 1]} : vector<6x128xbf16> to vector<6x121xbf16>
    %213 = vector.extract_strided_slice %178 {offsets = [0, 0], sizes = [6, 7], strides = [1, 1]} : vector<6x128xbf16> to vector<6x7xbf16>
    %214 = tpu.concatenate %212, %213 in 1 : vector<6x121xbf16>, vector<6x7xbf16> -> vector<6x128xbf16>
    %215 = vector.extract_strided_slice %1 {offsets = [6, 0], sizes = [1, 128], strides = [1, 1]} : vector<9x128xbf16> to vector<1x128xbf16>
    %216 = vector.broadcast %215 : vector<1x128xbf16> to vector<6x128xbf16>
    %217 = arith.mulf %214, %216 : vector<6x128xbf16>
    %218 = vector.extract_strided_slice %178 {offsets = [0, 8], sizes = [6, 120], strides = [1, 1]} : vector<6x128xbf16> to vector<6x120xbf16>
    %219 = vector.extract_strided_slice %178 {offsets = [0, 0], sizes = [6, 8], strides = [1, 1]} : vector<6x128xbf16> to vector<6x8xbf16>
    %220 = tpu.concatenate %218, %219 in 1 : vector<6x120xbf16>, vector<6x8xbf16> -> vector<6x128xbf16>
    %221 = vector.extract_strided_slice %1 {offsets = [7, 0], sizes = [1, 128], strides = [1, 1]} : vector<9x128xbf16> to vector<1x128xbf16>
    %222 = vector.broadcast %221 : vector<1x128xbf16> to vector<6x128xbf16>
    %223 = arith.mulf %220, %222 : vector<6x128xbf16>
    %224 = vector.extract_strided_slice %178 {offsets = [0, 9], sizes = [6, 119], strides = [1, 1]} : vector<6x128xbf16> to vector<6x119xbf16>
    %225 = vector.extract_strided_slice %178 {offsets = [0, 0], sizes = [6, 9], strides = [1, 1]} : vector<6x128xbf16> to vector<6x9xbf16>
    %226 = tpu.concatenate %224, %225 in 1 : vector<6x119xbf16>, vector<6x9xbf16> -> vector<6x128xbf16>
    %227 = vector.extract_strided_slice %1 {offsets = [8, 0], sizes = [1, 128], strides = [1, 1]} : vector<9x128xbf16> to vector<1x128xbf16>
    %228 = vector.broadcast %227 : vector<1x128xbf16> to vector<6x128xbf16>
    %229 = arith.mulf %226, %228 : vector<6x128xbf16>
    %230 = tpu.concatenate %184, %190, %196, %202, %205, %211, %217, %223, %229 in 0 : vector<6x128xbf16>, vector<6x128xbf16>, vector<6x128xbf16>, vector<6x128xbf16>, vector<6x128xbf16>, vector<6x128xbf16>, vector<6x128xbf16>, vector<6x128xbf16>, vector<6x128xbf16> -> vector<54x128xbf16>
    %cst_42 = arith.constant dense<0.000000e+00> : vector<32x128xf32>
    %231 = tpu.matmul %177, %230, %cst_42 {dimension_numbers = #tpu.dot_dimension_numbers<[1], [0], [0], [1], [0, 0, 1, 1], [], []>} : vector<32x54xbf16>, vector<54x128xbf16>, vector<32x128xf32> -> vector<32x128xf32>
    %c0_43 = arith.constant 0 : index
    %c0_44 = arith.constant 0 : index
    %232 = vector.load %arg21[%c0_43, %c0_44] : memref<32x1xf32, #tpu.memory_space<vmem>>, vector<32x1xf32>
    %233 = vector.broadcast %232 : vector<32x1xf32> to vector<32x128xf32>
    %234 = arith.addf %231, %233 : vector<32x128xf32>
    %cst_45 = arith.constant 0.000000e+00 : f32
    %235 = vector.broadcast %cst_45 : f32 to vector<32x128xf32>
    %236 = arith.maximumf %234, %235 : vector<32x128xf32>
    %c0_46 = arith.constant 0 : index
    %c0_47 = arith.constant 0 : index
    %237 = vector.load %arg22[%c0_46, %c0_47] : memref<32x32xbf16, #tpu.memory_space<vmem>>, vector<32x32xbf16>
    %238 = arith.truncf %236 : vector<32x128xf32> to vector<32x128xbf16>
    %cst_48 = arith.constant dense<0.000000e+00> : vector<32x128xf32>
    %239 = tpu.matmul %237, %238, %cst_48 {dimension_numbers = #tpu.dot_dimension_numbers<[1], [0], [0], [1], [0, 0, 1, 1], [], []>} : vector<32x32xbf16>, vector<32x128xbf16>, vector<32x128xf32> -> vector<32x128xf32>
    %c0_49 = arith.constant 0 : index
    %c0_50 = arith.constant 0 : index
    %240 = vector.load %arg23[%c0_49, %c0_50] : memref<32x1xf32, #tpu.memory_space<vmem>>, vector<32x1xf32>
    %241 = vector.broadcast %240 : vector<32x1xf32> to vector<32x128xf32>
    %242 = arith.addf %239, %241 : vector<32x128xf32>
    %cst_51 = arith.constant 0.000000e+00 : f32
    %243 = vector.broadcast %cst_51 : f32 to vector<32x128xf32>
    %244 = arith.maximumf %242, %243 : vector<32x128xf32>
    %c0_52 = arith.constant 0 : index
    %c0_53 = arith.constant 0 : index
    %245 = vector.load %arg24[%c0_52, %c0_53] : memref<12x288xbf16, #tpu.memory_space<vmem>>, vector<12x288xbf16>
    %246 = arith.truncf %244 : vector<32x128xf32> to vector<32x128xbf16>
    %247 = vector.extract_strided_slice %246 {offsets = [0, 119], sizes = [32, 9], strides = [1, 1]} : vector<32x128xbf16> to vector<32x9xbf16>
    %248 = vector.extract_strided_slice %246 {offsets = [0, 0], sizes = [32, 119], strides = [1, 1]} : vector<32x128xbf16> to vector<32x119xbf16>
    %249 = tpu.concatenate %247, %248 in 1 : vector<32x9xbf16>, vector<32x119xbf16> -> vector<32x128xbf16>
    %250 = vector.extract_strided_slice %1 {offsets = [0, 0], sizes = [1, 128], strides = [1, 1]} : vector<9x128xbf16> to vector<1x128xbf16>
    %251 = vector.broadcast %250 : vector<1x128xbf16> to vector<32x128xbf16>
    %252 = arith.mulf %249, %251 : vector<32x128xbf16>
    %253 = vector.extract_strided_slice %246 {offsets = [0, 120], sizes = [32, 8], strides = [1, 1]} : vector<32x128xbf16> to vector<32x8xbf16>
    %254 = vector.extract_strided_slice %246 {offsets = [0, 0], sizes = [32, 120], strides = [1, 1]} : vector<32x128xbf16> to vector<32x120xbf16>
    %255 = tpu.concatenate %253, %254 in 1 : vector<32x8xbf16>, vector<32x120xbf16> -> vector<32x128xbf16>
    %256 = vector.extract_strided_slice %1 {offsets = [1, 0], sizes = [1, 128], strides = [1, 1]} : vector<9x128xbf16> to vector<1x128xbf16>
    %257 = vector.broadcast %256 : vector<1x128xbf16> to vector<32x128xbf16>
    %258 = arith.mulf %255, %257 : vector<32x128xbf16>
    %259 = vector.extract_strided_slice %246 {offsets = [0, 121], sizes = [32, 7], strides = [1, 1]} : vector<32x128xbf16> to vector<32x7xbf16>
    %260 = vector.extract_strided_slice %246 {offsets = [0, 0], sizes = [32, 121], strides = [1, 1]} : vector<32x128xbf16> to vector<32x121xbf16>
    %261 = tpu.concatenate %259, %260 in 1 : vector<32x7xbf16>, vector<32x121xbf16> -> vector<32x128xbf16>
    %262 = vector.extract_strided_slice %1 {offsets = [2, 0], sizes = [1, 128], strides = [1, 1]} : vector<9x128xbf16> to vector<1x128xbf16>
    %263 = vector.broadcast %262 : vector<1x128xbf16> to vector<32x128xbf16>
    %264 = arith.mulf %261, %263 : vector<32x128xbf16>
    %265 = vector.extract_strided_slice %246 {offsets = [0, 127], sizes = [32, 1], strides = [1, 1]} : vector<32x128xbf16> to vector<32x1xbf16>
    %266 = vector.extract_strided_slice %246 {offsets = [0, 0], sizes = [32, 127], strides = [1, 1]} : vector<32x128xbf16> to vector<32x127xbf16>
    %267 = tpu.concatenate %265, %266 in 1 : vector<32x1xbf16>, vector<32x127xbf16> -> vector<32x128xbf16>
    %268 = vector.extract_strided_slice %1 {offsets = [3, 0], sizes = [1, 128], strides = [1, 1]} : vector<9x128xbf16> to vector<1x128xbf16>
    %269 = vector.broadcast %268 : vector<1x128xbf16> to vector<32x128xbf16>
    %270 = arith.mulf %267, %269 : vector<32x128xbf16>
    %271 = vector.extract_strided_slice %1 {offsets = [4, 0], sizes = [1, 128], strides = [1, 1]} : vector<9x128xbf16> to vector<1x128xbf16>
    %272 = vector.broadcast %271 : vector<1x128xbf16> to vector<32x128xbf16>
    %273 = arith.mulf %246, %272 : vector<32x128xbf16>
    %274 = vector.extract_strided_slice %246 {offsets = [0, 1], sizes = [32, 127], strides = [1, 1]} : vector<32x128xbf16> to vector<32x127xbf16>
    %275 = vector.extract_strided_slice %246 {offsets = [0, 0], sizes = [32, 1], strides = [1, 1]} : vector<32x128xbf16> to vector<32x1xbf16>
    %276 = tpu.concatenate %274, %275 in 1 : vector<32x127xbf16>, vector<32x1xbf16> -> vector<32x128xbf16>
    %277 = vector.extract_strided_slice %1 {offsets = [5, 0], sizes = [1, 128], strides = [1, 1]} : vector<9x128xbf16> to vector<1x128xbf16>
    %278 = vector.broadcast %277 : vector<1x128xbf16> to vector<32x128xbf16>
    %279 = arith.mulf %276, %278 : vector<32x128xbf16>
    %280 = vector.extract_strided_slice %246 {offsets = [0, 7], sizes = [32, 121], strides = [1, 1]} : vector<32x128xbf16> to vector<32x121xbf16>
    %281 = vector.extract_strided_slice %246 {offsets = [0, 0], sizes = [32, 7], strides = [1, 1]} : vector<32x128xbf16> to vector<32x7xbf16>
    %282 = tpu.concatenate %280, %281 in 1 : vector<32x121xbf16>, vector<32x7xbf16> -> vector<32x128xbf16>
    %283 = vector.extract_strided_slice %1 {offsets = [6, 0], sizes = [1, 128], strides = [1, 1]} : vector<9x128xbf16> to vector<1x128xbf16>
    %284 = vector.broadcast %283 : vector<1x128xbf16> to vector<32x128xbf16>
    %285 = arith.mulf %282, %284 : vector<32x128xbf16>
    %286 = vector.extract_strided_slice %246 {offsets = [0, 8], sizes = [32, 120], strides = [1, 1]} : vector<32x128xbf16> to vector<32x120xbf16>
    %287 = vector.extract_strided_slice %246 {offsets = [0, 0], sizes = [32, 8], strides = [1, 1]} : vector<32x128xbf16> to vector<32x8xbf16>
    %288 = tpu.concatenate %286, %287 in 1 : vector<32x120xbf16>, vector<32x8xbf16> -> vector<32x128xbf16>
    %289 = vector.extract_strided_slice %1 {offsets = [7, 0], sizes = [1, 128], strides = [1, 1]} : vector<9x128xbf16> to vector<1x128xbf16>
    %290 = vector.broadcast %289 : vector<1x128xbf16> to vector<32x128xbf16>
    %291 = arith.mulf %288, %290 : vector<32x128xbf16>
    %292 = vector.extract_strided_slice %246 {offsets = [0, 9], sizes = [32, 119], strides = [1, 1]} : vector<32x128xbf16> to vector<32x119xbf16>
    %293 = vector.extract_strided_slice %246 {offsets = [0, 0], sizes = [32, 9], strides = [1, 1]} : vector<32x128xbf16> to vector<32x9xbf16>
    %294 = tpu.concatenate %292, %293 in 1 : vector<32x119xbf16>, vector<32x9xbf16> -> vector<32x128xbf16>
    %295 = vector.extract_strided_slice %1 {offsets = [8, 0], sizes = [1, 128], strides = [1, 1]} : vector<9x128xbf16> to vector<1x128xbf16>
    %296 = vector.broadcast %295 : vector<1x128xbf16> to vector<32x128xbf16>
    %297 = arith.mulf %294, %296 : vector<32x128xbf16>
    %298 = tpu.concatenate %252, %258, %264, %270, %273, %279, %285, %291, %297 in 0 : vector<32x128xbf16>, vector<32x128xbf16>, vector<32x128xbf16>, vector<32x128xbf16>, vector<32x128xbf16>, vector<32x128xbf16>, vector<32x128xbf16>, vector<32x128xbf16>, vector<32x128xbf16> -> vector<288x128xbf16>
    %cst_54 = arith.constant dense<0.000000e+00> : vector<12x128xf32>
    %299 = tpu.matmul %245, %298, %cst_54 {dimension_numbers = #tpu.dot_dimension_numbers<[1], [0], [0], [1], [0, 0, 1, 1], [], []>} : vector<12x288xbf16>, vector<288x128xbf16>, vector<12x128xf32> -> vector<12x128xf32>
    %c0_55 = arith.constant 0 : index
    %c0_56 = arith.constant 0 : index
    %300 = vector.load %arg25[%c0_55, %c0_56] : memref<12x1xf32, #tpu.memory_space<vmem>>, vector<12x1xf32>
    %301 = vector.broadcast %300 : vector<12x1xf32> to vector<12x128xf32>
    %302 = arith.addf %299, %301 : vector<12x128xf32>
    %303 = vector.extract_strided_slice %302 {offsets = [0, 0], sizes = [6, 128], strides = [1, 1]} : vector<12x128xf32> to vector<6x128xf32>
    %304 = vector.extract_strided_slice %302 {offsets = [6, 0], sizes = [6, 128], strides = [1, 1]} : vector<12x128xf32> to vector<6x128xf32>
    %cst_57 = arith.constant 2.000000e+00 : f32
    %305 = vector.broadcast %cst_57 : f32 to vector<6x128xf32>
    %306 = arith.addf %303, %305 : vector<6x128xf32>
    %307 = arith.negf %306 : vector<6x128xf32>
    %308 = math.exp %307 : vector<6x128xf32>
    %cst_58 = arith.constant 1.000000e+00 : f32
    %309 = vector.broadcast %cst_58 : f32 to vector<6x128xf32>
    %310 = arith.addf %309, %308 : vector<6x128xf32>
    %311 = arith.divf %309, %310 : vector<6x128xf32>
    %cst_59 = arith.constant 0.000000e+00 : f32
    %312 = vector.broadcast %cst_59 : f32 to vector<6x128xf32>
    %313 = arith.minimumf %306, %312 : vector<6x128xf32>
    %314 = math.absf %306 : vector<6x128xf32>
    %cst_60 = arith.constant 0.000000e+00 : f32
    %315 = vector.broadcast %cst_60 : f32 to vector<6x128xf32>
    %316 = arith.subf %315, %314 : vector<6x128xf32>
    %317 = math.exp %316 : vector<6x128xf32>
    %cst_61 = arith.constant 1.000000e+00 : f32
    %318 = vector.broadcast %cst_61 : f32 to vector<6x128xf32>
    %319 = arith.addf %318, %317 : vector<6x128xf32>
    %320 = math.log %319 : vector<6x128xf32>
    %321 = arith.subf %313, %320 : vector<6x128xf32>
    %322 = arith.addf %176, %304 : vector<6x128xf32>
    %323 = arith.mulf %322, %311 : vector<6x128xf32>
    %cst_62 = arith.constant dense<0.000000e+00> : vector<128xf32>
    %324 = vector.multi_reduction <add>, %321, %cst_62 [0] : vector<6x128xf32> to vector<128xf32>
    %325 = vector.shape_cast %324 : vector<128xf32> to vector<1x128xf32>
    %326 = arith.addf %164, %325 : vector<1x128xf32>
    %327 = tpu.concatenate %175, %323 in 0 : vector<6x128xf32>, vector<6x128xf32> -> vector<12x128xf32>
    %c0_63 = arith.constant 0 : index
    %c0_64 = arith.constant 0 : index
    %328 = vector.load %arg5[%c0_63, %c0_64] : memref<24x36xbf16, #tpu.memory_space<vmem>>, vector<24x36xbf16>
    %c0_65 = arith.constant 0 : index
    %c0_66 = arith.constant 0 : index
    %329 = vector.load %arg1[%c0_65, %c0_66] : memref<4x128xf32, #tpu.memory_space<vmem>>, vector<4x128xf32>
    %330 = arith.truncf %329 : vector<4x128xf32> to vector<4x128xbf16>
    %331 = vector.extract_strided_slice %330 {offsets = [0, 119], sizes = [4, 9], strides = [1, 1]} : vector<4x128xbf16> to vector<4x9xbf16>
    %332 = vector.extract_strided_slice %330 {offsets = [0, 0], sizes = [4, 119], strides = [1, 1]} : vector<4x128xbf16> to vector<4x119xbf16>
    %333 = tpu.concatenate %331, %332 in 1 : vector<4x9xbf16>, vector<4x119xbf16> -> vector<4x128xbf16>
    %334 = vector.extract_strided_slice %1 {offsets = [0, 0], sizes = [1, 128], strides = [1, 1]} : vector<9x128xbf16> to vector<1x128xbf16>
    %335 = vector.broadcast %334 : vector<1x128xbf16> to vector<4x128xbf16>
    %336 = arith.mulf %333, %335 : vector<4x128xbf16>
    %337 = vector.extract_strided_slice %330 {offsets = [0, 120], sizes = [4, 8], strides = [1, 1]} : vector<4x128xbf16> to vector<4x8xbf16>
    %338 = vector.extract_strided_slice %330 {offsets = [0, 0], sizes = [4, 120], strides = [1, 1]} : vector<4x128xbf16> to vector<4x120xbf16>
    %339 = tpu.concatenate %337, %338 in 1 : vector<4x8xbf16>, vector<4x120xbf16> -> vector<4x128xbf16>
    %340 = vector.extract_strided_slice %1 {offsets = [1, 0], sizes = [1, 128], strides = [1, 1]} : vector<9x128xbf16> to vector<1x128xbf16>
    %341 = vector.broadcast %340 : vector<1x128xbf16> to vector<4x128xbf16>
    %342 = arith.mulf %339, %341 : vector<4x128xbf16>
    %343 = vector.extract_strided_slice %330 {offsets = [0, 121], sizes = [4, 7], strides = [1, 1]} : vector<4x128xbf16> to vector<4x7xbf16>
    %344 = vector.extract_strided_slice %330 {offsets = [0, 0], sizes = [4, 121], strides = [1, 1]} : vector<4x128xbf16> to vector<4x121xbf16>
    %345 = tpu.concatenate %343, %344 in 1 : vector<4x7xbf16>, vector<4x121xbf16> -> vector<4x128xbf16>
    %346 = vector.extract_strided_slice %1 {offsets = [2, 0], sizes = [1, 128], strides = [1, 1]} : vector<9x128xbf16> to vector<1x128xbf16>
    %347 = vector.broadcast %346 : vector<1x128xbf16> to vector<4x128xbf16>
    %348 = arith.mulf %345, %347 : vector<4x128xbf16>
    %349 = vector.extract_strided_slice %330 {offsets = [0, 127], sizes = [4, 1], strides = [1, 1]} : vector<4x128xbf16> to vector<4x1xbf16>
    %350 = vector.extract_strided_slice %330 {offsets = [0, 0], sizes = [4, 127], strides = [1, 1]} : vector<4x128xbf16> to vector<4x127xbf16>
    %351 = tpu.concatenate %349, %350 in 1 : vector<4x1xbf16>, vector<4x127xbf16> -> vector<4x128xbf16>
    %352 = vector.extract_strided_slice %1 {offsets = [3, 0], sizes = [1, 128], strides = [1, 1]} : vector<9x128xbf16> to vector<1x128xbf16>
    %353 = vector.broadcast %352 : vector<1x128xbf16> to vector<4x128xbf16>
    %354 = arith.mulf %351, %353 : vector<4x128xbf16>
    %355 = vector.extract_strided_slice %1 {offsets = [4, 0], sizes = [1, 128], strides = [1, 1]} : vector<9x128xbf16> to vector<1x128xbf16>
    %356 = vector.broadcast %355 : vector<1x128xbf16> to vector<4x128xbf16>
    %357 = arith.mulf %330, %356 : vector<4x128xbf16>
    %358 = vector.extract_strided_slice %330 {offsets = [0, 1], sizes = [4, 127], strides = [1, 1]} : vector<4x128xbf16> to vector<4x127xbf16>
    %359 = vector.extract_strided_slice %330 {offsets = [0, 0], sizes = [4, 1], strides = [1, 1]} : vector<4x128xbf16> to vector<4x1xbf16>
    %360 = tpu.concatenate %358, %359 in 1 : vector<4x127xbf16>, vector<4x1xbf16> -> vector<4x128xbf16>
    %361 = vector.extract_strided_slice %1 {offsets = [5, 0], sizes = [1, 128], strides = [1, 1]} : vector<9x128xbf16> to vector<1x128xbf16>
    %362 = vector.broadcast %361 : vector<1x128xbf16> to vector<4x128xbf16>
    %363 = arith.mulf %360, %362 : vector<4x128xbf16>
    %364 = vector.extract_strided_slice %330 {offsets = [0, 7], sizes = [4, 121], strides = [1, 1]} : vector<4x128xbf16> to vector<4x121xbf16>
    %365 = vector.extract_strided_slice %330 {offsets = [0, 0], sizes = [4, 7], strides = [1, 1]} : vector<4x128xbf16> to vector<4x7xbf16>
    %366 = tpu.concatenate %364, %365 in 1 : vector<4x121xbf16>, vector<4x7xbf16> -> vector<4x128xbf16>
    %367 = vector.extract_strided_slice %1 {offsets = [6, 0], sizes = [1, 128], strides = [1, 1]} : vector<9x128xbf16> to vector<1x128xbf16>
    %368 = vector.broadcast %367 : vector<1x128xbf16> to vector<4x128xbf16>
    %369 = arith.mulf %366, %368 : vector<4x128xbf16>
    %370 = vector.extract_strided_slice %330 {offsets = [0, 8], sizes = [4, 120], strides = [1, 1]} : vector<4x128xbf16> to vector<4x120xbf16>
    %371 = vector.extract_strided_slice %330 {offsets = [0, 0], sizes = [4, 8], strides = [1, 1]} : vector<4x128xbf16> to vector<4x8xbf16>
    %372 = tpu.concatenate %370, %371 in 1 : vector<4x120xbf16>, vector<4x8xbf16> -> vector<4x128xbf16>
    %373 = vector.extract_strided_slice %1 {offsets = [7, 0], sizes = [1, 128], strides = [1, 1]} : vector<9x128xbf16> to vector<1x128xbf16>
    %374 = vector.broadcast %373 : vector<1x128xbf16> to vector<4x128xbf16>
    %375 = arith.mulf %372, %374 : vector<4x128xbf16>
    %376 = vector.extract_strided_slice %330 {offsets = [0, 9], sizes = [4, 119], strides = [1, 1]} : vector<4x128xbf16> to vector<4x119xbf16>
    %377 = vector.extract_strided_slice %330 {offsets = [0, 0], sizes = [4, 9], strides = [1, 1]} : vector<4x128xbf16> to vector<4x9xbf16>
    %378 = tpu.concatenate %376, %377 in 1 : vector<4x119xbf16>, vector<4x9xbf16> -> vector<4x128xbf16>
    %379 = vector.extract_strided_slice %1 {offsets = [8, 0], sizes = [1, 128], strides = [1, 1]} : vector<9x128xbf16> to vector<1x128xbf16>
    %380 = vector.broadcast %379 : vector<1x128xbf16> to vector<4x128xbf16>
    %381 = arith.mulf %378, %380 : vector<4x128xbf16>
    %382 = tpu.concatenate %336, %342, %348, %354, %357, %363, %369, %375, %381 in 0 : vector<4x128xbf16>, vector<4x128xbf16>, vector<4x128xbf16>, vector<4x128xbf16>, vector<4x128xbf16>, vector<4x128xbf16>, vector<4x128xbf16>, vector<4x128xbf16>, vector<4x128xbf16> -> vector<36x128xbf16>
    %cst_67 = arith.constant dense<0.000000e+00> : vector<24x128xf32>
    %383 = tpu.matmul %328, %382, %cst_67 {dimension_numbers = #tpu.dot_dimension_numbers<[1], [0], [0], [1], [0, 0, 1, 1], [], []>} : vector<24x36xbf16>, vector<36x128xbf16>, vector<24x128xf32> -> vector<24x128xf32>
    %c0_68 = arith.constant 0 : index
    %c0_69 = arith.constant 0 : index
    %384 = vector.load %arg6[%c0_68, %c0_69] : memref<216x32xbf16, #tpu.memory_space<vmem>>, vector<216x32xbf16>
    %c0_70 = arith.constant 0 : index
    %c0_71 = arith.constant 0 : index
    %385 = vector.load %arg2[%c0_70, %c0_71] : memref<32x2xf32, #tpu.memory_space<vmem>>, vector<32x2xf32>
    %386 = arith.truncf %385 : vector<32x2xf32> to vector<32x2xbf16>
    %cst_72 = arith.constant dense<0.000000e+00> : vector<216x2xf32>
    %387 = tpu.matmul %384, %386, %cst_72 {dimension_numbers = #tpu.dot_dimension_numbers<[1], [0], [0], [1], [0, 0, 1, 1], [], []>} : vector<216x32xbf16>, vector<32x2xbf16>, vector<216x2xf32> -> vector<216x2xf32>
    %388 = arith.truncf %387 : vector<216x2xf32> to vector<216x2xbf16>
    %c0_73 = arith.constant 0 : index
    %c0_74 = arith.constant 0 : index
    %389 = vector.load %arg4[%c0_73, %c0_74] : memref<2x128xf32, #tpu.memory_space<vmem>>, vector<2x128xf32>
    %390 = arith.truncf %389 : vector<2x128xf32> to vector<2x128xbf16>
    %cst_75 = arith.constant dense<0.000000e+00> : vector<216x128xf32>
    %391 = tpu.matmul %388, %390, %cst_75 {dimension_numbers = #tpu.dot_dimension_numbers<[1], [0], [0], [1], [0, 0, 1, 1], [], []>} : vector<216x2xbf16>, vector<2x128xbf16>, vector<216x128xf32> -> vector<216x128xf32>
    %cst_76 = arith.constant 0.000000e+00 : f32
    %392 = vector.broadcast %cst_76 : f32 to vector<24x128xf32>
    %393 = vector.extract_strided_slice %391 {offsets = [0, 0], sizes = [24, 128], strides = [1, 1]} : vector<216x128xf32> to vector<24x128xf32>
    %394 = vector.extract_strided_slice %0 {offsets = [0, 0], sizes = [1, 128], strides = [1, 1]} : vector<9x128xf32> to vector<1x128xf32>
    %395 = vector.broadcast %394 : vector<1x128xf32> to vector<24x128xf32>
    %396 = arith.mulf %393, %395 : vector<24x128xf32>
    %397 = arith.addf %392, %396 : vector<24x128xf32>
    %398 = vector.extract_strided_slice %391 {offsets = [24, 0], sizes = [24, 128], strides = [1, 1]} : vector<216x128xf32> to vector<24x128xf32>
    %399 = vector.extract_strided_slice %0 {offsets = [1, 0], sizes = [1, 128], strides = [1, 1]} : vector<9x128xf32> to vector<1x128xf32>
    %400 = vector.broadcast %399 : vector<1x128xf32> to vector<24x128xf32>
    %401 = arith.mulf %398, %400 : vector<24x128xf32>
    %402 = arith.addf %397, %401 : vector<24x128xf32>
    %403 = vector.extract_strided_slice %391 {offsets = [48, 0], sizes = [24, 128], strides = [1, 1]} : vector<216x128xf32> to vector<24x128xf32>
    %404 = vector.extract_strided_slice %0 {offsets = [2, 0], sizes = [1, 128], strides = [1, 1]} : vector<9x128xf32> to vector<1x128xf32>
    %405 = vector.broadcast %404 : vector<1x128xf32> to vector<24x128xf32>
    %406 = arith.mulf %403, %405 : vector<24x128xf32>
    %407 = arith.addf %402, %406 : vector<24x128xf32>
    %408 = vector.extract_strided_slice %391 {offsets = [72, 0], sizes = [24, 128], strides = [1, 1]} : vector<216x128xf32> to vector<24x128xf32>
    %409 = vector.extract_strided_slice %0 {offsets = [3, 0], sizes = [1, 128], strides = [1, 1]} : vector<9x128xf32> to vector<1x128xf32>
    %410 = vector.broadcast %409 : vector<1x128xf32> to vector<24x128xf32>
    %411 = arith.mulf %408, %410 : vector<24x128xf32>
    %412 = arith.addf %407, %411 : vector<24x128xf32>
    %413 = vector.extract_strided_slice %391 {offsets = [96, 0], sizes = [24, 128], strides = [1, 1]} : vector<216x128xf32> to vector<24x128xf32>
    %414 = vector.extract_strided_slice %0 {offsets = [4, 0], sizes = [1, 128], strides = [1, 1]} : vector<9x128xf32> to vector<1x128xf32>
    %415 = vector.broadcast %414 : vector<1x128xf32> to vector<24x128xf32>
    %416 = arith.mulf %413, %415 : vector<24x128xf32>
    %417 = arith.addf %412, %416 : vector<24x128xf32>
    %418 = vector.extract_strided_slice %391 {offsets = [120, 0], sizes = [24, 128], strides = [1, 1]} : vector<216x128xf32> to vector<24x128xf32>
    %419 = vector.extract_strided_slice %0 {offsets = [5, 0], sizes = [1, 128], strides = [1, 1]} : vector<9x128xf32> to vector<1x128xf32>
    %420 = vector.broadcast %419 : vector<1x128xf32> to vector<24x128xf32>
    %421 = arith.mulf %418, %420 : vector<24x128xf32>
    %422 = arith.addf %417, %421 : vector<24x128xf32>
    %423 = vector.extract_strided_slice %391 {offsets = [144, 0], sizes = [24, 128], strides = [1, 1]} : vector<216x128xf32> to vector<24x128xf32>
    %424 = vector.extract_strided_slice %0 {offsets = [6, 0], sizes = [1, 128], strides = [1, 1]} : vector<9x128xf32> to vector<1x128xf32>
    %425 = vector.broadcast %424 : vector<1x128xf32> to vector<24x128xf32>
    %426 = arith.mulf %423, %425 : vector<24x128xf32>
    %427 = arith.addf %422, %426 : vector<24x128xf32>
    %428 = vector.extract_strided_slice %391 {offsets = [168, 0], sizes = [24, 128], strides = [1, 1]} : vector<216x128xf32> to vector<24x128xf32>
    %429 = vector.extract_strided_slice %0 {offsets = [7, 0], sizes = [1, 128], strides = [1, 1]} : vector<9x128xf32> to vector<1x128xf32>
    %430 = vector.broadcast %429 : vector<1x128xf32> to vector<24x128xf32>
    %431 = arith.mulf %428, %430 : vector<24x128xf32>
    %432 = arith.addf %427, %431 : vector<24x128xf32>
    %433 = vector.extract_strided_slice %391 {offsets = [192, 0], sizes = [24, 128], strides = [1, 1]} : vector<216x128xf32> to vector<24x128xf32>
    %434 = vector.extract_strided_slice %0 {offsets = [8, 0], sizes = [1, 128], strides = [1, 1]} : vector<9x128xf32> to vector<1x128xf32>
    %435 = vector.broadcast %434 : vector<1x128xf32> to vector<24x128xf32>
    %436 = arith.mulf %433, %435 : vector<24x128xf32>
    %437 = arith.addf %432, %436 : vector<24x128xf32>
    %438 = arith.addf %383, %437 : vector<24x128xf32>
    %c0_77 = arith.constant 0 : index
    %c0_78 = arith.constant 0 : index
    %439 = vector.load %arg7[%c0_77, %c0_78] : memref<24x1xf32, #tpu.memory_space<vmem>>, vector<24x1xf32>
    %440 = vector.broadcast %439 : vector<24x1xf32> to vector<24x128xf32>
    %441 = arith.addf %438, %440 : vector<24x128xf32>
    %442 = vector.extract_strided_slice %441 {offsets = [0, 0], sizes = [12, 128], strides = [1, 1]} : vector<24x128xf32> to vector<12x128xf32>
    %443 = vector.extract_strided_slice %441 {offsets = [12, 0], sizes = [12, 128], strides = [1, 1]} : vector<24x128xf32> to vector<12x128xf32>
    %444 = arith.subf %327, %442 : vector<12x128xf32>
    %cst_79 = arith.constant -0.918938517 : f32
    %445 = vector.broadcast %cst_79 : f32 to vector<12x128xf32>
    %446 = arith.subf %445, %443 : vector<12x128xf32>
    %cst_80 = arith.constant 5.000000e-01 : f32
    %447 = vector.broadcast %cst_80 : f32 to vector<12x128xf32>
    %448 = arith.mulf %447, %444 : vector<12x128xf32>
    %449 = arith.mulf %448, %444 : vector<12x128xf32>
    %cst_81 = arith.constant -2.000000e+00 : f32
    %450 = vector.broadcast %cst_81 : f32 to vector<12x128xf32>
    %451 = arith.mulf %450, %443 : vector<12x128xf32>
    %452 = math.exp %451 : vector<12x128xf32>
    %453 = arith.mulf %449, %452 : vector<12x128xf32>
    %454 = arith.subf %446, %453 : vector<12x128xf32>
    %c0_82 = arith.constant 0 : index
    %c0_83 = arith.constant 0 : index
    %455 = vector.load %arg26[%c0_82, %c0_83] : memref<12x128xf32, #tpu.memory_space<vmem>>, vector<12x128xf32>
    tpu.vector_store %arg26[%c0_82, %c0_83], %327 {strides = array<i32>} : memref<12x128xf32, #tpu.memory_space<vmem>>, vector<12x128xf32>,
    %c0_84 = arith.constant 0 : index
    %c0_85 = arith.constant 0 : index
    %456 = vector.load %arg27[%c0_84, %c0_85] : memref<1x128xf32, #tpu.memory_space<vmem>>, vector<1x128xf32>
    tpu.vector_store %arg27[%c0_84, %c0_85], %326 {strides = array<i32>} : memref<1x128xf32, #tpu.memory_space<vmem>>, vector<1x128xf32>,
    %cst_86 = arith.constant dense<0.000000e+00> : vector<128xf32>
    %457 = vector.multi_reduction <add>, %454, %cst_86 [0] : vector<12x128xf32> to vector<128xf32>
    %458 = vector.shape_cast %457 : vector<128xf32> to vector<1x128xf32>
    %c0_87 = arith.constant 0 : index
    %c0_88 = arith.constant 0 : index
    %459 = vector.load %arg28[%c0_87, %c0_88] : memref<1x128xf32, #tpu.memory_space<vmem>>, vector<1x128xf32>
    tpu.vector_store %arg28[%c0_87, %c0_88], %458 {strides = array<i32>} : memref<1x128xf32, #tpu.memory_space<vmem>>, vector<1x128xf32>,
    return
  }
}

module attributes {stable_mosaic.version = 11 : i64} {
  func.func @_block_kernel(%arg0: memref<12x32xf32, #tpu.memory_space<vmem>>, %arg1: memref<4x32xf32, #tpu.memory_space<vmem>>, %arg2: memref<32x2xf32, #tpu.memory_space<vmem>>, %arg3: memref<9x32xf32, #tpu.memory_space<vmem>>, %arg4: memref<2x32xf32, #tpu.memory_space<vmem>>, %arg5: memref<24x36xbf16, #tpu.memory_space<vmem>>, %arg6: memref<216x32xbf16, #tpu.memory_space<vmem>>, %arg7: memref<24x1xf32, #tpu.memory_space<vmem>>, %arg8: memref<12x1xf32, #tpu.memory_space<vmem>>, %arg9: memref<12x1xf32, #tpu.memory_space<vmem>>, %arg10: memref<12x12xbf16, #tpu.memory_space<vmem>>, %arg11: memref<32x54xbf16, #tpu.memory_space<vmem>>, %arg12: memref<32x1xf32, #tpu.memory_space<vmem>>, %arg13: memref<32x32xbf16, #tpu.memory_space<vmem>>, %arg14: memref<32x1xf32, #tpu.memory_space<vmem>>, %arg15: memref<12x288xbf16, #tpu.memory_space<vmem>>, %arg16: memref<12x1xf32, #tpu.memory_space<vmem>>, %arg17: memref<12x1xf32, #tpu.memory_space<vmem>>, %arg18: memref<12x1xf32, #tpu.memory_space<vmem>>, %arg19: memref<12x12xbf16, #tpu.memory_space<vmem>>, %arg20: memref<32x54xbf16, #tpu.memory_space<vmem>>, %arg21: memref<32x1xf32, #tpu.memory_space<vmem>>, %arg22: memref<32x32xbf16, #tpu.memory_space<vmem>>, %arg23: memref<32x1xf32, #tpu.memory_space<vmem>>, %arg24: memref<12x288xbf16, #tpu.memory_space<vmem>>, %arg25: memref<12x1xf32, #tpu.memory_space<vmem>>, %arg26: memref<12x32xf32, #tpu.memory_space<vmem>>, %arg27: memref<1x32xf32, #tpu.memory_space<vmem>>, %arg28: memref<1x32xf32, #tpu.memory_space<vmem>>) attributes {dimension_semantics = [], scalar_prefetch = 0 : i64, scratch_operands = 0 : i64, tpu.core_type = #tpu.core_type<tc>} {
    %c0 = arith.constant 0 : index
    %c0_0 = arith.constant 0 : index
    %0 = vector.load %arg3[%c0, %c0_0] : memref<9x32xf32, #tpu.memory_space<vmem>>, vector<9x32xf32>
    %1 = arith.truncf %0 : vector<9x32xf32> to vector<9x32xbf16>
    %c0_1 = arith.constant 0 : index
    %c0_2 = arith.constant 0 : index
    %2 = vector.load %arg0[%c0_1, %c0_2] : memref<12x32xf32, #tpu.memory_space<vmem>>, vector<12x32xf32>
    %cst = arith.constant 0.000000e+00 : f32
    %3 = vector.broadcast %cst : f32 to vector<1x32xf32>
    %c0_3 = arith.constant 0 : index
    %c0_4 = arith.constant 0 : index
    %4 = vector.load %arg8[%c0_3, %c0_4] : memref<12x1xf32, #tpu.memory_space<vmem>>, vector<12x1xf32>
    %c0_5 = arith.constant 0 : index
    %c0_6 = arith.constant 0 : index
    %5 = vector.load %arg9[%c0_5, %c0_6] : memref<12x1xf32, #tpu.memory_space<vmem>>, vector<12x1xf32>
    %6 = vector.broadcast %5 : vector<12x1xf32> to vector<12x32xf32>
    %7 = arith.addf %2, %6 : vector<12x32xf32>
    %8 = vector.broadcast %4 : vector<12x1xf32> to vector<12x32xf32>
    %9 = arith.mulf %8, %7 : vector<12x32xf32>
    %c0_7 = arith.constant 0 : index
    %c0_8 = arith.constant 0 : index
    %10 = vector.load %arg10[%c0_7, %c0_8] : memref<12x12xbf16, #tpu.memory_space<vmem>>, vector<12x12xbf16>
    %11 = arith.truncf %9 : vector<12x32xf32> to vector<12x32xbf16>
    %cst_9 = arith.constant dense<0.000000e+00> : vector<12x32xf32>
    %12 = tpu.matmul %10, %11, %cst_9 {dimension_numbers = #tpu.dot_dimension_numbers<[1], [0], [0], [1], [0, 0, 1, 1], [], []>} : vector<12x12xbf16>, vector<12x32xbf16>, vector<12x32xf32> -> vector<12x32xf32>
    %13 = vector.extract_strided_slice %12 {offsets = [0, 0], sizes = [6, 32], strides = [1, 1]} : vector<12x32xf32> to vector<6x32xf32>
    %14 = vector.extract_strided_slice %12 {offsets = [6, 0], sizes = [6, 32], strides = [1, 1]} : vector<12x32xf32> to vector<6x32xf32>
    %c0_10 = arith.constant 0 : index
    %c0_11 = arith.constant 0 : index
    %15 = vector.load %arg11[%c0_10, %c0_11] : memref<32x54xbf16, #tpu.memory_space<vmem>>, vector<32x54xbf16>
    %16 = arith.truncf %13 : vector<6x32xf32> to vector<6x32xbf16>
    %17 = vector.extract_strided_slice %16 {offsets = [0, 27], sizes = [6, 5], strides = [1, 1]} : vector<6x32xbf16> to vector<6x5xbf16>
    %18 = vector.extract_strided_slice %16 {offsets = [0, 0], sizes = [6, 27], strides = [1, 1]} : vector<6x32xbf16> to vector<6x27xbf16>
    %19 = tpu.concatenate %17, %18 in 1 : vector<6x5xbf16>, vector<6x27xbf16> -> vector<6x32xbf16>
    %20 = vector.extract_strided_slice %1 {offsets = [0, 0], sizes = [1, 32], strides = [1, 1]} : vector<9x32xbf16> to vector<1x32xbf16>
    %21 = vector.broadcast %20 : vector<1x32xbf16> to vector<6x32xbf16>
    %22 = arith.mulf %19, %21 : vector<6x32xbf16>
    %23 = vector.extract_strided_slice %16 {offsets = [0, 28], sizes = [6, 4], strides = [1, 1]} : vector<6x32xbf16> to vector<6x4xbf16>
    %24 = vector.extract_strided_slice %16 {offsets = [0, 0], sizes = [6, 28], strides = [1, 1]} : vector<6x32xbf16> to vector<6x28xbf16>
    %25 = tpu.concatenate %23, %24 in 1 : vector<6x4xbf16>, vector<6x28xbf16> -> vector<6x32xbf16>
    %26 = vector.extract_strided_slice %1 {offsets = [1, 0], sizes = [1, 32], strides = [1, 1]} : vector<9x32xbf16> to vector<1x32xbf16>
    %27 = vector.broadcast %26 : vector<1x32xbf16> to vector<6x32xbf16>
    %28 = arith.mulf %25, %27 : vector<6x32xbf16>
    %29 = vector.extract_strided_slice %16 {offsets = [0, 29], sizes = [6, 3], strides = [1, 1]} : vector<6x32xbf16> to vector<6x3xbf16>
    %30 = vector.extract_strided_slice %16 {offsets = [0, 0], sizes = [6, 29], strides = [1, 1]} : vector<6x32xbf16> to vector<6x29xbf16>
    %31 = tpu.concatenate %29, %30 in 1 : vector<6x3xbf16>, vector<6x29xbf16> -> vector<6x32xbf16>
    %32 = vector.extract_strided_slice %1 {offsets = [2, 0], sizes = [1, 32], strides = [1, 1]} : vector<9x32xbf16> to vector<1x32xbf16>
    %33 = vector.broadcast %32 : vector<1x32xbf16> to vector<6x32xbf16>
    %34 = arith.mulf %31, %33 : vector<6x32xbf16>
    %35 = vector.extract_strided_slice %16 {offsets = [0, 31], sizes = [6, 1], strides = [1, 1]} : vector<6x32xbf16> to vector<6x1xbf16>
    %36 = vector.extract_strided_slice %16 {offsets = [0, 0], sizes = [6, 31], strides = [1, 1]} : vector<6x32xbf16> to vector<6x31xbf16>
    %37 = tpu.concatenate %35, %36 in 1 : vector<6x1xbf16>, vector<6x31xbf16> -> vector<6x32xbf16>
    %38 = vector.extract_strided_slice %1 {offsets = [3, 0], sizes = [1, 32], strides = [1, 1]} : vector<9x32xbf16> to vector<1x32xbf16>
    %39 = vector.broadcast %38 : vector<1x32xbf16> to vector<6x32xbf16>
    %40 = arith.mulf %37, %39 : vector<6x32xbf16>
    %41 = vector.extract_strided_slice %1 {offsets = [4, 0], sizes = [1, 32], strides = [1, 1]} : vector<9x32xbf16> to vector<1x32xbf16>
    %42 = vector.broadcast %41 : vector<1x32xbf16> to vector<6x32xbf16>
    %43 = arith.mulf %16, %42 : vector<6x32xbf16>
    %44 = vector.extract_strided_slice %16 {offsets = [0, 1], sizes = [6, 31], strides = [1, 1]} : vector<6x32xbf16> to vector<6x31xbf16>
    %45 = vector.extract_strided_slice %16 {offsets = [0, 0], sizes = [6, 1], strides = [1, 1]} : vector<6x32xbf16> to vector<6x1xbf16>
    %46 = tpu.concatenate %44, %45 in 1 : vector<6x31xbf16>, vector<6x1xbf16> -> vector<6x32xbf16>
    %47 = vector.extract_strided_slice %1 {offsets = [5, 0], sizes = [1, 32], strides = [1, 1]} : vector<9x32xbf16> to vector<1x32xbf16>
    %48 = vector.broadcast %47 : vector<1x32xbf16> to vector<6x32xbf16>
    %49 = arith.mulf %46, %48 : vector<6x32xbf16>
    %50 = vector.extract_strided_slice %16 {offsets = [0, 3], sizes = [6, 29], strides = [1, 1]} : vector<6x32xbf16> to vector<6x29xbf16>
    %51 = vector.extract_strided_slice %16 {offsets = [0, 0], sizes = [6, 3], strides = [1, 1]} : vector<6x32xbf16> to vector<6x3xbf16>
    %52 = tpu.concatenate %50, %51 in 1 : vector<6x29xbf16>, vector<6x3xbf16> -> vector<6x32xbf16>
    %53 = vector.extract_strided_slice %1 {offsets = [6, 0], sizes = [1, 32], strides = [1, 1]} : vector<9x32xbf16> to vector<1x32xbf16>
    %54 = vector.broadcast %53 : vector<1x32xbf16> to vector<6x32xbf16>
    %55 = arith.mulf %52, %54 : vector<6x32xbf16>
    %56 = vector.extract_strided_slice %16 {offsets = [0, 4], sizes = [6, 28], strides = [1, 1]} : vector<6x32xbf16> to vector<6x28xbf16>
    %57 = vector.extract_strided_slice %16 {offsets = [0, 0], sizes = [6, 4], strides = [1, 1]} : vector<6x32xbf16> to vector<6x4xbf16>
    %58 = tpu.concatenate %56, %57 in 1 : vector<6x28xbf16>, vector<6x4xbf16> -> vector<6x32xbf16>
    %59 = vector.extract_strided_slice %1 {offsets = [7, 0], sizes = [1, 32], strides = [1, 1]} : vector<9x32xbf16> to vector<1x32xbf16>
    %60 = vector.broadcast %59 : vector<1x32xbf16> to vector<6x32xbf16>
    %61 = arith.mulf %58, %60 : vector<6x32xbf16>
    %62 = vector.extract_strided_slice %16 {offsets = [0, 5], sizes = [6, 27], strides = [1, 1]} : vector<6x32xbf16> to vector<6x27xbf16>
    %63 = vector.extract_strided_slice %16 {offsets = [0, 0], sizes = [6, 5], strides = [1, 1]} : vector<6x32xbf16> to vector<6x5xbf16>
    %64 = tpu.concatenate %62, %63 in 1 : vector<6x27xbf16>, vector<6x5xbf16> -> vector<6x32xbf16>
    %65 = vector.extract_strided_slice %1 {offsets = [8, 0], sizes = [1, 32], strides = [1, 1]} : vector<9x32xbf16> to vector<1x32xbf16>
    %66 = vector.broadcast %65 : vector<1x32xbf16> to vector<6x32xbf16>
    %67 = arith.mulf %64, %66 : vector<6x32xbf16>
    %68 = tpu.concatenate %22, %28, %34, %40, %43, %49, %55, %61, %67 in 0 : vector<6x32xbf16>, vector<6x32xbf16>, vector<6x32xbf16>, vector<6x32xbf16>, vector<6x32xbf16>, vector<6x32xbf16>, vector<6x32xbf16>, vector<6x32xbf16>, vector<6x32xbf16> -> vector<54x32xbf16>
    %cst_12 = arith.constant dense<0.000000e+00> : vector<32x32xf32>
    %69 = tpu.matmul %15, %68, %cst_12 {dimension_numbers = #tpu.dot_dimension_numbers<[1], [0], [0], [1], [0, 0, 1, 1], [], []>} : vector<32x54xbf16>, vector<54x32xbf16>, vector<32x32xf32> -> vector<32x32xf32>
    %c0_13 = arith.constant 0 : index
    %c0_14 = arith.constant 0 : index
    %70 = vector.load %arg12[%c0_13, %c0_14] : memref<32x1xf32, #tpu.memory_space<vmem>>, vector<32x1xf32>
    %71 = vector.broadcast %70 : vector<32x1xf32> to vector<32x32xf32>
    %72 = arith.addf %69, %71 : vector<32x32xf32>
    %cst_15 = arith.constant 0.000000e+00 : f32
    %73 = vector.broadcast %cst_15 : f32 to vector<32x32xf32>
    %74 = arith.maximumf %72, %73 : vector<32x32xf32>
    %c0_16 = arith.constant 0 : index
    %c0_17 = arith.constant 0 : index
    %75 = vector.load %arg13[%c0_16, %c0_17] : memref<32x32xbf16, #tpu.memory_space<vmem>>, vector<32x32xbf16>
    %76 = arith.truncf %74 : vector<32x32xf32> to vector<32x32xbf16>
    %cst_18 = arith.constant dense<0.000000e+00> : vector<32x32xf32>
    %77 = tpu.matmul %75, %76, %cst_18 {dimension_numbers = #tpu.dot_dimension_numbers<[1], [0], [0], [1], [0, 0, 1, 1], [], []>} : vector<32x32xbf16>, vector<32x32xbf16>, vector<32x32xf32> -> vector<32x32xf32>
    %c0_19 = arith.constant 0 : index
    %c0_20 = arith.constant 0 : index
    %78 = vector.load %arg14[%c0_19, %c0_20] : memref<32x1xf32, #tpu.memory_space<vmem>>, vector<32x1xf32>
    %79 = vector.broadcast %78 : vector<32x1xf32> to vector<32x32xf32>
    %80 = arith.addf %77, %79 : vector<32x32xf32>
    %cst_21 = arith.constant 0.000000e+00 : f32
    %81 = vector.broadcast %cst_21 : f32 to vector<32x32xf32>
    %82 = arith.maximumf %80, %81 : vector<32x32xf32>
    %c0_22 = arith.constant 0 : index
    %c0_23 = arith.constant 0 : index
    %83 = vector.load %arg15[%c0_22, %c0_23] : memref<12x288xbf16, #tpu.memory_space<vmem>>, vector<12x288xbf16>
    %84 = arith.truncf %82 : vector<32x32xf32> to vector<32x32xbf16>
    %85 = vector.extract_strided_slice %84 {offsets = [0, 27], sizes = [32, 5], strides = [1, 1]} : vector<32x32xbf16> to vector<32x5xbf16>
    %86 = vector.extract_strided_slice %84 {offsets = [0, 0], sizes = [32, 27], strides = [1, 1]} : vector<32x32xbf16> to vector<32x27xbf16>
    %87 = tpu.concatenate %85, %86 in 1 : vector<32x5xbf16>, vector<32x27xbf16> -> vector<32x32xbf16>
    %88 = vector.extract_strided_slice %1 {offsets = [0, 0], sizes = [1, 32], strides = [1, 1]} : vector<9x32xbf16> to vector<1x32xbf16>
    %89 = vector.broadcast %88 : vector<1x32xbf16> to vector<32x32xbf16>
    %90 = arith.mulf %87, %89 : vector<32x32xbf16>
    %91 = vector.extract_strided_slice %84 {offsets = [0, 28], sizes = [32, 4], strides = [1, 1]} : vector<32x32xbf16> to vector<32x4xbf16>
    %92 = vector.extract_strided_slice %84 {offsets = [0, 0], sizes = [32, 28], strides = [1, 1]} : vector<32x32xbf16> to vector<32x28xbf16>
    %93 = tpu.concatenate %91, %92 in 1 : vector<32x4xbf16>, vector<32x28xbf16> -> vector<32x32xbf16>
    %94 = vector.extract_strided_slice %1 {offsets = [1, 0], sizes = [1, 32], strides = [1, 1]} : vector<9x32xbf16> to vector<1x32xbf16>
    %95 = vector.broadcast %94 : vector<1x32xbf16> to vector<32x32xbf16>
    %96 = arith.mulf %93, %95 : vector<32x32xbf16>
    %97 = vector.extract_strided_slice %84 {offsets = [0, 29], sizes = [32, 3], strides = [1, 1]} : vector<32x32xbf16> to vector<32x3xbf16>
    %98 = vector.extract_strided_slice %84 {offsets = [0, 0], sizes = [32, 29], strides = [1, 1]} : vector<32x32xbf16> to vector<32x29xbf16>
    %99 = tpu.concatenate %97, %98 in 1 : vector<32x3xbf16>, vector<32x29xbf16> -> vector<32x32xbf16>
    %100 = vector.extract_strided_slice %1 {offsets = [2, 0], sizes = [1, 32], strides = [1, 1]} : vector<9x32xbf16> to vector<1x32xbf16>
    %101 = vector.broadcast %100 : vector<1x32xbf16> to vector<32x32xbf16>
    %102 = arith.mulf %99, %101 : vector<32x32xbf16>
    %103 = vector.extract_strided_slice %84 {offsets = [0, 31], sizes = [32, 1], strides = [1, 1]} : vector<32x32xbf16> to vector<32x1xbf16>
    %104 = vector.extract_strided_slice %84 {offsets = [0, 0], sizes = [32, 31], strides = [1, 1]} : vector<32x32xbf16> to vector<32x31xbf16>
    %105 = tpu.concatenate %103, %104 in 1 : vector<32x1xbf16>, vector<32x31xbf16> -> vector<32x32xbf16>
    %106 = vector.extract_strided_slice %1 {offsets = [3, 0], sizes = [1, 32], strides = [1, 1]} : vector<9x32xbf16> to vector<1x32xbf16>
    %107 = vector.broadcast %106 : vector<1x32xbf16> to vector<32x32xbf16>
    %108 = arith.mulf %105, %107 : vector<32x32xbf16>
    %109 = vector.extract_strided_slice %1 {offsets = [4, 0], sizes = [1, 32], strides = [1, 1]} : vector<9x32xbf16> to vector<1x32xbf16>
    %110 = vector.broadcast %109 : vector<1x32xbf16> to vector<32x32xbf16>
    %111 = arith.mulf %84, %110 : vector<32x32xbf16>
    %112 = vector.extract_strided_slice %84 {offsets = [0, 1], sizes = [32, 31], strides = [1, 1]} : vector<32x32xbf16> to vector<32x31xbf16>
    %113 = vector.extract_strided_slice %84 {offsets = [0, 0], sizes = [32, 1], strides = [1, 1]} : vector<32x32xbf16> to vector<32x1xbf16>
    %114 = tpu.concatenate %112, %113 in 1 : vector<32x31xbf16>, vector<32x1xbf16> -> vector<32x32xbf16>
    %115 = vector.extract_strided_slice %1 {offsets = [5, 0], sizes = [1, 32], strides = [1, 1]} : vector<9x32xbf16> to vector<1x32xbf16>
    %116 = vector.broadcast %115 : vector<1x32xbf16> to vector<32x32xbf16>
    %117 = arith.mulf %114, %116 : vector<32x32xbf16>
    %118 = vector.extract_strided_slice %84 {offsets = [0, 3], sizes = [32, 29], strides = [1, 1]} : vector<32x32xbf16> to vector<32x29xbf16>
    %119 = vector.extract_strided_slice %84 {offsets = [0, 0], sizes = [32, 3], strides = [1, 1]} : vector<32x32xbf16> to vector<32x3xbf16>
    %120 = tpu.concatenate %118, %119 in 1 : vector<32x29xbf16>, vector<32x3xbf16> -> vector<32x32xbf16>
    %121 = vector.extract_strided_slice %1 {offsets = [6, 0], sizes = [1, 32], strides = [1, 1]} : vector<9x32xbf16> to vector<1x32xbf16>
    %122 = vector.broadcast %121 : vector<1x32xbf16> to vector<32x32xbf16>
    %123 = arith.mulf %120, %122 : vector<32x32xbf16>
    %124 = vector.extract_strided_slice %84 {offsets = [0, 4], sizes = [32, 28], strides = [1, 1]} : vector<32x32xbf16> to vector<32x28xbf16>
    %125 = vector.extract_strided_slice %84 {offsets = [0, 0], sizes = [32, 4], strides = [1, 1]} : vector<32x32xbf16> to vector<32x4xbf16>
    %126 = tpu.concatenate %124, %125 in 1 : vector<32x28xbf16>, vector<32x4xbf16> -> vector<32x32xbf16>
    %127 = vector.extract_strided_slice %1 {offsets = [7, 0], sizes = [1, 32], strides = [1, 1]} : vector<9x32xbf16> to vector<1x32xbf16>
    %128 = vector.broadcast %127 : vector<1x32xbf16> to vector<32x32xbf16>
    %129 = arith.mulf %126, %128 : vector<32x32xbf16>
    %130 = vector.extract_strided_slice %84 {offsets = [0, 5], sizes = [32, 27], strides = [1, 1]} : vector<32x32xbf16> to vector<32x27xbf16>
    %131 = vector.extract_strided_slice %84 {offsets = [0, 0], sizes = [32, 5], strides = [1, 1]} : vector<32x32xbf16> to vector<32x5xbf16>
    %132 = tpu.concatenate %130, %131 in 1 : vector<32x27xbf16>, vector<32x5xbf16> -> vector<32x32xbf16>
    %133 = vector.extract_strided_slice %1 {offsets = [8, 0], sizes = [1, 32], strides = [1, 1]} : vector<9x32xbf16> to vector<1x32xbf16>
    %134 = vector.broadcast %133 : vector<1x32xbf16> to vector<32x32xbf16>
    %135 = arith.mulf %132, %134 : vector<32x32xbf16>
    %136 = tpu.concatenate %90, %96, %102, %108, %111, %117, %123, %129, %135 in 0 : vector<32x32xbf16>, vector<32x32xbf16>, vector<32x32xbf16>, vector<32x32xbf16>, vector<32x32xbf16>, vector<32x32xbf16>, vector<32x32xbf16>, vector<32x32xbf16>, vector<32x32xbf16> -> vector<288x32xbf16>
    %cst_24 = arith.constant dense<0.000000e+00> : vector<12x32xf32>
    %137 = tpu.matmul %83, %136, %cst_24 {dimension_numbers = #tpu.dot_dimension_numbers<[1], [0], [0], [1], [0, 0, 1, 1], [], []>} : vector<12x288xbf16>, vector<288x32xbf16>, vector<12x32xf32> -> vector<12x32xf32>
    %c0_25 = arith.constant 0 : index
    %c0_26 = arith.constant 0 : index
    %138 = vector.load %arg16[%c0_25, %c0_26] : memref<12x1xf32, #tpu.memory_space<vmem>>, vector<12x1xf32>
    %139 = vector.broadcast %138 : vector<12x1xf32> to vector<12x32xf32>
    %140 = arith.addf %137, %139 : vector<12x32xf32>
    %141 = vector.extract_strided_slice %140 {offsets = [0, 0], sizes = [6, 32], strides = [1, 1]} : vector<12x32xf32> to vector<6x32xf32>
    %142 = vector.extract_strided_slice %140 {offsets = [6, 0], sizes = [6, 32], strides = [1, 1]} : vector<12x32xf32> to vector<6x32xf32>
    %cst_27 = arith.constant 2.000000e+00 : f32
    %143 = vector.broadcast %cst_27 : f32 to vector<6x32xf32>
    %144 = arith.addf %141, %143 : vector<6x32xf32>
    %145 = arith.negf %144 : vector<6x32xf32>
    %146 = math.exp %145 : vector<6x32xf32>
    %cst_28 = arith.constant 1.000000e+00 : f32
    %147 = vector.broadcast %cst_28 : f32 to vector<6x32xf32>
    %148 = arith.addf %147, %146 : vector<6x32xf32>
    %149 = arith.divf %147, %148 : vector<6x32xf32>
    %cst_29 = arith.constant 0.000000e+00 : f32
    %150 = vector.broadcast %cst_29 : f32 to vector<6x32xf32>
    %151 = arith.minimumf %144, %150 : vector<6x32xf32>
    %152 = math.absf %144 : vector<6x32xf32>
    %cst_30 = arith.constant 0.000000e+00 : f32
    %153 = vector.broadcast %cst_30 : f32 to vector<6x32xf32>
    %154 = arith.subf %153, %152 : vector<6x32xf32>
    %155 = math.exp %154 : vector<6x32xf32>
    %cst_31 = arith.constant 1.000000e+00 : f32
    %156 = vector.broadcast %cst_31 : f32 to vector<6x32xf32>
    %157 = arith.addf %156, %155 : vector<6x32xf32>
    %158 = math.log %157 : vector<6x32xf32>
    %159 = arith.subf %151, %158 : vector<6x32xf32>
    %160 = arith.addf %14, %142 : vector<6x32xf32>
    %161 = arith.mulf %160, %149 : vector<6x32xf32>
    %cst_32 = arith.constant dense<0.000000e+00> : vector<32xf32>
    %162 = vector.multi_reduction <add>, %159, %cst_32 [0] : vector<6x32xf32> to vector<32xf32>
    %163 = vector.shape_cast %162 : vector<32xf32> to vector<1x32xf32>
    %164 = arith.addf %3, %163 : vector<1x32xf32>
    %165 = tpu.concatenate %13, %161 in 0 : vector<6x32xf32>, vector<6x32xf32> -> vector<12x32xf32>
    %c0_33 = arith.constant 0 : index
    %c0_34 = arith.constant 0 : index
    %166 = vector.load %arg17[%c0_33, %c0_34] : memref<12x1xf32, #tpu.memory_space<vmem>>, vector<12x1xf32>
    %c0_35 = arith.constant 0 : index
    %c0_36 = arith.constant 0 : index
    %167 = vector.load %arg18[%c0_35, %c0_36] : memref<12x1xf32, #tpu.memory_space<vmem>>, vector<12x1xf32>
    %168 = vector.broadcast %167 : vector<12x1xf32> to vector<12x32xf32>
    %169 = arith.addf %165, %168 : vector<12x32xf32>
    %170 = vector.broadcast %166 : vector<12x1xf32> to vector<12x32xf32>
    %171 = arith.mulf %170, %169 : vector<12x32xf32>
    %c0_37 = arith.constant 0 : index
    %c0_38 = arith.constant 0 : index
    %172 = vector.load %arg19[%c0_37, %c0_38] : memref<12x12xbf16, #tpu.memory_space<vmem>>, vector<12x12xbf16>
    %173 = arith.truncf %171 : vector<12x32xf32> to vector<12x32xbf16>
    %cst_39 = arith.constant dense<0.000000e+00> : vector<12x32xf32>
    %174 = tpu.matmul %172, %173, %cst_39 {dimension_numbers = #tpu.dot_dimension_numbers<[1], [0], [0], [1], [0, 0, 1, 1], [], []>} : vector<12x12xbf16>, vector<12x32xbf16>, vector<12x32xf32> -> vector<12x32xf32>
    %175 = vector.extract_strided_slice %174 {offsets = [0, 0], sizes = [6, 32], strides = [1, 1]} : vector<12x32xf32> to vector<6x32xf32>
    %176 = vector.extract_strided_slice %174 {offsets = [6, 0], sizes = [6, 32], strides = [1, 1]} : vector<12x32xf32> to vector<6x32xf32>
    %c0_40 = arith.constant 0 : index
    %c0_41 = arith.constant 0 : index
    %177 = vector.load %arg20[%c0_40, %c0_41] : memref<32x54xbf16, #tpu.memory_space<vmem>>, vector<32x54xbf16>
    %178 = arith.truncf %175 : vector<6x32xf32> to vector<6x32xbf16>
    %179 = vector.extract_strided_slice %178 {offsets = [0, 27], sizes = [6, 5], strides = [1, 1]} : vector<6x32xbf16> to vector<6x5xbf16>
    %180 = vector.extract_strided_slice %178 {offsets = [0, 0], sizes = [6, 27], strides = [1, 1]} : vector<6x32xbf16> to vector<6x27xbf16>
    %181 = tpu.concatenate %179, %180 in 1 : vector<6x5xbf16>, vector<6x27xbf16> -> vector<6x32xbf16>
    %182 = vector.extract_strided_slice %1 {offsets = [0, 0], sizes = [1, 32], strides = [1, 1]} : vector<9x32xbf16> to vector<1x32xbf16>
    %183 = vector.broadcast %182 : vector<1x32xbf16> to vector<6x32xbf16>
    %184 = arith.mulf %181, %183 : vector<6x32xbf16>
    %185 = vector.extract_strided_slice %178 {offsets = [0, 28], sizes = [6, 4], strides = [1, 1]} : vector<6x32xbf16> to vector<6x4xbf16>
    %186 = vector.extract_strided_slice %178 {offsets = [0, 0], sizes = [6, 28], strides = [1, 1]} : vector<6x32xbf16> to vector<6x28xbf16>
    %187 = tpu.concatenate %185, %186 in 1 : vector<6x4xbf16>, vector<6x28xbf16> -> vector<6x32xbf16>
    %188 = vector.extract_strided_slice %1 {offsets = [1, 0], sizes = [1, 32], strides = [1, 1]} : vector<9x32xbf16> to vector<1x32xbf16>
    %189 = vector.broadcast %188 : vector<1x32xbf16> to vector<6x32xbf16>
    %190 = arith.mulf %187, %189 : vector<6x32xbf16>
    %191 = vector.extract_strided_slice %178 {offsets = [0, 29], sizes = [6, 3], strides = [1, 1]} : vector<6x32xbf16> to vector<6x3xbf16>
    %192 = vector.extract_strided_slice %178 {offsets = [0, 0], sizes = [6, 29], strides = [1, 1]} : vector<6x32xbf16> to vector<6x29xbf16>
    %193 = tpu.concatenate %191, %192 in 1 : vector<6x3xbf16>, vector<6x29xbf16> -> vector<6x32xbf16>
    %194 = vector.extract_strided_slice %1 {offsets = [2, 0], sizes = [1, 32], strides = [1, 1]} : vector<9x32xbf16> to vector<1x32xbf16>
    %195 = vector.broadcast %194 : vector<1x32xbf16> to vector<6x32xbf16>
    %196 = arith.mulf %193, %195 : vector<6x32xbf16>
    %197 = vector.extract_strided_slice %178 {offsets = [0, 31], sizes = [6, 1], strides = [1, 1]} : vector<6x32xbf16> to vector<6x1xbf16>
    %198 = vector.extract_strided_slice %178 {offsets = [0, 0], sizes = [6, 31], strides = [1, 1]} : vector<6x32xbf16> to vector<6x31xbf16>
    %199 = tpu.concatenate %197, %198 in 1 : vector<6x1xbf16>, vector<6x31xbf16> -> vector<6x32xbf16>
    %200 = vector.extract_strided_slice %1 {offsets = [3, 0], sizes = [1, 32], strides = [1, 1]} : vector<9x32xbf16> to vector<1x32xbf16>
    %201 = vector.broadcast %200 : vector<1x32xbf16> to vector<6x32xbf16>
    %202 = arith.mulf %199, %201 : vector<6x32xbf16>
    %203 = vector.extract_strided_slice %1 {offsets = [4, 0], sizes = [1, 32], strides = [1, 1]} : vector<9x32xbf16> to vector<1x32xbf16>
    %204 = vector.broadcast %203 : vector<1x32xbf16> to vector<6x32xbf16>
    %205 = arith.mulf %178, %204 : vector<6x32xbf16>
    %206 = vector.extract_strided_slice %178 {offsets = [0, 1], sizes = [6, 31], strides = [1, 1]} : vector<6x32xbf16> to vector<6x31xbf16>
    %207 = vector.extract_strided_slice %178 {offsets = [0, 0], sizes = [6, 1], strides = [1, 1]} : vector<6x32xbf16> to vector<6x1xbf16>
    %208 = tpu.concatenate %206, %207 in 1 : vector<6x31xbf16>, vector<6x1xbf16> -> vector<6x32xbf16>
    %209 = vector.extract_strided_slice %1 {offsets = [5, 0], sizes = [1, 32], strides = [1, 1]} : vector<9x32xbf16> to vector<1x32xbf16>
    %210 = vector.broadcast %209 : vector<1x32xbf16> to vector<6x32xbf16>
    %211 = arith.mulf %208, %210 : vector<6x32xbf16>
    %212 = vector.extract_strided_slice %178 {offsets = [0, 3], sizes = [6, 29], strides = [1, 1]} : vector<6x32xbf16> to vector<6x29xbf16>
    %213 = vector.extract_strided_slice %178 {offsets = [0, 0], sizes = [6, 3], strides = [1, 1]} : vector<6x32xbf16> to vector<6x3xbf16>
    %214 = tpu.concatenate %212, %213 in 1 : vector<6x29xbf16>, vector<6x3xbf16> -> vector<6x32xbf16>
    %215 = vector.extract_strided_slice %1 {offsets = [6, 0], sizes = [1, 32], strides = [1, 1]} : vector<9x32xbf16> to vector<1x32xbf16>
    %216 = vector.broadcast %215 : vector<1x32xbf16> to vector<6x32xbf16>
    %217 = arith.mulf %214, %216 : vector<6x32xbf16>
    %218 = vector.extract_strided_slice %178 {offsets = [0, 4], sizes = [6, 28], strides = [1, 1]} : vector<6x32xbf16> to vector<6x28xbf16>
    %219 = vector.extract_strided_slice %178 {offsets = [0, 0], sizes = [6, 4], strides = [1, 1]} : vector<6x32xbf16> to vector<6x4xbf16>
    %220 = tpu.concatenate %218, %219 in 1 : vector<6x28xbf16>, vector<6x4xbf16> -> vector<6x32xbf16>
    %221 = vector.extract_strided_slice %1 {offsets = [7, 0], sizes = [1, 32], strides = [1, 1]} : vector<9x32xbf16> to vector<1x32xbf16>
    %222 = vector.broadcast %221 : vector<1x32xbf16> to vector<6x32xbf16>
    %223 = arith.mulf %220, %222 : vector<6x32xbf16>
    %224 = vector.extract_strided_slice %178 {offsets = [0, 5], sizes = [6, 27], strides = [1, 1]} : vector<6x32xbf16> to vector<6x27xbf16>
    %225 = vector.extract_strided_slice %178 {offsets = [0, 0], sizes = [6, 5], strides = [1, 1]} : vector<6x32xbf16> to vector<6x5xbf16>
    %226 = tpu.concatenate %224, %225 in 1 : vector<6x27xbf16>, vector<6x5xbf16> -> vector<6x32xbf16>
    %227 = vector.extract_strided_slice %1 {offsets = [8, 0], sizes = [1, 32], strides = [1, 1]} : vector<9x32xbf16> to vector<1x32xbf16>
    %228 = vector.broadcast %227 : vector<1x32xbf16> to vector<6x32xbf16>
    %229 = arith.mulf %226, %228 : vector<6x32xbf16>
    %230 = tpu.concatenate %184, %190, %196, %202, %205, %211, %217, %223, %229 in 0 : vector<6x32xbf16>, vector<6x32xbf16>, vector<6x32xbf16>, vector<6x32xbf16>, vector<6x32xbf16>, vector<6x32xbf16>, vector<6x32xbf16>, vector<6x32xbf16>, vector<6x32xbf16> -> vector<54x32xbf16>
    %cst_42 = arith.constant dense<0.000000e+00> : vector<32x32xf32>
    %231 = tpu.matmul %177, %230, %cst_42 {dimension_numbers = #tpu.dot_dimension_numbers<[1], [0], [0], [1], [0, 0, 1, 1], [], []>} : vector<32x54xbf16>, vector<54x32xbf16>, vector<32x32xf32> -> vector<32x32xf32>
    %c0_43 = arith.constant 0 : index
    %c0_44 = arith.constant 0 : index
    %232 = vector.load %arg21[%c0_43, %c0_44] : memref<32x1xf32, #tpu.memory_space<vmem>>, vector<32x1xf32>
    %233 = vector.broadcast %232 : vector<32x1xf32> to vector<32x32xf32>
    %234 = arith.addf %231, %233 : vector<32x32xf32>
    %cst_45 = arith.constant 0.000000e+00 : f32
    %235 = vector.broadcast %cst_45 : f32 to vector<32x32xf32>
    %236 = arith.maximumf %234, %235 : vector<32x32xf32>
    %c0_46 = arith.constant 0 : index
    %c0_47 = arith.constant 0 : index
    %237 = vector.load %arg22[%c0_46, %c0_47] : memref<32x32xbf16, #tpu.memory_space<vmem>>, vector<32x32xbf16>
    %238 = arith.truncf %236 : vector<32x32xf32> to vector<32x32xbf16>
    %cst_48 = arith.constant dense<0.000000e+00> : vector<32x32xf32>
    %239 = tpu.matmul %237, %238, %cst_48 {dimension_numbers = #tpu.dot_dimension_numbers<[1], [0], [0], [1], [0, 0, 1, 1], [], []>} : vector<32x32xbf16>, vector<32x32xbf16>, vector<32x32xf32> -> vector<32x32xf32>
    %c0_49 = arith.constant 0 : index
    %c0_50 = arith.constant 0 : index
    %240 = vector.load %arg23[%c0_49, %c0_50] : memref<32x1xf32, #tpu.memory_space<vmem>>, vector<32x1xf32>
    %241 = vector.broadcast %240 : vector<32x1xf32> to vector<32x32xf32>
    %242 = arith.addf %239, %241 : vector<32x32xf32>
    %cst_51 = arith.constant 0.000000e+00 : f32
    %243 = vector.broadcast %cst_51 : f32 to vector<32x32xf32>
    %244 = arith.maximumf %242, %243 : vector<32x32xf32>
    %c0_52 = arith.constant 0 : index
    %c0_53 = arith.constant 0 : index
    %245 = vector.load %arg24[%c0_52, %c0_53] : memref<12x288xbf16, #tpu.memory_space<vmem>>, vector<12x288xbf16>
    %246 = arith.truncf %244 : vector<32x32xf32> to vector<32x32xbf16>
    %247 = vector.extract_strided_slice %246 {offsets = [0, 27], sizes = [32, 5], strides = [1, 1]} : vector<32x32xbf16> to vector<32x5xbf16>
    %248 = vector.extract_strided_slice %246 {offsets = [0, 0], sizes = [32, 27], strides = [1, 1]} : vector<32x32xbf16> to vector<32x27xbf16>
    %249 = tpu.concatenate %247, %248 in 1 : vector<32x5xbf16>, vector<32x27xbf16> -> vector<32x32xbf16>
    %250 = vector.extract_strided_slice %1 {offsets = [0, 0], sizes = [1, 32], strides = [1, 1]} : vector<9x32xbf16> to vector<1x32xbf16>
    %251 = vector.broadcast %250 : vector<1x32xbf16> to vector<32x32xbf16>
    %252 = arith.mulf %249, %251 : vector<32x32xbf16>
    %253 = vector.extract_strided_slice %246 {offsets = [0, 28], sizes = [32, 4], strides = [1, 1]} : vector<32x32xbf16> to vector<32x4xbf16>
    %254 = vector.extract_strided_slice %246 {offsets = [0, 0], sizes = [32, 28], strides = [1, 1]} : vector<32x32xbf16> to vector<32x28xbf16>
    %255 = tpu.concatenate %253, %254 in 1 : vector<32x4xbf16>, vector<32x28xbf16> -> vector<32x32xbf16>
    %256 = vector.extract_strided_slice %1 {offsets = [1, 0], sizes = [1, 32], strides = [1, 1]} : vector<9x32xbf16> to vector<1x32xbf16>
    %257 = vector.broadcast %256 : vector<1x32xbf16> to vector<32x32xbf16>
    %258 = arith.mulf %255, %257 : vector<32x32xbf16>
    %259 = vector.extract_strided_slice %246 {offsets = [0, 29], sizes = [32, 3], strides = [1, 1]} : vector<32x32xbf16> to vector<32x3xbf16>
    %260 = vector.extract_strided_slice %246 {offsets = [0, 0], sizes = [32, 29], strides = [1, 1]} : vector<32x32xbf16> to vector<32x29xbf16>
    %261 = tpu.concatenate %259, %260 in 1 : vector<32x3xbf16>, vector<32x29xbf16> -> vector<32x32xbf16>
    %262 = vector.extract_strided_slice %1 {offsets = [2, 0], sizes = [1, 32], strides = [1, 1]} : vector<9x32xbf16> to vector<1x32xbf16>
    %263 = vector.broadcast %262 : vector<1x32xbf16> to vector<32x32xbf16>
    %264 = arith.mulf %261, %263 : vector<32x32xbf16>
    %265 = vector.extract_strided_slice %246 {offsets = [0, 31], sizes = [32, 1], strides = [1, 1]} : vector<32x32xbf16> to vector<32x1xbf16>
    %266 = vector.extract_strided_slice %246 {offsets = [0, 0], sizes = [32, 31], strides = [1, 1]} : vector<32x32xbf16> to vector<32x31xbf16>
    %267 = tpu.concatenate %265, %266 in 1 : vector<32x1xbf16>, vector<32x31xbf16> -> vector<32x32xbf16>
    %268 = vector.extract_strided_slice %1 {offsets = [3, 0], sizes = [1, 32], strides = [1, 1]} : vector<9x32xbf16> to vector<1x32xbf16>
    %269 = vector.broadcast %268 : vector<1x32xbf16> to vector<32x32xbf16>
    %270 = arith.mulf %267, %269 : vector<32x32xbf16>
    %271 = vector.extract_strided_slice %1 {offsets = [4, 0], sizes = [1, 32], strides = [1, 1]} : vector<9x32xbf16> to vector<1x32xbf16>
    %272 = vector.broadcast %271 : vector<1x32xbf16> to vector<32x32xbf16>
    %273 = arith.mulf %246, %272 : vector<32x32xbf16>
    %274 = vector.extract_strided_slice %246 {offsets = [0, 1], sizes = [32, 31], strides = [1, 1]} : vector<32x32xbf16> to vector<32x31xbf16>
    %275 = vector.extract_strided_slice %246 {offsets = [0, 0], sizes = [32, 1], strides = [1, 1]} : vector<32x32xbf16> to vector<32x1xbf16>
    %276 = tpu.concatenate %274, %275 in 1 : vector<32x31xbf16>, vector<32x1xbf16> -> vector<32x32xbf16>
    %277 = vector.extract_strided_slice %1 {offsets = [5, 0], sizes = [1, 32], strides = [1, 1]} : vector<9x32xbf16> to vector<1x32xbf16>
    %278 = vector.broadcast %277 : vector<1x32xbf16> to vector<32x32xbf16>
    %279 = arith.mulf %276, %278 : vector<32x32xbf16>
    %280 = vector.extract_strided_slice %246 {offsets = [0, 3], sizes = [32, 29], strides = [1, 1]} : vector<32x32xbf16> to vector<32x29xbf16>
    %281 = vector.extract_strided_slice %246 {offsets = [0, 0], sizes = [32, 3], strides = [1, 1]} : vector<32x32xbf16> to vector<32x3xbf16>
    %282 = tpu.concatenate %280, %281 in 1 : vector<32x29xbf16>, vector<32x3xbf16> -> vector<32x32xbf16>
    %283 = vector.extract_strided_slice %1 {offsets = [6, 0], sizes = [1, 32], strides = [1, 1]} : vector<9x32xbf16> to vector<1x32xbf16>
    %284 = vector.broadcast %283 : vector<1x32xbf16> to vector<32x32xbf16>
    %285 = arith.mulf %282, %284 : vector<32x32xbf16>
    %286 = vector.extract_strided_slice %246 {offsets = [0, 4], sizes = [32, 28], strides = [1, 1]} : vector<32x32xbf16> to vector<32x28xbf16>
    %287 = vector.extract_strided_slice %246 {offsets = [0, 0], sizes = [32, 4], strides = [1, 1]} : vector<32x32xbf16> to vector<32x4xbf16>
    %288 = tpu.concatenate %286, %287 in 1 : vector<32x28xbf16>, vector<32x4xbf16> -> vector<32x32xbf16>
    %289 = vector.extract_strided_slice %1 {offsets = [7, 0], sizes = [1, 32], strides = [1, 1]} : vector<9x32xbf16> to vector<1x32xbf16>
    %290 = vector.broadcast %289 : vector<1x32xbf16> to vector<32x32xbf16>
    %291 = arith.mulf %288, %290 : vector<32x32xbf16>
    %292 = vector.extract_strided_slice %246 {offsets = [0, 5], sizes = [32, 27], strides = [1, 1]} : vector<32x32xbf16> to vector<32x27xbf16>
    %293 = vector.extract_strided_slice %246 {offsets = [0, 0], sizes = [32, 5], strides = [1, 1]} : vector<32x32xbf16> to vector<32x5xbf16>
    %294 = tpu.concatenate %292, %293 in 1 : vector<32x27xbf16>, vector<32x5xbf16> -> vector<32x32xbf16>
    %295 = vector.extract_strided_slice %1 {offsets = [8, 0], sizes = [1, 32], strides = [1, 1]} : vector<9x32xbf16> to vector<1x32xbf16>
    %296 = vector.broadcast %295 : vector<1x32xbf16> to vector<32x32xbf16>
    %297 = arith.mulf %294, %296 : vector<32x32xbf16>
    %298 = tpu.concatenate %252, %258, %264, %270, %273, %279, %285, %291, %297 in 0 : vector<32x32xbf16>, vector<32x32xbf16>, vector<32x32xbf16>, vector<32x32xbf16>, vector<32x32xbf16>, vector<32x32xbf16>, vector<32x32xbf16>, vector<32x32xbf16>, vector<32x32xbf16> -> vector<288x32xbf16>
    %cst_54 = arith.constant dense<0.000000e+00> : vector<12x32xf32>
    %299 = tpu.matmul %245, %298, %cst_54 {dimension_numbers = #tpu.dot_dimension_numbers<[1], [0], [0], [1], [0, 0, 1, 1], [], []>} : vector<12x288xbf16>, vector<288x32xbf16>, vector<12x32xf32> -> vector<12x32xf32>
    %c0_55 = arith.constant 0 : index
    %c0_56 = arith.constant 0 : index
    %300 = vector.load %arg25[%c0_55, %c0_56] : memref<12x1xf32, #tpu.memory_space<vmem>>, vector<12x1xf32>
    %301 = vector.broadcast %300 : vector<12x1xf32> to vector<12x32xf32>
    %302 = arith.addf %299, %301 : vector<12x32xf32>
    %303 = vector.extract_strided_slice %302 {offsets = [0, 0], sizes = [6, 32], strides = [1, 1]} : vector<12x32xf32> to vector<6x32xf32>
    %304 = vector.extract_strided_slice %302 {offsets = [6, 0], sizes = [6, 32], strides = [1, 1]} : vector<12x32xf32> to vector<6x32xf32>
    %cst_57 = arith.constant 2.000000e+00 : f32
    %305 = vector.broadcast %cst_57 : f32 to vector<6x32xf32>
    %306 = arith.addf %303, %305 : vector<6x32xf32>
    %307 = arith.negf %306 : vector<6x32xf32>
    %308 = math.exp %307 : vector<6x32xf32>
    %cst_58 = arith.constant 1.000000e+00 : f32
    %309 = vector.broadcast %cst_58 : f32 to vector<6x32xf32>
    %310 = arith.addf %309, %308 : vector<6x32xf32>
    %311 = arith.divf %309, %310 : vector<6x32xf32>
    %cst_59 = arith.constant 0.000000e+00 : f32
    %312 = vector.broadcast %cst_59 : f32 to vector<6x32xf32>
    %313 = arith.minimumf %306, %312 : vector<6x32xf32>
    %314 = math.absf %306 : vector<6x32xf32>
    %cst_60 = arith.constant 0.000000e+00 : f32
    %315 = vector.broadcast %cst_60 : f32 to vector<6x32xf32>
    %316 = arith.subf %315, %314 : vector<6x32xf32>
    %317 = math.exp %316 : vector<6x32xf32>
    %cst_61 = arith.constant 1.000000e+00 : f32
    %318 = vector.broadcast %cst_61 : f32 to vector<6x32xf32>
    %319 = arith.addf %318, %317 : vector<6x32xf32>
    %320 = math.log %319 : vector<6x32xf32>
    %321 = arith.subf %313, %320 : vector<6x32xf32>
    %322 = arith.addf %176, %304 : vector<6x32xf32>
    %323 = arith.mulf %322, %311 : vector<6x32xf32>
    %cst_62 = arith.constant dense<0.000000e+00> : vector<32xf32>
    %324 = vector.multi_reduction <add>, %321, %cst_62 [0] : vector<6x32xf32> to vector<32xf32>
    %325 = vector.shape_cast %324 : vector<32xf32> to vector<1x32xf32>
    %326 = arith.addf %164, %325 : vector<1x32xf32>
    %327 = tpu.concatenate %175, %323 in 0 : vector<6x32xf32>, vector<6x32xf32> -> vector<12x32xf32>
    %c0_63 = arith.constant 0 : index
    %c0_64 = arith.constant 0 : index
    %328 = vector.load %arg5[%c0_63, %c0_64] : memref<24x36xbf16, #tpu.memory_space<vmem>>, vector<24x36xbf16>
    %c0_65 = arith.constant 0 : index
    %c0_66 = arith.constant 0 : index
    %329 = vector.load %arg1[%c0_65, %c0_66] : memref<4x32xf32, #tpu.memory_space<vmem>>, vector<4x32xf32>
    %330 = arith.truncf %329 : vector<4x32xf32> to vector<4x32xbf16>
    %331 = vector.extract_strided_slice %330 {offsets = [0, 27], sizes = [4, 5], strides = [1, 1]} : vector<4x32xbf16> to vector<4x5xbf16>
    %332 = vector.extract_strided_slice %330 {offsets = [0, 0], sizes = [4, 27], strides = [1, 1]} : vector<4x32xbf16> to vector<4x27xbf16>
    %333 = tpu.concatenate %331, %332 in 1 : vector<4x5xbf16>, vector<4x27xbf16> -> vector<4x32xbf16>
    %334 = vector.extract_strided_slice %1 {offsets = [0, 0], sizes = [1, 32], strides = [1, 1]} : vector<9x32xbf16> to vector<1x32xbf16>
    %335 = vector.broadcast %334 : vector<1x32xbf16> to vector<4x32xbf16>
    %336 = arith.mulf %333, %335 : vector<4x32xbf16>
    %337 = vector.extract_strided_slice %330 {offsets = [0, 28], sizes = [4, 4], strides = [1, 1]} : vector<4x32xbf16> to vector<4x4xbf16>
    %338 = vector.extract_strided_slice %330 {offsets = [0, 0], sizes = [4, 28], strides = [1, 1]} : vector<4x32xbf16> to vector<4x28xbf16>
    %339 = tpu.concatenate %337, %338 in 1 : vector<4x4xbf16>, vector<4x28xbf16> -> vector<4x32xbf16>
    %340 = vector.extract_strided_slice %1 {offsets = [1, 0], sizes = [1, 32], strides = [1, 1]} : vector<9x32xbf16> to vector<1x32xbf16>
    %341 = vector.broadcast %340 : vector<1x32xbf16> to vector<4x32xbf16>
    %342 = arith.mulf %339, %341 : vector<4x32xbf16>
    %343 = vector.extract_strided_slice %330 {offsets = [0, 29], sizes = [4, 3], strides = [1, 1]} : vector<4x32xbf16> to vector<4x3xbf16>
    %344 = vector.extract_strided_slice %330 {offsets = [0, 0], sizes = [4, 29], strides = [1, 1]} : vector<4x32xbf16> to vector<4x29xbf16>
    %345 = tpu.concatenate %343, %344 in 1 : vector<4x3xbf16>, vector<4x29xbf16> -> vector<4x32xbf16>
    %346 = vector.extract_strided_slice %1 {offsets = [2, 0], sizes = [1, 32], strides = [1, 1]} : vector<9x32xbf16> to vector<1x32xbf16>
    %347 = vector.broadcast %346 : vector<1x32xbf16> to vector<4x32xbf16>
    %348 = arith.mulf %345, %347 : vector<4x32xbf16>
    %349 = vector.extract_strided_slice %330 {offsets = [0, 31], sizes = [4, 1], strides = [1, 1]} : vector<4x32xbf16> to vector<4x1xbf16>
    %350 = vector.extract_strided_slice %330 {offsets = [0, 0], sizes = [4, 31], strides = [1, 1]} : vector<4x32xbf16> to vector<4x31xbf16>
    %351 = tpu.concatenate %349, %350 in 1 : vector<4x1xbf16>, vector<4x31xbf16> -> vector<4x32xbf16>
    %352 = vector.extract_strided_slice %1 {offsets = [3, 0], sizes = [1, 32], strides = [1, 1]} : vector<9x32xbf16> to vector<1x32xbf16>
    %353 = vector.broadcast %352 : vector<1x32xbf16> to vector<4x32xbf16>
    %354 = arith.mulf %351, %353 : vector<4x32xbf16>
    %355 = vector.extract_strided_slice %1 {offsets = [4, 0], sizes = [1, 32], strides = [1, 1]} : vector<9x32xbf16> to vector<1x32xbf16>
    %356 = vector.broadcast %355 : vector<1x32xbf16> to vector<4x32xbf16>
    %357 = arith.mulf %330, %356 : vector<4x32xbf16>
    %358 = vector.extract_strided_slice %330 {offsets = [0, 1], sizes = [4, 31], strides = [1, 1]} : vector<4x32xbf16> to vector<4x31xbf16>
    %359 = vector.extract_strided_slice %330 {offsets = [0, 0], sizes = [4, 1], strides = [1, 1]} : vector<4x32xbf16> to vector<4x1xbf16>
    %360 = tpu.concatenate %358, %359 in 1 : vector<4x31xbf16>, vector<4x1xbf16> -> vector<4x32xbf16>
    %361 = vector.extract_strided_slice %1 {offsets = [5, 0], sizes = [1, 32], strides = [1, 1]} : vector<9x32xbf16> to vector<1x32xbf16>
    %362 = vector.broadcast %361 : vector<1x32xbf16> to vector<4x32xbf16>
    %363 = arith.mulf %360, %362 : vector<4x32xbf16>
    %364 = vector.extract_strided_slice %330 {offsets = [0, 3], sizes = [4, 29], strides = [1, 1]} : vector<4x32xbf16> to vector<4x29xbf16>
    %365 = vector.extract_strided_slice %330 {offsets = [0, 0], sizes = [4, 3], strides = [1, 1]} : vector<4x32xbf16> to vector<4x3xbf16>
    %366 = tpu.concatenate %364, %365 in 1 : vector<4x29xbf16>, vector<4x3xbf16> -> vector<4x32xbf16>
    %367 = vector.extract_strided_slice %1 {offsets = [6, 0], sizes = [1, 32], strides = [1, 1]} : vector<9x32xbf16> to vector<1x32xbf16>
    %368 = vector.broadcast %367 : vector<1x32xbf16> to vector<4x32xbf16>
    %369 = arith.mulf %366, %368 : vector<4x32xbf16>
    %370 = vector.extract_strided_slice %330 {offsets = [0, 4], sizes = [4, 28], strides = [1, 1]} : vector<4x32xbf16> to vector<4x28xbf16>
    %371 = vector.extract_strided_slice %330 {offsets = [0, 0], sizes = [4, 4], strides = [1, 1]} : vector<4x32xbf16> to vector<4x4xbf16>
    %372 = tpu.concatenate %370, %371 in 1 : vector<4x28xbf16>, vector<4x4xbf16> -> vector<4x32xbf16>
    %373 = vector.extract_strided_slice %1 {offsets = [7, 0], sizes = [1, 32], strides = [1, 1]} : vector<9x32xbf16> to vector<1x32xbf16>
    %374 = vector.broadcast %373 : vector<1x32xbf16> to vector<4x32xbf16>
    %375 = arith.mulf %372, %374 : vector<4x32xbf16>
    %376 = vector.extract_strided_slice %330 {offsets = [0, 5], sizes = [4, 27], strides = [1, 1]} : vector<4x32xbf16> to vector<4x27xbf16>
    %377 = vector.extract_strided_slice %330 {offsets = [0, 0], sizes = [4, 5], strides = [1, 1]} : vector<4x32xbf16> to vector<4x5xbf16>
    %378 = tpu.concatenate %376, %377 in 1 : vector<4x27xbf16>, vector<4x5xbf16> -> vector<4x32xbf16>
    %379 = vector.extract_strided_slice %1 {offsets = [8, 0], sizes = [1, 32], strides = [1, 1]} : vector<9x32xbf16> to vector<1x32xbf16>
    %380 = vector.broadcast %379 : vector<1x32xbf16> to vector<4x32xbf16>
    %381 = arith.mulf %378, %380 : vector<4x32xbf16>
    %382 = tpu.concatenate %336, %342, %348, %354, %357, %363, %369, %375, %381 in 0 : vector<4x32xbf16>, vector<4x32xbf16>, vector<4x32xbf16>, vector<4x32xbf16>, vector<4x32xbf16>, vector<4x32xbf16>, vector<4x32xbf16>, vector<4x32xbf16>, vector<4x32xbf16> -> vector<36x32xbf16>
    %cst_67 = arith.constant dense<0.000000e+00> : vector<24x32xf32>
    %383 = tpu.matmul %328, %382, %cst_67 {dimension_numbers = #tpu.dot_dimension_numbers<[1], [0], [0], [1], [0, 0, 1, 1], [], []>} : vector<24x36xbf16>, vector<36x32xbf16>, vector<24x32xf32> -> vector<24x32xf32>
    %c0_68 = arith.constant 0 : index
    %c0_69 = arith.constant 0 : index
    %384 = vector.load %arg6[%c0_68, %c0_69] : memref<216x32xbf16, #tpu.memory_space<vmem>>, vector<216x32xbf16>
    %c0_70 = arith.constant 0 : index
    %c0_71 = arith.constant 0 : index
    %385 = vector.load %arg2[%c0_70, %c0_71] : memref<32x2xf32, #tpu.memory_space<vmem>>, vector<32x2xf32>
    %386 = arith.truncf %385 : vector<32x2xf32> to vector<32x2xbf16>
    %cst_72 = arith.constant dense<0.000000e+00> : vector<216x2xf32>
    %387 = tpu.matmul %384, %386, %cst_72 {dimension_numbers = #tpu.dot_dimension_numbers<[1], [0], [0], [1], [0, 0, 1, 1], [], []>} : vector<216x32xbf16>, vector<32x2xbf16>, vector<216x2xf32> -> vector<216x2xf32>
    %388 = arith.truncf %387 : vector<216x2xf32> to vector<216x2xbf16>
    %c0_73 = arith.constant 0 : index
    %c0_74 = arith.constant 0 : index
    %389 = vector.load %arg4[%c0_73, %c0_74] : memref<2x32xf32, #tpu.memory_space<vmem>>, vector<2x32xf32>
    %390 = arith.truncf %389 : vector<2x32xf32> to vector<2x32xbf16>
    %cst_75 = arith.constant dense<0.000000e+00> : vector<216x32xf32>
    %391 = tpu.matmul %388, %390, %cst_75 {dimension_numbers = #tpu.dot_dimension_numbers<[1], [0], [0], [1], [0, 0, 1, 1], [], []>} : vector<216x2xbf16>, vector<2x32xbf16>, vector<216x32xf32> -> vector<216x32xf32>
    %cst_76 = arith.constant 0.000000e+00 : f32
    %392 = vector.broadcast %cst_76 : f32 to vector<24x32xf32>
    %393 = vector.extract_strided_slice %391 {offsets = [0, 0], sizes = [24, 32], strides = [1, 1]} : vector<216x32xf32> to vector<24x32xf32>
    %394 = vector.extract_strided_slice %0 {offsets = [0, 0], sizes = [1, 32], strides = [1, 1]} : vector<9x32xf32> to vector<1x32xf32>
    %395 = vector.broadcast %394 : vector<1x32xf32> to vector<24x32xf32>
    %396 = arith.mulf %393, %395 : vector<24x32xf32>
    %397 = arith.addf %392, %396 : vector<24x32xf32>
    %398 = vector.extract_strided_slice %391 {offsets = [24, 0], sizes = [24, 32], strides = [1, 1]} : vector<216x32xf32> to vector<24x32xf32>
    %399 = vector.extract_strided_slice %0 {offsets = [1, 0], sizes = [1, 32], strides = [1, 1]} : vector<9x32xf32> to vector<1x32xf32>
    %400 = vector.broadcast %399 : vector<1x32xf32> to vector<24x32xf32>
    %401 = arith.mulf %398, %400 : vector<24x32xf32>
    %402 = arith.addf %397, %401 : vector<24x32xf32>
    %403 = vector.extract_strided_slice %391 {offsets = [48, 0], sizes = [24, 32], strides = [1, 1]} : vector<216x32xf32> to vector<24x32xf32>
    %404 = vector.extract_strided_slice %0 {offsets = [2, 0], sizes = [1, 32], strides = [1, 1]} : vector<9x32xf32> to vector<1x32xf32>
    %405 = vector.broadcast %404 : vector<1x32xf32> to vector<24x32xf32>
    %406 = arith.mulf %403, %405 : vector<24x32xf32>
    %407 = arith.addf %402, %406 : vector<24x32xf32>
    %408 = vector.extract_strided_slice %391 {offsets = [72, 0], sizes = [24, 32], strides = [1, 1]} : vector<216x32xf32> to vector<24x32xf32>
    %409 = vector.extract_strided_slice %0 {offsets = [3, 0], sizes = [1, 32], strides = [1, 1]} : vector<9x32xf32> to vector<1x32xf32>
    %410 = vector.broadcast %409 : vector<1x32xf32> to vector<24x32xf32>
    %411 = arith.mulf %408, %410 : vector<24x32xf32>
    %412 = arith.addf %407, %411 : vector<24x32xf32>
    %413 = vector.extract_strided_slice %391 {offsets = [96, 0], sizes = [24, 32], strides = [1, 1]} : vector<216x32xf32> to vector<24x32xf32>
    %414 = vector.extract_strided_slice %0 {offsets = [4, 0], sizes = [1, 32], strides = [1, 1]} : vector<9x32xf32> to vector<1x32xf32>
    %415 = vector.broadcast %414 : vector<1x32xf32> to vector<24x32xf32>
    %416 = arith.mulf %413, %415 : vector<24x32xf32>
    %417 = arith.addf %412, %416 : vector<24x32xf32>
    %418 = vector.extract_strided_slice %391 {offsets = [120, 0], sizes = [24, 32], strides = [1, 1]} : vector<216x32xf32> to vector<24x32xf32>
    %419 = vector.extract_strided_slice %0 {offsets = [5, 0], sizes = [1, 32], strides = [1, 1]} : vector<9x32xf32> to vector<1x32xf32>
    %420 = vector.broadcast %419 : vector<1x32xf32> to vector<24x32xf32>
    %421 = arith.mulf %418, %420 : vector<24x32xf32>
    %422 = arith.addf %417, %421 : vector<24x32xf32>
    %423 = vector.extract_strided_slice %391 {offsets = [144, 0], sizes = [24, 32], strides = [1, 1]} : vector<216x32xf32> to vector<24x32xf32>
    %424 = vector.extract_strided_slice %0 {offsets = [6, 0], sizes = [1, 32], strides = [1, 1]} : vector<9x32xf32> to vector<1x32xf32>
    %425 = vector.broadcast %424 : vector<1x32xf32> to vector<24x32xf32>
    %426 = arith.mulf %423, %425 : vector<24x32xf32>
    %427 = arith.addf %422, %426 : vector<24x32xf32>
    %428 = vector.extract_strided_slice %391 {offsets = [168, 0], sizes = [24, 32], strides = [1, 1]} : vector<216x32xf32> to vector<24x32xf32>
    %429 = vector.extract_strided_slice %0 {offsets = [7, 0], sizes = [1, 32], strides = [1, 1]} : vector<9x32xf32> to vector<1x32xf32>
    %430 = vector.broadcast %429 : vector<1x32xf32> to vector<24x32xf32>
    %431 = arith.mulf %428, %430 : vector<24x32xf32>
    %432 = arith.addf %427, %431 : vector<24x32xf32>
    %433 = vector.extract_strided_slice %391 {offsets = [192, 0], sizes = [24, 32], strides = [1, 1]} : vector<216x32xf32> to vector<24x32xf32>
    %434 = vector.extract_strided_slice %0 {offsets = [8, 0], sizes = [1, 32], strides = [1, 1]} : vector<9x32xf32> to vector<1x32xf32>
    %435 = vector.broadcast %434 : vector<1x32xf32> to vector<24x32xf32>
    %436 = arith.mulf %433, %435 : vector<24x32xf32>
    %437 = arith.addf %432, %436 : vector<24x32xf32>
    %438 = arith.addf %383, %437 : vector<24x32xf32>
    %c0_77 = arith.constant 0 : index
    %c0_78 = arith.constant 0 : index
    %439 = vector.load %arg7[%c0_77, %c0_78] : memref<24x1xf32, #tpu.memory_space<vmem>>, vector<24x1xf32>
    %440 = vector.broadcast %439 : vector<24x1xf32> to vector<24x32xf32>
    %441 = arith.addf %438, %440 : vector<24x32xf32>
    %442 = vector.extract_strided_slice %441 {offsets = [0, 0], sizes = [12, 32], strides = [1, 1]} : vector<24x32xf32> to vector<12x32xf32>
    %443 = vector.extract_strided_slice %441 {offsets = [12, 0], sizes = [12, 32], strides = [1, 1]} : vector<24x32xf32> to vector<12x32xf32>
    %444 = arith.subf %327, %442 : vector<12x32xf32>
    %cst_79 = arith.constant -0.918938517 : f32
    %445 = vector.broadcast %cst_79 : f32 to vector<12x32xf32>
    %446 = arith.subf %445, %443 : vector<12x32xf32>
    %cst_80 = arith.constant 5.000000e-01 : f32
    %447 = vector.broadcast %cst_80 : f32 to vector<12x32xf32>
    %448 = arith.mulf %447, %444 : vector<12x32xf32>
    %449 = arith.mulf %448, %444 : vector<12x32xf32>
    %cst_81 = arith.constant -2.000000e+00 : f32
    %450 = vector.broadcast %cst_81 : f32 to vector<12x32xf32>
    %451 = arith.mulf %450, %443 : vector<12x32xf32>
    %452 = math.exp %451 : vector<12x32xf32>
    %453 = arith.mulf %449, %452 : vector<12x32xf32>
    %454 = arith.subf %446, %453 : vector<12x32xf32>
    %c0_82 = arith.constant 0 : index
    %c0_83 = arith.constant 0 : index
    %455 = vector.load %arg26[%c0_82, %c0_83] : memref<12x32xf32, #tpu.memory_space<vmem>>, vector<12x32xf32>
    tpu.vector_store %arg26[%c0_82, %c0_83], %327 {strides = array<i32>} : memref<12x32xf32, #tpu.memory_space<vmem>>, vector<12x32xf32>,
    %c0_84 = arith.constant 0 : index
    %c0_85 = arith.constant 0 : index
    %456 = vector.load %arg27[%c0_84, %c0_85] : memref<1x32xf32, #tpu.memory_space<vmem>>, vector<1x32xf32>
    tpu.vector_store %arg27[%c0_84, %c0_85], %326 {strides = array<i32>} : memref<1x32xf32, #tpu.memory_space<vmem>>, vector<1x32xf32>,
    %cst_86 = arith.constant dense<0.000000e+00> : vector<32xf32>
    %457 = vector.multi_reduction <add>, %454, %cst_86 [0] : vector<12x32xf32> to vector<32xf32>
    %458 = vector.shape_cast %457 : vector<32xf32> to vector<1x32xf32>
    %c0_87 = arith.constant 0 : index
    %c0_88 = arith.constant 0 : index
    %459 = vector.load %arg28[%c0_87, %c0_88] : memref<1x32xf32, #tpu.memory_space<vmem>>, vector<1x32xf32>
    tpu.vector_store %arg28[%c0_87, %c0_88], %458 {strides = array<i32>} : memref<1x32xf32, #tpu.memory_space<vmem>>, vector<1x32xf32>,
    return
  }
}

</mosaic_0001>

<llo_original>
// kernel: cond_proglow_mpn_forward.3
$region0: #{cond_proglow_mpn_forward.3}
  #allocation0 [shape = 'u32[]', space=smem, size = 0x4, offset = 0x4, fixed_abs, tag = 'smem constant byte address 0x4 - core index']
  #allocation1 [shape = 'u32[144,128]{1,0:T(1,128)}', space=vmem, size = 0x12000, scoped, tag = 'internal scratch']
  %s0 = inlined_call_operand.vmem [shape: f32[16,16], index: 0, kind: input, shape index: {}]
  %s1 = inlined_call_operand.vmem [shape: f32[2,8,8], index: 1, kind: input, shape index: {}]
  %s2 = inlined_call_operand.vmem [shape: bf16[2,16], index: 2, kind: input, shape index: {}]
  %s3 = inlined_call_operand.vmem [shape: bf16[16,32], index: 3, kind: input, shape index: {}]
  %s4 = inlined_call_operand.vmem [shape: f32[1,32], index: 4, kind: input, shape index: {}]
  %s5 = inlined_call_operand.vmem [shape: bf16[32,32], index: 5, kind: input, shape index: {}]
  %s6 = inlined_call_operand.vmem [shape: bf16[16,32], index: 6, kind: input, shape index: {}]
  %s7 = inlined_call_operand.vmem [shape: bf16[32,32], index: 7, kind: input, shape index: {}]
  %s8 = inlined_call_operand.vmem [shape: f32[1,32], index: 8, kind: input, shape index: {}]
  %s9 = inlined_call_operand.vmem [shape: bf16[32,32], index: 9, kind: input, shape index: {}]
  %s10 = inlined_call_operand.vmem [shape: f32[1,32], index: 10, kind: input, shape index: {}]
  %s11 = inlined_call_operand.vmem [shape: f32[2,32], index: 11, kind: output, shape index: {}]
  %s12 = sld [smem:[#allocation0]]
  $region54: #{cond_proglow_mpn_forward.3} parent=0
    _
  %s14 = ssub.s32 1, %s12
  %s15 = scalar_select 0, %s14, %s12
  // Predicated region
  $region2: #{cond_proglow_mpn_forward.3} parent=0 // pred_check
    _
  $region3: #{cond_proglow_mpn_forward.3} parent=0 // pred_check_branch
    %17 = sbr.rel (0) target = $region5
  $region4: #{cond_proglow_mpn_forward.3} parent=0 // pred_region
    _
  $region5: #{cond_proglow_mpn_forward.3} parent=0 // pred_fallthru
    _
  // Predicated region
  $region6: #{cond_proglow_mpn_forward.3} parent=0 // pred_check
    _
  $region7: #{cond_proglow_mpn_forward.3} parent=0 // pred_check_branch
    %19 = sbr.rel (0) target = $region9
  $region8: #{cond_proglow_mpn_forward.3} parent=0 // pred_region
    _
  $region9: #{cond_proglow_mpn_forward.3} parent=0 // pred_fallthru
    _
  // Predicated region
  $region10: #{cond_proglow_mpn_forward.3} parent=0 // pred_check
    _
  $region11: #{cond_proglow_mpn_forward.3} parent=0 // pred_check_branch
    %21 = sbr.rel (0) target = $region13
  $region12: #{cond_proglow_mpn_forward.3} parent=0 // pred_region
    _
  $region13: #{cond_proglow_mpn_forward.3} parent=0 // pred_fallthru
    _
  // Predicated region
  $region14: #{cond_proglow_mpn_forward.3} parent=0 // pred_check
    _
  $region15: #{cond_proglow_mpn_forward.3} parent=0 // pred_check_branch
    %23 = sbr.rel (0) target = $region17
  $region16: #{cond_proglow_mpn_forward.3} parent=0 // pred_region
    _
  $region17: #{cond_proglow_mpn_forward.3} parent=0 // pred_fallthru
    _
  // Predicated region
  $region18: #{cond_proglow_mpn_forward.3} parent=0 // pred_check
    _
  $region19: #{cond_proglow_mpn_forward.3} parent=0 // pred_check_branch
    %25 = sbr.rel (0) target = $region21
  $region20: #{cond_proglow_mpn_forward.3} parent=0 // pred_region
    _
  $region21: #{cond_proglow_mpn_forward.3} parent=0 // pred_fallthru
    _
  // Predicated region
  $region22: #{cond_proglow_mpn_forward.3} parent=0 // pred_check
    _
  $region23: #{cond_proglow_mpn_forward.3} parent=0 // pred_check_branch
    %27 = sbr.rel (0) target = $region25
  $region24: #{cond_proglow_mpn_forward.3} parent=0 // pred_region
    _
  $region25: #{cond_proglow_mpn_forward.3} parent=0 // pred_fallthru
    _
  // Predicated region
  $region26: #{cond_proglow_mpn_forward.3} parent=0 // pred_check
    _
  $region27: #{cond_proglow_mpn_forward.3} parent=0 // pred_check_branch
    %29 = sbr.rel (0) target = $region29
  $region28: #{cond_proglow_mpn_forward.3} parent=0 // pred_region
    _
  $region29: #{cond_proglow_mpn_forward.3} parent=0 // pred_fallthru
    _
  // Predicated region
  $region30: #{cond_proglow_mpn_forward.3} parent=0 // pred_check
    _
  $region31: #{cond_proglow_mpn_forward.3} parent=0 // pred_check_branch
    %31 = sbr.rel (0) target = $region33
  $region32: #{cond_proglow_mpn_forward.3} parent=0 // pred_region
    _
  $region33: #{cond_proglow_mpn_forward.3} parent=0 // pred_fallthru
    _
  // Predicated region
  $region34: #{cond_proglow_mpn_forward.3} parent=0 // pred_check
    _
  $region35: #{cond_proglow_mpn_forward.3} parent=0 // pred_check_branch
    %33 = sbr.rel (0) target = $region37
  $region36: #{cond_proglow_mpn_forward.3} parent=0 // pred_region
    _
  $region37: #{cond_proglow_mpn_forward.3} parent=0 // pred_fallthru
    _
  // Predicated region
  $region38: #{cond_proglow_mpn_forward.3} parent=0 // pred_check
    _
  $region39: #{cond_proglow_mpn_forward.3} parent=0 // pred_check_branch
    %35 = sbr.rel (0) target = $region41
  $region40: #{cond_proglow_mpn_forward.3} parent=0 // pred_region
    _
  $region41: #{cond_proglow_mpn_forward.3} parent=0 // pred_fallthru
    _
  // Predicated region
  $region42: #{cond_proglow_mpn_forward.3} parent=0 // pred_check
    _
  $region43: #{cond_proglow_mpn_forward.3} parent=0 // pred_check_branch
    %37 = sbr.rel (0) target = $region45
  $region44: #{cond_proglow_mpn_forward.3} parent=0 // pred_region
    _
  $region45: #{cond_proglow_mpn_forward.3} parent=0 // pred_fallthru
    _
  %v39 = vld [vmem:[%s0] sm:$0xff]
  %v40 = vld [vmem:[%s0 + $0x8] sm:$0xff]
  %v41 = vpack.c.bf16 %v40, %v39
  %v42 = vld [vmem:[%s3] sm:$0xf]
  %v43 = vld [vmem:[%s3 + $0x4] sm:$0xf]
  %v44 = vld [vmem:[%s4] sm:$0x1]
  %v46 = vlaneseq
  %v47 = vshrl.u32 %v46, 7
  %v48 = vsub.s32 0, %v47
  %v49 = vrot.slane %v44, %v48
  %v53 = vunpack.c.l.b16 %v42
  %v54 = vunpack.c.l.b16 %v43
  %v55 = vpack.c.b16 %v54, %v53
  %vm57 = vcmask 130048
  %v59 = vsel %vm57, %v41, 0
  %61 = vmatprep.subr.bf16.mxu0 0
  %62 = vmatpush1.bf16.msra.mxu0 %v55
  %63 = vmatprep.subr.bf16.mxu0 0
  %64 = vmatpush1.bf16.msra.mxu0 0
  %65 = vmatprep.subr.bf16.mxu0 0
  %66 = vmatpush1.bf16.msra.mxu0 0
  %67 = vmatprep.subr.bf16.mxu0 0
  %68 = vmatpush1.bf16.msra.mxu0 0
  %69 = vmatprep.subr.bf16.mxu0 0
  %70 = vmatpush1.bf16.msra.mxu0 0
  %71 = vmatprep.subr.bf16.mxu0 0
  %72 = vmatpush1.bf16.msra.mxu0 0
  %73 = vmatprep.subr.bf16.mxu0 0
  %74 = vmatpush1.bf16.msra.mxu0 0
  %75 = vmatprep.subr.bf16.mxu0 0
  %76 = vmatpush1.bf16.msra.mxu0 0
  %77 = vmatprep.subr.bf16.mxu0 0
  %78 = vmatpush1.bf16.msra.mxu0 0
  %79 = vmatprep.subr.bf16.mxu0 0
  %80 = vmatpush1.bf16.msra.mxu0 0
  %81 = vmatprep.subr.bf16.mxu0 0
  %82 = vmatpush1.bf16.msra.mxu0 0
  %83 = vmatprep.subr.bf16.mxu0 0
  %84 = vmatpush1.bf16.msra.mxu0 0
  %85 = vmatprep.subr.bf16.mxu0 0
  %86 = vmatpush1.bf16.msra.mxu0 0
  %87 = vmatprep.subr.bf16.mxu0 0
  %88 = vmatpush1.bf16.msra.mxu0 0
  %89 = vmatprep.subr.bf16.mxu0 0
  %90 = vmatpush1.bf16.msra.mxu0 0
  %91 = vmatprep.subr.bf16.mxu0 0
  %92 = vmatpush1.bf16.msra.mxu0 0
  %93 = vmatprep.mubr.bf16.mxu0 0
  %94 = vmatmul.mubr.bf16.gmra.mrb[0].mxu0 %v59
  %v95 = vpop.f32.mrb[0].mxu0
  %v96 = vadd.f32 %v49, %v95
  %v97 = vpop.f32.mrb[0].mxu0
  %v98 = vpop.f32.mrb[0].mxu0
  %v99 = vadd.f32 %v49, %v98
  %v100 = vpop.f32.mrb[0].mxu0
  %101 = vdwg.mxu0
  %v102 = vmax.f32 %v96, 0.0
  %v103 = vmax.f32 %v99, 0.0
  %v104 = vpack.c.bf16 %v103, %v102
  %v105 = vld [vmem:[%s1] sm:$0xff]
  %v106 = vpack.c.bf16 %v105, %v105
  %vm107 = vcmask 64512
  %v109 = vsel %vm107, %v106, 0
  %vm111 = vcmask 1043456
  %v113 = vsel %vm111, %v104, 0
  %115 = vmatprep.subr.bf16.mxu0 0
  %116 = vmatpush1.bf16.msra.mxu0 %v113
  %117 = vmatprep.subr.bf16.mxu0 0
  %118 = vmatpush1.bf16.msra.mxu0 0
  %119 = vmatprep.subr.bf16.mxu0 0
  %120 = vmatpush1.bf16.msra.mxu0 0
  %121 = vmatprep.subr.bf16.mxu0 0
  %122 = vmatpush1.bf16.msra.mxu0 0
  %123 = vmatprep.subr.bf16.mxu0 0
  %124 = vmatpush1.bf16.msra.mxu0 0
  %125 = vmatprep.subr.bf16.mxu0 0
  %126 = vmatpush1.bf16.msra.mxu0 0
  %127 = vmatprep.subr.bf16.mxu0 0
  %128 = vmatpush1.bf16.msra.mxu0 0
  %129 = vmatprep.subr.bf16.mxu0 0
  %130 = vmatpush1.bf16.msra.mxu0 0
  %131 = vmatprep.subr.bf16.mxu0 0
  %132 = vmatpush1.bf16.msra.mxu0 0
  %133 = vmatprep.subr.bf16.mxu0 0
  %134 = vmatpush1.bf16.msra.mxu0 0
  %135 = vmatprep.subr.bf16.mxu0 0
  %136 = vmatpush1.bf16.msra.mxu0 0
  %137 = vmatprep.subr.bf16.mxu0 0
  %138 = vmatpush1.bf16.msra.mxu0 0
  %139 = vmatprep.subr.bf16.mxu0 0
  %140 = vmatpush1.bf16.msra.mxu0 0
  %141 = vmatprep.subr.bf16.mxu0 0
  %142 = vmatpush1.bf16.msra.mxu0 0
  %143 = vmatprep.subr.bf16.mxu0 0
  %144 = vmatpush1.bf16.msra.mxu0 0
  %145 = vmatprep.subr.bf16.mxu0 0
  %146 = vmatpush1.bf16.msra.mxu0 0
  %147 = vmatprep.mubr.bf16.mxu0 0
  %148 = vmatmul.mubr.bf16.gmra.mrb[0].mxu0 %v109
  %v149 = vpop.f32.mrb[0].mxu0
  %v150 = vadd.f32 0.0, %v149
  %v151 = vpop.f32.mrb[0].mxu0
  %v152 = vpop.f32.mrb[0].mxu0
  %v153 = vpop.f32.mrb[0].mxu0
  %154 = vdwg.mxu0
  %s155 = scalar_lea.vmem %s1, 8
  %v156 = vld [vmem:[%s155] sm:$0xff]
  %v157 = vpack.c.bf16 %v156, %v156
  %v159 = vrot.slane %v104, 4
  %v161 = vsel %vm107, %v157, 0
  %v164 = vsel %vm111, %v159, 0
  %166 = vmatprep.subr.bf16.mxu0 0
  %167 = vmatpush1.bf16.msra.mxu0 %v164
  %168 = vmatprep.subr.bf16.mxu0 0
  %169 = vmatpush1.bf16.msra.mxu0 0
  %170 = vmatprep.subr.bf16.mxu0 0
  %171 = vmatpush1.bf16.msra.mxu0 0
  %172 = vmatprep.subr.bf16.mxu0 0
  %173 = vmatpush1.bf16.msra.mxu0 0
  %174 = vmatprep.subr.bf16.mxu0 0
  %175 = vmatpush1.bf16.msra.mxu0 0
  %176 = vmatprep.subr.bf16.mxu0 0
  %177 = vmatpush1.bf16.msra.mxu0 0
  %178 = vmatprep.subr.bf16.mxu0 0
  %179 = vmatpush1.bf16.msra.mxu0 0
  %180 = vmatprep.subr.bf16.mxu0 0
  %181 = vmatpush1.bf16.msra.mxu0 0
  %182 = vmatprep.subr.bf16.mxu0 0
  %183 = vmatpush1.bf16.msra.mxu0 0
  %184 = vmatprep.subr.bf16.mxu0 0
  %185 = vmatpush1.bf16.msra.mxu0 0
  %186 = vmatprep.subr.bf16.mxu0 0
  %187 = vmatpush1.bf16.msra.mxu0 0
  %188 = vmatprep.subr.bf16.mxu0 0
  %189 = vmatpush1.bf16.msra.mxu0 0
  %190 = vmatprep.subr.bf16.mxu0 0
  %191 = vmatpush1.bf16.msra.mxu0 0
  %192 = vmatprep.subr.bf16.mxu0 0
  %193 = vmatpush1.bf16.msra.mxu0 0
  %194 = vmatprep.subr.bf16.mxu0 0
  %195 = vmatpush1.bf16.msra.mxu0 0
  %196 = vmatprep.subr.bf16.mxu0 0
  %197 = vmatpush1.bf16.msra.mxu0 0
  %198 = vmatprep.mubr.bf16.mxu0 0
  %199 = vmatmul.mubr.bf16.gmra.mrb[0].mxu0 %v161
  %v200 = vpop.f32.mrb[0].mxu0
  %v201 = vadd.f32 0.0, %v200
  %v202 = vpop.f32.mrb[0].mxu0
  %v203 = vpop.f32.mrb[0].mxu0
  %v204 = vpop.f32.mrb[0].mxu0
  %205 = vdwg.mxu0
  %v206 = vpack.c.bf16 %v201, %v150
  %v207 = vld [vmem:[%s5] sm:$0xf]
  %v208 = vld [vmem:[%s5 + $0x4] sm:$0xf]
  %v209 = vld [vmem:[%s5 + $0x8] sm:$0xf]
  %v210 = vld [vmem:[%s5 + $0xc] sm:$0xf]
  %v215 = vunpack.c.l.b16 %v207
  %v216 = vunpack.c.l.b16 %v208
  %v217 = vunpack.c.l.b16 %v209
  %v218 = vunpack.c.l.b16 %v210
  %v219 = vpack.c.b16 %v216, %v215
  %v220 = vpack.c.b16 %v218, %v217
  %vm223 = vcmask 261120
  %v225 = vsel %vm223, %v206, 0
  %227 = vmatprep.subr.bf16.mxu0 0
  %228 = vmatpush1.bf16.msra.mxu0 %v219
  %229 = vmatprep.subr.bf16.mxu0 0
  %230 = vmatpush1.bf16.msra.mxu0 %v220
  %231 = vmatprep.subr.bf16.mxu0 0
  %232 = vmatpush1.bf16.msra.mxu0 0
  %233 = vmatprep.subr.bf16.mxu0 0
  %234 = vmatpush1.bf16.msra.mxu0 0
  %235 = vmatprep.subr.bf16.mxu0 0
  %236 = vmatpush1.bf16.msra.mxu0 0
  %237 = vmatprep.subr.bf16.mxu0 0
  %238 = vmatpush1.bf16.msra.mxu0 0
  %239 = vmatprep.subr.bf16.mxu0 0
  %240 = vmatpush1.bf16.msra.mxu0 0
  %241 = vmatprep.subr.bf16.mxu0 0
  %242 = vmatpush1.bf16.msra.mxu0 0
  %243 = vmatprep.subr.bf16.mxu0 0
  %244 = vmatpush1.bf16.msra.mxu0 0
  %245 = vmatprep.subr.bf16.mxu0 0
  %246 = vmatpush1.bf16.msra.mxu0 0
  %247 = vmatprep.subr.bf16.mxu0 0
  %248 = vmatpush1.bf16.msra.mxu0 0
  %249 = vmatprep.subr.bf16.mxu0 0
  %250 = vmatpush1.bf16.msra.mxu0 0
  %251 = vmatprep.subr.bf16.mxu0 0
  %252 = vmatpush1.bf16.msra.mxu0 0
  %253 = vmatprep.subr.bf16.mxu0 0
  %254 = vmatpush1.bf16.msra.mxu0 0
  %255 = vmatprep.subr.bf16.mxu0 0
  %256 = vmatpush1.bf16.msra.mxu0 0
  %257 = vmatprep.subr.bf16.mxu0 0
  %258 = vmatpush1.bf16.msra.mxu0 0
  %259 = vmatprep.mubr.bf16.mxu0 0
  %260 = vmatmul.mubr.bf16.gmra.mrb[0].mxu0 %v225
  %v261 = vpop.f32.mrb[0].mxu0
  %v262 = vadd.f32 0.0, %v261
  %v263 = vpop.f32.mrb[0].mxu0
  %v264 = vpop.f32.mrb[0].mxu0
  %v265 = vadd.f32 0.0, %v264
  %v266 = vpop.f32.mrb[0].mxu0
  %267 = vdwg.mxu0
  %v268 = vadd.f32 %v102, %v262
  %v269 = vadd.f32 %v103, %v265
  %v270 = vmax.f32 %v268, 0.0
  %v271 = vmax.f32 %v269, 0.0
  %v272 = vpack.c.bf16 %v271, %v270
  %v274 = vsel %vm111, %v272, 0
  %276 = vmatprep.subr.bf16.mxu0 0
  %277 = vmatpush1.bf16.msra.mxu0 %v274
  %278 = vmatprep.subr.bf16.mxu0 0
  %279 = vmatpush1.bf16.msra.mxu0 0
  %280 = vmatprep.subr.bf16.mxu0 0
  %281 = vmatpush1.bf16.msra.mxu0 0
  %282 = vmatprep.subr.bf16.mxu0 0
  %283 = vmatpush1.bf16.msra.mxu0 0
  %284 = vmatprep.subr.bf16.mxu0 0
  %285 = vmatpush1.bf16.msra.mxu0 0
  %286 = vmatprep.subr.bf16.mxu0 0
  %287 = vmatpush1.bf16.msra.mxu0 0
  %288 = vmatprep.subr.bf16.mxu0 0
  %289 = vmatpush1.bf16.msra.mxu0 0
  %290 = vmatprep.subr.bf16.mxu0 0
  %291 = vmatpush1.bf16.msra.mxu0 0
  %292 = vmatprep.subr.bf16.mxu0 0
  %293 = vmatpush1.bf16.msra.mxu0 0
  %294 = vmatprep.subr.bf16.mxu0 0
  %295 = vmatpush1.bf16.msra.mxu0 0
  %296 = vmatprep.subr.bf16.mxu0 0
  %297 = vmatpush1.bf16.msra.mxu0 0
  %298 = vmatprep.subr.bf16.mxu0 0
  %299 = vmatpush1.bf16.msra.mxu0 0
  %300 = vmatprep.subr.bf16.mxu0 0
  %301 = vmatpush1.bf16.msra.mxu0 0
  %302 = vmatprep.subr.bf16.mxu0 0
  %303 = vmatpush1.bf16.msra.mxu0 0
  %304 = vmatprep.subr.bf16.mxu0 0
  %305 = vmatpush1.bf16.msra.mxu0 0
  %306 = vmatprep.subr.bf16.mxu0 0
  %307 = vmatpush1.bf16.msra.mxu0 0
  %308 = vmatprep.mubr.bf16.mxu0 0
  %309 = vmatmul.mubr.bf16.gmra.mrb[0].mxu0 %v109
  %v310 = vpop.f32.mrb[0].mxu0
  %v311 = vadd.f32 0.0, %v310
  %v312 = vpop.f32.mrb[0].mxu0
  %v313 = vpop.f32.mrb[0].mxu0
  %v314 = vpop.f32.mrb[0].mxu0
  %315 = vdwg.mxu0
  %v317 = vrot.slane %v272, 4
  %v319 = vsel %vm111, %v317, 0
  %321 = vmatprep.subr.bf16.mxu0 0
  %322 = vmatpush1.bf16.msra.mxu0 %v319
  %323 = vmatprep.subr.bf16.mxu0 0
  %324 = vmatpush1.bf16.msra.mxu0 0
  %325 = vmatprep.subr.bf16.mxu0 0
  %326 = vmatpush1.bf16.msra.mxu0 0
  %327 = vmatprep.subr.bf16.mxu0 0
  %328 = vmatpush1.bf16.msra.mxu0 0
  %329 = vmatprep.subr.bf16.mxu0 0
  %330 = vmatpush1.bf16.msra.mxu0 0
  %331 = vmatprep.subr.bf16.mxu0 0
  %332 = vmatpush1.bf16.msra.mxu0 0
  %333 = vmatprep.subr.bf16.mxu0 0
  %334 = vmatpush1.bf16.msra.mxu0 0
  %335 = vmatprep.subr.bf16.mxu0 0
  %336 = vmatpush1.bf16.msra.mxu0 0
  %337 = vmatprep.subr.bf16.mxu0 0
  %338 = vmatpush1.bf16.msra.mxu0 0
  %339 = vmatprep.subr.bf16.mxu0 0
  %340 = vmatpush1.bf16.msra.mxu0 0
  %341 = vmatprep.subr.bf16.mxu0 0
  %342 = vmatpush1.bf16.msra.mxu0 0
  %343 = vmatprep.subr.bf16.mxu0 0
  %344 = vmatpush1.bf16.msra.mxu0 0
  %345 = vmatprep.subr.bf16.mxu0 0
  %346 = vmatpush1.bf16.msra.mxu0 0
  %347 = vmatprep.subr.bf16.mxu0 0
  %348 = vmatpush1.bf16.msra.mxu0 0
  %349 = vmatprep.subr.bf16.mxu0 0
  %350 = vmatpush1.bf16.msra.mxu0 0
  %351 = vmatprep.subr.bf16.mxu0 0
  %352 = vmatpush1.bf16.msra.mxu0 0
  %353 = vmatprep.mubr.bf16.mxu0 0
  %354 = vmatmul.mubr.bf16.gmra.mrb[0].mxu0 %v161
  %v355 = vpop.f32.mrb[0].mxu0
  %v356 = vadd.f32 0.0, %v355
  %v357 = vpop.f32.mrb[0].mxu0
  %v358 = vpop.f32.mrb[0].mxu0
  %v359 = vpop.f32.mrb[0].mxu0
  %360 = vdwg.mxu0
  %v361 = vpack.c.bf16 %v356, %v311
  %v363 = vsel %vm223, %v361, 0
  %365 = vmatprep.subr.bf16.mxu0 0
  %366 = vmatpush1.bf16.msra.mxu0 %v219
  %367 = vmatprep.subr.bf16.mxu0 0
  %368 = vmatpush1.bf16.msra.mxu0 %v220
  %369 = vmatprep.subr.bf16.mxu0 0
  %370 = vmatpush1.bf16.msra.mxu0 0
  %371 = vmatprep.subr.bf16.mxu0 0
  %372 = vmatpush1.bf16.msra.mxu0 0
  %373 = vmatprep.subr.bf16.mxu0 0
  %374 = vmatpush1.bf16.msra.mxu0 0
  %375 = vmatprep.subr.bf16.mxu0 0
  %376 = vmatpush1.bf16.msra.mxu0 0
  %377 = vmatprep.subr.bf16.mxu0 0
  %378 = vmatpush1.bf16.msra.mxu0 0
  %379 = vmatprep.subr.bf16.mxu0 0
  %380 = vmatpush1.bf16.msra.mxu0 0
  %381 = vmatprep.subr.bf16.mxu0 0
  %382 = vmatpush1.bf16.msra.mxu0 0
  %383 = vmatprep.subr.bf16.mxu0 0
  %384 = vmatpush1.bf16.msra.mxu0 0
  %385 = vmatprep.subr.bf16.mxu0 0
  %386 = vmatpush1.bf16.msra.mxu0 0
  %387 = vmatprep.subr.bf16.mxu0 0
  %388 = vmatpush1.bf16.msra.mxu0 0
  %389 = vmatprep.subr.bf16.mxu0 0
  %390 = vmatpush1.bf16.msra.mxu0 0
  %391 = vmatprep.subr.bf16.mxu0 0
  %392 = vmatpush1.bf16.msra.mxu0 0
  %393 = vmatprep.subr.bf16.mxu0 0
  %394 = vmatpush1.bf16.msra.mxu0 0
  %395 = vmatprep.subr.bf16.mxu0 0
  %396 = vmatpush1.bf16.msra.mxu0 0
  %397 = vmatprep.mubr.bf16.mxu0 0
  %398 = vmatmul.mubr.bf16.gmra.mrb[0].mxu0 %v363
  %v399 = vpop.f32.mrb[0].mxu0
  %v400 = vadd.f32 0.0, %v399
  %v401 = vpop.f32.mrb[0].mxu0
  %v402 = vpop.f32.mrb[0].mxu0
  %v403 = vadd.f32 0.0, %v402
  %v404 = vpop.f32.mrb[0].mxu0
  %405 = vdwg.mxu0
  %v406 = vadd.f32 %v102, %v400
  %v407 = vadd.f32 %v103, %v403
  %v408 = vmax.f32 %v406, 0.0
  %v409 = vmax.f32 %v407, 0.0
  %v410 = vpack.c.bf16 %v409, %v408
  %v412 = vsel %vm111, %v410, 0
  %414 = vmatprep.subr.bf16.mxu0 0
  %415 = vmatpush1.bf16.msra.mxu0 %v412
  %416 = vmatprep.subr.bf16.mxu0 0
  %417 = vmatpush1.bf16.msra.mxu0 0
  %418 = vmatprep.subr.bf16.mxu0 0
  %419 = vmatpush1.bf16.msra.mxu0 0
  %420 = vmatprep.subr.bf16.mxu0 0
  %421 = vmatpush1.bf16.msra.mxu0 0
  %422 = vmatprep.subr.bf16.mxu0 0
  %423 = vmatpush1.bf16.msra.mxu0 0
  %424 = vmatprep.subr.bf16.mxu0 0
  %425 = vmatpush1.bf16.msra.mxu0 0
  %426 = vmatprep.subr.bf16.mxu0 0
  %427 = vmatpush1.bf16.msra.mxu0 0
  %428 = vmatprep.subr.bf16.mxu0 0
  %429 = vmatpush1.bf16.msra.mxu0 0
  %430 = vmatprep.subr.bf16.mxu0 0
  %431 = vmatpush1.bf16.msra.mxu0 0
  %432 = vmatprep.subr.bf16.mxu0 0
  %433 = vmatpush1.bf16.msra.mxu0 0
  %434 = vmatprep.subr.bf16.mxu0 0
  %435 = vmatpush1.bf16.msra.mxu0 0
  %436 = vmatprep.subr.bf16.mxu0 0
  %437 = vmatpush1.bf16.msra.mxu0 0
  %438 = vmatprep.subr.bf16.mxu0 0
  %439 = vmatpush1.bf16.msra.mxu0 0
  %440 = vmatprep.subr.bf16.mxu0 0
  %441 = vmatpush1.bf16.msra.mxu0 0
  %442 = vmatprep.subr.bf16.mxu0 0
  %443 = vmatpush1.bf16.msra.mxu0 0
  %444 = vmatprep.subr.bf16.mxu0 0
  %445 = vmatpush1.bf16.msra.mxu0 0
  %446 = vmatprep.mubr.bf16.mxu0 0
  %447 = vmatmul.mubr.bf16.gmra.mrb[0].mxu0 %v109
  %v448 = vpop.f32.mrb[0].mxu0
  %v449 = vadd.f32 0.0, %v448
  %v450 = vpop.f32.mrb[0].mxu0
  %v451 = vpop.f32.mrb[0].mxu0
  %v452 = vpop.f32.mrb[0].mxu0
  %453 = vdwg.mxu0
  %v455 = vrot.slane %v410, 4
  %v457 = vsel %vm111, %v455, 0
  %459 = vmatprep.subr.bf16.mxu0 0
  %460 = vmatpush1.bf16.msra.mxu0 %v457
  %461 = vmatprep.subr.bf16.mxu0 0
  %462 = vmatpush1.bf16.msra.mxu0 0
  %463 = vmatprep.subr.bf16.mxu0 0
  %464 = vmatpush1.bf16.msra.mxu0 0
  %465 = vmatprep.subr.bf16.mxu0 0
  %466 = vmatpush1.bf16.msra.mxu0 0
  %467 = vmatprep.subr.bf16.mxu0 0
  %468 = vmatpush1.bf16.msra.mxu0 0
  %469 = vmatprep.subr.bf16.mxu0 0
  %470 = vmatpush1.bf16.msra.mxu0 0
  %471 = vmatprep.subr.bf16.mxu0 0
  %472 = vmatpush1.bf16.msra.mxu0 0
  %473 = vmatprep.subr.bf16.mxu0 0
  %474 = vmatpush1.bf16.msra.mxu0 0
  %475 = vmatprep.subr.bf16.mxu0 0
  %476 = vmatpush1.bf16.msra.mxu0 0
  %477 = vmatprep.subr.bf16.mxu0 0
  %478 = vmatpush1.bf16.msra.mxu0 0
  %479 = vmatprep.subr.bf16.mxu0 0
  %480 = vmatpush1.bf16.msra.mxu0 0
  %481 = vmatprep.subr.bf16.mxu0 0
  %482 = vmatpush1.bf16.msra.mxu0 0
  %483 = vmatprep.subr.bf16.mxu0 0
  %484 = vmatpush1.bf16.msra.mxu0 0
  %485 = vmatprep.subr.bf16.mxu0 0
  %486 = vmatpush1.bf16.msra.mxu0 0
  %487 = vmatprep.subr.bf16.mxu0 0
  %488 = vmatpush1.bf16.msra.mxu0 0
  %489 = vmatprep.subr.bf16.mxu0 0
  %490 = vmatpush1.bf16.msra.mxu0 0
  %491 = vmatprep.mubr.bf16.mxu0 0
  %492 = vmatmul.mubr.bf16.gmra.mrb[0].mxu0 %v161
  %v493 = vpop.f32.mrb[0].mxu0
  %v494 = vadd.f32 0.0, %v493
  %v495 = vpop.f32.mrb[0].mxu0
  %v496 = vpop.f32.mrb[0].mxu0
  %v497 = vpop.f32.mrb[0].mxu0
  %498 = vdwg.mxu0
  %v499 = vpack.c.bf16 %v494, %v449
  %v501 = vsel %vm223, %v499, 0
  %503 = vmatprep.subr.bf16.mxu0 0
  %504 = vmatpush1.bf16.msra.mxu0 %v219
  %505 = vmatprep.subr.bf16.mxu0 0
  %506 = vmatpush1.bf16.msra.mxu0 %v220
  %507 = vmatprep.subr.bf16.mxu0 0
  %508 = vmatpush1.bf16.msra.mxu0 0
  %509 = vmatprep.subr.bf16.mxu0 0
  %510 = vmatpush1.bf16.msra.mxu0 0
  %511 = vmatprep.subr.bf16.mxu0 0
  %512 = vmatpush1.bf16.msra.mxu0 0
  %513 = vmatprep.subr.bf16.mxu0 0
  %514 = vmatpush1.bf16.msra.mxu0 0
  %515 = vmatprep.subr.bf16.mxu0 0
  %516 = vmatpush1.bf16.msra.mxu0 0
  %517 = vmatprep.subr.bf16.mxu0 0
  %518 = vmatpush1.bf16.msra.mxu0 0
  %519 = vmatprep.subr.bf16.mxu0 0
  %520 = vmatpush1.bf16.msra.mxu0 0
  %521 = vmatprep.subr.bf16.mxu0 0
  %522 = vmatpush1.bf16.msra.mxu0 0
  %523 = vmatprep.subr.bf16.mxu0 0
  %524 = vmatpush1.bf16.msra.mxu0 0
  %525 = vmatprep.subr.bf16.mxu0 0
  %526 = vmatpush1.bf16.msra.mxu0 0
  %527 = vmatprep.subr.bf16.mxu0 0
  %528 = vmatpush1.bf16.msra.mxu0 0
  %529 = vmatprep.subr.bf16.mxu0 0
  %530 = vmatpush1.bf16.msra.mxu0 0
  %531 = vmatprep.subr.bf16.mxu0 0
  %532 = vmatpush1.bf16.msra.mxu0 0
  %533 = vmatprep.subr.bf16.mxu0 0
  %534 = vmatpush1.bf16.msra.mxu0 0
  %535 = vmatprep.mubr.bf16.mxu0 0
  %536 = vmatmul.mubr.bf16.gmra.mrb[0].mxu0 %v501
  %v537 = vpop.f32.mrb[0].mxu0
  %v538 = vadd.f32 0.0, %v537
  %v539 = vpop.f32.mrb[0].mxu0
  %v540 = vpop.f32.mrb[0].mxu0
  %v541 = vadd.f32 0.0, %v540
  %v542 = vpop.f32.mrb[0].mxu0
  %543 = vdwg.mxu0
  %v544 = vadd.f32 %v102, %v538
  %v545 = vadd.f32 %v103, %v541
  %v546 = vmax.f32 %v544, 0.0
  %v547 = vmax.f32 %v545, 0.0
  %v548 = vpack.c.bf16 %v547, %v546
  %v550 = vsel %vm111, %v548, 0
  %552 = vmatprep.subr.bf16.mxu0 0
  %553 = vmatpush1.bf16.msra.mxu0 %v550
  %554 = vmatprep.subr.bf16.mxu0 0
  %555 = vmatpush1.bf16.msra.mxu0 0
  %556 = vmatprep.subr.bf16.mxu0 0
  %557 = vmatpush1.bf16.msra.mxu0 0
  %558 = vmatprep.subr.bf16.mxu0 0
  %559 = vmatpush1.bf16.msra.mxu0 0
  %560 = vmatprep.subr.bf16.mxu0 0
  %561 = vmatpush1.bf16.msra.mxu0 0
  %562 = vmatprep.subr.bf16.mxu0 0
  %563 = vmatpush1.bf16.msra.mxu0 0
  %564 = vmatprep.subr.bf16.mxu0 0
  %565 = vmatpush1.bf16.msra.mxu0 0
  %566 = vmatprep.subr.bf16.mxu0 0
  %567 = vmatpush1.bf16.msra.mxu0 0
  %568 = vmatprep.subr.bf16.mxu0 0
  %569 = vmatpush1.bf16.msra.mxu0 0
  %570 = vmatprep.subr.bf16.mxu0 0
  %571 = vmatpush1.bf16.msra.mxu0 0
  %572 = vmatprep.subr.bf16.mxu0 0
  %573 = vmatpush1.bf16.msra.mxu0 0
  %574 = vmatprep.subr.bf16.mxu0 0
  %575 = vmatpush1.bf16.msra.mxu0 0
  %576 = vmatprep.subr.bf16.mxu0 0
  %577 = vmatpush1.bf16.msra.mxu0 0
  %578 = vmatprep.subr.bf16.mxu0 0
  %579 = vmatpush1.bf16.msra.mxu0 0
  %580 = vmatprep.subr.bf16.mxu0 0
  %581 = vmatpush1.bf16.msra.mxu0 0
  %582 = vmatprep.subr.bf16.mxu0 0
  %583 = vmatpush1.bf16.msra.mxu0 0
  %584 = vmatprep.mubr.bf16.mxu0 0
  %585 = vmatmul.mubr.bf16.gmra.mrb[0].mxu0 %v109
  %v586 = vpop.f32.mrb[0].mxu0
  %v587 = vadd.f32 0.0, %v586
  %v588 = vpop.f32.mrb[0].mxu0
  %v589 = vpop.f32.mrb[0].mxu0
  %v590 = vpop.f32.mrb[0].mxu0
  %591 = vdwg.mxu0
  %v593 = vrot.slane %v548, 4
  %v595 = vsel %vm111, %v593, 0
  %597 = vmatprep.subr.bf16.mxu0 0
  %598 = vmatpush1.bf16.msra.mxu0 %v595
  %599 = vmatprep.subr.bf16.mxu0 0
  %600 = vmatpush1.bf16.msra.mxu0 0
  %601 = vmatprep.subr.bf16.mxu0 0
  %602 = vmatpush1.bf16.msra.mxu0 0
  %603 = vmatprep.subr.bf16.mxu0 0
  %604 = vmatpush1.bf16.msra.mxu0 0
  %605 = vmatprep.subr.bf16.mxu0 0
  %606 = vmatpush1.bf16.msra.mxu0 0
  %607 = vmatprep.subr.bf16.mxu0 0
  %608 = vmatpush1.bf16.msra.mxu0 0
  %609 = vmatprep.subr.bf16.mxu0 0
  %610 = vmatpush1.bf16.msra.mxu0 0
  %611 = vmatprep.subr.bf16.mxu0 0
  %612 = vmatpush1.bf16.msra.mxu0 0
  %613 = vmatprep.subr.bf16.mxu0 0
  %614 = vmatpush1.bf16.msra.mxu0 0
  %615 = vmatprep.subr.bf16.mxu0 0
  %616 = vmatpush1.bf16.msra.mxu0 0
  %617 = vmatprep.subr.bf16.mxu0 0
  %618 = vmatpush1.bf16.msra.mxu0 0
  %619 = vmatprep.subr.bf16.mxu0 0
  %620 = vmatpush1.bf16.msra.mxu0 0
  %621 = vmatprep.subr.bf16.mxu0 0
  %622 = vmatpush1.bf16.msra.mxu0 0
  %623 = vmatprep.subr.bf16.mxu0 0
  %624 = vmatpush1.bf16.msra.mxu0 0
  %625 = vmatprep.subr.bf16.mxu0 0
  %626 = vmatpush1.bf16.msra.mxu0 0
  %627 = vmatprep.subr.bf16.mxu0 0
  %628 = vmatpush1.bf16.msra.mxu0 0
  %629 = vmatprep.mubr.bf16.mxu0 0
  %630 = vmatmul.mubr.bf16.gmra.mrb[0].mxu0 %v161
  %v631 = vpop.f32.mrb[0].mxu0
  %v632 = vadd.f32 0.0, %v631
  %v633 = vpop.f32.mrb[0].mxu0
  %v634 = vpop.f32.mrb[0].mxu0
  %v635 = vpop.f32.mrb[0].mxu0
  %636 = vdwg.mxu0
  %v637 = vpack.c.bf16 %v632, %v587
  %v639 = vsel %vm223, %v637, 0
  %641 = vmatprep.subr.bf16.mxu0 0
  %642 = vmatpush1.bf16.msra.mxu0 %v219
  %643 = vmatprep.subr.bf16.mxu0 0
  %644 = vmatpush1.bf16.msra.mxu0 %v220
  %645 = vmatprep.subr.bf16.mxu0 0
  %646 = vmatpush1.bf16.msra.mxu0 0
  %647 = vmatprep.subr.bf16.mxu0 0
  %648 = vmatpush1.bf16.msra.mxu0 0
  %649 = vmatprep.subr.bf16.mxu0 0
  %650 = vmatpush1.bf16.msra.mxu0 0
  %651 = vmatprep.subr.bf16.mxu0 0
  %652 = vmatpush1.bf16.msra.mxu0 0
  %653 = vmatprep.subr.bf16.mxu0 0
  %654 = vmatpush1.bf16.msra.mxu0 0
  %655 = vmatprep.subr.bf16.mxu0 0
  %656 = vmatpush1.bf16.msra.mxu0 0
  %657 = vmatprep.subr.bf16.mxu0 0
  %658 = vmatpush1.bf16.msra.mxu0 0
  %659 = vmatprep.subr.bf16.mxu0 0
  %660 = vmatpush1.bf16.msra.mxu0 0
  %661 = vmatprep.subr.bf16.mxu0 0
  %662 = vmatpush1.bf16.msra.mxu0 0
  %663 = vmatprep.subr.bf16.mxu0 0
  %664 = vmatpush1.bf16.msra.mxu0 0
  %665 = vmatprep.subr.bf16.mxu0 0
  %666 = vmatpush1.bf16.msra.mxu0 0
  %667 = vmatprep.subr.bf16.mxu0 0
  %668 = vmatpush1.bf16.msra.mxu0 0
  %669 = vmatprep.subr.bf16.mxu0 0
  %670 = vmatpush1.bf16.msra.mxu0 0
  %671 = vmatprep.subr.bf16.mxu0 0
  %672 = vmatpush1.bf16.msra.mxu0 0
  %673 = vmatprep.mubr.bf16.mxu0 0
  %674 = vmatmul.mubr.bf16.gmra.mrb[0].mxu0 %v639
  %v675 = vpop.f32.mrb[0].mxu0
  %v676 = vadd.f32 0.0, %v675
  %v677 = vpop.f32.mrb[0].mxu0
  %v678 = vpop.f32.mrb[0].mxu0
  %v679 = vadd.f32 0.0, %v678
  %v680 = vpop.f32.mrb[0].mxu0
  %681 = vdwg.mxu0
  %v682 = vadd.f32 %v102, %v676
  %v683 = vadd.f32 %v103, %v679
  %v684 = vmax.f32 %v682, 0.0
  %v685 = vmax.f32 %v683, 0.0
  %v686 = vld [vmem:[%s6] sm:$0xf]
  %v687 = vld [vmem:[%s6 + $0x4] sm:$0xf]
  %v688 = vpack.c.bf16 %v685, %v684
  %v689 = vld [vmem:[%s7] sm:$0xf]
  %v690 = vld [vmem:[%s7 + $0x4] sm:$0xf]
  %v691 = vld [vmem:[%s7 + $0x8] sm:$0xf]
  %v692 = vld [vmem:[%s7 + $0xc] sm:$0xf]
  %v697 = vunpack.c.l.b16 %v689
  %v698 = vunpack.c.l.b16 %v690
  %v699 = vunpack.c.l.b16 %v691
  %v700 = vunpack.c.l.b16 %v692
  %v701 = vpack.c.b16 %v698, %v697
  %v702 = vpack.c.b16 %v700, %v699
  %v706 = vsel %vm223, %v688, 0
  %708 = vmatprep.subr.bf16.mxu0 0
  %709 = vmatpush1.bf16.msra.mxu0 %v701
  %710 = vmatprep.subr.bf16.mxu0 0
  %711 = vmatpush1.bf16.msra.mxu0 %v702
  %712 = vmatprep.subr.bf16.mxu0 0
  %713 = vmatpush1.bf16.msra.mxu0 0
  %714 = vmatprep.subr.bf16.mxu0 0
  %715 = vmatpush1.bf16.msra.mxu0 0
  %716 = vmatprep.subr.bf16.mxu0 0
  %717 = vmatpush1.bf16.msra.mxu0 0
  %718 = vmatprep.subr.bf16.mxu0 0
  %719 = vmatpush1.bf16.msra.mxu0 0
  %720 = vmatprep.subr.bf16.mxu0 0
  %721 = vmatpush1.bf16.msra.mxu0 0
  %722 = vmatprep.subr.bf16.mxu0 0
  %723 = vmatpush1.bf16.msra.mxu0 0
  %724 = vmatprep.subr.bf16.mxu0 0
  %725 = vmatpush1.bf16.msra.mxu0 0
  %726 = vmatprep.subr.bf16.mxu0 0
  %727 = vmatpush1.bf16.msra.mxu0 0
  %728 = vmatprep.subr.bf16.mxu0 0
  %729 = vmatpush1.bf16.msra.mxu0 0
  %730 = vmatprep.subr.bf16.mxu0 0
  %731 = vmatpush1.bf16.msra.mxu0 0
  %732 = vmatprep.subr.bf16.mxu0 0
  %733 = vmatpush1.bf16.msra.mxu0 0
  %734 = vmatprep.subr.bf16.mxu0 0
  %735 = vmatpush1.bf16.msra.mxu0 0
  %736 = vmatprep.subr.bf16.mxu0 0
  %737 = vmatpush1.bf16.msra.mxu0 0
  %738 = vmatprep.subr.bf16.mxu0 0
  %739 = vmatpush1.bf16.msra.mxu0 0
  %740 = vmatprep.mubr.bf16.mxu0 0
  %741 = vmatmul.mubr.bf16.gmra.mrb[0].mxu0 %v706
  %v742 = vpop.f32.mrb[0].mxu0
  %v743 = vadd.f32 0.0, %v742
  %v744 = vpop.f32.mrb[0].mxu0
  %v745 = vpop.f32.mrb[0].mxu0
  %v746 = vadd.f32 0.0, %v745
  %v747 = vpop.f32.mrb[0].mxu0
  %748 = vdwg.mxu0
  %v751 = vunpack.c.l.b16 %v686
  %v752 = vunpack.c.l.b16 %v687
  %v753 = vpack.c.b16 %v752, %v751
  %755 = vmatprep.subr.bf16.mxu0 0
  %756 = vmatpush1.bf16.msra.mxu0 %v753
  %757 = vmatprep.subr.bf16.mxu0 0
  %758 = vmatpush1.bf16.msra.mxu0 0
  %759 = vmatprep.subr.bf16.mxu0 0
  %760 = vmatpush1.bf16.msra.mxu0 0
  %761 = vmatprep.subr.bf16.mxu0 0
  %762 = vmatpush1.bf16.msra.mxu0 0
  %763 = vmatprep.subr.bf16.mxu0 0
  %764 = vmatpush1.bf16.msra.mxu0 0
  %765 = vmatprep.subr.bf16.mxu0 0
  %766 = vmatpush1.bf16.msra.mxu0 0
  %767 = vmatprep.subr.bf16.mxu0 0
  %768 = vmatpush1.bf16.msra.mxu0 0
  %769 = vmatprep.subr.bf16.mxu0 0
  %770 = vmatpush1.bf16.msra.mxu0 0
  %771 = vmatprep.subr.bf16.mxu0 0
  %772 = vmatpush1.bf16.msra.mxu0 0
  %773 = vmatprep.subr.bf16.mxu0 0
  %774 = vmatpush1.bf16.msra.mxu0 0
  %775 = vmatprep.subr.bf16.mxu0 0
  %776 = vmatpush1.bf16.msra.mxu0 0
  %777 = vmatprep.subr.bf16.mxu0 0
  %778 = vmatpush1.bf16.msra.mxu0 0
  %779 = vmatprep.subr.bf16.mxu0 0
  %780 = vmatpush1.bf16.msra.mxu0 0
  %781 = vmatprep.subr.bf16.mxu0 0
  %782 = vmatpush1.bf16.msra.mxu0 0
  %783 = vmatprep.subr.bf16.mxu0 0
  %784 = vmatpush1.bf16.msra.mxu0 0
  %785 = vmatprep.subr.bf16.mxu0 0
  %786 = vmatpush1.bf16.msra.mxu0 0
  %787 = vmatprep.mubr.bf16.mxu0 0
  %788 = vmatmul.mubr.bf16.gmra.mrb[0].mxu0 %v59
  %v789 = vpop.f32.mrb[0].mxu0
  %v790 = vadd.f32 %v743, %v789
  %v791 = vpop.f32.mrb[0].mxu0
  %v792 = vpop.f32.mrb[0].mxu0
  %v793 = vadd.f32 %v746, %v792
  %v794 = vpop.f32.mrb[0].mxu0
  %795 = vdwg.mxu0
  %v796 = vld [vmem:[%s8] sm:$0x1]
  %v798 = vlaneseq
  %v799 = vshrl.u32 %v798, 7
  %v800 = vsub.s32 0, %v799
  %v801 = vrot.slane %v796, %v800
  %v803 = vadd.f32 %v790, %v801
  %v804 = vadd.f32 %v793, %v801
  %v805 = vmax.f32 %v803, 0.0
  %v806 = vmax.f32 %v804, 0.0
  %v807 = vld [vmem:[%s2] sm:$0x1]
  %v808 = vpack.c.bf16 %v806, %v805
  %v810 = vsel %vm57, %v807, 0
  %812 = vmatprep.subr.bf16.mxu0 0
  %813 = vmatpush1.bf16.msra.mxu0 %v808
  %814 = vmatprep.subr.bf16.mxu0 0
  %815 = vmatpush1.bf16.msra.mxu0 0
  %816 = vmatprep.subr.bf16.mxu0 0
  %817 = vmatpush1.bf16.msra.mxu0 0
  %818 = vmatprep.subr.bf16.mxu0 0
  %819 = vmatpush1.bf16.msra.mxu0 0
  %820 = vmatprep.subr.bf16.mxu0 0
  %821 = vmatpush1.bf16.msra.mxu0 0
  %822 = vmatprep.subr.bf16.mxu0 0
  %823 = vmatpush1.bf16.msra.mxu0 0
  %824 = vmatprep.subr.bf16.mxu0 0
  %825 = vmatpush1.bf16.msra.mxu0 0
  %826 = vmatprep.subr.bf16.mxu0 0
  %827 = vmatpush1.bf16.msra.mxu0 0
  %828 = vmatprep.subr.bf16.mxu0 0
  %829 = vmatpush1.bf16.msra.mxu0 0
  %830 = vmatprep.subr.bf16.mxu0 0
  %831 = vmatpush1.bf16.msra.mxu0 0
  %832 = vmatprep.subr.bf16.mxu0 0
  %833 = vmatpush1.bf16.msra.mxu0 0
  %834 = vmatprep.subr.bf16.mxu0 0
  %835 = vmatpush1.bf16.msra.mxu0 0
  %836 = vmatprep.subr.bf16.mxu0 0
  %837 = vmatpush1.bf16.msra.mxu0 0
  %838 = vmatprep.subr.bf16.mxu0 0
  %839 = vmatpush1.bf16.msra.mxu0 0
  %840 = vmatprep.subr.bf16.mxu0 0
  %841 = vmatpush1.bf16.msra.mxu0 0
  %842 = vmatprep.subr.bf16.mxu0 0
  %843 = vmatpush1.bf16.msra.mxu0 0
  %844 = vmatprep.mubr.bf16.mxu0 0
  %845 = vmatmul.mubr.bf16.gmra.mrb[0].mxu0 %v810
  %v846 = vpop.f32.mrb[0].mxu0
  %v847 = vadd.f32 0.0, %v846
  %v848 = vpop.f32.mrb[0].mxu0
  %v849 = vpop.f32.mrb[0].mxu0
  %v850 = vpop.f32.mrb[0].mxu0
  %851 = vdwg.mxu0
  %v852 = vpack.c.bf16 %v847, %v847
  %v853 = vld [vmem:[%s9] sm:$0xf]
  %v854 = vld [vmem:[%s9 + $0x4] sm:$0xf]
  %v855 = vld [vmem:[%s9 + $0x8] sm:$0xf]
  %v856 = vld [vmem:[%s9 + $0xc] sm:$0xf]
  %v857 = vld [vmem:[%s10] sm:$0x1]
  %v859 = vlaneseq
  %v860 = vshrl.u32 %v859, 7
  %v861 = vsub.s32 0, %v860
  %v862 = vrot.slane %v857, %v861
  %v868 = vunpack.c.l.b16 %v853
  %v869 = vunpack.c.l.b16 %v854
  %v870 = vunpack.c.l.b16 %v855
  %v871 = vunpack.c.l.b16 %v856
  %v872 = vpack.c.b16 %v869, %v868
  %v873 = vpack.c.b16 %v871, %v870
  %v877 = vsel %vm223, %v852, 0
  %879 = vmatprep.subr.bf16.mxu0 0
  %880 = vmatpush1.bf16.msra.mxu0 %v872
  %881 = vmatprep.subr.bf16.mxu0 0
  %882 = vmatpush1.bf16.msra.mxu0 %v873
  %883 = vmatprep.subr.bf16.mxu0 0
  %884 = vmatpush1.bf16.msra.mxu0 0
  %885 = vmatprep.subr.bf16.mxu0 0
  %886 = vmatpush1.bf16.msra.mxu0 0
  %887 = vmatprep.subr.bf16.mxu0 0
  %888 = vmatpush1.bf16.msra.mxu0 0
  %889 = vmatprep.subr.bf16.mxu0 0
  %890 = vmatpush1.bf16.msra.mxu0 0
  %891 = vmatprep.subr.bf16.mxu0 0
  %892 = vmatpush1.bf16.msra.mxu0 0
  %893 = vmatprep.subr.bf16.mxu0 0
  %894 = vmatpush1.bf16.msra.mxu0 0
  %895 = vmatprep.subr.bf16.mxu0 0
  %896 = vmatpush1.bf16.msra.mxu0 0
  %897 = vmatprep.subr.bf16.mxu0 0
  %898 = vmatpush1.bf16.msra.mxu0 0
  %899 = vmatprep.subr.bf16.mxu0 0
  %900 = vmatpush1.bf16.msra.mxu0 0
  %901 = vmatprep.subr.bf16.mxu0 0
  %902 = vmatpush1.bf16.msra.mxu0 0
  %903 = vmatprep.subr.bf16.mxu0 0
  %904 = vmatpush1.bf16.msra.mxu0 0
  %905 = vmatprep.subr.bf16.mxu0 0
  %906 = vmatpush1.bf16.msra.mxu0 0
  %907 = vmatprep.subr.bf16.mxu0 0
  %908 = vmatpush1.bf16.msra.mxu0 0
  %909 = vmatprep.subr.bf16.mxu0 0
  %910 = vmatpush1.bf16.msra.mxu0 0
  %911 = vmatprep.mubr.bf16.mxu0 0
  %912 = vmatmul.mubr.bf16.gmra.mrb[0].mxu0 %v877
  %v913 = vpop.f32.mrb[0].mxu0
  %v914 = vadd.f32 %v862, %v913
  %v915 = vpop.f32.mrb[0].mxu0
  %v916 = vpop.f32.mrb[0].mxu0
  %v917 = vpop.f32.mrb[0].mxu0
  %918 = vdwg.mxu0
  %vm919 = vcmask 254976
  %920 = vst.msk [vmem:[%s11] sm:$0x3] %vm919, %v914
  // Predicated region
  $region46: #{cond_proglow_mpn_forward.3} parent=0 // pred_check
    _
  $region47: #{cond_proglow_mpn_forward.3} parent=0 // pred_check_branch
    %922 = sbr.rel (0) target = $region49
  $region48: #{cond_proglow_mpn_forward.3} parent=0 // pred_region
    _
  $region49: #{cond_proglow_mpn_forward.3} parent=0 // pred_fallthru
    _
  // Predicated region
  $region50: #{cond_proglow_mpn_forward.3} parent=0 // pred_check
    _
  $region51: #{cond_proglow_mpn_forward.3} parent=0 // pred_check_branch
    %924 = sbr.rel (0) target = $region53
  $region52: #{cond_proglow_mpn_forward.3} parent=0 // pred_region
    _
  $region53: #{cond_proglow_mpn_forward.3} parent=0 // pred_fallthru
    _

// kernel: cond_proglow_mpn_forward.4
$region0: #{cond_proglow_mpn_forward.4}
  #allocation0 [shape = 'u32[]', space=smem, size = 0x4, offset = 0x4, fixed_abs, tag = 'smem constant byte address 0x4 - core index']
  #allocation1 [shape = 'u32[144,128]{1,0:T(1,128)}', space=vmem, size = 0x12000, scoped, tag = 'internal scratch']
  %s0 = inlined_call_operand.vmem [shape: f32[12,128], index: 0, kind: input, shape index: {}]
  %s1 = inlined_call_operand.vmem [shape: f32[4,128], index: 1, kind: input, shape index: {}]
  %s2 = inlined_call_operand.vmem [shape: f32[32,2], index: 2, kind: input, shape index: {}]
  %s3 = inlined_call_operand.vmem [shape: f32[9,128], index: 3, kind: input, shape index: {}]
  %s4 = inlined_call_operand.vmem [shape: f32[2,128], index: 4, kind: input, shape index: {}]
  %s5 = inlined_call_operand.vmem [shape: bf16[24,36], index: 5, kind: input, shape index: {}]
  %s6 = inlined_call_operand.vmem [shape: bf16[216,32], index: 6, kind: input, shape index: {}]
  %s7 = inlined_call_operand.vmem [shape: f32[24,1], index: 7, kind: input, shape index: {}]
  %s8 = inlined_call_operand.vmem [shape: f32[12,1], index: 8, kind: input, shape index: {}]
  %s9 = inlined_call_operand.vmem [shape: f32[12,1], index: 9, kind: input, shape index: {}]
  %s10 = inlined_call_operand.vmem [shape: bf16[12,12], index: 10, kind: input, shape index: {}]
  %s11 = inlined_call_operand.vmem [shape: bf16[32,54], index: 11, kind: input, shape index: {}]
  %s12 = inlined_call_operand.vmem [shape: f32[32,1], index: 12, kind: input, shape index: {}]
  %s13 = inlined_call_operand.vmem [shape: bf16[32,32], index: 13, kind: input, shape index: {}]
  %s14 = inlined_call_operand.vmem [shape: f32[32,1], index: 14, kind: input, shape index: {}]
  %s15 = inlined_call_operand.vmem [shape: bf16[12,288], index: 15, kind: input, shape index: {}]
  %s16 = inlined_call_operand.vmem [shape: f32[12,1], index: 16, kind: input, shape index: {}]
  %s17 = inlined_call_operand.vmem [shape: f32[12,1], index: 17, kind: input, shape index: {}]
  %s18 = inlined_call_operand.vmem [shape: f32[12,1], index: 18, kind: input, shape index: {}]
  %s19 = inlined_call_operand.vmem [shape: bf16[12,12], index: 19, kind: input, shape index: {}]
  %s20 = inlined_call_operand.vmem [shape: bf16[32,54], index: 20, kind: input, shape index: {}]
  %s21 = inlined_call_operand.vmem [shape: f32[32,1], index: 21, kind: input, shape index: {}]
  %s22 = inlined_call_operand.vmem [shape: bf16[32,32], index: 22, kind: input, shape index: {}]
  %s23 = inlined_call_operand.vmem [shape: f32[32,1], index: 23, kind: input, shape index: {}]
  %s24 = inlined_call_operand.vmem [shape: bf16[12,288], index: 24, kind: input, shape index: {}]
  %s25 = inlined_call_operand.vmem [shape: f32[12,1], index: 25, kind: input, shape index: {}]
  %s26 = inlined_call_operand.vmem [shape: f32[12,128], index: 26, kind: output, shape index: {0}]
  %s27 = inlined_call_operand.vmem [shape: f32[1,128], index: 27, kind: output, shape index: {1}]
  %s28 = inlined_call_operand.vmem [shape: f32[1,128], index: 28, kind: output, shape index: {2}]
  %29 = xla_tuple %s26, %s27, %s28
  %s30 = sld [smem:[#allocation0]]
  $region130: #{cond_proglow_mpn_forward.4} parent=0
    _
  %s32 = ssub.s32 1, %s30
  %s33 = scalar_select 0, %s32, %s30
  // Predicated region
  $region2: #{cond_proglow_mpn_forward.4} parent=0 // pred_check
    _
  $region3: #{cond_proglow_mpn_forward.4} parent=0 // pred_check_branch
    %35 = sbr.rel (0) target = $region5
  $region4: #{cond_proglow_mpn_forward.4} parent=0 // pred_region
    _
  $region5: #{cond_proglow_mpn_forward.4} parent=0 // pred_fallthru
    _
  // Predicated region
  $region6: #{cond_proglow_mpn_forward.4} parent=0 // pred_check
    _
  $region7: #{cond_proglow_mpn_forward.4} parent=0 // pred_check_branch
    %37 = sbr.rel (0) target = $region9
  $region8: #{cond_proglow_mpn_forward.4} parent=0 // pred_region
    _
  $region9: #{cond_proglow_mpn_forward.4} parent=0 // pred_fallthru
    _
  // Predicated region
  $region10: #{cond_proglow_mpn_forward.4} parent=0 // pred_check
    _
  $region11: #{cond_proglow_mpn_forward.4} parent=0 // pred_check_branch
    %39 = sbr.rel (0) target = $region13
  $region12: #{cond_proglow_mpn_forward.4} parent=0 // pred_region
    _
  $region13: #{cond_proglow_mpn_forward.4} parent=0 // pred_fallthru
    _
  // Predicated region
  $region14: #{cond_proglow_mpn_forward.4} parent=0 // pred_check
    _
  $region15: #{cond_proglow_mpn_forward.4} parent=0 // pred_check_branch
    %41 = sbr.rel (0) target = $region17
  $region16: #{cond_proglow_mpn_forward.4} parent=0 // pred_region
    _
  $region17: #{cond_proglow_mpn_forward.4} parent=0 // pred_fallthru
    _
  // Predicated region
  $region18: #{cond_proglow_mpn_forward.4} parent=0 // pred_check
    _
  $region19: #{cond_proglow_mpn_forward.4} parent=0 // pred_check_branch
    %43 = sbr.rel (0) target = $region21
  $region20: #{cond_proglow_mpn_forward.4} parent=0 // pred_region
    _
  $region21: #{cond_proglow_mpn_forward.4} parent=0 // pred_fallthru
    _
  // Predicated region
  $region22: #{cond_proglow_mpn_forward.4} parent=0 // pred_check
    _
  $region23: #{cond_proglow_mpn_forward.4} parent=0 // pred_check_branch
    %45 = sbr.rel (0) target = $region25
  $region24: #{cond_proglow_mpn_forward.4} parent=0 // pred_region
    _
  $region25: #{cond_proglow_mpn_forward.4} parent=0 // pred_fallthru
    _
  // Predicated region
  $region26: #{cond_proglow_mpn_forward.4} parent=0 // pred_check
    _
  $region27: #{cond_proglow_mpn_forward.4} parent=0 // pred_check_branch
    %47 = sbr.rel (0) target = $region29
  $region28: #{cond_proglow_mpn_forward.4} parent=0 // pred_region
    _
  $region29: #{cond_proglow_mpn_forward.4} parent=0 // pred_fallthru
    _
  // Predicated region
  $region30: #{cond_proglow_mpn_forward.4} parent=0 // pred_check
    _
  $region31: #{cond_proglow_mpn_forward.4} parent=0 // pred_check_branch
    %49 = sbr.rel (0) target = $region33
  $region32: #{cond_proglow_mpn_forward.4} parent=0 // pred_region
    _
  $region33: #{cond_proglow_mpn_forward.4} parent=0 // pred_fallthru
    _
  // Predicated region
  $region34: #{cond_proglow_mpn_forward.4} parent=0 // pred_check
    _
  $region35: #{cond_proglow_mpn_forward.4} parent=0 // pred_check_branch
    %51 = sbr.rel (0) target = $region37
  $region36: #{cond_proglow_mpn_forward.4} parent=0 // pred_region
    _
  $region37: #{cond_proglow_mpn_forward.4} parent=0 // pred_fallthru
    _
  // Predicated region
  $region38: #{cond_proglow_mpn_forward.4} parent=0 // pred_check
    _
  $region39: #{cond_proglow_mpn_forward.4} parent=0 // pred_check_branch
    %53 = sbr.rel (0) target = $region41
  $region40: #{cond_proglow_mpn_forward.4} parent=0 // pred_region
    _
  $region41: #{cond_proglow_mpn_forward.4} parent=0 // pred_fallthru
    _
  // Predicated region
  $region42: #{cond_proglow_mpn_forward.4} parent=0 // pred_check
    _
  $region43: #{cond_proglow_mpn_forward.4} parent=0 // pred_check_branch
    %55 = sbr.rel (0) target = $region45
  $region44: #{cond_proglow_mpn_forward.4} parent=0 // pred_region
    _
  $region45: #{cond_proglow_mpn_forward.4} parent=0 // pred_fallthru
    _
  // Predicated region
  $region46: #{cond_proglow_mpn_forward.4} parent=0 // pred_check
    _
  $region47: #{cond_proglow_mpn_forward.4} parent=0 // pred_check_branch
    %57 = sbr.rel (0) target = $region49
  $region48: #{cond_proglow_mpn_forward.4} parent=0 // pred_region
    _
  $region49: #{cond_proglow_mpn_forward.4} parent=0 // pred_fallthru
    _
  // Predicated region
  $region50: #{cond_proglow_mpn_forward.4} parent=0 // pred_check
    _
  $region51: #{cond_proglow_mpn_forward.4} parent=0 // pred_check_branch
    %59 = sbr.rel (0) target = $region53
  $region52: #{cond_proglow_mpn_forward.4} parent=0 // pred_region
    _
  $region53: #{cond_proglow_mpn_forward.4} parent=0 // pred_fallthru
    _
  // Predicated region
  $region54: #{cond_proglow_mpn_forward.4} parent=0 // pred_check
    _
  $region55: #{cond_proglow_mpn_forward.4} parent=0 // pred_check_branch
    %61 = sbr.rel (0) target = $region57
  $region56: #{cond_proglow_mpn_forward.4} parent=0 // pred_region
    _
  $region57: #{cond_proglow_mpn_forward.4} parent=0 // pred_fallthru
    _
  // Predicated region
  $region58: #{cond_proglow_mpn_forward.4} parent=0 // pred_check
    _
  $region59: #{cond_proglow_mpn_forward.4} parent=0 // pred_check_branch
    %63 = sbr.rel (0) target = $region61
  $region60: #{cond_proglow_mpn_forward.4} parent=0 // pred_region
    _
  $region61: #{cond_proglow_mpn_forward.4} parent=0 // pred_fallthru
    _
  // Predicated region
  $region62: #{cond_proglow_mpn_forward.4} parent=0 // pred_check
    _
  $region63: #{cond_proglow_mpn_forward.4} parent=0 // pred_check_branch
    %65 = sbr.rel (0) target = $region65
  $region64: #{cond_proglow_mpn_forward.4} parent=0 // pred_region
    _
  $region65: #{cond_proglow_mpn_forward.4} parent=0 // pred_fallthru
    _
  // Predicated region
  $region66: #{cond_proglow_mpn_forward.4} parent=0 // pred_check
    _
  $region67: #{cond_proglow_mpn_forward.4} parent=0 // pred_check_branch
    %67 = sbr.rel (0) target = $region69
  $region68: #{cond_proglow_mpn_forward.4} parent=0 // pred_region
    _
  $region69: #{cond_proglow_mpn_forward.4} parent=0 // pred_fallthru
    _
  // Predicated region
  $region70: #{cond_proglow_mpn_forward.4} parent=0 // pred_check
    _
  $region71: #{cond_proglow_mpn_forward.4} parent=0 // pred_check_branch
    %69 = sbr.rel (0) target = $region73
  $region72: #{cond_proglow_mpn_forward.4} parent=0 // pred_region
    _
  $region73: #{cond_proglow_mpn_forward.4} parent=0 // pred_fallthru
    _
  // Predicated region
  $region74: #{cond_proglow_mpn_forward.4} parent=0 // pred_check
    _
  $region75: #{cond_proglow_mpn_forward.4} parent=0 // pred_check_branch
    %71 = sbr.rel (0) target = $region77
  $region76: #{cond_proglow_mpn_forward.4} parent=0 // pred_region
    _
  $region77: #{cond_proglow_mpn_forward.4} parent=0 // pred_fallthru
    _
  // Predicated region
  $region78: #{cond_proglow_mpn_forward.4} parent=0 // pred_check
    _
  $region79: #{cond_proglow_mpn_forward.4} parent=0 // pred_check_branch
    %73 = sbr.rel (0) target = $region81
  $region80: #{cond_proglow_mpn_forward.4} parent=0 // pred_region
    _
  $region81: #{cond_proglow_mpn_forward.4} parent=0 // pred_fallthru
    _
  // Predicated region
  $region82: #{cond_proglow_mpn_forward.4} parent=0 // pred_check
    _
  $region83: #{cond_proglow_mpn_forward.4} parent=0 // pred_check_branch
    %75 = sbr.rel (0) target = $region85
  $region84: #{cond_proglow_mpn_forward.4} parent=0 // pred_region
    _
  $region85: #{cond_proglow_mpn_forward.4} parent=0 // pred_fallthru
    _
  // Predicated region
  $region86: #{cond_proglow_mpn_forward.4} parent=0 // pred_check
    _
  $region87: #{cond_proglow_mpn_forward.4} parent=0 // pred_check_branch
    %77 = sbr.rel (0) target = $region89
  $region88: #{cond_proglow_mpn_forward.4} parent=0 // pred_region
    _
  $region89: #{cond_proglow_mpn_forward.4} parent=0 // pred_fallthru
    _
  // Predicated region
  $region90: #{cond_proglow_mpn_forward.4} parent=0 // pred_check
    _
  $region91: #{cond_proglow_mpn_forward.4} parent=0 // pred_check_branch
    %79 = sbr.rel (0) target = $region93
  $region92: #{cond_proglow_mpn_forward.4} parent=0 // pred_region
    _
  $region93: #{cond_proglow_mpn_forward.4} parent=0 // pred_fallthru
    _
  // Predicated region
  $region94: #{cond_proglow_mpn_forward.4} parent=0 // pred_check
    _
  $region95: #{cond_proglow_mpn_forward.4} parent=0 // pred_check_branch
    %81 = sbr.rel (0) target = $region97
  $region96: #{cond_proglow_mpn_forward.4} parent=0 // pred_region
    _
  $region97: #{cond_proglow_mpn_forward.4} parent=0 // pred_fallthru
    _
  // Predicated region
  $region98: #{cond_proglow_mpn_forward.4} parent=0 // pred_check
    _
  $region99: #{cond_proglow_mpn_forward.4} parent=0 // pred_check_branch
    %83 = sbr.rel (0) target = $region101
  $region100: #{cond_proglow_mpn_forward.4} parent=0 // pred_region
    _
  $region101: #{cond_proglow_mpn_forward.4} parent=0 // pred_fallthru
    _
  // Predicated region
  $region102: #{cond_proglow_mpn_forward.4} parent=0 // pred_check
    _
  $region103: #{cond_proglow_mpn_forward.4} parent=0 // pred_check_branch
    %85 = sbr.rel (0) target = $region105
  $region104: #{cond_proglow_mpn_forward.4} parent=0 // pred_region
    _
  $region105: #{cond_proglow_mpn_forward.4} parent=0 // pred_fallthru
    _
  %v87 = vld [vmem:[%s3] sm:$0xff]
  %v88 = vld [vmem:[%s3 + $0x8] sm:$0x1]
  %v89 = vpack.c.bf16 %v88, %v87
  %v90 = vld [vmem:[%s0] sm:$0xff]
  %v91 = vld [vmem:[%s0 + $0x8] sm:$0xf]
  %v92 = vld [vmem:[%s8] sm:$0xff]
  %v93 = vld [vmem:[%s8 + $0x8] sm:$0xf]
  %v94 = vld [vmem:[%s9] sm:$0xff]
  %v95 = vld [vmem:[%s9 + $0x8] sm:$0xf]
  %97 = vset.pattern.permute.xlu0 0
  %98 = vperm.xlu0 %97, %v94
  %v99 = vpop.permute.xlu0 %98
  %102 = vset.pattern.permute.xlu0 0
  %103 = vperm.xlu0 %102, %v95
  %v104 = vpop.permute.xlu0 %103
  %v106 = vadd.f32 %v90, %v99
  %v107 = vadd.f32 %v91, %v104
  %109 = vset.pattern.permute.xlu0 0
  %110 = vperm.xlu0 %109, %v92
  %v111 = vpop.permute.xlu0 %110
  %114 = vset.pattern.permute.xlu0 0
  %115 = vperm.xlu0 %114, %v93
  %v116 = vpop.permute.xlu0 %115
  %v118 = vmul.f32 %v111, %v106
  %v119 = vmul.f32 %v116, %v107
  %v120 = vld [vmem:[%s10] sm:$0xf]
  %v121 = vld [vmem:[%s10 + $0x4] sm:$0x3]
  %v122 = vpack.c.bf16 %v119, %v118
  %v125 = vunpack.c.l.b16 %v120
  %v126 = vunpack.c.l.b16 %v121
  %v127 = vpack.c.b16 %v126, %v125
  %vm128 = vcmask 97280
  %v130 = vsel %vm128, %v127, 0
  %vm132 = vcmask 1045504
  %v134 = vsel %vm132, %v122, 0
  %136 = vmatprep.subr.bf16.mxu0 0
  %137 = vmatpush1.bf16.msra.mxu0 %v134
  %138 = vmatprep.subr.bf16.mxu0 0
  %139 = vmatpush1.bf16.msra.mxu0 0
  %140 = vmatprep.subr.bf16.mxu0 0
  %141 = vmatpush1.bf16.msra.mxu0 0
  %142 = vmatprep.subr.bf16.mxu0 0
  %143 = vmatpush1.bf16.msra.mxu0 0
  %144 = vmatprep.subr.bf16.mxu0 0
  %145 = vmatpush1.bf16.msra.mxu0 0
  %146 = vmatprep.subr.bf16.mxu0 0
  %147 = vmatpush1.bf16.msra.mxu0 0
  %148 = vmatprep.subr.bf16.mxu0 0
  %149 = vmatpush1.bf16.msra.mxu0 0
  %150 = vmatprep.subr.bf16.mxu0 0
  %151 = vmatpush1.bf16.msra.mxu0 0
  %152 = vmatprep.subr.bf16.mxu0 0
  %153 = vmatpush1.bf16.msra.mxu0 0
  %154 = vmatprep.subr.bf16.mxu0 0
  %155 = vmatpush1.bf16.msra.mxu0 0
  %156 = vmatprep.subr.bf16.mxu0 0
  %157 = vmatpush1.bf16.msra.mxu0 0
  %158 = vmatprep.subr.bf16.mxu0 0
  %159 = vmatpush1.bf16.msra.mxu0 0
  %160 = vmatprep.subr.bf16.mxu0 0
  %161 = vmatpush1.bf16.msra.mxu0 0
  %162 = vmatprep.subr.bf16.mxu0 0
  %163 = vmatpush1.bf16.msra.mxu0 0
  %164 = vmatprep.subr.bf16.mxu0 0
  %165 = vmatpush1.bf16.msra.mxu0 0
  %166 = vmatprep.subr.bf16.mxu0 0
  %167 = vmatpush1.bf16.msra.mxu0 0
  %168 = vmatprep.mubr.bf16.mxu0 0
  %169 = vmatmul.mubr.bf16.gmra.mrb[0].mxu0 %v130
  %v170 = vpop.f32.mrb[0].mxu0
  %v171 = vadd.f32 0.0, %v170
  %v172 = vpop.f32.mrb[0].mxu0
  %v173 = vpop.f32.mrb[0].mxu0
  %v174 = vadd.f32 0.0, %v173
  %v175 = vpop.f32.mrb[0].mxu0
  %176 = vdwg.mxu0
  %v177 = vld [vmem:[%s11] sm:$0xf]
  %v178 = vld [vmem:[%s11 + $0x4] sm:$0xf]
  %v179 = vld [vmem:[%s11 + $0x8] sm:$0xf]
  %v180 = vld [vmem:[%s11 + $0xc] sm:$0xf]
  %v181 = vpack.c.bf16 %v171, %v171
  %183 = vrot.lane.b32.xlu0 %v181, 9
  %v184 = vpop.permute.xlu0 %183
  %v188 = vpack.i.b16 %v89, %v89
  %v190 = vlaneseq
  %v191 = vshrl.u32 %v190, 7
  %v192 = vsub.s32 0, %v191
  %v193 = vrot.slane %v188, %v192
  %v194 = vmul.bf16 %v184, %v193
  %195 = vrot.lane.b32.xlu0 %v181, 8
  %v196 = vpop.permute.xlu0 %195
  %v199 = vshrl.u32 %v89, 16
  %v200 = vpack.i.b16 %v199, %v199
  %v202 = vlaneseq
  %v203 = vshrl.u32 %v202, 7
  %v204 = vsub.s32 0, %v203
  %v205 = vrot.slane %v200, %v204
  %v206 = vmul.bf16 %v196, %v205
  %207 = vrot.lane.b32.xlu0 %v181, 7
  %v208 = vpop.permute.xlu0 %207
  %v211 = vlaneseq
  %v212 = vshrl.u32 %v211, 7
  %v213 = vsub.s32 1, %v212
  %v214 = vrot.slane %v188, %v213
  %v215 = vmul.bf16 %v208, %v214
  %216 = vrot.lane.b32.xlu0 %v181, 1
  %v217 = vpop.permute.xlu0 %216
  %v220 = vlaneseq
  %v221 = vshrl.u32 %v220, 7
  %v222 = vsub.s32 1, %v221
  %v223 = vrot.slane %v200, %v222
  %v224 = vmul.bf16 %v217, %v223
  %v225 = vlaneseq
  %v226 = vshrl.u32 %v225, 7
  %v227 = vsub.s32 2, %v226
  %v228 = vrot.slane %v188, %v227
  %v229 = vmul.bf16 %v181, %v228
  %230 = vrot.lane.b32.xlu0 %v181, 127
  %v231 = vpop.permute.xlu0 %230
  %v234 = vlaneseq
  %v235 = vshrl.u32 %v234, 7
  %v236 = vsub.s32 2, %v235
  %v237 = vrot.slane %v200, %v236
  %v238 = vmul.bf16 %v231, %v237
  %239 = vrot.lane.b32.xlu0 %v181, 121
  %v240 = vpop.permute.xlu0 %239
  %v243 = vlaneseq
  %v244 = vshrl.u32 %v243, 7
  %v245 = vsub.s32 3, %v244
  %v246 = vrot.slane %v188, %v245
  %v247 = vmul.bf16 %v240, %v246
  %248 = vrot.lane.b32.xlu0 %v181, 120
  %v249 = vpop.permute.xlu0 %248
  %v252 = vlaneseq
  %v253 = vshrl.u32 %v252, 7
  %v254 = vsub.s32 3, %v253
  %v255 = vrot.slane %v200, %v254
  %v256 = vmul.bf16 %v249, %v255
  %257 = vrot.lane.b32.xlu0 %v181, 119
  %v258 = vpop.permute.xlu0 %257
  %v261 = vlaneseq
  %v262 = vshrl.u32 %v261, 7
  %v263 = vsub.s32 4, %v262
  %v264 = vrot.slane %v188, %v263
  %v265 = vmul.bf16 %v258, %v264
  %v267 = vrot.slane %v206, 5
  %v269 = vrot.slane %v215, 2
  %v271 = vrot.slane %v224, 7
  %v273 = vrot.slane %v229, 4
  %v275 = vrot.slane %v238, 1
  %v277 = vrot.slane %v247, 6
  %v279 = vrot.slane %v256, 3
  %vm280 = vcmask 1042432
  %v283 = vsel %vm280, %v194, %v267
  %v285 = vsel %vm132, %v283, %v269
  %vm287 = vcmask 1040384
  %v289 = vsel %vm287, %v269, %v271
  %vm290 = vcmask 1043456
  %v292 = vsel %vm290, %v289, %v273
  %vm293 = vcmask 1046528
  %v295 = vsel %vm293, %v292, %v275
  %vm297 = vcmask 1041408
  %v299 = vsel %vm297, %v275, %v277
  %vm300 = vcmask 1044480
  %v302 = vsel %vm300, %v299, %v279
  %v304 = vld [vmem:[%s12] sm:$0xff]
  %v305 = vld [vmem:[%s12 + $0x8] sm:$0xff]
  %v306 = vld [vmem:[%s12 + $0x10] sm:$0xff]
  %v307 = vld [vmem:[%s12 + $0x18] sm:$0xff]
  %309 = vset.pattern.permute.xlu0 0
  %310 = vperm.xlu0 %309, %v304
  %v311 = vpop.permute.xlu0 %310
  %314 = vset.pattern.permute.xlu0 0
  %315 = vperm.xlu0 %314, %v305
  %v316 = vpop.permute.xlu0 %315
  %319 = vset.pattern.permute.xlu0 0
  %320 = vperm.xlu0 %319, %v306
  %v321 = vpop.permute.xlu0 %320
  %324 = vset.pattern.permute.xlu0 0
  %325 = vperm.xlu0 %324, %v307
  %v326 = vpop.permute.xlu0 %325
  %v332 = vunpack.c.l.b16 %v177
  %v333 = vunpack.c.l.b16 %v178
  %v334 = vunpack.c.l.b16 %v179
  %v335 = vunpack.c.l.b16 %v180
  %v336 = vpack.c.b16 %v333, %v332
  %v337 = vpack.c.b16 %v335, %v334
  %vm338 = vcmask 441344
  %v340 = vsel %vm338, %v336, 0
  %v343 = vsel %vm338, %v337, 0
  %v346 = vsel %vm280, %v265, 0
  %348 = vmatprep.subr.bf16.mxu0 0
  %349 = vmatpush1.bf16.msra.mxu0 %v285
  %350 = vmatprep.subr.bf16.mxu0 0
  %351 = vmatpush1.bf16.msra.mxu0 %v295
  %352 = vmatprep.subr.bf16.mxu0 0
  %353 = vmatpush1.bf16.msra.mxu0 %v302
  %354 = vmatprep.subr.bf16.mxu0 0
  %355 = vmatpush1.bf16.msra.mxu0 %v346
  %356 = vmatprep.subr.bf16.mxu0 0
  %357 = vmatpush1.bf16.msra.mxu0 0
  %358 = vmatprep.subr.bf16.mxu0 0
  %359 = vmatpush1.bf16.msra.mxu0 0
  %360 = vmatprep.subr.bf16.mxu0 0
  %361 = vmatpush1.bf16.msra.mxu0 0
  %362 = vmatprep.subr.bf16.mxu0 0
  %363 = vmatpush1.bf16.msra.mxu0 0
  %364 = vmatprep.subr.bf16.mxu0 0
  %365 = vmatpush1.bf16.msra.mxu0 0
  %366 = vmatprep.subr.bf16.mxu0 0
  %367 = vmatpush1.bf16.msra.mxu0 0
  %368 = vmatprep.subr.bf16.mxu0 0
  %369 = vmatpush1.bf16.msra.mxu0 0
  %370 = vmatprep.subr.bf16.mxu0 0
  %371 = vmatpush1.bf16.msra.mxu0 0
  %372 = vmatprep.subr.bf16.mxu0 0
  %373 = vmatpush1.bf16.msra.mxu0 0
  %374 = vmatprep.subr.bf16.mxu0 0
  %375 = vmatpush1.bf16.msra.mxu0 0
  %376 = vmatprep.subr.bf16.mxu0 0
  %377 = vmatpush1.bf16.msra.mxu0 0
  %378 = vmatprep.subr.bf16.mxu0 0
  %379 = vmatpush1.bf16.msra.mxu0 0
  %380 = vmatprep.mubr.bf16.mxu0 0
  %381 = vmatmul.mubr.bf16.gmra.mrb[0].mxu0 %v340
  %v382 = vpop.f32.mrb[0].mxu0
  %v383 = vadd.f32 %v311, %v382
  %v384 = vpop.f32.mrb[0].mxu0
  %v385 = vpop.f32.mrb[0].mxu0
  %v386 = vadd.f32 %v316, %v385
  %v387 = vpop.f32.mrb[0].mxu0
  %388 = vmatprep.mubr.bf16.mxu0 0
  %389 = vmatmul.mubr.bf16.gmra.mrb[0].mxu0 %v343
  %v390 = vpop.f32.mrb[0].mxu0
  %v391 = vadd.f32 %v321, %v390
  %v392 = vpop.f32.mrb[0].mxu0
  %v393 = vpop.f32.mrb[0].mxu0
  %v394 = vadd.f32 %v326, %v393
  %v395 = vpop.f32.mrb[0].mxu0
  %396 = vdwg.mxu0
  %v397 = vmax.f32 %v383, 0.0
  %v398 = vmax.f32 %v386, 0.0
  %v399 = vmax.f32 %v391, 0.0
  %v400 = vmax.f32 %v394, 0.0
  %v401 = vld [vmem:[%s13] sm:$0xf]
  %v402 = vld [vmem:[%s13 + $0x4] sm:$0xf]
  %v403 = vld [vmem:[%s13 + $0x8] sm:$0xf]
  %v404 = vld [vmem:[%s13 + $0xc] sm:$0xf]
  %v405 = vpack.c.bf16 %v398, %v397
  %v406 = vpack.c.bf16 %v400, %v399
  %v407 = vld [vmem:[%s14] sm:$0xff]
  %v408 = vld [vmem:[%s14 + $0x8] sm:$0xff]
  %v409 = vld [vmem:[%s14 + $0x10] sm:$0xff]
  %v410 = vld [vmem:[%s14 + $0x18] sm:$0xff]
  %412 = vset.pattern.permute.xlu0 0
  %413 = vperm.xlu0 %412, %v407
  %v414 = vpop.permute.xlu0 %413
  %417 = vset.pattern.permute.xlu0 0
  %418 = vperm.xlu0 %417, %v408
  %v419 = vpop.permute.xlu0 %418
  %422 = vset.pattern.permute.xlu0 0
  %423 = vperm.xlu0 %422, %v409
  %v424 = vpop.permute.xlu0 %423
  %427 = vset.pattern.permute.xlu0 0
  %428 = vperm.xlu0 %427, %v410
  %v429 = vpop.permute.xlu0 %428
  %v435 = vunpack.c.l.b16 %v401
  %v436 = vunpack.c.l.b16 %v402
  %v437 = vunpack.c.l.b16 %v403
  %v438 = vunpack.c.l.b16 %v404
  %v439 = vpack.c.b16 %v436, %v435
  %v440 = vpack.c.b16 %v438, %v437
  %vm441 = vcmask 261120
  %v443 = vsel %vm441, %v439, 0
  %v446 = vsel %vm441, %v440, 0
  %448 = vmatprep.subr.bf16.mxu0 0
  %449 = vmatpush1.bf16.msra.mxu0 %v405
  %450 = vmatprep.subr.bf16.mxu0 0
  %451 = vmatpush1.bf16.msra.mxu0 %v406
  %452 = vmatprep.subr.bf16.mxu0 0
  %453 = vmatpush1.bf16.msra.mxu0 0
  %454 = vmatprep.subr.bf16.mxu0 0
  %455 = vmatpush1.bf16.msra.mxu0 0
  %456 = vmatprep.subr.bf16.mxu0 0
  %457 = vmatpush1.bf16.msra.mxu0 0
  %458 = vmatprep.subr.bf16.mxu0 0
  %459 = vmatpush1.bf16.msra.mxu0 0
  %460 = vmatprep.subr.bf16.mxu0 0
  %461 = vmatpush1.bf16.msra.mxu0 0
  %462 = vmatprep.subr.bf16.mxu0 0
  %463 = vmatpush1.bf16.msra.mxu0 0
  %464 = vmatprep.subr.bf16.mxu0 0
  %465 = vmatpush1.bf16.msra.mxu0 0
  %466 = vmatprep.subr.bf16.mxu0 0
  %467 = vmatpush1.bf16.msra.mxu0 0
  %468 = vmatprep.subr.bf16.mxu0 0
  %469 = vmatpush1.bf16.msra.mxu0 0
  %470 = vmatprep.subr.bf16.mxu0 0
  %471 = vmatpush1.bf16.msra.mxu0 0
  %472 = vmatprep.subr.bf16.mxu0 0
  %473 = vmatpush1.bf16.msra.mxu0 0
  %474 = vmatprep.subr.bf16.mxu0 0
  %475 = vmatpush1.bf16.msra.mxu0 0
  %476 = vmatprep.subr.bf16.mxu0 0
  %477 = vmatpush1.bf16.msra.mxu0 0
  %478 = vmatprep.subr.bf16.mxu0 0
  %479 = vmatpush1.bf16.msra.mxu0 0
  %480 = vmatprep.mubr.bf16.mxu0 0
  %481 = vmatmul.mubr.bf16.gmra.mrb[0].mxu0 %v443
  %v482 = vpop.f32.mrb[0].mxu0
  %v483 = vadd.f32 %v414, %v482
  %v484 = vpop.f32.mrb[0].mxu0
  %v485 = vpop.f32.mrb[0].mxu0
  %v486 = vadd.f32 %v419, %v485
  %v487 = vpop.f32.mrb[0].mxu0
  %488 = vmatprep.mubr.bf16.mxu0 0
  %489 = vmatmul.mubr.bf16.gmra.mrb[0].mxu0 %v446
  %v490 = vpop.f32.mrb[0].mxu0
  %v491 = vadd.f32 %v424, %v490
  %v492 = vpop.f32.mrb[0].mxu0
  %v493 = vpop.f32.mrb[0].mxu0
  %v494 = vadd.f32 %v429, %v493
  %v495 = vpop.f32.mrb[0].mxu0
  %496 = vdwg.mxu0
  %v497 = vmax.f32 %v483, 0.0
  %v498 = vmax.f32 %v486, 0.0
  %v499 = vmax.f32 %v491, 0.0
  %v500 = vmax.f32 %v494, 0.0
  %v501 = vld [vmem:[%s15] sm:$0xff]
  %v502 = vld [vmem:[%s15 + $0x8] sm:$0xf]
  %v503 = vld [vmem:[%s15 + $0xc] sm:$0x33]
  %v504 = vld [vmem:[%s15 + $0x14] sm:$0x3]
  %v505 = vpack.c.bf16 %v498, %v497
  %v506 = vpack.c.bf16 %v500, %v499
  %509 = vrot.lane.b32.xlu0 %v505, 9
  %v510 = vpop.permute.xlu0 %509
  %511 = vrot.lane.b32.xlu0 %v506, 9
  %v512 = vpop.permute.xlu0 %511
  %v517 = vmul.bf16 %v510, %v193
  %v518 = vmul.bf16 %v512, %v193
  %519 = vrot.lane.b32.xlu0 %v505, 8
  %v520 = vpop.permute.xlu0 %519
  %521 = vrot.lane.b32.xlu0 %v506, 8
  %v522 = vpop.permute.xlu0 %521
  %v527 = vmul.bf16 %v520, %v205
  %v528 = vmul.bf16 %v522, %v205
  %529 = vrot.lane.b32.xlu0 %v505, 7
  %v530 = vpop.permute.xlu0 %529
  %531 = vrot.lane.b32.xlu0 %v506, 7
  %v532 = vpop.permute.xlu0 %531
  %v537 = vmul.bf16 %v530, %v214
  %v538 = vmul.bf16 %v532, %v214
  %539 = vrot.lane.b32.xlu0 %v505, 1
  %v540 = vpop.permute.xlu0 %539
  %541 = vrot.lane.b32.xlu0 %v506, 1
  %v542 = vpop.permute.xlu0 %541
  %v547 = vmul.bf16 %v540, %v223
  %v548 = vmul.bf16 %v542, %v223
  %v549 = vmul.bf16 %v505, %v228
  %v550 = vmul.bf16 %v506, %v228
  %551 = vrot.lane.b32.xlu0 %v505, 127
  %v552 = vpop.permute.xlu0 %551
  %553 = vrot.lane.b32.xlu0 %v506, 127
  %v554 = vpop.permute.xlu0 %553
  %v559 = vmul.bf16 %v552, %v237
  %v560 = vmul.bf16 %v554, %v237
  %561 = vrot.lane.b32.xlu0 %v505, 121
  %v562 = vpop.permute.xlu0 %561
  %563 = vrot.lane.b32.xlu0 %v506, 121
  %v564 = vpop.permute.xlu0 %563
  %v569 = vmul.bf16 %v562, %v246
  %v570 = vmul.bf16 %v564, %v246
  %571 = vrot.lane.b32.xlu0 %v505, 120
  %v572 = vpop.permute.xlu0 %571
  %573 = vrot.lane.b32.xlu0 %v506, 120
  %v574 = vpop.permute.xlu0 %573
  %v579 = vmul.bf16 %v572, %v255
  %v580 = vmul.bf16 %v574, %v255
  %581 = vrot.lane.b32.xlu0 %v505, 119
  %v582 = vpop.permute.xlu0 %581
  %583 = vrot.lane.b32.xlu0 %v506, 119
  %v584 = vpop.permute.xlu0 %583
  %v589 = vmul.bf16 %v582, %v264
  %v590 = vmul.bf16 %v584, %v264
  %v591 = vld [vmem:[%s16] sm:$0xff]
  %v592 = vld [vmem:[%s16 + $0x8] sm:$0xf]
  %594 = vset.pattern.permute.xlu0 0
  %595 = vperm.xlu0 %594, %v591
  %v596 = vpop.permute.xlu0 %595
  %599 = vset.pattern.permute.xlu0 0
  %600 = vperm.xlu0 %599, %v592
  %v601 = vpop.permute.xlu0 %600
  %v607 = vunpack.c.l.b16 %v501
  %v608 = vunpack.c.h.b16 %v501
  %v609 = vunpack.c.l.b16 %v502
  %v610 = vunpack.c.l.b16 %v503
  %v611 = vunpack.c.h.b16 %v503
  %v612 = vunpack.c.l.b16 %v504
  %v613 = vpack.c.b16 %v610, %v607
  %v614 = vpack.c.b16 %v611, %v608
  %v615 = vpack.c.b16 %v612, %v609
  %v619 = vsel %vm441, %v615, 0
  %621 = vmatprep.subr.bf16.mxu0 0
  %622 = vmatpush1.bf16.msra.mxu0 %v517
  %623 = vmatprep.subr.bf16.mxu0 0
  %624 = vmatpush1.bf16.msra.mxu0 %v518
  %625 = vmatprep.subr.bf16.mxu0 0
  %626 = vmatpush1.bf16.msra.mxu0 %v527
  %627 = vmatprep.subr.bf16.mxu0 0
  %628 = vmatpush1.bf16.msra.mxu0 %v528
  %629 = vmatprep.subr.bf16.mxu0 0
  %630 = vmatpush1.bf16.msra.mxu0 %v537
  %631 = vmatprep.subr.bf16.mxu0 0
  %632 = vmatpush1.bf16.msra.mxu0 %v538
  %633 = vmatprep.subr.bf16.mxu0 0
  %634 = vmatpush1.bf16.msra.mxu0 %v547
  %635 = vmatprep.subr.bf16.mxu0 0
  %636 = vmatpush1.bf16.msra.mxu0 %v548
  %637 = vmatprep.subr.bf16.mxu0 0
  %638 = vmatpush1.bf16.msra.mxu0 %v549
  %639 = vmatprep.subr.bf16.mxu0 0
  %640 = vmatpush1.bf16.msra.mxu0 %v550
  %641 = vmatprep.subr.bf16.mxu0 0
  %642 = vmatpush1.bf16.msra.mxu0 %v559
  %643 = vmatprep.subr.bf16.mxu0 0
  %644 = vmatpush1.bf16.msra.mxu0 %v560
  %645 = vmatprep.subr.bf16.mxu0 0
  %646 = vmatpush1.bf16.msra.mxu0 %v569
  %647 = vmatprep.subr.bf16.mxu0 0
  %648 = vmatpush1.bf16.msra.mxu0 %v570
  %649 = vmatprep.subr.bf16.mxu0 0
  %650 = vmatpush1.bf16.msra.mxu0 %v579
  %651 = vmatprep.subr.bf16.mxu0 0
  %652 = vmatpush1.bf16.msra.mxu0 %v580
  %653 = vmatprep.mubr.bf16.mxu0 %v614
  %654 = vmatmul.mubr.bf16.gmra.mrb[0].mxu0 %v613
  %v655 = vpop.f32.mrb[0].mxu0
  %v656 = vadd.f32 %v596, %v655
  %v657 = vpop.f32.mrb[0].mxu0
  %v658 = vpop.f32.mrb[0].mxu0
  %v659 = vadd.f32 %v601, %v658
  %v660 = vpop.f32.mrb[0].mxu0
  %661 = vdwg.mxu0
  %662 = vmatprep.subr.bf16.mxu0 0
  %663 = vmatpush1.bf16.msra.mxu0 %v589
  %664 = vmatprep.subr.bf16.mxu0 0
  %665 = vmatpush1.bf16.msra.mxu0 %v590
  %666 = vmatprep.subr.bf16.mxu0 0
  %667 = vmatpush1.bf16.msra.mxu0 0
  %668 = vmatprep.subr.bf16.mxu0 0
  %669 = vmatpush1.bf16.msra.mxu0 0
  %670 = vmatprep.subr.bf16.mxu0 0
  %671 = vmatpush1.bf16.msra.mxu0 0
  %672 = vmatprep.subr.bf16.mxu0 0
  %673 = vmatpush1.bf16.msra.mxu0 0
  %674 = vmatprep.subr.bf16.mxu0 0
  %675 = vmatpush1.bf16.msra.mxu0 0
  %676 = vmatprep.subr.bf16.mxu0 0
  %677 = vmatpush1.bf16.msra.mxu0 0
  %678 = vmatprep.subr.bf16.mxu0 0
  %679 = vmatpush1.bf16.msra.mxu0 0
  %680 = vmatprep.subr.bf16.mxu0 0
  %681 = vmatpush1.bf16.msra.mxu0 0
  %682 = vmatprep.subr.bf16.mxu0 0
  %683 = vmatpush1.bf16.msra.mxu0 0
  %684 = vmatprep.subr.bf16.mxu0 0
  %685 = vmatpush1.bf16.msra.mxu0 0
  %686 = vmatprep.subr.bf16.mxu0 0
  %687 = vmatpush1.bf16.msra.mxu0 0
  %688 = vmatprep.subr.bf16.mxu0 0
  %689 = vmatpush1.bf16.msra.mxu0 0
  %690 = vmatprep.subr.bf16.mxu0 0
  %691 = vmatpush1.bf16.msra.mxu0 0
  %692 = vmatprep.subr.bf16.mxu0 0
  %693 = vmatpush1.bf16.msra.mxu0 0
  %694 = vmatprep.mubr.bf16.mxu0 0
  %695 = vmatmul.mubr.bf16.gmra.mrb[0].mxu0 %v619
  %v696 = vpop.f32.mrb[0].mxu0
  %v697 = vadd.f32 %v656, %v696
  %v698 = vpop.f32.mrb[0].mxu0
  %v699 = vpop.f32.mrb[0].mxu0
  %v700 = vadd.f32 %v659, %v699
  %v701 = vpop.f32.mrb[0].mxu0
  %702 = vdwg.mxu0
  %v703 = vadd.f32 %v697, 2.0
  %v704 = vxor.u32 %v703, 2147483648
  %v705 = vmul.f32 %v704, 1.442695
  %v706 = vpow.pop %v705
  %v707 = vadd.f32 %v706, 1.0
  %v708 = vrcp.pop %v707
  %v709 = vmul.f32 1.0, %v708
  %v710 = vmin.f32 %v703, 0.0
  %v711 = vand.u32 2147483647, %v703
  %v712 = vsub.f32 0.0, %v711
  %v713 = vmul.f32 %v712, 1.442695
  %v714 = vpow.pop %v713
  %v715 = vadd.f32 %v714, 1.0
  %v716 = vlog2.pop %v715
  %v717 = vmul.f32 %v716, 0.6931472
  %v718 = vsub.f32 %v710, %v717
  %v719 = vadd.f32 %v171, %v697
  %v720 = vadd.f32 %v174, %v700
  %v722 = vrot.slane %v709, 2
  %v724 = vmul.f32 %v719, %v722
  %v725 = vmul.f32 %v720, %v722
  %v726 = vsel %vm132, %v718, 0.0
  %v727 = vrot.slane %v726, 4
  %v728 = vadd.f32 %v726, %v727
  %v729 = vrot.slane %v728, 2
  %v730 = vadd.f32 %v728, %v729
  %v731 = vrot.slane %v730, 1
  %v732 = vadd.f32 %v730, %v731
  %v733 = vadd.f32 %v732, 0.0
  %v734 = vsel %vm132, %v171, %v724
  %v735 = vld [vmem:[%s17] sm:$0xff]
  %v736 = vld [vmem:[%s17 + $0x8] sm:$0xf]
  %v737 = vld [vmem:[%s18] sm:$0xff]
  %v738 = vld [vmem:[%s18 + $0x8] sm:$0xf]
  %740 = vset.pattern.permute.xlu0 0
  %741 = vperm.xlu0 %740, %v737
  %v742 = vpop.permute.xlu0 %741
  %745 = vset.pattern.permute.xlu0 0
  %746 = vperm.xlu0 %745, %v738
  %v747 = vpop.permute.xlu0 %746
  %v749 = vadd.f32 %v734, %v742
  %v750 = vadd.f32 %v725, %v747
  %752 = vset.pattern.permute.xlu0 0
  %753 = vperm.xlu0 %752, %v735
  %v754 = vpop.permute.xlu0 %753
  %757 = vset.pattern.permute.xlu0 0
  %758 = vperm.xlu0 %757, %v736
  %v759 = vpop.permute.xlu0 %758
  %v761 = vmul.f32 %v754, %v749
  %v762 = vmul.f32 %v759, %v750
  %v763 = vld [vmem:[%s19] sm:$0xf]
  %v764 = vld [vmem:[%s19 + $0x4] sm:$0x3]
  %v765 = vpack.c.bf16 %v762, %v761
  %v768 = vunpack.c.l.b16 %v763
  %v769 = vunpack.c.l.b16 %v764
  %v770 = vpack.c.b16 %v769, %v768
  %v772 = vsel %vm128, %v770, 0
  %v775 = vsel %vm132, %v765, 0
  %777 = vmatprep.subr.bf16.mxu0 0
  %778 = vmatpush1.bf16.msra.mxu0 %v775
  %779 = vmatprep.subr.bf16.mxu0 0
  %780 = vmatpush1.bf16.msra.mxu0 0
  %781 = vmatprep.subr.bf16.mxu0 0
  %782 = vmatpush1.bf16.msra.mxu0 0
  %783 = vmatprep.subr.bf16.mxu0 0
  %784 = vmatpush1.bf16.msra.mxu0 0
  %785 = vmatprep.subr.bf16.mxu0 0
  %786 = vmatpush1.bf16.msra.mxu0 0
  %787 = vmatprep.subr.bf16.mxu0 0
  %788 = vmatpush1.bf16.msra.mxu0 0
  %789 = vmatprep.subr.bf16.mxu0 0
  %790 = vmatpush1.bf16.msra.mxu0 0
  %791 = vmatprep.subr.bf16.mxu0 0
  %792 = vmatpush1.bf16.msra.mxu0 0
  %793 = vmatprep.subr.bf16.mxu0 0
  %794 = vmatpush1.bf16.msra.mxu0 0
  %795 = vmatprep.subr.bf16.mxu0 0
  %796 = vmatpush1.bf16.msra.mxu0 0
  %797 = vmatprep.subr.bf16.mxu0 0
  %798 = vmatpush1.bf16.msra.mxu0 0
  %799 = vmatprep.subr.bf16.mxu0 0
  %800 = vmatpush1.bf16.msra.mxu0 0
  %801 = vmatprep.subr.bf16.mxu0 0
  %802 = vmatpush1.bf16.msra.mxu0 0
  %803 = vmatprep.subr.bf16.mxu0 0
  %804 = vmatpush1.bf16.msra.mxu0 0
  %805 = vmatprep.subr.bf16.mxu0 0
  %806 = vmatpush1.bf16.msra.mxu0 0
  %807 = vmatprep.subr.bf16.mxu0 0
  %808 = vmatpush1.bf16.msra.mxu0 0
  %809 = vmatprep.mubr.bf16.mxu0 0
  %810 = vmatmul.mubr.bf16.gmra.mrb[0].mxu0 %v772
  %v811 = vpop.f32.mrb[0].mxu0
  %v812 = vadd.f32 0.0, %v811
  %v813 = vpop.f32.mrb[0].mxu0
  %v814 = vpop.f32.mrb[0].mxu0
  %v815 = vadd.f32 0.0, %v814
  %v816 = vpop.f32.mrb[0].mxu0
  %817 = vdwg.mxu0
  %v818 = vld [vmem:[%s20] sm:$0xf]
  %v819 = vld [vmem:[%s20 + $0x4] sm:$0xf]
  %v820 = vld [vmem:[%s20 + $0x8] sm:$0xf]
  %v821 = vld [vmem:[%s20 + $0xc] sm:$0xf]
  %v822 = vpack.c.bf16 %v812, %v812
  %824 = vrot.lane.b32.xlu0 %v822, 9
  %v825 = vpop.permute.xlu0 %824
  %v828 = vmul.bf16 %v825, %v193
  %829 = vrot.lane.b32.xlu0 %v822, 8
  %v830 = vpop.permute.xlu0 %829
  %v833 = vmul.bf16 %v830, %v205
  %834 = vrot.lane.b32.xlu0 %v822, 7
  %v835 = vpop.permute.xlu0 %834
  %v838 = vmul.bf16 %v835, %v214
  %839 = vrot.lane.b32.xlu0 %v822, 1
  %v840 = vpop.permute.xlu0 %839
  %v843 = vmul.bf16 %v840, %v223
  %v844 = vmul.bf16 %v822, %v228
  %845 = vrot.lane.b32.xlu0 %v822, 127
  %v846 = vpop.permute.xlu0 %845
  %v849 = vmul.bf16 %v846, %v237
  %850 = vrot.lane.b32.xlu0 %v822, 121
  %v851 = vpop.permute.xlu0 %850
  %v854 = vmul.bf16 %v851, %v246
  %855 = vrot.lane.b32.xlu0 %v822, 120
  %v856 = vpop.permute.xlu0 %855
  %v859 = vmul.bf16 %v856, %v255
  %860 = vrot.lane.b32.xlu0 %v822, 119
  %v861 = vpop.permute.xlu0 %860
  %v864 = vmul.bf16 %v861, %v264
  %v866 = vrot.slane %v833, 5
  %v868 = vrot.slane %v838, 2
  %v870 = vrot.slane %v843, 7
  %v872 = vrot.slane %v844, 4
  %v874 = vrot.slane %v849, 1
  %v876 = vrot.slane %v854, 6
  %v878 = vrot.slane %v859, 3
  %v881 = vsel %vm280, %v828, %v866
  %v883 = vsel %vm132, %v881, %v868
  %v886 = vsel %vm287, %v868, %v870
  %v888 = vsel %vm290, %v886, %v872
  %v890 = vsel %vm293, %v888, %v874
  %v893 = vsel %vm297, %v874, %v876
  %v895 = vsel %vm300, %v893, %v878
  %v897 = vld [vmem:[%s21] sm:$0xff]
  %v898 = vld [vmem:[%s21 + $0x8] sm:$0xff]
  %v899 = vld [vmem:[%s21 + $0x10] sm:$0xff]
  %v900 = vld [vmem:[%s21 + $0x18] sm:$0xff]
  %902 = vset.pattern.permute.xlu0 0
  %903 = vperm.xlu0 %902, %v897
  %v904 = vpop.permute.xlu0 %903
  %907 = vset.pattern.permute.xlu0 0
  %908 = vperm.xlu0 %907, %v898
  %v909 = vpop.permute.xlu0 %908
  %912 = vset.pattern.permute.xlu0 0
  %913 = vperm.xlu0 %912, %v899
  %v914 = vpop.permute.xlu0 %913
  %917 = vset.pattern.permute.xlu0 0
  %918 = vperm.xlu0 %917, %v900
  %v919 = vpop.permute.xlu0 %918
  %v925 = vunpack.c.l.b16 %v818
  %v926 = vunpack.c.l.b16 %v819
  %v927 = vunpack.c.l.b16 %v820
  %v928 = vunpack.c.l.b16 %v821
  %v929 = vpack.c.b16 %v926, %v925
  %v930 = vpack.c.b16 %v928, %v927
  %v932 = vsel %vm338, %v929, 0
  %v935 = vsel %vm338, %v930, 0
  %v938 = vsel %vm280, %v864, 0
  %940 = vmatprep.subr.bf16.mxu0 0
  %941 = vmatpush1.bf16.msra.mxu0 %v883
  %942 = vmatprep.subr.bf16.mxu0 0
  %943 = vmatpush1.bf16.msra.mxu0 %v890
  %944 = vmatprep.subr.bf16.mxu0 0
  %945 = vmatpush1.bf16.msra.mxu0 %v895
  %946 = vmatprep.subr.bf16.mxu0 0
  %947 = vmatpush1.bf16.msra.mxu0 %v938
  %948 = vmatprep.subr.bf16.mxu0 0
  %949 = vmatpush1.bf16.msra.mxu0 0
  %950 = vmatprep.subr.bf16.mxu0 0
  %951 = vmatpush1.bf16.msra.mxu0 0
  %952 = vmatprep.subr.bf16.mxu0 0
  %953 = vmatpush1.bf16.msra.mxu0 0
  %954 = vmatprep.subr.bf16.mxu0 0
  %955 = vmatpush1.bf16.msra.mxu0 0
  %956 = vmatprep.subr.bf16.mxu0 0
  %957 = vmatpush1.bf16.msra.mxu0 0
  %958 = vmatprep.subr.bf16.mxu0 0
  %959 = vmatpush1.bf16.msra.mxu0 0
  %960 = vmatprep.subr.bf16.mxu0 0
  %961 = vmatpush1.bf16.msra.mxu0 0
  %962 = vmatprep.subr.bf16.mxu0 0
  %963 = vmatpush1.bf16.msra.mxu0 0
  %964 = vmatprep.subr.bf16.mxu0 0
  %965 = vmatpush1.bf16.msra.mxu0 0
  %966 = vmatprep.subr.bf16.mxu0 0
  %967 = vmatpush1.bf16.msra.mxu0 0
  %968 = vmatprep.subr.bf16.mxu0 0
  %969 = vmatpush1.bf16.msra.mxu0 0
  %970 = vmatprep.subr.bf16.mxu0 0
  %971 = vmatpush1.bf16.msra.mxu0 0
  %972 = vmatprep.mubr.bf16.mxu0 0
  %973 = vmatmul.mubr.bf16.gmra.mrb[0].mxu0 %v932
  %v974 = vpop.f32.mrb[0].mxu0
  %v975 = vadd.f32 %v904, %v974
  %v976 = vpop.f32.mrb[0].mxu0
  %v977 = vpop.f32.mrb[0].mxu0
  %v978 = vadd.f32 %v909, %v977
  %v979 = vpop.f32.mrb[0].mxu0
  %980 = vmatprep.mubr.bf16.mxu0 0
  %981 = vmatmul.mubr.bf16.gmra.mrb[0].mxu0 %v935
  %v982 = vpop.f32.mrb[0].mxu0
  %v983 = vadd.f32 %v914, %v982
  %v984 = vpop.f32.mrb[0].mxu0
  %v985 = vpop.f32.mrb[0].mxu0
  %v986 = vadd.f32 %v919, %v985
  %v987 = vpop.f32.mrb[0].mxu0
  %988 = vdwg.mxu0
  %v989 = vmax.f32 %v975, 0.0
  %v990 = vmax.f32 %v978, 0.0
  %v991 = vmax.f32 %v983, 0.0
  %v992 = vmax.f32 %v986, 0.0
  %v993 = vld [vmem:[%s22] sm:$0xf]
  %v994 = vld [vmem:[%s22 + $0x4] sm:$0xf]
  %v995 = vld [vmem:[%s22 + $0x8] sm:$0xf]
  %v996 = vld [vmem:[%s22 + $0xc] sm:$0xf]
  %v997 = vpack.c.bf16 %v990, %v989
  %v998 = vpack.c.bf16 %v992, %v991
  %v999 = vld [vmem:[%s23] sm:$0xff]
  %v1000 = vld [vmem:[%s23 + $0x8] sm:$0xff]
  %v1001 = vld [vmem:[%s23 + $0x10] sm:$0xff]
  %v1002 = vld [vmem:[%s23 + $0x18] sm:$0xff]
  %1004 = vset.pattern.permute.xlu0 0
  %1005 = vperm.xlu0 %1004, %v999
  %v1006 = vpop.permute.xlu0 %1005
  %1009 = vset.pattern.permute.xlu0 0
  %1010 = vperm.xlu0 %1009, %v1000
  %v1011 = vpop.permute.xlu0 %1010
  %1014 = vset.pattern.permute.xlu0 0
  %1015 = vperm.xlu0 %1014, %v1001
  %v1016 = vpop.permute.xlu0 %1015
  %1019 = vset.pattern.permute.xlu0 0
  %1020 = vperm.xlu0 %1019, %v1002
  %v1021 = vpop.permute.xlu0 %1020
  %v1027 = vunpack.c.l.b16 %v993
  %v1028 = vunpack.c.l.b16 %v994
  %v1029 = vunpack.c.l.b16 %v995
  %v1030 = vunpack.c.l.b16 %v996
  %v1031 = vpack.c.b16 %v1028, %v1027
  %v1032 = vpack.c.b16 %v1030, %v1029
  %v1034 = vsel %vm441, %v1031, 0
  %v1037 = vsel %vm441, %v1032, 0
  %1039 = vmatprep.subr.bf16.mxu0 0
  %1040 = vmatpush1.bf16.msra.mxu0 %v997
  %1041 = vmatprep.subr.bf16.mxu0 0
  %1042 = vmatpush1.bf16.msra.mxu0 %v998
  %1043 = vmatprep.subr.bf16.mxu0 0
  %1044 = vmatpush1.bf16.msra.mxu0 0
  %1045 = vmatprep.subr.bf16.mxu0 0
  %1046 = vmatpush1.bf16.msra.mxu0 0
  %1047 = vmatprep.subr.bf16.mxu0 0
  %1048 = vmatpush1.bf16.msra.mxu0 0
  %1049 = vmatprep.subr.bf16.mxu0 0
  %1050 = vmatpush1.bf16.msra.mxu0 0
  %1051 = vmatprep.subr.bf16.mxu0 0
  %1052 = vmatpush1.bf16.msra.mxu0 0
  %1053 = vmatprep.subr.bf16.mxu0 0
  %1054 = vmatpush1.bf16.msra.mxu0 0
  %1055 = vmatprep.subr.bf16.mxu0 0
  %1056 = vmatpush1.bf16.msra.mxu0 0
  %1057 = vmatprep.subr.bf16.mxu0 0
  %1058 = vmatpush1.bf16.msra.mxu0 0
  %1059 = vmatprep.subr.bf16.mxu0 0
  %1060 = vmatpush1.bf16.msra.mxu0 0
  %1061 = vmatprep.subr.bf16.mxu0 0
  %1062 = vmatpush1.bf16.msra.mxu0 0
  %1063 = vmatprep.subr.bf16.mxu0 0
  %1064 = vmatpush1.bf16.msra.mxu0 0
  %1065 = vmatprep.subr.bf16.mxu0 0
  %1066 = vmatpush1.bf16.msra.mxu0 0
  %1067 = vmatprep.subr.bf16.mxu0 0
  %1068 = vmatpush1.bf16.msra.mxu0 0
  %1069 = vmatprep.subr.bf16.mxu0 0
  %1070 = vmatpush1.bf16.msra.mxu0 0
  %1071 = vmatprep.mubr.bf16.mxu0 0
  %1072 = vmatmul.mubr.bf16.gmra.mrb[0].mxu0 %v1034
  %v1073 = vpop.f32.mrb[0].mxu0
  %v1074 = vadd.f32 %v1006, %v1073
  %v1075 = vpop.f32.mrb[0].mxu0
  %v1076 = vpop.f32.mrb[0].mxu0
  %v1077 = vadd.f32 %v1011, %v1076
  %v1078 = vpop.f32.mrb[0].mxu0
  %1079 = vmatprep.mubr.bf16.mxu0 0
  %1080 = vmatmul.mubr.bf16.gmra.mrb[0].mxu0 %v1037
  %v1081 = vpop.f32.mrb[0].mxu0
  %v1082 = vadd.f32 %v1016, %v1081
  %v1083 = vpop.f32.mrb[0].mxu0
  %v1084 = vpop.f32.mrb[0].mxu0
  %v1085 = vadd.f32 %v1021, %v1084
  %v1086 = vpop.f32.mrb[0].mxu0
  %1087 = vdwg.mxu0
  %v1088 = vmax.f32 %v1074, 0.0
  %v1089 = vmax.f32 %v1077, 0.0
  %v1090 = vmax.f32 %v1082, 0.0
  %v1091 = vmax.f32 %v1085, 0.0
  %v1092 = vld [vmem:[%s24] sm:$0xff]
  %v1093 = vld [vmem:[%s24 + $0x8] sm:$0xf]
  %v1094 = vld [vmem:[%s24 + $0xc] sm:$0x33]
  %v1095 = vld [vmem:[%s24 + $0x14] sm:$0x3]
  %v1096 = vpack.c.bf16 %v1089, %v1088
  %v1097 = vpack.c.bf16 %v1091, %v1090
  %1100 = vrot.lane.b32.xlu0 %v1096, 9
  %v1101 = vpop.permute.xlu0 %1100
  %1102 = vrot.lane.b32.xlu0 %v1097, 9
  %v1103 = vpop.permute.xlu0 %1102
  %v1108 = vmul.bf16 %v1101, %v193
  %v1109 = vmul.bf16 %v1103, %v193
  %1110 = vrot.lane.b32.xlu0 %v1096, 8
  %v1111 = vpop.permute.xlu0 %1110
  %1112 = vrot.lane.b32.xlu0 %v1097, 8
  %v1113 = vpop.permute.xlu0 %1112
  %v1118 = vmul.bf16 %v1111, %v205
  %v1119 = vmul.bf16 %v1113, %v205
  %1120 = vrot.lane.b32.xlu0 %v1096, 7
  %v1121 = vpop.permute.xlu0 %1120
  %1122 = vrot.lane.b32.xlu0 %v1097, 7
  %v1123 = vpop.permute.xlu0 %1122
  %v1128 = vmul.bf16 %v1121, %v214
  %v1129 = vmul.bf16 %v1123, %v214
  %1130 = vrot.lane.b32.xlu0 %v1096, 1
  %v1131 = vpop.permute.xlu0 %1130
  %1132 = vrot.lane.b32.xlu0 %v1097, 1
  %v1133 = vpop.permute.xlu0 %1132
  %v1138 = vmul.bf16 %v1131, %v223
  %v1139 = vmul.bf16 %v1133, %v223
  %v1140 = vmul.bf16 %v1096, %v228
  %v1141 = vmul.bf16 %v1097, %v228
  %1142 = vrot.lane.b32.xlu0 %v1096, 127
  %v1143 = vpop.permute.xlu0 %1142
  %1144 = vrot.lane.b32.xlu0 %v1097, 127
  %v1145 = vpop.permute.xlu0 %1144
  %v1150 = vmul.bf16 %v1143, %v237
  %v1151 = vmul.bf16 %v1145, %v237
  %1152 = vrot.lane.b32.xlu0 %v1096, 121
  %v1153 = vpop.permute.xlu0 %1152
  %1154 = vrot.lane.b32.xlu0 %v1097, 121
  %v1155 = vpop.permute.xlu0 %1154
  %v1160 = vmul.bf16 %v1153, %v246
  %v1161 = vmul.bf16 %v1155, %v246
  %1162 = vrot.lane.b32.xlu0 %v1096, 120
  %v1163 = vpop.permute.xlu0 %1162
  %1164 = vrot.lane.b32.xlu0 %v1097, 120
  %v1165 = vpop.permute.xlu0 %1164
  %v1170 = vmul.bf16 %v1163, %v255
  %v1171 = vmul.bf16 %v1165, %v255
  %1172 = vrot.lane.b32.xlu0 %v1096, 119
  %v1173 = vpop.permute.xlu0 %1172
  %1174 = vrot.lane.b32.xlu0 %v1097, 119
  %v1175 = vpop.permute.xlu0 %1174
  %v1180 = vmul.bf16 %v1173, %v264
  %v1181 = vmul.bf16 %v1175, %v264
  %v1182 = vld [vmem:[%s25] sm:$0xff]
  %v1183 = vld [vmem:[%s25 + $0x8] sm:$0xf]
  %1185 = vset.pattern.permute.xlu0 0
  %1186 = vperm.xlu0 %1185, %v1182
  %v1187 = vpop.permute.xlu0 %1186
  %1190 = vset.pattern.permute.xlu0 0
  %1191 = vperm.xlu0 %1190, %v1183
  %v1192 = vpop.permute.xlu0 %1191
  %v1198 = vunpack.c.l.b16 %v1092
  %v1199 = vunpack.c.h.b16 %v1092
  %v1200 = vunpack.c.l.b16 %v1093
  %v1201 = vunpack.c.l.b16 %v1094
  %v1202 = vunpack.c.h.b16 %v1094
  %v1203 = vunpack.c.l.b16 %v1095
  %v1204 = vpack.c.b16 %v1201, %v1198
  %v1205 = vpack.c.b16 %v1202, %v1199
  %v1206 = vpack.c.b16 %v1203, %v1200
  %v1210 = vsel %vm441, %v1206, 0
  %1212 = vmatprep.subr.bf16.mxu0 0
  %1213 = vmatpush1.bf16.msra.mxu0 %v1108
  %1214 = vmatprep.subr.bf16.mxu0 0
  %1215 = vmatpush1.bf16.msra.mxu0 %v1109
  %1216 = vmatprep.subr.bf16.mxu0 0
  %1217 = vmatpush1.bf16.msra.mxu0 %v1118
  %1218 = vmatprep.subr.bf16.mxu0 0
  %1219 = vmatpush1.bf16.msra.mxu0 %v1119
  %1220 = vmatprep.subr.bf16.mxu0 0
  %1221 = vmatpush1.bf16.msra.mxu0 %v1128
  %1222 = vmatprep.subr.bf16.mxu0 0
  %1223 = vmatpush1.bf16.msra.mxu0 %v1129
  %1224 = vmatprep.subr.bf16.mxu0 0
  %1225 = vmatpush1.bf16.msra.mxu0 %v1138
  %1226 = vmatprep.subr.bf16.mxu0 0
  %1227 = vmatpush1.bf16.msra.mxu0 %v1139
  %1228 = vmatprep.subr.bf16.mxu0 0
  %1229 = vmatpush1.bf16.msra.mxu0 %v1140
  %1230 = vmatprep.subr.bf16.mxu0 0
  %1231 = vmatpush1.bf16.msra.mxu0 %v1141
  %1232 = vmatprep.subr.bf16.mxu0 0
  %1233 = vmatpush1.bf16.msra.mxu0 %v1150
  %1234 = vmatprep.subr.bf16.mxu0 0
  %1235 = vmatpush1.bf16.msra.mxu0 %v1151
  %1236 = vmatprep.subr.bf16.mxu0 0
  %1237 = vmatpush1.bf16.msra.mxu0 %v1160
  %1238 = vmatprep.subr.bf16.mxu0 0
  %1239 = vmatpush1.bf16.msra.mxu0 %v1161
  %1240 = vmatprep.subr.bf16.mxu0 0
  %1241 = vmatpush1.bf16.msra.mxu0 %v1170
  %1242 = vmatprep.subr.bf16.mxu0 0
  %1243 = vmatpush1.bf16.msra.mxu0 %v1171
  %1244 = vmatprep.mubr.bf16.mxu0 %v1205
  %1245 = vmatmul.mubr.bf16.gmra.mrb[0].mxu0 %v1204
  %v1246 = vpop.f32.mrb[0].mxu0
  %v1247 = vadd.f32 %v1187, %v1246
  %v1248 = vpop.f32.mrb[0].mxu0
  %v1249 = vpop.f32.mrb[0].mxu0
  %v1250 = vadd.f32 %v1192, %v1249
  %v1251 = vpop.f32.mrb[0].mxu0
  %1252 = vdwg.mxu0
  %1253 = vmatprep.subr.bf16.mxu0 0
  %1254 = vmatpush1.bf16.msra.mxu0 %v1180
  %1255 = vmatprep.subr.bf16.mxu0 0
  %1256 = vmatpush1.bf16.msra.mxu0 %v1181
  %1257 = vmatprep.subr.bf16.mxu0 0
  %1258 = vmatpush1.bf16.msra.mxu0 0
  %1259 = vmatprep.subr.bf16.mxu0 0
  %1260 = vmatpush1.bf16.msra.mxu0 0
  %1261 = vmatprep.subr.bf16.mxu0 0
  %1262 = vmatpush1.bf16.msra.mxu0 0
  %1263 = vmatprep.subr.bf16.mxu0 0
  %1264 = vmatpush1.bf16.msra.mxu0 0
  %1265 = vmatprep.subr.bf16.mxu0 0
  %1266 = vmatpush1.bf16.msra.mxu0 0
  %1267 = vmatprep.subr.bf16.mxu0 0
  %1268 = vmatpush1.bf16.msra.mxu0 0
  %1269 = vmatprep.subr.bf16.mxu0 0
  %1270 = vmatpush1.bf16.msra.mxu0 0
  %1271 = vmatprep.subr.bf16.mxu0 0
  %1272 = vmatpush1.bf16.msra.mxu0 0
  %1273 = vmatprep.subr.bf16.mxu0 0
  %1274 = vmatpush1.bf16.msra.mxu0 0
  %1275 = vmatprep.subr.bf16.mxu0 0
  %1276 = vmatpush1.bf16.msra.mxu0 0
  %1277 = vmatprep.subr.bf16.mxu0 0
  %1278 = vmatpush1.bf16.msra.mxu0 0
  %1279 = vmatprep.subr.bf16.mxu0 0
  %1280 = vmatpush1.bf16.msra.mxu0 0
  %1281 = vmatprep.subr.bf16.mxu0 0
  %1282 = vmatpush1.bf16.msra.mxu0 0
  %1283 = vmatprep.subr.bf16.mxu0 0
  %1284 = vmatpush1.bf16.msra.mxu0 0
  %1285 = vmatprep.mubr.bf16.mxu0 0
  %1286 = vmatmul.mubr.bf16.gmra.mrb[0].mxu0 %v1210
  %v1287 = vpop.f32.mrb[0].mxu0
  %v1288 = vadd.f32 %v1247, %v1287
  %v1289 = vpop.f32.mrb[0].mxu0
  %v1290 = vpop.f32.mrb[0].mxu0
  %v1291 = vadd.f32 %v1250, %v1290
  %v1292 = vpop.f32.mrb[0].mxu0
  %1293 = vdwg.mxu0
  %v1294 = vadd.f32 %v1288, 2.0
  %v1295 = vxor.u32 %v1294, 2147483648
  %v1296 = vmul.f32 %v1295, 1.442695
  %v1297 = vpow.pop %v1296
  %v1298 = vadd.f32 %v1297, 1.0
  %v1299 = vrcp.pop %v1298
  %v1300 = vmul.f32 1.0, %v1299
  %v1301 = vmin.f32 %v1294, 0.0
  %v1302 = vand.u32 2147483647, %v1294
  %v1303 = vsub.f32 0.0, %v1302
  %v1304 = vmul.f32 %v1303, 1.442695
  %v1305 = vpow.pop %v1304
  %v1306 = vadd.f32 %v1305, 1.0
  %v1307 = vlog2.pop %v1306
  %v1308 = vmul.f32 %v1307, 0.6931472
  %v1309 = vsub.f32 %v1301, %v1308
  %v1310 = vadd.f32 %v812, %v1288
  %v1311 = vadd.f32 %v815, %v1291
  %v1313 = vrot.slane %v1300, 2
  %v1315 = vmul.f32 %v1310, %v1313
  %v1316 = vmul.f32 %v1311, %v1313
  %v1317 = vsel %vm132, %v1309, 0.0
  %v1318 = vrot.slane %v1317, 4
  %v1319 = vadd.f32 %v1317, %v1318
  %v1320 = vrot.slane %v1319, 2
  %v1321 = vadd.f32 %v1319, %v1320
  %v1322 = vrot.slane %v1321, 1
  %v1323 = vadd.f32 %v1321, %v1322
  %v1324 = vadd.f32 %v733, %v1323
  %v1325 = vsel %vm132, %v812, %v1315
  %v1326 = vld [vmem:[%s5] sm:$0xf]
  %v1327 = vld [vmem:[%s5 + $0x4] sm:$0xf]
  %v1328 = vld [vmem:[%s5 + $0x8] sm:$0xf]
  %v1329 = vld [vmem:[%s1] sm:$0xf]
  %v1330 = vpack.c.bf16 %v1329, %v1329
  %1332 = vrot.lane.b32.xlu0 %v1330, 9
  %v1333 = vpop.permute.xlu0 %1332
  %v1336 = vmul.bf16 %v1333, %v193
  %1337 = vrot.lane.b32.xlu0 %v1330, 8
  %v1338 = vpop.permute.xlu0 %1337
  %v1341 = vmul.bf16 %v1338, %v205
  %1342 = vrot.lane.b32.xlu0 %v1330, 7
  %v1343 = vpop.permute.xlu0 %1342
  %v1346 = vmul.bf16 %v1343, %v214
  %1347 = vrot.lane.b32.xlu0 %v1330, 1
  %v1348 = vpop.permute.xlu0 %1347
  %v1351 = vmul.bf16 %v1348, %v223
  %v1352 = vmul.bf16 %v1330, %v228
  %1353 = vrot.lane.b32.xlu0 %v1330, 127
  %v1354 = vpop.permute.xlu0 %1353
  %v1357 = vmul.bf16 %v1354, %v237
  %1358 = vrot.lane.b32.xlu0 %v1330, 121
  %v1359 = vpop.permute.xlu0 %1358
  %v1362 = vmul.bf16 %v1359, %v246
  %1363 = vrot.lane.b32.xlu0 %v1330, 120
  %v1364 = vpop.permute.xlu0 %1363
  %v1367 = vmul.bf16 %v1364, %v255
  %1368 = vrot.lane.b32.xlu0 %v1330, 119
  %v1369 = vpop.permute.xlu0 %1368
  %v1372 = vmul.bf16 %v1369, %v264
  %v1374 = vrot.slane %v1341, 6
  %v1376 = vrot.slane %v1346, 4
  %v1378 = vrot.slane %v1351, 2
  %v1380 = vrot.slane %v1357, 6
  %v1382 = vrot.slane %v1362, 4
  %v1384 = vrot.slane %v1367, 2
  %v1387 = vsel %vm297, %v1336, %v1374
  %v1389 = vsel %vm290, %v1387, %v1376
  %v1391 = vsel %vm132, %v1389, %v1378
  %v1395 = vsel %vm297, %v1352, %v1380
  %v1397 = vsel %vm290, %v1395, %v1382
  %v1399 = vsel %vm132, %v1397, %v1384
  %v1401 = vld [vmem:[%s6] sm:$0xf]
  %v1402 = vld [vmem:[%s6 + $0x4] sm:$0xf]
  %v1403 = vld [vmem:[%s6 + $0x8] sm:$0xf]
  %v1404 = vld [vmem:[%s6 + $0xc] sm:$0xf]
  %v1405 = vld [vmem:[%s6 + $0x10] sm:$0xf]
  %v1406 = vld [vmem:[%s6 + $0x14] sm:$0xf]
  %v1407 = vld [vmem:[%s6 + $0x18] sm:$0xf]
  %v1408 = vld [vmem:[%s6 + $0x1c] sm:$0xf]
  %v1409 = vld [vmem:[%s6 + $0x20] sm:$0xf]
  %v1410 = vld [vmem:[%s6 + $0x24] sm:$0xf]
  %v1411 = vld [vmem:[%s6 + $0x28] sm:$0xf]
  %v1412 = vld [vmem:[%s6 + $0x2c] sm:$0xf]
  %v1413 = vld [vmem:[%s6 + $0x30] sm:$0xf]
  %v1414 = vld [vmem:[%s6 + $0x34] sm:$0xf]
  %v1415 = vld [vmem:[%s6 + $0x38] sm:$0xf]
  %v1416 = vld [vmem:[%s6 + $0x3c] sm:$0xf]
  %v1417 = vld [vmem:[%s6 + $0x40] sm:$0xf]
  %v1418 = vld [vmem:[%s6 + $0x44] sm:$0xf]
  %v1419 = vld [vmem:[%s6 + $0x48] sm:$0xf]
  %v1420 = vld [vmem:[%s6 + $0x4c] sm:$0xf]
  %v1421 = vld [vmem:[%s6 + $0x50] sm:$0xf]
  %v1422 = vld [vmem:[%s6 + $0x54] sm:$0xf]
  %v1423 = vld [vmem:[%s6 + $0x58] sm:$0xf]
  %v1424 = vld [vmem:[%s6 + $0x5c] sm:$0xf]
  %v1425 = vld [vmem:[%s6 + $0x60] sm:$0xf]
  %v1426 = vld [vmem:[%s6 + $0x64] sm:$0xf]
  %v1427 = vld [vmem:[%s6 + $0x68] sm:$0xf]
  %v1428 = vld [vmem:[%s2] sm:$0xff]
  %v1429 = vld [vmem:[%s2 + $0x8] sm:$0xff]
  %v1430 = vld [vmem:[%s2 + $0x10] sm:$0xff]
  %v1431 = vld [vmem:[%s2 + $0x18] sm:$0xff]
  %v1432 = vpack.c.bf16 %v1429, %v1428
  %v1433 = vpack.c.bf16 %v1431, %v1430
  %v1461 = vunpack.c.l.b16 %v1401
  %v1462 = vunpack.c.l.b16 %v1402
  %v1463 = vunpack.c.l.b16 %v1403
  %v1464 = vunpack.c.l.b16 %v1404
  %v1465 = vunpack.c.l.b16 %v1405
  %v1466 = vunpack.c.l.b16 %v1406
  %v1467 = vunpack.c.l.b16 %v1407
  %v1468 = vunpack.c.l.b16 %v1408
  %v1469 = vunpack.c.l.b16 %v1409
  %v1470 = vunpack.c.l.b16 %v1410
  %v1471 = vunpack.c.l.b16 %v1411
  %v1472 = vunpack.c.l.b16 %v1412
  %v1473 = vunpack.c.l.b16 %v1413
  %v1474 = vunpack.c.l.b16 %v1414
  %v1475 = vunpack.c.l.b16 %v1415
  %v1476 = vunpack.c.l.b16 %v1416
  %v1477 = vunpack.c.l.b16 %v1417
  %v1478 = vunpack.c.l.b16 %v1418
  %v1479 = vunpack.c.l.b16 %v1419
  %v1480 = vunpack.c.l.b16 %v1420
  %v1481 = vunpack.c.l.b16 %v1421
  %v1482 = vunpack.c.l.b16 %v1422
  %v1483 = vunpack.c.l.b16 %v1423
  %v1484 = vunpack.c.l.b16 %v1424
  %v1485 = vunpack.c.l.b16 %v1425
  %v1486 = vunpack.c.l.b16 %v1426
  %v1487 = vunpack.c.l.b16 %v1427
  %v1488 = vpack.c.b16 %v1462, %v1461
  %v1489 = vpack.c.b16 %v1464, %v1463
  %v1490 = vpack.c.b16 %v1466, %v1465
  %v1491 = vpack.c.b16 %v1468, %v1467
  %v1492 = vpack.c.b16 %v1470, %v1469
  %v1493 = vpack.c.b16 %v1472, %v1471
  %v1494 = vpack.c.b16 %v1474, %v1473
  %v1495 = vpack.c.b16 %v1476, %v1475
  %v1496 = vpack.c.b16 %v1478, %v1477
  %v1497 = vpack.c.b16 %v1480, %v1479
  %v1498 = vpack.c.b16 %v1482, %v1481
  %v1499 = vpack.c.b16 %v1484, %v1483
  %v1500 = vpack.c.b16 %v1486, %v1485
  %v1501 = vpack.c.b16 %v1487, %v1487
  %v1503 = vsel %vm441, %v1488, 0
  %v1506 = vsel %vm441, %v1489, 0
  %v1509 = vsel %vm441, %v1490, 0
  %v1512 = vsel %vm441, %v1491, 0
  %v1515 = vsel %vm441, %v1492, 0
  %v1518 = vsel %vm441, %v1493, 0
  %v1521 = vsel %vm441, %v1494, 0
  %v1524 = vsel %vm441, %v1495, 0
  %v1527 = vsel %vm441, %v1496, 0
  %v1530 = vsel %vm441, %v1497, 0
  %v1533 = vsel %vm441, %v1498, 0
  %v1536 = vsel %vm441, %v1499, 0
  %v1539 = vsel %vm441, %v1500, 0
  %v1542 = vsel %vm441, %v1501, 0
  %1544 = vmatprep.subr.bf16.mxu0 0
  %1545 = vmatpush1.bf16.msra.mxu0 %v1432
  %1546 = vmatprep.subr.bf16.mxu0 0
  %1547 = vmatpush1.bf16.msra.mxu0 %v1433
  %1548 = vmatprep.subr.bf16.mxu0 0
  %1549 = vmatpush1.bf16.msra.mxu0 0
  %1550 = vmatprep.subr.bf16.mxu0 0
  %1551 = vmatpush1.bf16.msra.mxu0 0
  %1552 = vmatprep.subr.bf16.mxu0 0
  %1553 = vmatpush1.bf16.msra.mxu0 0
  %1554 = vmatprep.subr.bf16.mxu0 0
  %1555 = vmatpush1.bf16.msra.mxu0 0
  %1556 = vmatprep.subr.bf16.mxu0 0
  %1557 = vmatpush1.bf16.msra.mxu0 0
  %1558 = vmatprep.subr.bf16.mxu0 0
  %1559 = vmatpush1.bf16.msra.mxu0 0
  %1560 = vmatprep.subr.bf16.mxu0 0
  %1561 = vmatpush1.bf16.msra.mxu0 0
  %1562 = vmatprep.subr.bf16.mxu0 0
  %1563 = vmatpush1.bf16.msra.mxu0 0
  %1564 = vmatprep.subr.bf16.mxu0 0
  %1565 = vmatpush1.bf16.msra.mxu0 0
  %1566 = vmatprep.subr.bf16.mxu0 0
  %1567 = vmatpush1.bf16.msra.mxu0 0
  %1568 = vmatprep.subr.bf16.mxu0 0
  %1569 = vmatpush1.bf16.msra.mxu0 0
  %1570 = vmatprep.subr.bf16.mxu0 0
  %1571 = vmatpush1.bf16.msra.mxu0 0
  %1572 = vmatprep.subr.bf16.mxu0 0
  %1573 = vmatpush1.bf16.msra.mxu0 0
  %1574 = vmatprep.subr.bf16.mxu0 0
  %1575 = vmatpush1.bf16.msra.mxu0 0
  %1576 = vmatprep.mubr.bf16.mxu0 0
  %1577 = vmatmul.mubr.bf16.gmra.mrb[0].mxu0 %v1503
  %v1578 = vpop.f32.mrb[0].mxu0
  %v1579 = vadd.f32 0.0, %v1578
  %v1580 = vpop.f32.mrb[0].mxu0
  %v1581 = vpop.f32.mrb[0].mxu0
  %v1582 = vadd.f32 0.0, %v1581
  %v1583 = vpop.f32.mrb[0].mxu0
  %1584 = vmatprep.mubr.bf16.mxu0 0
  %1585 = vmatmul.mubr.bf16.gmra.mrb[0].mxu0 %v1506
  %v1586 = vpop.f32.mrb[0].mxu0
  %v1587 = vadd.f32 0.0, %v1586
  %v1588 = vpop.f32.mrb[0].mxu0
  %v1589 = vpop.f32.mrb[0].mxu0
  %v1590 = vadd.f32 0.0, %v1589
  %v1591 = vpop.f32.mrb[0].mxu0
  %1592 = vmatprep.mubr.bf16.mxu0 0
  %1593 = vmatmul.mubr.bf16.gmra.mrb[0].mxu0 %v1509
  %v1594 = vpop.f32.mrb[0].mxu0
  %v1595 = vadd.f32 0.0, %v1594
  %v1596 = vpop.f32.mrb[0].mxu0
  %v1597 = vpop.f32.mrb[0].mxu0
  %v1598 = vadd.f32 0.0, %v1597
  %v1599 = vpop.f32.mrb[0].mxu0
  %1600 = vmatprep.mubr.bf16.mxu0 0
  %1601 = vmatmul.mubr.bf16.gmra.mrb[0].mxu0 %v1512
  %v1602 = vpop.f32.mrb[0].mxu0
  %v1603 = vadd.f32 0.0, %v1602
  %v1604 = vpop.f32.mrb[0].mxu0
  %v1605 = vpop.f32.mrb[0].mxu0
  %v1606 = vadd.f32 0.0, %v1605
  %v1607 = vpop.f32.mrb[0].mxu0
  %1608 = vmatprep.mubr.bf16.mxu0 0
  %1609 = vmatmul.mubr.bf16.gmra.mrb[0].mxu0 %v1515
  %v1610 = vpop.f32.mrb[0].mxu0
  %v1611 = vadd.f32 0.0, %v1610
  %v1612 = vpop.f32.mrb[0].mxu0
  %v1613 = vpop.f32.mrb[0].mxu0
  %v1614 = vadd.f32 0.0, %v1613
  %v1615 = vpop.f32.mrb[0].mxu0
  %1616 = vmatprep.mubr.bf16.mxu0 0
  %1617 = vmatmul.mubr.bf16.gmra.mrb[0].mxu0 %v1518
  %v1618 = vpop.f32.mrb[0].mxu0
  %v1619 = vadd.f32 0.0, %v1618
  %v1620 = vpop.f32.mrb[0].mxu0
  %v1621 = vpop.f32.mrb[0].mxu0
  %v1622 = vadd.f32 0.0, %v1621
  %v1623 = vpop.f32.mrb[0].mxu0
  %1624 = vmatprep.mubr.bf16.mxu0 0
  %1625 = vmatmul.mubr.bf16.gmra.mrb[0].mxu0 %v1521
  %v1626 = vpop.f32.mrb[0].mxu0
  %v1627 = vadd.f32 0.0, %v1626
  %v1628 = vpop.f32.mrb[0].mxu0
  %v1629 = vpop.f32.mrb[0].mxu0
  %v1630 = vadd.f32 0.0, %v1629
  %v1631 = vpop.f32.mrb[0].mxu0
  %1632 = vmatprep.mubr.bf16.mxu0 0
  %1633 = vmatmul.mubr.bf16.gmra.mrb[0].mxu0 %v1524
  %v1634 = vpop.f32.mrb[0].mxu0
  %v1635 = vadd.f32 0.0, %v1634
  %v1636 = vpop.f32.mrb[0].mxu0
  %v1637 = vpop.f32.mrb[0].mxu0
  %v1638 = vadd.f32 0.0, %v1637
  %v1639 = vpop.f32.mrb[0].mxu0
  %1640 = vmatprep.mubr.bf16.mxu0 0
  %1641 = vmatmul.mubr.bf16.gmra.mrb[0].mxu0 %v1527
  %v1642 = vpop.f32.mrb[0].mxu0
  %v1643 = vadd.f32 0.0, %v1642
  %v1644 = vpop.f32.mrb[0].mxu0
  %v1645 = vpop.f32.mrb[0].mxu0
  %v1646 = vadd.f32 0.0, %v1645
  %v1647 = vpop.f32.mrb[0].mxu0
  %1648 = vmatprep.mubr.bf16.mxu0 0
  %1649 = vmatmul.mubr.bf16.gmra.mrb[0].mxu0 %v1530
  %v1650 = vpop.f32.mrb[0].mxu0
  %v1651 = vadd.f32 0.0, %v1650
  %v1652 = vpop.f32.mrb[0].mxu0
  %v1653 = vpop.f32.mrb[0].mxu0
  %v1654 = vadd.f32 0.0, %v1653
  %v1655 = vpop.f32.mrb[0].mxu0
  %1656 = vmatprep.mubr.bf16.mxu0 0
  %1657 = vmatmul.mubr.bf16.gmra.mrb[0].mxu0 %v1533
  %v1658 = vpop.f32.mrb[0].mxu0
  %v1659 = vadd.f32 0.0, %v1658
  %v1660 = vpop.f32.mrb[0].mxu0
  %v1661 = vpop.f32.mrb[0].mxu0
  %v1662 = vadd.f32 0.0, %v1661
  %v1663 = vpop.f32.mrb[0].mxu0
  %1664 = vmatprep.mubr.bf16.mxu0 0
  %1665 = vmatmul.mubr.bf16.gmra.mrb[0].mxu0 %v1536
  %v1666 = vpop.f32.mrb[0].mxu0
  %v1667 = vadd.f32 0.0, %v1666
  %v1668 = vpop.f32.mrb[0].mxu0
  %v1669 = vpop.f32.mrb[0].mxu0
  %v1670 = vadd.f32 0.0, %v1669
  %v1671 = vpop.f32.mrb[0].mxu0
  %1672 = vmatprep.mubr.bf16.mxu0 0
  %1673 = vmatmul.mubr.bf16.gmra.mrb[0].mxu0 %v1539
  %v1674 = vpop.f32.mrb[0].mxu0
  %v1675 = vadd.f32 0.0, %v1674
  %v1676 = vpop.f32.mrb[0].mxu0
  %v1677 = vpop.f32.mrb[0].mxu0
  %v1678 = vadd.f32 0.0, %v1677
  %v1679 = vpop.f32.mrb[0].mxu0
  %1680 = vmatprep.mubr.bf16.mxu0 0
  %1681 = vmatmul.mubr.bf16.gmra.mrb[0].mxu0 %v1542
  %v1682 = vpop.f32.mrb[0].mxu0
  %v1683 = vadd.f32 0.0, %v1682
  %v1684 = vpop.f32.mrb[0].mxu0
  %v1685 = vpop.f32.mrb[0].mxu0
  %v1686 = vpop.f32.mrb[0].mxu0
  %1687 = vdwg.mxu0
  %v1688 = vpack.c.bf16 %v1582, %v1579
  %v1689 = vpack.c.bf16 %v1590, %v1587
  %v1690 = vpack.c.bf16 %v1598, %v1595
  %v1691 = vpack.c.bf16 %v1606, %v1603
  %v1692 = vpack.c.bf16 %v1614, %v1611
  %v1693 = vpack.c.bf16 %v1622, %v1619
  %v1694 = vpack.c.bf16 %v1630, %v1627
  %v1695 = vpack.c.bf16 %v1638, %v1635
  %v1696 = vpack.c.bf16 %v1646, %v1643
  %v1697 = vpack.c.bf16 %v1654, %v1651
  %v1698 = vpack.c.bf16 %v1662, %v1659
  %v1699 = vpack.c.bf16 %v1670, %v1667
  %v1700 = vpack.c.bf16 %v1678, %v1675
  %v1701 = vpack.c.bf16 %v1683, %v1683
  %v1702 = vld [vmem:[%s4] sm:$0x3]
  %v1703 = vpack.c.bf16 %v1702, %v1702
  %vm1704 = vcmask 15360
  %v1706 = vsel %vm1704, %v1688, 0
  %v1709 = vsel %vm1704, %v1689, 0
  %v1712 = vsel %vm1704, %v1690, 0
  %v1715 = vsel %vm1704, %v1691, 0
  %v1718 = vsel %vm1704, %v1692, 0
  %v1721 = vsel %vm1704, %v1693, 0
  %v1724 = vsel %vm1704, %v1694, 0
  %v1727 = vsel %vm1704, %v1695, 0
  %v1730 = vsel %vm1704, %v1696, 0
  %v1733 = vsel %vm1704, %v1697, 0
  %v1736 = vsel %vm1704, %v1698, 0
  %v1739 = vsel %vm1704, %v1699, 0
  %v1742 = vsel %vm1704, %v1700, 0
  %v1745 = vsel %vm1704, %v1701, 0
  %v1748 = vsel %vm287, %v1703, 0
  %1750 = vmatprep.subr.bf16.mxu0 0
  %1751 = vmatpush1.bf16.msra.mxu0 %v1748
  %1752 = vmatprep.subr.bf16.mxu0 0
  %1753 = vmatpush1.bf16.msra.mxu0 0
  %1754 = vmatprep.subr.bf16.mxu0 0
  %1755 = vmatpush1.bf16.msra.mxu0 0
  %1756 = vmatprep.subr.bf16.mxu0 0
  %1757 = vmatpush1.bf16.msra.mxu0 0
  %1758 = vmatprep.subr.bf16.mxu0 0
  %1759 = vmatpush1.bf16.msra.mxu0 0
  %1760 = vmatprep.subr.bf16.mxu0 0
  %1761 = vmatpush1.bf16.msra.mxu0 0
  %1762 = vmatprep.subr.bf16.mxu0 0
  %1763 = vmatpush1.bf16.msra.mxu0 0
  %1764 = vmatprep.subr.bf16.mxu0 0
  %1765 = vmatpush1.bf16.msra.mxu0 0
  %1766 = vmatprep.subr.bf16.mxu0 0
  %1767 = vmatpush1.bf16.msra.mxu0 0
  %1768 = vmatprep.subr.bf16.mxu0 0
  %1769 = vmatpush1.bf16.msra.mxu0 0
  %1770 = vmatprep.subr.bf16.mxu0 0
  %1771 = vmatpush1.bf16.msra.mxu0 0
  %1772 = vmatprep.subr.bf16.mxu0 0
  %1773 = vmatpush1.bf16.msra.mxu0 0
  %1774 = vmatprep.subr.bf16.mxu0 0
  %1775 = vmatpush1.bf16.msra.mxu0 0
  %1776 = vmatprep.subr.bf16.mxu0 0
  %1777 = vmatpush1.bf16.msra.mxu0 0
  %1778 = vmatprep.subr.bf16.mxu0 0
  %1779 = vmatpush1.bf16.msra.mxu0 0
  %1780 = vmatprep.subr.bf16.mxu0 0
  %1781 = vmatpush1.bf16.msra.mxu0 0
  %1782 = vmatprep.mubr.bf16.mxu0 0
  %1783 = vmatmul.mubr.bf16.gmra.mrb[0].mxu0 %v1706
  %v1784 = vpop.f32.mrb[0].mxu0
  %v1785 = vadd.f32 0.0, %v1784
  %v1786 = vpop.f32.mrb[0].mxu0
  %v1787 = vpop.f32.mrb[0].mxu0
  %v1788 = vadd.f32 0.0, %v1787
  %v1789 = vpop.f32.mrb[0].mxu0
  %1790 = vmatprep.mubr.bf16.mxu0 0
  %1791 = vmatmul.mubr.bf16.gmra.mrb[0].mxu0 %v1709
  %v1792 = vpop.f32.mrb[0].mxu0
  %v1793 = vadd.f32 0.0, %v1792
  %v1794 = vpop.f32.mrb[0].mxu0
  %v1795 = vpop.f32.mrb[0].mxu0
  %v1796 = vadd.f32 0.0, %v1795
  %v1797 = vpop.f32.mrb[0].mxu0
  %1798 = vmatprep.mubr.bf16.mxu0 0
  %1799 = vmatmul.mubr.bf16.gmra.mrb[0].mxu0 %v1712
  %v1800 = vpop.f32.mrb[0].mxu0
  %v1801 = vadd.f32 0.0, %v1800
  %v1802 = vpop.f32.mrb[0].mxu0
  %v1803 = vpop.f32.mrb[0].mxu0
  %v1804 = vadd.f32 0.0, %v1803
  %v1805 = vpop.f32.mrb[0].mxu0
  %1806 = vmatprep.mubr.bf16.mxu0 0
  %1807 = vmatmul.mubr.bf16.gmra.mrb[0].mxu0 %v1715
  %v1808 = vpop.f32.mrb[0].mxu0
  %v1809 = vadd.f32 0.0, %v1808
  %v1810 = vpop.f32.mrb[0].mxu0
  %v1811 = vpop.f32.mrb[0].mxu0
  %v1812 = vadd.f32 0.0, %v1811
  %v1813 = vpop.f32.mrb[0].mxu0
  %1814 = vmatprep.mubr.bf16.mxu0 0
  %1815 = vmatmul.mubr.bf16.gmra.mrb[0].mxu0 %v1718
  %v1816 = vpop.f32.mrb[0].mxu0
  %v1817 = vadd.f32 0.0, %v1816
  %v1818 = vpop.f32.mrb[0].mxu0
  %v1819 = vpop.f32.mrb[0].mxu0
  %v1820 = vadd.f32 0.0, %v1819
  %v1821 = vpop.f32.mrb[0].mxu0
  %1822 = vmatprep.mubr.bf16.mxu0 0
  %1823 = vmatmul.mubr.bf16.gmra.mrb[0].mxu0 %v1721
  %v1824 = vpop.f32.mrb[0].mxu0
  %v1825 = vadd.f32 0.0, %v1824
  %v1826 = vpop.f32.mrb[0].mxu0
  %v1827 = vpop.f32.mrb[0].mxu0
  %v1828 = vadd.f32 0.0, %v1827
  %v1829 = vpop.f32.mrb[0].mxu0
  %1830 = vmatprep.mubr.bf16.mxu0 0
  %1831 = vmatmul.mubr.bf16.gmra.mrb[0].mxu0 %v1724
  %v1832 = vpop.f32.mrb[0].mxu0
  %v1833 = vadd.f32 0.0, %v1832
  %v1834 = vpop.f32.mrb[0].mxu0
  %v1835 = vpop.f32.mrb[0].mxu0
  %v1836 = vadd.f32 0.0, %v1835
  %v1837 = vpop.f32.mrb[0].mxu0
  %1838 = vmatprep.mubr.bf16.mxu0 0
  %1839 = vmatmul.mubr.bf16.gmra.mrb[0].mxu0 %v1727
  %v1840 = vpop.f32.mrb[0].mxu0
  %v1841 = vadd.f32 0.0, %v1840
  %v1842 = vpop.f32.mrb[0].mxu0
  %v1843 = vpop.f32.mrb[0].mxu0
  %v1844 = vadd.f32 0.0, %v1843
  %v1845 = vpop.f32.mrb[0].mxu0
  %1846 = vmatprep.mubr.bf16.mxu0 0
  %1847 = vmatmul.mubr.bf16.gmra.mrb[0].mxu0 %v1730
  %v1848 = vpop.f32.mrb[0].mxu0
  %v1849 = vadd.f32 0.0, %v1848
  %v1850 = vpop.f32.mrb[0].mxu0
  %v1851 = vpop.f32.mrb[0].mxu0
  %v1852 = vadd.f32 0.0, %v1851
  %v1853 = vpop.f32.mrb[0].mxu0
  %1854 = vmatprep.mubr.bf16.mxu0 0
  %1855 = vmatmul.mubr.bf16.gmra.mrb[0].mxu0 %v1733
  %v1856 = vpop.f32.mrb[0].mxu0
  %v1857 = vadd.f32 0.0, %v1856
  %v1858 = vpop.f32.mrb[0].mxu0
  %v1859 = vpop.f32.mrb[0].mxu0
  %v1860 = vadd.f32 0.0, %v1859
  %v1861 = vpop.f32.mrb[0].mxu0
  %1862 = vmatprep.mubr.bf16.mxu0 0
  %1863 = vmatmul.mubr.bf16.gmra.mrb[0].mxu0 %v1736
  %v1864 = vpop.f32.mrb[0].mxu0
  %v1865 = vadd.f32 0.0, %v1864
  %v1866 = vpop.f32.mrb[0].mxu0
  %v1867 = vpop.f32.mrb[0].mxu0
  %v1868 = vadd.f32 0.0, %v1867
  %v1869 = vpop.f32.mrb[0].mxu0
  %1870 = vmatprep.mubr.bf16.mxu0 0
  %1871 = vmatmul.mubr.bf16.gmra.mrb[0].mxu0 %v1739
  %v1872 = vpop.f32.mrb[0].mxu0
  %v1873 = vadd.f32 0.0, %v1872
  %v1874 = vpop.f32.mrb[0].mxu0
  %v1875 = vpop.f32.mrb[0].mxu0
  %v1876 = vadd.f32 0.0, %v1875
  %v1877 = vpop.f32.mrb[0].mxu0
  %1878 = vmatprep.mubr.bf16.mxu0 0
  %1879 = vmatmul.mubr.bf16.gmra.mrb[0].mxu0 %v1742
  %v1880 = vpop.f32.mrb[0].mxu0
  %v1881 = vadd.f32 0.0, %v1880
  %v1882 = vpop.f32.mrb[0].mxu0
  %v1883 = vpop.f32.mrb[0].mxu0
  %v1884 = vadd.f32 0.0, %v1883
  %v1885 = vpop.f32.mrb[0].mxu0
  %1886 = vmatprep.mubr.bf16.mxu0 0
  %1887 = vmatmul.mubr.bf16.gmra.mrb[0].mxu0 %v1745
  %v1888 = vpop.f32.mrb[0].mxu0
  %v1889 = vadd.f32 0.0, %v1888
  %v1890 = vpop.f32.mrb[0].mxu0
  %v1891 = vpop.f32.mrb[0].mxu0
  %v1892 = vpop.f32.mrb[0].mxu0
  %1893 = vdwg.mxu0
  %v1894 = vlaneseq
  %v1895 = vshrl.u32 %v1894, 7
  %v1896 = vsub.s32 0, %v1895
  %v1897 = vrot.slane %v87, %v1896
  %v1898 = vmul.f32 %v1785, %v1897
  %v1899 = vmul.f32 %v1788, %v1897
  %v1900 = vmul.f32 %v1793, %v1897
  %v1901 = vadd.f32 %v1898, 0.0
  %v1902 = vadd.f32 %v1899, 0.0
  %v1903 = vadd.f32 %v1900, 0.0
  %v1904 = vlaneseq
  %v1905 = vshrl.u32 %v1904, 7
  %v1906 = vsub.s32 1, %v1905
  %v1907 = vrot.slane %v87, %v1906
  %v1908 = vmul.f32 %v1796, %v1907
  %v1909 = vmul.f32 %v1801, %v1907
  %v1910 = vmul.f32 %v1804, %v1907
  %v1911 = vadd.f32 %v1901, %v1908
  %v1912 = vadd.f32 %v1902, %v1909
  %v1913 = vadd.f32 %v1903, %v1910
  %v1914 = vlaneseq
  %v1915 = vshrl.u32 %v1914, 7
  %v1916 = vsub.s32 2, %v1915
  %v1917 = vrot.slane %v87, %v1916
  %v1918 = vmul.f32 %v1809, %v1917
  %v1919 = vmul.f32 %v1812, %v1917
  %v1920 = vmul.f32 %v1817, %v1917
  %v1921 = vadd.f32 %v1911, %v1918
  %v1922 = vadd.f32 %v1912, %v1919
  %v1923 = vadd.f32 %v1913, %v1920
  %v1924 = vlaneseq
  %v1925 = vshrl.u32 %v1924, 7
  %v1926 = vsub.s32 3, %v1925
  %v1927 = vrot.slane %v87, %v1926
  %v1928 = vmul.f32 %v1820, %v1927
  %v1929 = vmul.f32 %v1825, %v1927
  %v1930 = vmul.f32 %v1828, %v1927
  %v1931 = vadd.f32 %v1921, %v1928
  %v1932 = vadd.f32 %v1922, %v1929
  %v1933 = vadd.f32 %v1923, %v1930
  %v1934 = vlaneseq
  %v1935 = vshrl.u32 %v1934, 7
  %v1936 = vsub.s32 4, %v1935
  %v1937 = vrot.slane %v87, %v1936
  %v1938 = vmul.f32 %v1833, %v1937
  %v1939 = vmul.f32 %v1836, %v1937
  %v1940 = vmul.f32 %v1841, %v1937
  %v1941 = vadd.f32 %v1931, %v1938
  %v1942 = vadd.f32 %v1932, %v1939
  %v1943 = vadd.f32 %v1933, %v1940
  %v1944 = vlaneseq
  %v1945 = vshrl.u32 %v1944, 7
  %v1946 = vsub.s32 5, %v1945
  %v1947 = vrot.slane %v87, %v1946
  %v1948 = vmul.f32 %v1844, %v1947
  %v1949 = vmul.f32 %v1849, %v1947
  %v1950 = vmul.f32 %v1852, %v1947
  %v1951 = vadd.f32 %v1941, %v1948
  %v1952 = vadd.f32 %v1942, %v1949
  %v1953 = vadd.f32 %v1943, %v1950
  %v1954 = vlaneseq
  %v1955 = vshrl.u32 %v1954, 7
  %v1956 = vsub.s32 6, %v1955
  %v1957 = vrot.slane %v87, %v1956
  %v1958 = vmul.f32 %v1857, %v1957
  %v1959 = vmul.f32 %v1860, %v1957
  %v1960 = vmul.f32 %v1865, %v1957
  %v1961 = vadd.f32 %v1951, %v1958
  %v1962 = vadd.f32 %v1952, %v1959
  %v1963 = vadd.f32 %v1953, %v1960
  %v1964 = vlaneseq
  %v1965 = vshrl.u32 %v1964, 7
  %v1966 = vsub.s32 7, %v1965
  %v1967 = vrot.slane %v87, %v1966
  %v1968 = vmul.f32 %v1868, %v1967
  %v1969 = vmul.f32 %v1873, %v1967
  %v1970 = vmul.f32 %v1876, %v1967
  %v1971 = vadd.f32 %v1961, %v1968
  %v1972 = vadd.f32 %v1962, %v1969
  %v1973 = vadd.f32 %v1963, %v1970
  %v1974 = vlaneseq
  %v1975 = vshrl.u32 %v1974, 7
  %v1976 = vsub.s32 0, %v1975
  %v1977 = vrot.slane %v88, %v1976
  %v1978 = vmul.f32 %v1881, %v1977
  %v1979 = vmul.f32 %v1884, %v1977
  %v1980 = vmul.f32 %v1889, %v1977
  %v1981 = vadd.f32 %v1971, %v1978
  %v1982 = vadd.f32 %v1972, %v1979
  %v1983 = vadd.f32 %v1973, %v1980
  %v1987 = vunpack.c.l.b16 %v1326
  %v1988 = vunpack.c.l.b16 %v1327
  %v1989 = vunpack.c.l.b16 %v1328
  %v1990 = vpack.c.b16 %v1988, %v1987
  %v1991 = vpack.c.b16 %v1989, %v1989
  %vm1992 = vcmask 293888
  %v1994 = vsel %vm1992, %v1990, 0
  %v1997 = vsel %vm1992, %v1991, 0
  %v2000 = vsel %vm297, %v1372, 0
  %2002 = vmatprep.subr.bf16.mxu0 0
  %2003 = vmatpush1.bf16.msra.mxu0 %v1391
  %2004 = vmatprep.subr.bf16.mxu0 0
  %2005 = vmatpush1.bf16.msra.mxu0 %v1399
  %2006 = vmatprep.subr.bf16.mxu0 0
  %2007 = vmatpush1.bf16.msra.mxu0 %v2000
  %2008 = vmatprep.subr.bf16.mxu0 0
  %2009 = vmatpush1.bf16.msra.mxu0 0
  %2010 = vmatprep.subr.bf16.mxu0 0
  %2011 = vmatpush1.bf16.msra.mxu0 0
  %2012 = vmatprep.subr.bf16.mxu0 0
  %2013 = vmatpush1.bf16.msra.mxu0 0
  %2014 = vmatprep.subr.bf16.mxu0 0
  %2015 = vmatpush1.bf16.msra.mxu0 0
  %2016 = vmatprep.subr.bf16.mxu0 0
  %2017 = vmatpush1.bf16.msra.mxu0 0
  %2018 = vmatprep.subr.bf16.mxu0 0
  %2019 = vmatpush1.bf16.msra.mxu0 0
  %2020 = vmatprep.subr.bf16.mxu0 0
  %2021 = vmatpush1.bf16.msra.mxu0 0
  %2022 = vmatprep.subr.bf16.mxu0 0
  %2023 = vmatpush1.bf16.msra.mxu0 0
  %2024 = vmatprep.subr.bf16.mxu0 0
  %2025 = vmatpush1.bf16.msra.mxu0 0
  %2026 = vmatprep.subr.bf16.mxu0 0
  %2027 = vmatpush1.bf16.msra.mxu0 0
  %2028 = vmatprep.subr.bf16.mxu0 0
  %2029 = vmatpush1.bf16.msra.mxu0 0
  %2030 = vmatprep.subr.bf16.mxu0 0
  %2031 = vmatpush1.bf16.msra.mxu0 0
  %2032 = vmatprep.subr.bf16.mxu0 0
  %2033 = vmatpush1.bf16.msra.mxu0 0
  %2034 = vmatprep.mubr.bf16.mxu0 0
  %2035 = vmatmul.mubr.bf16.gmra.mrb[0].mxu0 %v1994
  %v2036 = vpop.f32.mrb[0].mxu0
  %v2037 = vadd.f32 %v1981, %v2036
  %v2038 = vpop.f32.mrb[0].mxu0
  %v2039 = vpop.f32.mrb[0].mxu0
  %v2040 = vadd.f32 %v1982, %v2039
  %v2041 = vpop.f32.mrb[0].mxu0
  %2042 = vmatprep.mubr.bf16.mxu0 0
  %2043 = vmatmul.mubr.bf16.gmra.mrb[0].mxu0 %v1997
  %v2044 = vpop.f32.mrb[0].mxu0
  %v2045 = vadd.f32 %v1983, %v2044
  %v2046 = vpop.f32.mrb[0].mxu0
  %v2047 = vpop.f32.mrb[0].mxu0
  %v2048 = vpop.f32.mrb[0].mxu0
  %2049 = vdwg.mxu0
  %v2050 = vld [vmem:[%s7] sm:$0xff]
  %v2051 = vld [vmem:[%s7 + $0x8] sm:$0xff]
  %v2052 = vld [vmem:[%s7 + $0x10] sm:$0xff]
  %2054 = vset.pattern.permute.xlu0 0
  %2055 = vperm.xlu0 %2054, %v2050
  %v2056 = vpop.permute.xlu0 %2055
  %2059 = vset.pattern.permute.xlu0 0
  %2060 = vperm.xlu0 %2059, %v2051
  %v2061 = vpop.permute.xlu0 %2060
  %2064 = vset.pattern.permute.xlu0 0
  %2065 = vperm.xlu0 %2064, %v2052
  %v2066 = vpop.permute.xlu0 %2065
  %v2068 = vadd.f32 %v2037, %v2056
  %v2069 = vadd.f32 %v2040, %v2061
  %v2070 = vadd.f32 %v2045, %v2066
  %v2071 = vsub.f32 %v1325, %v2068
  %v2072 = vsub.f32 %v1316, %v2069
  %v2073 = vsub.f32 -0.9189385, %v2069
  %v2074 = vsub.f32 -0.9189385, %v2070
  %v2075 = vmul.f32 %v2071, 0.5
  %v2076 = vmul.f32 %v2072, 0.5
  %v2077 = vmul.f32 %v2075, %v2071
  %v2078 = vmul.f32 %v2076, %v2072
  %v2079 = vmul.f32 %v2069, -2.0
  %v2080 = vmul.f32 %v2070, -2.0
  %v2081 = vmul.f32 %v2079, 1.442695
  %v2082 = vpow.pop %v2081
  %v2083 = vmul.f32 %v2080, 1.442695
  %v2084 = vpow.pop %v2083
  %v2087 = vrot.slane %v2082, 4
  %v2088 = vrot.slane %v2084, 4
  %v2089 = vsel %vm290, %v2087, %v2088
  %v2092 = vmul.f32 %v2077, %v2089
  %v2093 = vmul.f32 %v2078, %v2088
  %v2096 = vrot.slane %v2092, 4
  %v2097 = vrot.slane %v2093, 4
  %v2098 = vsel %vm290, %v2096, %v2097
  %v2101 = vsub.f32 %v2073, %v2096
  %v2102 = vsub.f32 %v2074, %v2098
  %2103 = vst [vmem:[%s26] sm:$0xff] %v1325
  %2104 = vst [vmem:[%s26 + $0x8] sm:$0xf] %v1316
  %2105 = vst [vmem:[%s27] sm:$0x1] %v1324
  %v2108 = vrot.slane %v2101, 4
  %v2109 = vrot.slane %v2102, 4
  %v2110 = vsel %vm290, %v2108, %v2109
  %v2113 = vsel %vm290, %v2109, 0.0
  %v2114 = vadd.f32 %v2110, %v2113
  %v2115 = vrot.slane %v2114, 4
  %v2116 = vadd.f32 %v2114, %v2115
  %v2117 = vrot.slane %v2116, 2
  %v2118 = vadd.f32 %v2116, %v2117
  %v2119 = vrot.slane %v2118, 1
  %v2120 = vadd.f32 %v2118, %v2119
  %2121 = vst [vmem:[%s28] sm:$0x1] %v2120
  // Predicated region
  $region106: #{cond_proglow_mpn_forward.4} parent=0 // pred_check
    _
  $region107: #{cond_proglow_mpn_forward.4} parent=0 // pred_check_branch
    %2123 = sbr.rel (0) target = $region109
  $region108: #{cond_proglow_mpn_forward.4} parent=0 // pred_region
    _
  $region109: #{cond_proglow_mpn_forward.4} parent=0 // pred_fallthru
    _
  // Predicated region
  $region110: #{cond_proglow_mpn_forward.4} parent=0 // pred_check
    _
  $region111: #{cond_proglow_mpn_forward.4} parent=0 // pred_check_branch
    %2125 = sbr.rel (0) target = $region113
  $region112: #{cond_proglow_mpn_forward.4} parent=0 // pred_region
    _
  $region113: #{cond_proglow_mpn_forward.4} parent=0 // pred_fallthru
    _
  // Predicated region
  $region114: #{cond_proglow_mpn_forward.4} parent=0 // pred_check
    _
  $region115: #{cond_proglow_mpn_forward.4} parent=0 // pred_check_branch
    %2127 = sbr.rel (0) target = $region117
  $region116: #{cond_proglow_mpn_forward.4} parent=0 // pred_region
    _
  $region117: #{cond_proglow_mpn_forward.4} parent=0 // pred_fallthru
    _
  // Predicated region
  $region118: #{cond_proglow_mpn_forward.4} parent=0 // pred_check
    _
  $region119: #{cond_proglow_mpn_forward.4} parent=0 // pred_check_branch
    %2129 = sbr.rel (0) target = $region121
  $region120: #{cond_proglow_mpn_forward.4} parent=0 // pred_region
    _
  $region121: #{cond_proglow_mpn_forward.4} parent=0 // pred_fallthru
    _
  // Predicated region
  $region122: #{cond_proglow_mpn_forward.4} parent=0 // pred_check
    _
  $region123: #{cond_proglow_mpn_forward.4} parent=0 // pred_check_branch
    %2131 = sbr.rel (0) target = $region125
  $region124: #{cond_proglow_mpn_forward.4} parent=0 // pred_region
    _
  $region125: #{cond_proglow_mpn_forward.4} parent=0 // pred_fallthru
    _
  // Predicated region
  $region126: #{cond_proglow_mpn_forward.4} parent=0 // pred_check
    _
  $region127: #{cond_proglow_mpn_forward.4} parent=0 // pred_check_branch
    %2133 = sbr.rel (0) target = $region129
  $region128: #{cond_proglow_mpn_forward.4} parent=0 // pred_region
    _
  $region129: #{cond_proglow_mpn_forward.4} parent=0 // pred_fallthru
    _

// kernel: cond_proglow_mpn_forward.5
$region0: #{cond_proglow_mpn_forward.5}
  #allocation0 [shape = 'u32[]', space=smem, size = 0x4, offset = 0x4, fixed_abs, tag = 'smem constant byte address 0x4 - core index']
  #allocation1 [shape = 'u32[144,128]{1,0:T(1,128)}', space=vmem, size = 0x12000, scoped, tag = 'internal scratch']
  %s0 = inlined_call_operand.vmem [shape: f32[12,32], index: 0, kind: input, shape index: {}]
  %s1 = inlined_call_operand.vmem [shape: f32[4,32], index: 1, kind: input, shape index: {}]
  %s2 = inlined_call_operand.vmem [shape: f32[32,2], index: 2, kind: input, shape index: {}]
  %s3 = inlined_call_operand.vmem [shape: f32[9,32], index: 3, kind: input, shape index: {}]
  %s4 = inlined_call_operand.vmem [shape: f32[2,32], index: 4, kind: input, shape index: {}]
  %s5 = inlined_call_operand.vmem [shape: bf16[24,36], index: 5, kind: input, shape index: {}]
  %s6 = inlined_call_operand.vmem [shape: bf16[216,32], index: 6, kind: input, shape index: {}]
  %s7 = inlined_call_operand.vmem [shape: f32[24,1], index: 7, kind: input, shape index: {}]
  %s8 = inlined_call_operand.vmem [shape: f32[12,1], index: 8, kind: input, shape index: {}]
  %s9 = inlined_call_operand.vmem [shape: f32[12,1], index: 9, kind: input, shape index: {}]
  %s10 = inlined_call_operand.vmem [shape: bf16[12,12], index: 10, kind: input, shape index: {}]
  %s11 = inlined_call_operand.vmem [shape: bf16[32,54], index: 11, kind: input, shape index: {}]
  %s12 = inlined_call_operand.vmem [shape: f32[32,1], index: 12, kind: input, shape index: {}]
  %s13 = inlined_call_operand.vmem [shape: bf16[32,32], index: 13, kind: input, shape index: {}]
  %s14 = inlined_call_operand.vmem [shape: f32[32,1], index: 14, kind: input, shape index: {}]
  %s15 = inlined_call_operand.vmem [shape: bf16[12,288], index: 15, kind: input, shape index: {}]
  %s16 = inlined_call_operand.vmem [shape: f32[12,1], index: 16, kind: input, shape index: {}]
  %s17 = inlined_call_operand.vmem [shape: f32[12,1], index: 17, kind: input, shape index: {}]
  %s18 = inlined_call_operand.vmem [shape: f32[12,1], index: 18, kind: input, shape index: {}]
  %s19 = inlined_call_operand.vmem [shape: bf16[12,12], index: 19, kind: input, shape index: {}]
  %s20 = inlined_call_operand.vmem [shape: bf16[32,54], index: 20, kind: input, shape index: {}]
  %s21 = inlined_call_operand.vmem [shape: f32[32,1], index: 21, kind: input, shape index: {}]
  %s22 = inlined_call_operand.vmem [shape: bf16[32,32], index: 22, kind: input, shape index: {}]
  %s23 = inlined_call_operand.vmem [shape: f32[32,1], index: 23, kind: input, shape index: {}]
  %s24 = inlined_call_operand.vmem [shape: bf16[12,288], index: 24, kind: input, shape index: {}]
  %s25 = inlined_call_operand.vmem [shape: f32[12,1], index: 25, kind: input, shape index: {}]
  %s26 = inlined_call_operand.vmem [shape: f32[12,32], index: 26, kind: output, shape index: {0}]
  %s27 = inlined_call_operand.vmem [shape: f32[1,32], index: 27, kind: output, shape index: {1}]
  %s28 = inlined_call_operand.vmem [shape: f32[1,32], index: 28, kind: output, shape index: {2}]
  %29 = xla_tuple %s26, %s27, %s28
  %s30 = sld [smem:[#allocation0]]
  $region130: #{cond_proglow_mpn_forward.5} parent=0
    _
  %s32 = ssub.s32 1, %s30
  %s33 = scalar_select 0, %s32, %s30
  // Predicated region
  $region2: #{cond_proglow_mpn_forward.5} parent=0 // pred_check
    _
  $region3: #{cond_proglow_mpn_forward.5} parent=0 // pred_check_branch
    %35 = sbr.rel (0) target = $region5
  $region4: #{cond_proglow_mpn_forward.5} parent=0 // pred_region
    _
  $region5: #{cond_proglow_mpn_forward.5} parent=0 // pred_fallthru
    _
  // Predicated region
  $region6: #{cond_proglow_mpn_forward.5} parent=0 // pred_check
    _
  $region7: #{cond_proglow_mpn_forward.5} parent=0 // pred_check_branch
    %37 = sbr.rel (0) target = $region9
  $region8: #{cond_proglow_mpn_forward.5} parent=0 // pred_region
    _
  $region9: #{cond_proglow_mpn_forward.5} parent=0 // pred_fallthru
    _
  // Predicated region
  $region10: #{cond_proglow_mpn_forward.5} parent=0 // pred_check
    _
  $region11: #{cond_proglow_mpn_forward.5} parent=0 // pred_check_branch
    %39 = sbr.rel (0) target = $region13
  $region12: #{cond_proglow_mpn_forward.5} parent=0 // pred_region
    _
  $region13: #{cond_proglow_mpn_forward.5} parent=0 // pred_fallthru
    _
  // Predicated region
  $region14: #{cond_proglow_mpn_forward.5} parent=0 // pred_check
    _
  $region15: #{cond_proglow_mpn_forward.5} parent=0 // pred_check_branch
    %41 = sbr.rel (0) target = $region17
  $region16: #{cond_proglow_mpn_forward.5} parent=0 // pred_region
    _
  $region17: #{cond_proglow_mpn_forward.5} parent=0 // pred_fallthru
    _
  // Predicated region
  $region18: #{cond_proglow_mpn_forward.5} parent=0 // pred_check
    _
  $region19: #{cond_proglow_mpn_forward.5} parent=0 // pred_check_branch
    %43 = sbr.rel (0) target = $region21
  $region20: #{cond_proglow_mpn_forward.5} parent=0 // pred_region
    _
  $region21: #{cond_proglow_mpn_forward.5} parent=0 // pred_fallthru
    _
  // Predicated region
  $region22: #{cond_proglow_mpn_forward.5} parent=0 // pred_check
    _
  $region23: #{cond_proglow_mpn_forward.5} parent=0 // pred_check_branch
    %45 = sbr.rel (0) target = $region25
  $region24: #{cond_proglow_mpn_forward.5} parent=0 // pred_region
    _
  $region25: #{cond_proglow_mpn_forward.5} parent=0 // pred_fallthru
    _
  // Predicated region
  $region26: #{cond_proglow_mpn_forward.5} parent=0 // pred_check
    _
  $region27: #{cond_proglow_mpn_forward.5} parent=0 // pred_check_branch
    %47 = sbr.rel (0) target = $region29
  $region28: #{cond_proglow_mpn_forward.5} parent=0 // pred_region
    _
  $region29: #{cond_proglow_mpn_forward.5} parent=0 // pred_fallthru
    _
  // Predicated region
  $region30: #{cond_proglow_mpn_forward.5} parent=0 // pred_check
    _
  $region31: #{cond_proglow_mpn_forward.5} parent=0 // pred_check_branch
    %49 = sbr.rel (0) target = $region33
  $region32: #{cond_proglow_mpn_forward.5} parent=0 // pred_region
    _
  $region33: #{cond_proglow_mpn_forward.5} parent=0 // pred_fallthru
    _
  // Predicated region
  $region34: #{cond_proglow_mpn_forward.5} parent=0 // pred_check
    _
  $region35: #{cond_proglow_mpn_forward.5} parent=0 // pred_check_branch
    %51 = sbr.rel (0) target = $region37
  $region36: #{cond_proglow_mpn_forward.5} parent=0 // pred_region
    _
  $region37: #{cond_proglow_mpn_forward.5} parent=0 // pred_fallthru
    _
  // Predicated region
  $region38: #{cond_proglow_mpn_forward.5} parent=0 // pred_check
    _
  $region39: #{cond_proglow_mpn_forward.5} parent=0 // pred_check_branch
    %53 = sbr.rel (0) target = $region41
  $region40: #{cond_proglow_mpn_forward.5} parent=0 // pred_region
    _
  $region41: #{cond_proglow_mpn_forward.5} parent=0 // pred_fallthru
    _
  // Predicated region
  $region42: #{cond_proglow_mpn_forward.5} parent=0 // pred_check
    _
  $region43: #{cond_proglow_mpn_forward.5} parent=0 // pred_check_branch
    %55 = sbr.rel (0) target = $region45
  $region44: #{cond_proglow_mpn_forward.5} parent=0 // pred_region
    _
  $region45: #{cond_proglow_mpn_forward.5} parent=0 // pred_fallthru
    _
  // Predicated region
  $region46: #{cond_proglow_mpn_forward.5} parent=0 // pred_check
    _
  $region47: #{cond_proglow_mpn_forward.5} parent=0 // pred_check_branch
    %57 = sbr.rel (0) target = $region49
  $region48: #{cond_proglow_mpn_forward.5} parent=0 // pred_region
    _
  $region49: #{cond_proglow_mpn_forward.5} parent=0 // pred_fallthru
    _
  // Predicated region
  $region50: #{cond_proglow_mpn_forward.5} parent=0 // pred_check
    _
  $region51: #{cond_proglow_mpn_forward.5} parent=0 // pred_check_branch
    %59 = sbr.rel (0) target = $region53
  $region52: #{cond_proglow_mpn_forward.5} parent=0 // pred_region
    _
  $region53: #{cond_proglow_mpn_forward.5} parent=0 // pred_fallthru
    _
  // Predicated region
  $region54: #{cond_proglow_mpn_forward.5} parent=0 // pred_check
    _
  $region55: #{cond_proglow_mpn_forward.5} parent=0 // pred_check_branch
    %61 = sbr.rel (0) target = $region57
  $region56: #{cond_proglow_mpn_forward.5} parent=0 // pred_region
    _
  $region57: #{cond_proglow_mpn_forward.5} parent=0 // pred_fallthru
    _
  // Predicated region
  $region58: #{cond_proglow_mpn_forward.5} parent=0 // pred_check
    _
  $region59: #{cond_proglow_mpn_forward.5} parent=0 // pred_check_branch
    %63 = sbr.rel (0) target = $region61
  $region60: #{cond_proglow_mpn_forward.5} parent=0 // pred_region
    _
  $region61: #{cond_proglow_mpn_forward.5} parent=0 // pred_fallthru
    _
  // Predicated region
  $region62: #{cond_proglow_mpn_forward.5} parent=0 // pred_check
    _
  $region63: #{cond_proglow_mpn_forward.5} parent=0 // pred_check_branch
    %65 = sbr.rel (0) target = $region65
  $region64: #{cond_proglow_mpn_forward.5} parent=0 // pred_region
    _
  $region65: #{cond_proglow_mpn_forward.5} parent=0 // pred_fallthru
    _
  // Predicated region
  $region66: #{cond_proglow_mpn_forward.5} parent=0 // pred_check
    _
  $region67: #{cond_proglow_mpn_forward.5} parent=0 // pred_check_branch
    %67 = sbr.rel (0) target = $region69
  $region68: #{cond_proglow_mpn_forward.5} parent=0 // pred_region
    _
  $region69: #{cond_proglow_mpn_forward.5} parent=0 // pred_fallthru
    _
  // Predicated region
  $region70: #{cond_proglow_mpn_forward.5} parent=0 // pred_check
    _
  $region71: #{cond_proglow_mpn_forward.5} parent=0 // pred_check_branch
    %69 = sbr.rel (0) target = $region73
  $region72: #{cond_proglow_mpn_forward.5} parent=0 // pred_region
    _
  $region73: #{cond_proglow_mpn_forward.5} parent=0 // pred_fallthru
    _
  // Predicated region
  $region74: #{cond_proglow_mpn_forward.5} parent=0 // pred_check
    _
  $region75: #{cond_proglow_mpn_forward.5} parent=0 // pred_check_branch
    %71 = sbr.rel (0) target = $region77
  $region76: #{cond_proglow_mpn_forward.5} parent=0 // pred_region
    _
  $region77: #{cond_proglow_mpn_forward.5} parent=0 // pred_fallthru
    _
  // Predicated region
  $region78: #{cond_proglow_mpn_forward.5} parent=0 // pred_check
    _
  $region79: #{cond_proglow_mpn_forward.5} parent=0 // pred_check_branch
    %73 = sbr.rel (0) target = $region81
  $region80: #{cond_proglow_mpn_forward.5} parent=0 // pred_region
    _
  $region81: #{cond_proglow_mpn_forward.5} parent=0 // pred_fallthru
    _
  // Predicated region
  $region82: #{cond_proglow_mpn_forward.5} parent=0 // pred_check
    _
  $region83: #{cond_proglow_mpn_forward.5} parent=0 // pred_check_branch
    %75 = sbr.rel (0) target = $region85
  $region84: #{cond_proglow_mpn_forward.5} parent=0 // pred_region
    _
  $region85: #{cond_proglow_mpn_forward.5} parent=0 // pred_fallthru
    _
  // Predicated region
  $region86: #{cond_proglow_mpn_forward.5} parent=0 // pred_check
    _
  $region87: #{cond_proglow_mpn_forward.5} parent=0 // pred_check_branch
    %77 = sbr.rel (0) target = $region89
  $region88: #{cond_proglow_mpn_forward.5} parent=0 // pred_region
    _
  $region89: #{cond_proglow_mpn_forward.5} parent=0 // pred_fallthru
    _
  // Predicated region
  $region90: #{cond_proglow_mpn_forward.5} parent=0 // pred_check
    _
  $region91: #{cond_proglow_mpn_forward.5} parent=0 // pred_check_branch
    %79 = sbr.rel (0) target = $region93
  $region92: #{cond_proglow_mpn_forward.5} parent=0 // pred_region
    _
  $region93: #{cond_proglow_mpn_forward.5} parent=0 // pred_fallthru
    _
  // Predicated region
  $region94: #{cond_proglow_mpn_forward.5} parent=0 // pred_check
    _
  $region95: #{cond_proglow_mpn_forward.5} parent=0 // pred_check_branch
    %81 = sbr.rel (0) target = $region97
  $region96: #{cond_proglow_mpn_forward.5} parent=0 // pred_region
    _
  $region97: #{cond_proglow_mpn_forward.5} parent=0 // pred_fallthru
    _
  // Predicated region
  $region98: #{cond_proglow_mpn_forward.5} parent=0 // pred_check
    _
  $region99: #{cond_proglow_mpn_forward.5} parent=0 // pred_check_branch
    %83 = sbr.rel (0) target = $region101
  $region100: #{cond_proglow_mpn_forward.5} parent=0 // pred_region
    _
  $region101: #{cond_proglow_mpn_forward.5} parent=0 // pred_fallthru
    _
  // Predicated region
  $region102: #{cond_proglow_mpn_forward.5} parent=0 // pred_check
    _
  $region103: #{cond_proglow_mpn_forward.5} parent=0 // pred_check_branch
    %85 = sbr.rel (0) target = $region105
  $region104: #{cond_proglow_mpn_forward.5} parent=0 // pred_region
    _
  $region105: #{cond_proglow_mpn_forward.5} parent=0 // pred_fallthru
    _
  %v87 = vld [vmem:[%s3] sm:$0xff]
  %v88 = vld [vmem:[%s3 + $0x8] sm:$0x1]
  %v89 = vpack.c.bf16 %v88, %v87
  %v90 = vld [vmem:[%s0] sm:$0xff]
  %v91 = vld [vmem:[%s0 + $0x8] sm:$0xf]
  %v92 = vld [vmem:[%s8] sm:$0xff]
  %v93 = vld [vmem:[%s8 + $0x8] sm:$0xf]
  %v94 = vld [vmem:[%s9] sm:$0xff]
  %v95 = vld [vmem:[%s9 + $0x8] sm:$0xf]
  %97 = vset.pattern.permute.xlu0 0
  %98 = vperm.xlu0 %97, %v94
  %v99 = vpop.permute.xlu0 %98
  %102 = vset.pattern.permute.xlu0 0
  %103 = vperm.xlu0 %102, %v95
  %v104 = vpop.permute.xlu0 %103
  %v106 = vadd.f32 %v90, %v99
  %v107 = vadd.f32 %v91, %v104
  %109 = vset.pattern.permute.xlu0 0
  %110 = vperm.xlu0 %109, %v92
  %v111 = vpop.permute.xlu0 %110
  %114 = vset.pattern.permute.xlu0 0
  %115 = vperm.xlu0 %114, %v93
  %v116 = vpop.permute.xlu0 %115
  %v118 = vmul.f32 %v111, %v106
  %v119 = vmul.f32 %v116, %v107
  %v120 = vld [vmem:[%s10] sm:$0xf]
  %v121 = vld [vmem:[%s10 + $0x4] sm:$0x3]
  %v122 = vpack.c.bf16 %v119, %v118
  %v125 = vunpack.c.l.b16 %v120
  %v126 = vunpack.c.l.b16 %v121
  %v127 = vpack.c.b16 %v126, %v125
  %vm128 = vcmask 97280
  %v130 = vsel %vm128, %v127, 0
  %vm132 = vcmask 1045504
  %v134 = vsel %vm132, %v122, 0
  %136 = vmatprep.subr.bf16.mxu0 0
  %137 = vmatpush1.bf16.msra.mxu0 %v134
  %138 = vmatprep.subr.bf16.mxu0 0
  %139 = vmatpush1.bf16.msra.mxu0 0
  %140 = vmatprep.subr.bf16.mxu0 0
  %141 = vmatpush1.bf16.msra.mxu0 0
  %142 = vmatprep.subr.bf16.mxu0 0
  %143 = vmatpush1.bf16.msra.mxu0 0
  %144 = vmatprep.subr.bf16.mxu0 0
  %145 = vmatpush1.bf16.msra.mxu0 0
  %146 = vmatprep.subr.bf16.mxu0 0
  %147 = vmatpush1.bf16.msra.mxu0 0
  %148 = vmatprep.subr.bf16.mxu0 0
  %149 = vmatpush1.bf16.msra.mxu0 0
  %150 = vmatprep.subr.bf16.mxu0 0
  %151 = vmatpush1.bf16.msra.mxu0 0
  %152 = vmatprep.subr.bf16.mxu0 0
  %153 = vmatpush1.bf16.msra.mxu0 0
  %154 = vmatprep.subr.bf16.mxu0 0
  %155 = vmatpush1.bf16.msra.mxu0 0
  %156 = vmatprep.subr.bf16.mxu0 0
  %157 = vmatpush1.bf16.msra.mxu0 0
  %158 = vmatprep.subr.bf16.mxu0 0
  %159 = vmatpush1.bf16.msra.mxu0 0
  %160 = vmatprep.subr.bf16.mxu0 0
  %161 = vmatpush1.bf16.msra.mxu0 0
  %162 = vmatprep.subr.bf16.mxu0 0
  %163 = vmatpush1.bf16.msra.mxu0 0
  %164 = vmatprep.subr.bf16.mxu0 0
  %165 = vmatpush1.bf16.msra.mxu0 0
  %166 = vmatprep.subr.bf16.mxu0 0
  %167 = vmatpush1.bf16.msra.mxu0 0
  %168 = vmatprep.mubr.bf16.mxu0 0
  %169 = vmatmul.mubr.bf16.gmra.mrb[0].mxu0 %v130
  %v170 = vpop.f32.mrb[0].mxu0
  %v171 = vadd.f32 0.0, %v170
  %v172 = vpop.f32.mrb[0].mxu0
  %v173 = vpop.f32.mrb[0].mxu0
  %v174 = vadd.f32 0.0, %v173
  %v175 = vpop.f32.mrb[0].mxu0
  %176 = vdwg.mxu0
  %v177 = vld [vmem:[%s11] sm:$0xf]
  %v178 = vld [vmem:[%s11 + $0x4] sm:$0xf]
  %v179 = vld [vmem:[%s11 + $0x8] sm:$0xf]
  %v180 = vld [vmem:[%s11 + $0xc] sm:$0xf]
  %v181 = vpack.c.bf16 %v171, %v171
  %183 = vrot.lane.b32.xlu0 %v181, 101
  %v184 = vpop.permute.xlu0 %183
  %185 = vrot.lane.b32.xlu0 %v181, 5
  %v186 = vpop.permute.xlu0 %185
  %vm187 = vcmask 39936
  %v190 = vsel %vm187, %v184, %v186
  %v193 = vpack.i.b16 %v89, %v89
  %v195 = vlaneseq
  %v196 = vshrl.u32 %v195, 7
  %v197 = vsub.s32 0, %v196
  %v198 = vrot.slane %v193, %v197
  %v199 = vmul.bf16 %v190, %v198
  %200 = vrot.lane.b32.xlu0 %v181, 100
  %v201 = vpop.permute.xlu0 %200
  %202 = vrot.lane.b32.xlu0 %v181, 4
  %v203 = vpop.permute.xlu0 %202
  %vm204 = vcmask 31744
  %v207 = vsel %vm204, %v201, %v203
  %v209 = vshrl.u32 %v89, 16
  %v210 = vpack.i.b16 %v209, %v209
  %v212 = vlaneseq
  %v213 = vshrl.u32 %v212, 7
  %v214 = vsub.s32 0, %v213
  %v215 = vrot.slane %v210, %v214
  %v216 = vmul.bf16 %v207, %v215
  %217 = vrot.lane.b32.xlu0 %v181, 99
  %v218 = vpop.permute.xlu0 %217
  %219 = vrot.lane.b32.xlu0 %v181, 3
  %v220 = vpop.permute.xlu0 %219
  %vm221 = vcmask 23552
  %v224 = vsel %vm221, %v218, %v220
  %v226 = vlaneseq
  %v227 = vshrl.u32 %v226, 7
  %v228 = vsub.s32 1, %v227
  %v229 = vrot.slane %v193, %v228
  %v230 = vmul.bf16 %v224, %v229
  %231 = vrot.lane.b32.xlu0 %v181, 97
  %v232 = vpop.permute.xlu0 %231
  %233 = vrot.lane.b32.xlu0 %v181, 1
  %v234 = vpop.permute.xlu0 %233
  %vm235 = vcmask 7168
  %v238 = vsel %vm235, %v232, %v234
  %v240 = vlaneseq
  %v241 = vshrl.u32 %v240, 7
  %v242 = vsub.s32 1, %v241
  %v243 = vrot.slane %v210, %v242
  %v244 = vmul.bf16 %v238, %v243
  %v245 = vlaneseq
  %v246 = vshrl.u32 %v245, 7
  %v247 = vsub.s32 2, %v246
  %v248 = vrot.slane %v193, %v247
  %v249 = vmul.bf16 %v181, %v248
  %250 = vrot.lane.b32.xlu0 %v181, 127
  %v251 = vpop.permute.xlu0 %250
  %252 = vrot.lane.b32.xlu0 %v181, 31
  %v253 = vpop.permute.xlu0 %252
  %vm254 = vcmask 252928
  %v257 = vsel %vm254, %v251, %v253
  %v259 = vlaneseq
  %v260 = vshrl.u32 %v259, 7
  %v261 = vsub.s32 2, %v260
  %v262 = vrot.slane %v210, %v261
  %v263 = vmul.bf16 %v257, %v262
  %264 = vrot.lane.b32.xlu0 %v181, 125
  %v265 = vpop.permute.xlu0 %264
  %266 = vrot.lane.b32.xlu0 %v181, 29
  %v267 = vpop.permute.xlu0 %266
  %vm268 = vcmask 236544
  %v271 = vsel %vm268, %v265, %v267
  %v273 = vlaneseq
  %v274 = vshrl.u32 %v273, 7
  %v275 = vsub.s32 3, %v274
  %v276 = vrot.slane %v193, %v275
  %v277 = vmul.bf16 %v271, %v276
  %278 = vrot.lane.b32.xlu0 %v181, 124
  %v279 = vpop.permute.xlu0 %278
  %280 = vrot.lane.b32.xlu0 %v181, 28
  %v281 = vpop.permute.xlu0 %280
  %vm282 = vcmask 228352
  %v285 = vsel %vm282, %v279, %v281
  %v287 = vlaneseq
  %v288 = vshrl.u32 %v287, 7
  %v289 = vsub.s32 3, %v288
  %v290 = vrot.slane %v210, %v289
  %v291 = vmul.bf16 %v285, %v290
  %292 = vrot.lane.b32.xlu0 %v181, 123
  %v293 = vpop.permute.xlu0 %292
  %294 = vrot.lane.b32.xlu0 %v181, 27
  %v295 = vpop.permute.xlu0 %294
  %vm296 = vcmask 220160
  %v299 = vsel %vm296, %v293, %v295
  %v301 = vlaneseq
  %v302 = vshrl.u32 %v301, 7
  %v303 = vsub.s32 4, %v302
  %v304 = vrot.slane %v193, %v303
  %v305 = vmul.bf16 %v299, %v304
  %v307 = vrot.slane %v216, 5
  %v309 = vrot.slane %v230, 2
  %v311 = vrot.slane %v244, 7
  %v313 = vrot.slane %v249, 4
  %v315 = vrot.slane %v263, 1
  %v317 = vrot.slane %v277, 6
  %v319 = vrot.slane %v291, 3
  %vm320 = vcmask 1042432
  %v323 = vsel %vm320, %v199, %v307
  %v325 = vsel %vm132, %v323, %v309
  %vm327 = vcmask 1040384
  %v329 = vsel %vm327, %v309, %v311
  %vm330 = vcmask 1043456
  %v332 = vsel %vm330, %v329, %v313
  %vm333 = vcmask 1046528
  %v335 = vsel %vm333, %v332, %v315
  %vm337 = vcmask 1041408
  %v339 = vsel %vm337, %v315, %v317
  %vm340 = vcmask 1044480
  %v342 = vsel %vm340, %v339, %v319
  %v344 = vld [vmem:[%s12] sm:$0xff]
  %v345 = vld [vmem:[%s12 + $0x8] sm:$0xff]
  %v346 = vld [vmem:[%s12 + $0x10] sm:$0xff]
  %v347 = vld [vmem:[%s12 + $0x18] sm:$0xff]
  %349 = vset.pattern.permute.xlu0 0
  %350 = vperm.xlu0 %349, %v344
  %v351 = vpop.permute.xlu0 %350
  %354 = vset.pattern.permute.xlu0 0
  %355 = vperm.xlu0 %354, %v345
  %v356 = vpop.permute.xlu0 %355
  %359 = vset.pattern.permute.xlu0 0
  %360 = vperm.xlu0 %359, %v346
  %v361 = vpop.permute.xlu0 %360
  %364 = vset.pattern.permute.xlu0 0
  %365 = vperm.xlu0 %364, %v347
  %v366 = vpop.permute.xlu0 %365
  %v372 = vunpack.c.l.b16 %v177
  %v373 = vunpack.c.l.b16 %v178
  %v374 = vunpack.c.l.b16 %v179
  %v375 = vunpack.c.l.b16 %v180
  %v376 = vpack.c.b16 %v373, %v372
  %v377 = vpack.c.b16 %v375, %v374
  %vm378 = vcmask 441344
  %v380 = vsel %vm378, %v376, 0
  %v383 = vsel %vm378, %v377, 0
  %v386 = vsel %vm320, %v305, 0
  %388 = vmatprep.subr.bf16.mxu0 0
  %389 = vmatpush1.bf16.msra.mxu0 %v325
  %390 = vmatprep.subr.bf16.mxu0 0
  %391 = vmatpush1.bf16.msra.mxu0 %v335
  %392 = vmatprep.subr.bf16.mxu0 0
  %393 = vmatpush1.bf16.msra.mxu0 %v342
  %394 = vmatprep.subr.bf16.mxu0 0
  %395 = vmatpush1.bf16.msra.mxu0 %v386
  %396 = vmatprep.subr.bf16.mxu0 0
  %397 = vmatpush1.bf16.msra.mxu0 0
  %398 = vmatprep.subr.bf16.mxu0 0
  %399 = vmatpush1.bf16.msra.mxu0 0
  %400 = vmatprep.subr.bf16.mxu0 0
  %401 = vmatpush1.bf16.msra.mxu0 0
  %402 = vmatprep.subr.bf16.mxu0 0
  %403 = vmatpush1.bf16.msra.mxu0 0
  %404 = vmatprep.subr.bf16.mxu0 0
  %405 = vmatpush1.bf16.msra.mxu0 0
  %406 = vmatprep.subr.bf16.mxu0 0
  %407 = vmatpush1.bf16.msra.mxu0 0
  %408 = vmatprep.subr.bf16.mxu0 0
  %409 = vmatpush1.bf16.msra.mxu0 0
  %410 = vmatprep.subr.bf16.mxu0 0
  %411 = vmatpush1.bf16.msra.mxu0 0
  %412 = vmatprep.subr.bf16.mxu0 0
  %413 = vmatpush1.bf16.msra.mxu0 0
  %414 = vmatprep.subr.bf16.mxu0 0
  %415 = vmatpush1.bf16.msra.mxu0 0
  %416 = vmatprep.subr.bf16.mxu0 0
  %417 = vmatpush1.bf16.msra.mxu0 0
  %418 = vmatprep.subr.bf16.mxu0 0
  %419 = vmatpush1.bf16.msra.mxu0 0
  %420 = vmatprep.mubr.bf16.mxu0 0
  %421 = vmatmul.mubr.bf16.gmra.mrb[0].mxu0 %v380
  %v422 = vpop.f32.mrb[0].mxu0
  %v423 = vadd.f32 %v351, %v422
  %v424 = vpop.f32.mrb[0].mxu0
  %v425 = vpop.f32.mrb[0].mxu0
  %v426 = vadd.f32 %v356, %v425
  %v427 = vpop.f32.mrb[0].mxu0
  %428 = vmatprep.mubr.bf16.mxu0 0
  %429 = vmatmul.mubr.bf16.gmra.mrb[0].mxu0 %v383
  %v430 = vpop.f32.mrb[0].mxu0
  %v431 = vadd.f32 %v361, %v430
  %v432 = vpop.f32.mrb[0].mxu0
  %v433 = vpop.f32.mrb[0].mxu0
  %v434 = vadd.f32 %v366, %v433
  %v435 = vpop.f32.mrb[0].mxu0
  %436 = vdwg.mxu0
  %v437 = vmax.f32 %v423, 0.0
  %v438 = vmax.f32 %v426, 0.0
  %v439 = vmax.f32 %v431, 0.0
  %v440 = vmax.f32 %v434, 0.0
  %v441 = vld [vmem:[%s13] sm:$0xf]
  %v442 = vld [vmem:[%s13 + $0x4] sm:$0xf]
  %v443 = vld [vmem:[%s13 + $0x8] sm:$0xf]
  %v444 = vld [vmem:[%s13 + $0xc] sm:$0xf]
  %v445 = vpack.c.bf16 %v438, %v437
  %v446 = vpack.c.bf16 %v440, %v439
  %v447 = vld [vmem:[%s14] sm:$0xff]
  %v448 = vld [vmem:[%s14 + $0x8] sm:$0xff]
  %v449 = vld [vmem:[%s14 + $0x10] sm:$0xff]
  %v450 = vld [vmem:[%s14 + $0x18] sm:$0xff]
  %452 = vset.pattern.permute.xlu0 0
  %453 = vperm.xlu0 %452, %v447
  %v454 = vpop.permute.xlu0 %453
  %457 = vset.pattern.permute.xlu0 0
  %458 = vperm.xlu0 %457, %v448
  %v459 = vpop.permute.xlu0 %458
  %462 = vset.pattern.permute.xlu0 0
  %463 = vperm.xlu0 %462, %v449
  %v464 = vpop.permute.xlu0 %463
  %467 = vset.pattern.permute.xlu0 0
  %468 = vperm.xlu0 %467, %v450
  %v469 = vpop.permute.xlu0 %468
  %v475 = vunpack.c.l.b16 %v441
  %v476 = vunpack.c.l.b16 %v442
  %v477 = vunpack.c.l.b16 %v443
  %v478 = vunpack.c.l.b16 %v444
  %v479 = vpack.c.b16 %v476, %v475
  %v480 = vpack.c.b16 %v478, %v477
  %vm481 = vcmask 261120
  %v483 = vsel %vm481, %v479, 0
  %v486 = vsel %vm481, %v480, 0
  %488 = vmatprep.subr.bf16.mxu0 0
  %489 = vmatpush1.bf16.msra.mxu0 %v445
  %490 = vmatprep.subr.bf16.mxu0 0
  %491 = vmatpush1.bf16.msra.mxu0 %v446
  %492 = vmatprep.subr.bf16.mxu0 0
  %493 = vmatpush1.bf16.msra.mxu0 0
  %494 = vmatprep.subr.bf16.mxu0 0
  %495 = vmatpush1.bf16.msra.mxu0 0
  %496 = vmatprep.subr.bf16.mxu0 0
  %497 = vmatpush1.bf16.msra.mxu0 0
  %498 = vmatprep.subr.bf16.mxu0 0
  %499 = vmatpush1.bf16.msra.mxu0 0
  %500 = vmatprep.subr.bf16.mxu0 0
  %501 = vmatpush1.bf16.msra.mxu0 0
  %502 = vmatprep.subr.bf16.mxu0 0
  %503 = vmatpush1.bf16.msra.mxu0 0
  %504 = vmatprep.subr.bf16.mxu0 0
  %505 = vmatpush1.bf16.msra.mxu0 0
  %506 = vmatprep.subr.bf16.mxu0 0
  %507 = vmatpush1.bf16.msra.mxu0 0
  %508 = vmatprep.subr.bf16.mxu0 0
  %509 = vmatpush1.bf16.msra.mxu0 0
  %510 = vmatprep.subr.bf16.mxu0 0
  %511 = vmatpush1.bf16.msra.mxu0 0
  %512 = vmatprep.subr.bf16.mxu0 0
  %513 = vmatpush1.bf16.msra.mxu0 0
  %514 = vmatprep.subr.bf16.mxu0 0
  %515 = vmatpush1.bf16.msra.mxu0 0
  %516 = vmatprep.subr.bf16.mxu0 0
  %517 = vmatpush1.bf16.msra.mxu0 0
  %518 = vmatprep.subr.bf16.mxu0 0
  %519 = vmatpush1.bf16.msra.mxu0 0
  %520 = vmatprep.mubr.bf16.mxu0 0
  %521 = vmatmul.mubr.bf16.gmra.mrb[0].mxu0 %v483
  %v522 = vpop.f32.mrb[0].mxu0
  %v523 = vadd.f32 %v454, %v522
  %v524 = vpop.f32.mrb[0].mxu0
  %v525 = vpop.f32.mrb[0].mxu0
  %v526 = vadd.f32 %v459, %v525
  %v527 = vpop.f32.mrb[0].mxu0
  %528 = vmatprep.mubr.bf16.mxu0 0
  %529 = vmatmul.mubr.bf16.gmra.mrb[0].mxu0 %v486
  %v530 = vpop.f32.mrb[0].mxu0
  %v531 = vadd.f32 %v464, %v530
  %v532 = vpop.f32.mrb[0].mxu0
  %v533 = vpop.f32.mrb[0].mxu0
  %v534 = vadd.f32 %v469, %v533
  %v535 = vpop.f32.mrb[0].mxu0
  %536 = vdwg.mxu0
  %v537 = vmax.f32 %v523, 0.0
  %v538 = vmax.f32 %v526, 0.0
  %v539 = vmax.f32 %v531, 0.0
  %v540 = vmax.f32 %v534, 0.0
  %v541 = vld [vmem:[%s15] sm:$0xff]
  %v542 = vld [vmem:[%s15 + $0x8] sm:$0xf]
  %v543 = vld [vmem:[%s15 + $0xc] sm:$0x33]
  %v544 = vld [vmem:[%s15 + $0x14] sm:$0x3]
  %v545 = vpack.c.bf16 %v538, %v537
  %v546 = vpack.c.bf16 %v540, %v539
  %549 = vrot.lane.b32.xlu0 %v545, 101
  %v550 = vpop.permute.xlu0 %549
  %551 = vrot.lane.b32.xlu0 %v546, 101
  %v552 = vpop.permute.xlu0 %551
  %553 = vrot.lane.b32.xlu0 %v545, 5
  %v554 = vpop.permute.xlu0 %553
  %555 = vrot.lane.b32.xlu0 %v546, 5
  %v556 = vpop.permute.xlu0 %555
  %v559 = vsel %vm187, %v550, %v554
  %v563 = vsel %vm187, %v552, %v556
  %v565 = vmul.bf16 %v559, %v198
  %v566 = vmul.bf16 %v563, %v198
  %567 = vrot.lane.b32.xlu0 %v545, 100
  %v568 = vpop.permute.xlu0 %567
  %569 = vrot.lane.b32.xlu0 %v546, 100
  %v570 = vpop.permute.xlu0 %569
  %571 = vrot.lane.b32.xlu0 %v545, 4
  %v572 = vpop.permute.xlu0 %571
  %573 = vrot.lane.b32.xlu0 %v546, 4
  %v574 = vpop.permute.xlu0 %573
  %v577 = vsel %vm204, %v568, %v572
  %v581 = vsel %vm204, %v570, %v574
  %v583 = vmul.bf16 %v577, %v215
  %v584 = vmul.bf16 %v581, %v215
  %585 = vrot.lane.b32.xlu0 %v545, 99
  %v586 = vpop.permute.xlu0 %585
  %587 = vrot.lane.b32.xlu0 %v546, 99
  %v588 = vpop.permute.xlu0 %587
  %589 = vrot.lane.b32.xlu0 %v545, 3
  %v590 = vpop.permute.xlu0 %589
  %591 = vrot.lane.b32.xlu0 %v546, 3
  %v592 = vpop.permute.xlu0 %591
  %v595 = vsel %vm221, %v586, %v590
  %v599 = vsel %vm221, %v588, %v592
  %v601 = vmul.bf16 %v595, %v229
  %v602 = vmul.bf16 %v599, %v229
  %603 = vrot.lane.b32.xlu0 %v545, 97
  %v604 = vpop.permute.xlu0 %603
  %605 = vrot.lane.b32.xlu0 %v546, 97
  %v606 = vpop.permute.xlu0 %605
  %607 = vrot.lane.b32.xlu0 %v545, 1
  %v608 = vpop.permute.xlu0 %607
  %609 = vrot.lane.b32.xlu0 %v546, 1
  %v610 = vpop.permute.xlu0 %609
  %v613 = vsel %vm235, %v604, %v608
  %v617 = vsel %vm235, %v606, %v610
  %v619 = vmul.bf16 %v613, %v243
  %v620 = vmul.bf16 %v617, %v243
  %v621 = vmul.bf16 %v545, %v248
  %v622 = vmul.bf16 %v546, %v248
  %623 = vrot.lane.b32.xlu0 %v545, 127
  %v624 = vpop.permute.xlu0 %623
  %625 = vrot.lane.b32.xlu0 %v546, 127
  %v626 = vpop.permute.xlu0 %625
  %627 = vrot.lane.b32.xlu0 %v545, 31
  %v628 = vpop.permute.xlu0 %627
  %629 = vrot.lane.b32.xlu0 %v546, 31
  %v630 = vpop.permute.xlu0 %629
  %v633 = vsel %vm254, %v624, %v628
  %v637 = vsel %vm254, %v626, %v630
  %v639 = vmul.bf16 %v633, %v262
  %v640 = vmul.bf16 %v637, %v262
  %641 = vrot.lane.b32.xlu0 %v545, 125
  %v642 = vpop.permute.xlu0 %641
  %643 = vrot.lane.b32.xlu0 %v546, 125
  %v644 = vpop.permute.xlu0 %643
  %645 = vrot.lane.b32.xlu0 %v545, 29
  %v646 = vpop.permute.xlu0 %645
  %647 = vrot.lane.b32.xlu0 %v546, 29
  %v648 = vpop.permute.xlu0 %647
  %v651 = vsel %vm268, %v642, %v646
  %v655 = vsel %vm268, %v644, %v648
  %v657 = vmul.bf16 %v651, %v276
  %v658 = vmul.bf16 %v655, %v276
  %659 = vrot.lane.b32.xlu0 %v545, 124
  %v660 = vpop.permute.xlu0 %659
  %661 = vrot.lane.b32.xlu0 %v546, 124
  %v662 = vpop.permute.xlu0 %661
  %663 = vrot.lane.b32.xlu0 %v545, 28
  %v664 = vpop.permute.xlu0 %663
  %665 = vrot.lane.b32.xlu0 %v546, 28
  %v666 = vpop.permute.xlu0 %665
  %v669 = vsel %vm282, %v660, %v664
  %v673 = vsel %vm282, %v662, %v666
  %v675 = vmul.bf16 %v669, %v290
  %v676 = vmul.bf16 %v673, %v290
  %677 = vrot.lane.b32.xlu0 %v545, 123
  %v678 = vpop.permute.xlu0 %677
  %679 = vrot.lane.b32.xlu0 %v546, 123
  %v680 = vpop.permute.xlu0 %679
  %681 = vrot.lane.b32.xlu0 %v545, 27
  %v682 = vpop.permute.xlu0 %681
  %683 = vrot.lane.b32.xlu0 %v546, 27
  %v684 = vpop.permute.xlu0 %683
  %v687 = vsel %vm296, %v678, %v682
  %v691 = vsel %vm296, %v680, %v684
  %v693 = vmul.bf16 %v687, %v304
  %v694 = vmul.bf16 %v691, %v304
  %v695 = vld [vmem:[%s16] sm:$0xff]
  %v696 = vld [vmem:[%s16 + $0x8] sm:$0xf]
  %698 = vset.pattern.permute.xlu0 0
  %699 = vperm.xlu0 %698, %v695
  %v700 = vpop.permute.xlu0 %699
  %703 = vset.pattern.permute.xlu0 0
  %704 = vperm.xlu0 %703, %v696
  %v705 = vpop.permute.xlu0 %704
  %v711 = vunpack.c.l.b16 %v541
  %v712 = vunpack.c.h.b16 %v541
  %v713 = vunpack.c.l.b16 %v542
  %v714 = vunpack.c.l.b16 %v543
  %v715 = vunpack.c.h.b16 %v543
  %v716 = vunpack.c.l.b16 %v544
  %v717 = vpack.c.b16 %v714, %v711
  %v718 = vpack.c.b16 %v715, %v712
  %v719 = vpack.c.b16 %v716, %v713
  %v723 = vsel %vm481, %v719, 0
  %725 = vmatprep.subr.bf16.mxu0 0
  %726 = vmatpush1.bf16.msra.mxu0 %v565
  %727 = vmatprep.subr.bf16.mxu0 0
  %728 = vmatpush1.bf16.msra.mxu0 %v566
  %729 = vmatprep.subr.bf16.mxu0 0
  %730 = vmatpush1.bf16.msra.mxu0 %v583
  %731 = vmatprep.subr.bf16.mxu0 0
  %732 = vmatpush1.bf16.msra.mxu0 %v584
  %733 = vmatprep.subr.bf16.mxu0 0
  %734 = vmatpush1.bf16.msra.mxu0 %v601
  %735 = vmatprep.subr.bf16.mxu0 0
  %736 = vmatpush1.bf16.msra.mxu0 %v602
  %737 = vmatprep.subr.bf16.mxu0 0
  %738 = vmatpush1.bf16.msra.mxu0 %v619
  %739 = vmatprep.subr.bf16.mxu0 0
  %740 = vmatpush1.bf16.msra.mxu0 %v620
  %741 = vmatprep.subr.bf16.mxu0 0
  %742 = vmatpush1.bf16.msra.mxu0 %v621
  %743 = vmatprep.subr.bf16.mxu0 0
  %744 = vmatpush1.bf16.msra.mxu0 %v622
  %745 = vmatprep.subr.bf16.mxu0 0
  %746 = vmatpush1.bf16.msra.mxu0 %v639
  %747 = vmatprep.subr.bf16.mxu0 0
  %748 = vmatpush1.bf16.msra.mxu0 %v640
  %749 = vmatprep.subr.bf16.mxu0 0
  %750 = vmatpush1.bf16.msra.mxu0 %v657
  %751 = vmatprep.subr.bf16.mxu0 0
  %752 = vmatpush1.bf16.msra.mxu0 %v658
  %753 = vmatprep.subr.bf16.mxu0 0
  %754 = vmatpush1.bf16.msra.mxu0 %v675
  %755 = vmatprep.subr.bf16.mxu0 0
  %756 = vmatpush1.bf16.msra.mxu0 %v676
  %757 = vmatprep.mubr.bf16.mxu0 %v718
  %758 = vmatmul.mubr.bf16.gmra.mrb[0].mxu0 %v717
  %v759 = vpop.f32.mrb[0].mxu0
  %v760 = vadd.f32 %v700, %v759
  %v761 = vpop.f32.mrb[0].mxu0
  %v762 = vpop.f32.mrb[0].mxu0
  %v763 = vadd.f32 %v705, %v762
  %v764 = vpop.f32.mrb[0].mxu0
  %765 = vdwg.mxu0
  %766 = vmatprep.subr.bf16.mxu0 0
  %767 = vmatpush1.bf16.msra.mxu0 %v693
  %768 = vmatprep.subr.bf16.mxu0 0
  %769 = vmatpush1.bf16.msra.mxu0 %v694
  %770 = vmatprep.subr.bf16.mxu0 0
  %771 = vmatpush1.bf16.msra.mxu0 0
  %772 = vmatprep.subr.bf16.mxu0 0
  %773 = vmatpush1.bf16.msra.mxu0 0
  %774 = vmatprep.subr.bf16.mxu0 0
  %775 = vmatpush1.bf16.msra.mxu0 0
  %776 = vmatprep.subr.bf16.mxu0 0
  %777 = vmatpush1.bf16.msra.mxu0 0
  %778 = vmatprep.subr.bf16.mxu0 0
  %779 = vmatpush1.bf16.msra.mxu0 0
  %780 = vmatprep.subr.bf16.mxu0 0
  %781 = vmatpush1.bf16.msra.mxu0 0
  %782 = vmatprep.subr.bf16.mxu0 0
  %783 = vmatpush1.bf16.msra.mxu0 0
  %784 = vmatprep.subr.bf16.mxu0 0
  %785 = vmatpush1.bf16.msra.mxu0 0
  %786 = vmatprep.subr.bf16.mxu0 0
  %787 = vmatpush1.bf16.msra.mxu0 0
  %788 = vmatprep.subr.bf16.mxu0 0
  %789 = vmatpush1.bf16.msra.mxu0 0
  %790 = vmatprep.subr.bf16.mxu0 0
  %791 = vmatpush1.bf16.msra.mxu0 0
  %792 = vmatprep.subr.bf16.mxu0 0
  %793 = vmatpush1.bf16.msra.mxu0 0
  %794 = vmatprep.subr.bf16.mxu0 0
  %795 = vmatpush1.bf16.msra.mxu0 0
  %796 = vmatprep.subr.bf16.mxu0 0
  %797 = vmatpush1.bf16.msra.mxu0 0
  %798 = vmatprep.mubr.bf16.mxu0 0
  %799 = vmatmul.mubr.bf16.gmra.mrb[0].mxu0 %v723
  %v800 = vpop.f32.mrb[0].mxu0
  %v801 = vadd.f32 %v760, %v800
  %v802 = vpop.f32.mrb[0].mxu0
  %v803 = vpop.f32.mrb[0].mxu0
  %v804 = vadd.f32 %v763, %v803
  %v805 = vpop.f32.mrb[0].mxu0
  %806 = vdwg.mxu0
  %v807 = vadd.f32 %v801, 2.0
  %v808 = vxor.u32 %v807, 2147483648
  %v809 = vmul.f32 %v808, 1.442695
  %v810 = vpow.pop %v809
  %v811 = vadd.f32 %v810, 1.0
  %v812 = vrcp.pop %v811
  %v813 = vmul.f32 1.0, %v812
  %v814 = vmin.f32 %v807, 0.0
  %v815 = vand.u32 2147483647, %v807
  %v816 = vsub.f32 0.0, %v815
  %v817 = vmul.f32 %v816, 1.442695
  %v818 = vpow.pop %v817
  %v819 = vadd.f32 %v818, 1.0
  %v820 = vlog2.pop %v819
  %v821 = vmul.f32 %v820, 0.6931472
  %v822 = vsub.f32 %v814, %v821
  %v823 = vadd.f32 %v171, %v801
  %v824 = vadd.f32 %v174, %v804
  %v826 = vrot.slane %v813, 2
  %v828 = vmul.f32 %v823, %v826
  %v829 = vmul.f32 %v824, %v826
  %vm830 = vcmask 259072
  %v831 = vsel %vm830, %v822, 0.0
  %v832 = vrot.slane %v831, 4
  %v833 = vadd.f32 %v831, %v832
  %v834 = vrot.slane %v833, 2
  %v835 = vadd.f32 %v833, %v834
  %v836 = vrot.slane %v835, 1
  %v837 = vadd.f32 %v835, %v836
  %v838 = vadd.f32 %v837, 0.0
  %v839 = vsel %vm132, %v171, %v828
  %v840 = vld [vmem:[%s17] sm:$0xff]
  %v841 = vld [vmem:[%s17 + $0x8] sm:$0xf]
  %v842 = vld [vmem:[%s18] sm:$0xff]
  %v843 = vld [vmem:[%s18 + $0x8] sm:$0xf]
  %845 = vset.pattern.permute.xlu0 0
  %846 = vperm.xlu0 %845, %v842
  %v847 = vpop.permute.xlu0 %846
  %850 = vset.pattern.permute.xlu0 0
  %851 = vperm.xlu0 %850, %v843
  %v852 = vpop.permute.xlu0 %851
  %v854 = vadd.f32 %v839, %v847
  %v855 = vadd.f32 %v829, %v852
  %857 = vset.pattern.permute.xlu0 0
  %858 = vperm.xlu0 %857, %v840
  %v859 = vpop.permute.xlu0 %858
  %862 = vset.pattern.permute.xlu0 0
  %863 = vperm.xlu0 %862, %v841
  %v864 = vpop.permute.xlu0 %863
  %v866 = vmul.f32 %v859, %v854
  %v867 = vmul.f32 %v864, %v855
  %v868 = vld [vmem:[%s19] sm:$0xf]
  %v869 = vld [vmem:[%s19 + $0x4] sm:$0x3]
  %v870 = vpack.c.bf16 %v867, %v866
  %v873 = vunpack.c.l.b16 %v868
  %v874 = vunpack.c.l.b16 %v869
  %v875 = vpack.c.b16 %v874, %v873
  %v877 = vsel %vm128, %v875, 0
  %v880 = vsel %vm132, %v870, 0
  %882 = vmatprep.subr.bf16.mxu0 0
  %883 = vmatpush1.bf16.msra.mxu0 %v880
  %884 = vmatprep.subr.bf16.mxu0 0
  %885 = vmatpush1.bf16.msra.mxu0 0
  %886 = vmatprep.subr.bf16.mxu0 0
  %887 = vmatpush1.bf16.msra.mxu0 0
  %888 = vmatprep.subr.bf16.mxu0 0
  %889 = vmatpush1.bf16.msra.mxu0 0
  %890 = vmatprep.subr.bf16.mxu0 0
  %891 = vmatpush1.bf16.msra.mxu0 0
  %892 = vmatprep.subr.bf16.mxu0 0
  %893 = vmatpush1.bf16.msra.mxu0 0
  %894 = vmatprep.subr.bf16.mxu0 0
  %895 = vmatpush1.bf16.msra.mxu0 0
  %896 = vmatprep.subr.bf16.mxu0 0
  %897 = vmatpush1.bf16.msra.mxu0 0
  %898 = vmatprep.subr.bf16.mxu0 0
  %899 = vmatpush1.bf16.msra.mxu0 0
  %900 = vmatprep.subr.bf16.mxu0 0
  %901 = vmatpush1.bf16.msra.mxu0 0
  %902 = vmatprep.subr.bf16.mxu0 0
  %903 = vmatpush1.bf16.msra.mxu0 0
  %904 = vmatprep.subr.bf16.mxu0 0
  %905 = vmatpush1.bf16.msra.mxu0 0
  %906 = vmatprep.subr.bf16.mxu0 0
  %907 = vmatpush1.bf16.msra.mxu0 0
  %908 = vmatprep.subr.bf16.mxu0 0
  %909 = vmatpush1.bf16.msra.mxu0 0
  %910 = vmatprep.subr.bf16.mxu0 0
  %911 = vmatpush1.bf16.msra.mxu0 0
  %912 = vmatprep.subr.bf16.mxu0 0
  %913 = vmatpush1.bf16.msra.mxu0 0
  %914 = vmatprep.mubr.bf16.mxu0 0
  %915 = vmatmul.mubr.bf16.gmra.mrb[0].mxu0 %v877
  %v916 = vpop.f32.mrb[0].mxu0
  %v917 = vadd.f32 0.0, %v916
  %v918 = vpop.f32.mrb[0].mxu0
  %v919 = vpop.f32.mrb[0].mxu0
  %v920 = vadd.f32 0.0, %v919
  %v921 = vpop.f32.mrb[0].mxu0
  %922 = vdwg.mxu0
  %v923 = vld [vmem:[%s20] sm:$0xf]
  %v924 = vld [vmem:[%s20 + $0x4] sm:$0xf]
  %v925 = vld [vmem:[%s20 + $0x8] sm:$0xf]
  %v926 = vld [vmem:[%s20 + $0xc] sm:$0xf]
  %v927 = vpack.c.bf16 %v917, %v917
  %929 = vrot.lane.b32.xlu0 %v927, 101
  %v930 = vpop.permute.xlu0 %929
  %931 = vrot.lane.b32.xlu0 %v927, 5
  %v932 = vpop.permute.xlu0 %931
  %v935 = vsel %vm187, %v930, %v932
  %v937 = vmul.bf16 %v935, %v198
  %938 = vrot.lane.b32.xlu0 %v927, 100
  %v939 = vpop.permute.xlu0 %938
  %940 = vrot.lane.b32.xlu0 %v927, 4
  %v941 = vpop.permute.xlu0 %940
  %v944 = vsel %vm204, %v939, %v941
  %v946 = vmul.bf16 %v944, %v215
  %947 = vrot.lane.b32.xlu0 %v927, 99
  %v948 = vpop.permute.xlu0 %947
  %949 = vrot.lane.b32.xlu0 %v927, 3
  %v950 = vpop.permute.xlu0 %949
  %v953 = vsel %vm221, %v948, %v950
  %v955 = vmul.bf16 %v953, %v229
  %956 = vrot.lane.b32.xlu0 %v927, 97
  %v957 = vpop.permute.xlu0 %956
  %958 = vrot.lane.b32.xlu0 %v927, 1
  %v959 = vpop.permute.xlu0 %958
  %v962 = vsel %vm235, %v957, %v959
  %v964 = vmul.bf16 %v962, %v243
  %v965 = vmul.bf16 %v927, %v248
  %966 = vrot.lane.b32.xlu0 %v927, 127
  %v967 = vpop.permute.xlu0 %966
  %968 = vrot.lane.b32.xlu0 %v927, 31
  %v969 = vpop.permute.xlu0 %968
  %v972 = vsel %vm254, %v967, %v969
  %v974 = vmul.bf16 %v972, %v262
  %975 = vrot.lane.b32.xlu0 %v927, 125
  %v976 = vpop.permute.xlu0 %975
  %977 = vrot.lane.b32.xlu0 %v927, 29
  %v978 = vpop.permute.xlu0 %977
  %v981 = vsel %vm268, %v976, %v978
  %v983 = vmul.bf16 %v981, %v276
  %984 = vrot.lane.b32.xlu0 %v927, 124
  %v985 = vpop.permute.xlu0 %984
  %986 = vrot.lane.b32.xlu0 %v927, 28
  %v987 = vpop.permute.xlu0 %986
  %v990 = vsel %vm282, %v985, %v987
  %v992 = vmul.bf16 %v990, %v290
  %993 = vrot.lane.b32.xlu0 %v927, 123
  %v994 = vpop.permute.xlu0 %993
  %995 = vrot.lane.b32.xlu0 %v927, 27
  %v996 = vpop.permute.xlu0 %995
  %v999 = vsel %vm296, %v994, %v996
  %v1001 = vmul.bf16 %v999, %v304
  %v1003 = vrot.slane %v946, 5
  %v1005 = vrot.slane %v955, 2
  %v1007 = vrot.slane %v964, 7
  %v1009 = vrot.slane %v965, 4
  %v1011 = vrot.slane %v974, 1
  %v1013 = vrot.slane %v983, 6
  %v1015 = vrot.slane %v992, 3
  %v1018 = vsel %vm320, %v937, %v1003
  %v1020 = vsel %vm132, %v1018, %v1005
  %v1023 = vsel %vm327, %v1005, %v1007
  %v1025 = vsel %vm330, %v1023, %v1009
  %v1027 = vsel %vm333, %v1025, %v1011
  %v1030 = vsel %vm337, %v1011, %v1013
  %v1032 = vsel %vm340, %v1030, %v1015
  %v1034 = vld [vmem:[%s21] sm:$0xff]
  %v1035 = vld [vmem:[%s21 + $0x8] sm:$0xff]
  %v1036 = vld [vmem:[%s21 + $0x10] sm:$0xff]
  %v1037 = vld [vmem:[%s21 + $0x18] sm:$0xff]
  %1039 = vset.pattern.permute.xlu0 0
  %1040 = vperm.xlu0 %1039, %v1034
  %v1041 = vpop.permute.xlu0 %1040
  %1044 = vset.pattern.permute.xlu0 0
  %1045 = vperm.xlu0 %1044, %v1035
  %v1046 = vpop.permute.xlu0 %1045
  %1049 = vset.pattern.permute.xlu0 0
  %1050 = vperm.xlu0 %1049, %v1036
  %v1051 = vpop.permute.xlu0 %1050
  %1054 = vset.pattern.permute.xlu0 0
  %1055 = vperm.xlu0 %1054, %v1037
  %v1056 = vpop.permute.xlu0 %1055
  %v1062 = vunpack.c.l.b16 %v923
  %v1063 = vunpack.c.l.b16 %v924
  %v1064 = vunpack.c.l.b16 %v925
  %v1065 = vunpack.c.l.b16 %v926
  %v1066 = vpack.c.b16 %v1063, %v1062
  %v1067 = vpack.c.b16 %v1065, %v1064
  %v1069 = vsel %vm378, %v1066, 0
  %v1072 = vsel %vm378, %v1067, 0
  %v1075 = vsel %vm320, %v1001, 0
  %1077 = vmatprep.subr.bf16.mxu0 0
  %1078 = vmatpush1.bf16.msra.mxu0 %v1020
  %1079 = vmatprep.subr.bf16.mxu0 0
  %1080 = vmatpush1.bf16.msra.mxu0 %v1027
  %1081 = vmatprep.subr.bf16.mxu0 0
  %1082 = vmatpush1.bf16.msra.mxu0 %v1032
  %1083 = vmatprep.subr.bf16.mxu0 0
  %1084 = vmatpush1.bf16.msra.mxu0 %v1075
  %1085 = vmatprep.subr.bf16.mxu0 0
  %1086 = vmatpush1.bf16.msra.mxu0 0
  %1087 = vmatprep.subr.bf16.mxu0 0
  %1088 = vmatpush1.bf16.msra.mxu0 0
  %1089 = vmatprep.subr.bf16.mxu0 0
  %1090 = vmatpush1.bf16.msra.mxu0 0
  %1091 = vmatprep.subr.bf16.mxu0 0
  %1092 = vmatpush1.bf16.msra.mxu0 0
  %1093 = vmatprep.subr.bf16.mxu0 0
  %1094 = vmatpush1.bf16.msra.mxu0 0
  %1095 = vmatprep.subr.bf16.mxu0 0
  %1096 = vmatpush1.bf16.msra.mxu0 0
  %1097 = vmatprep.subr.bf16.mxu0 0
  %1098 = vmatpush1.bf16.msra.mxu0 0
  %1099 = vmatprep.subr.bf16.mxu0 0
  %1100 = vmatpush1.bf16.msra.mxu0 0
  %1101 = vmatprep.subr.bf16.mxu0 0
  %1102 = vmatpush1.bf16.msra.mxu0 0
  %1103 = vmatprep.subr.bf16.mxu0 0
  %1104 = vmatpush1.bf16.msra.mxu0 0
  %1105 = vmatprep.subr.bf16.mxu0 0
  %1106 = vmatpush1.bf16.msra.mxu0 0
  %1107 = vmatprep.subr.bf16.mxu0 0
  %1108 = vmatpush1.bf16.msra.mxu0 0
  %1109 = vmatprep.mubr.bf16.mxu0 0
  %1110 = vmatmul.mubr.bf16.gmra.mrb[0].mxu0 %v1069
  %v1111 = vpop.f32.mrb[0].mxu0
  %v1112 = vadd.f32 %v1041, %v1111
  %v1113 = vpop.f32.mrb[0].mxu0
  %v1114 = vpop.f32.mrb[0].mxu0
  %v1115 = vadd.f32 %v1046, %v1114
  %v1116 = vpop.f32.mrb[0].mxu0
  %1117 = vmatprep.mubr.bf16.mxu0 0
  %1118 = vmatmul.mubr.bf16.gmra.mrb[0].mxu0 %v1072
  %v1119 = vpop.f32.mrb[0].mxu0
  %v1120 = vadd.f32 %v1051, %v1119
  %v1121 = vpop.f32.mrb[0].mxu0
  %v1122 = vpop.f32.mrb[0].mxu0
  %v1123 = vadd.f32 %v1056, %v1122
  %v1124 = vpop.f32.mrb[0].mxu0
  %1125 = vdwg.mxu0
  %v1126 = vmax.f32 %v1112, 0.0
  %v1127 = vmax.f32 %v1115, 0.0
  %v1128 = vmax.f32 %v1120, 0.0
  %v1129 = vmax.f32 %v1123, 0.0
  %v1130 = vld [vmem:[%s22] sm:$0xf]
  %v1131 = vld [vmem:[%s22 + $0x4] sm:$0xf]
  %v1132 = vld [vmem:[%s22 + $0x8] sm:$0xf]
  %v1133 = vld [vmem:[%s22 + $0xc] sm:$0xf]
  %v1134 = vpack.c.bf16 %v1127, %v1126
  %v1135 = vpack.c.bf16 %v1129, %v1128
  %v1136 = vld [vmem:[%s23] sm:$0xff]
  %v1137 = vld [vmem:[%s23 + $0x8] sm:$0xff]
  %v1138 = vld [vmem:[%s23 + $0x10] sm:$0xff]
  %v1139 = vld [vmem:[%s23 + $0x18] sm:$0xff]
  %1141 = vset.pattern.permute.xlu0 0
  %1142 = vperm.xlu0 %1141, %v1136
  %v1143 = vpop.permute.xlu0 %1142
  %1146 = vset.pattern.permute.xlu0 0
  %1147 = vperm.xlu0 %1146, %v1137
  %v1148 = vpop.permute.xlu0 %1147
  %1151 = vset.pattern.permute.xlu0 0
  %1152 = vperm.xlu0 %1151, %v1138
  %v1153 = vpop.permute.xlu0 %1152
  %1156 = vset.pattern.permute.xlu0 0
  %1157 = vperm.xlu0 %1156, %v1139
  %v1158 = vpop.permute.xlu0 %1157
  %v1164 = vunpack.c.l.b16 %v1130
  %v1165 = vunpack.c.l.b16 %v1131
  %v1166 = vunpack.c.l.b16 %v1132
  %v1167 = vunpack.c.l.b16 %v1133
  %v1168 = vpack.c.b16 %v1165, %v1164
  %v1169 = vpack.c.b16 %v1167, %v1166
  %v1171 = vsel %vm481, %v1168, 0
  %v1174 = vsel %vm481, %v1169, 0
  %1176 = vmatprep.subr.bf16.mxu0 0
  %1177 = vmatpush1.bf16.msra.mxu0 %v1134
  %1178 = vmatprep.subr.bf16.mxu0 0
  %1179 = vmatpush1.bf16.msra.mxu0 %v1135
  %1180 = vmatprep.subr.bf16.mxu0 0
  %1181 = vmatpush1.bf16.msra.mxu0 0
  %1182 = vmatprep.subr.bf16.mxu0 0
  %1183 = vmatpush1.bf16.msra.mxu0 0
  %1184 = vmatprep.subr.bf16.mxu0 0
  %1185 = vmatpush1.bf16.msra.mxu0 0
  %1186 = vmatprep.subr.bf16.mxu0 0
  %1187 = vmatpush1.bf16.msra.mxu0 0
  %1188 = vmatprep.subr.bf16.mxu0 0
  %1189 = vmatpush1.bf16.msra.mxu0 0
  %1190 = vmatprep.subr.bf16.mxu0 0
  %1191 = vmatpush1.bf16.msra.mxu0 0
  %1192 = vmatprep.subr.bf16.mxu0 0
  %1193 = vmatpush1.bf16.msra.mxu0 0
  %1194 = vmatprep.subr.bf16.mxu0 0
  %1195 = vmatpush1.bf16.msra.mxu0 0
  %1196 = vmatprep.subr.bf16.mxu0 0
  %1197 = vmatpush1.bf16.msra.mxu0 0
  %1198 = vmatprep.subr.bf16.mxu0 0
  %1199 = vmatpush1.bf16.msra.mxu0 0
  %1200 = vmatprep.subr.bf16.mxu0 0
  %1201 = vmatpush1.bf16.msra.mxu0 0
  %1202 = vmatprep.subr.bf16.mxu0 0
  %1203 = vmatpush1.bf16.msra.mxu0 0
  %1204 = vmatprep.subr.bf16.mxu0 0
  %1205 = vmatpush1.bf16.msra.mxu0 0
  %1206 = vmatprep.subr.bf16.mxu0 0
  %1207 = vmatpush1.bf16.msra.mxu0 0
  %1208 = vmatprep.mubr.bf16.mxu0 0
  %1209 = vmatmul.mubr.bf16.gmra.mrb[0].mxu0 %v1171
  %v1210 = vpop.f32.mrb[0].mxu0
  %v1211 = vadd.f32 %v1143, %v1210
  %v1212 = vpop.f32.mrb[0].mxu0
  %v1213 = vpop.f32.mrb[0].mxu0
  %v1214 = vadd.f32 %v1148, %v1213
  %v1215 = vpop.f32.mrb[0].mxu0
  %1216 = vmatprep.mubr.bf16.mxu0 0
  %1217 = vmatmul.mubr.bf16.gmra.mrb[0].mxu0 %v1174
  %v1218 = vpop.f32.mrb[0].mxu0
  %v1219 = vadd.f32 %v1153, %v1218
  %v1220 = vpop.f32.mrb[0].mxu0
  %v1221 = vpop.f32.mrb[0].mxu0
  %v1222 = vadd.f32 %v1158, %v1221
  %v1223 = vpop.f32.mrb[0].mxu0
  %1224 = vdwg.mxu0
  %v1225 = vmax.f32 %v1211, 0.0
  %v1226 = vmax.f32 %v1214, 0.0
  %v1227 = vmax.f32 %v1219, 0.0
  %v1228 = vmax.f32 %v1222, 0.0
  %v1229 = vld [vmem:[%s24] sm:$0xff]
  %v1230 = vld [vmem:[%s24 + $0x8] sm:$0xf]
  %v1231 = vld [vmem:[%s24 + $0xc] sm:$0x33]
  %v1232 = vld [vmem:[%s24 + $0x14] sm:$0x3]
  %v1233 = vpack.c.bf16 %v1226, %v1225
  %v1234 = vpack.c.bf16 %v1228, %v1227
  %1237 = vrot.lane.b32.xlu0 %v1233, 101
  %v1238 = vpop.permute.xlu0 %1237
  %1239 = vrot.lane.b32.xlu0 %v1234, 101
  %v1240 = vpop.permute.xlu0 %1239
  %1241 = vrot.lane.b32.xlu0 %v1233, 5
  %v1242 = vpop.permute.xlu0 %1241
  %1243 = vrot.lane.b32.xlu0 %v1234, 5
  %v1244 = vpop.permute.xlu0 %1243
  %v1247 = vsel %vm187, %v1238, %v1242
  %v1251 = vsel %vm187, %v1240, %v1244
  %v1253 = vmul.bf16 %v1247, %v198
  %v1254 = vmul.bf16 %v1251, %v198
  %1255 = vrot.lane.b32.xlu0 %v1233, 100
  %v1256 = vpop.permute.xlu0 %1255
  %1257 = vrot.lane.b32.xlu0 %v1234, 100
  %v1258 = vpop.permute.xlu0 %1257
  %1259 = vrot.lane.b32.xlu0 %v1233, 4
  %v1260 = vpop.permute.xlu0 %1259
  %1261 = vrot.lane.b32.xlu0 %v1234, 4
  %v1262 = vpop.permute.xlu0 %1261
  %v1265 = vsel %vm204, %v1256, %v1260
  %v1269 = vsel %vm204, %v1258, %v1262
  %v1271 = vmul.bf16 %v1265, %v215
  %v1272 = vmul.bf16 %v1269, %v215
  %1273 = vrot.lane.b32.xlu0 %v1233, 99
  %v1274 = vpop.permute.xlu0 %1273
  %1275 = vrot.lane.b32.xlu0 %v1234, 99
  %v1276 = vpop.permute.xlu0 %1275
  %1277 = vrot.lane.b32.xlu0 %v1233, 3
  %v1278 = vpop.permute.xlu0 %1277
  %1279 = vrot.lane.b32.xlu0 %v1234, 3
  %v1280 = vpop.permute.xlu0 %1279
  %v1283 = vsel %vm221, %v1274, %v1278
  %v1287 = vsel %vm221, %v1276, %v1280
  %v1289 = vmul.bf16 %v1283, %v229
  %v1290 = vmul.bf16 %v1287, %v229
  %1291 = vrot.lane.b32.xlu0 %v1233, 97
  %v1292 = vpop.permute.xlu0 %1291
  %1293 = vrot.lane.b32.xlu0 %v1234, 97
  %v1294 = vpop.permute.xlu0 %1293
  %1295 = vrot.lane.b32.xlu0 %v1233, 1
  %v1296 = vpop.permute.xlu0 %1295
  %1297 = vrot.lane.b32.xlu0 %v1234, 1
  %v1298 = vpop.permute.xlu0 %1297
  %v1301 = vsel %vm235, %v1292, %v1296
  %v1305 = vsel %vm235, %v1294, %v1298
  %v1307 = vmul.bf16 %v1301, %v243
  %v1308 = vmul.bf16 %v1305, %v243
  %v1309 = vmul.bf16 %v1233, %v248
  %v1310 = vmul.bf16 %v1234, %v248
  %1311 = vrot.lane.b32.xlu0 %v1233, 127
  %v1312 = vpop.permute.xlu0 %1311
  %1313 = vrot.lane.b32.xlu0 %v1234, 127
  %v1314 = vpop.permute.xlu0 %1313
  %1315 = vrot.lane.b32.xlu0 %v1233, 31
  %v1316 = vpop.permute.xlu0 %1315
  %1317 = vrot.lane.b32.xlu0 %v1234, 31
  %v1318 = vpop.permute.xlu0 %1317
  %v1321 = vsel %vm254, %v1312, %v1316
  %v1325 = vsel %vm254, %v1314, %v1318
  %v1327 = vmul.bf16 %v1321, %v262
  %v1328 = vmul.bf16 %v1325, %v262
  %1329 = vrot.lane.b32.xlu0 %v1233, 125
  %v1330 = vpop.permute.xlu0 %1329
  %1331 = vrot.lane.b32.xlu0 %v1234, 125
  %v1332 = vpop.permute.xlu0 %1331
  %1333 = vrot.lane.b32.xlu0 %v1233, 29
  %v1334 = vpop.permute.xlu0 %1333
  %1335 = vrot.lane.b32.xlu0 %v1234, 29
  %v1336 = vpop.permute.xlu0 %1335
  %v1339 = vsel %vm268, %v1330, %v1334
  %v1343 = vsel %vm268, %v1332, %v1336
  %v1345 = vmul.bf16 %v1339, %v276
  %v1346 = vmul.bf16 %v1343, %v276
  %1347 = vrot.lane.b32.xlu0 %v1233, 124
  %v1348 = vpop.permute.xlu0 %1347
  %1349 = vrot.lane.b32.xlu0 %v1234, 124
  %v1350 = vpop.permute.xlu0 %1349
  %1351 = vrot.lane.b32.xlu0 %v1233, 28
  %v1352 = vpop.permute.xlu0 %1351
  %1353 = vrot.lane.b32.xlu0 %v1234, 28
  %v1354 = vpop.permute.xlu0 %1353
  %v1357 = vsel %vm282, %v1348, %v1352
  %v1361 = vsel %vm282, %v1350, %v1354
  %v1363 = vmul.bf16 %v1357, %v290
  %v1364 = vmul.bf16 %v1361, %v290
  %1365 = vrot.lane.b32.xlu0 %v1233, 123
  %v1366 = vpop.permute.xlu0 %1365
  %1367 = vrot.lane.b32.xlu0 %v1234, 123
  %v1368 = vpop.permute.xlu0 %1367
  %1369 = vrot.lane.b32.xlu0 %v1233, 27
  %v1370 = vpop.permute.xlu0 %1369
  %1371 = vrot.lane.b32.xlu0 %v1234, 27
  %v1372 = vpop.permute.xlu0 %1371
  %v1375 = vsel %vm296, %v1366, %v1370
  %v1379 = vsel %vm296, %v1368, %v1372
  %v1381 = vmul.bf16 %v1375, %v304
  %v1382 = vmul.bf16 %v1379, %v304
  %v1383 = vld [vmem:[%s25] sm:$0xff]
  %v1384 = vld [vmem:[%s25 + $0x8] sm:$0xf]
  %1386 = vset.pattern.permute.xlu0 0
  %1387 = vperm.xlu0 %1386, %v1383
  %v1388 = vpop.permute.xlu0 %1387
  %1391 = vset.pattern.permute.xlu0 0
  %1392 = vperm.xlu0 %1391, %v1384
  %v1393 = vpop.permute.xlu0 %1392
  %v1399 = vunpack.c.l.b16 %v1229
  %v1400 = vunpack.c.h.b16 %v1229
  %v1401 = vunpack.c.l.b16 %v1230
  %v1402 = vunpack.c.l.b16 %v1231
  %v1403 = vunpack.c.h.b16 %v1231
  %v1404 = vunpack.c.l.b16 %v1232
  %v1405 = vpack.c.b16 %v1402, %v1399
  %v1406 = vpack.c.b16 %v1403, %v1400
  %v1407 = vpack.c.b16 %v1404, %v1401
  %v1411 = vsel %vm481, %v1407, 0
  %1413 = vmatprep.subr.bf16.mxu0 0
  %1414 = vmatpush1.bf16.msra.mxu0 %v1253
  %1415 = vmatprep.subr.bf16.mxu0 0
  %1416 = vmatpush1.bf16.msra.mxu0 %v1254
  %1417 = vmatprep.subr.bf16.mxu0 0
  %1418 = vmatpush1.bf16.msra.mxu0 %v1271
  %1419 = vmatprep.subr.bf16.mxu0 0
  %1420 = vmatpush1.bf16.msra.mxu0 %v1272
  %1421 = vmatprep.subr.bf16.mxu0 0
  %1422 = vmatpush1.bf16.msra.mxu0 %v1289
  %1423 = vmatprep.subr.bf16.mxu0 0
  %1424 = vmatpush1.bf16.msra.mxu0 %v1290
  %1425 = vmatprep.subr.bf16.mxu0 0
  %1426 = vmatpush1.bf16.msra.mxu0 %v1307
  %1427 = vmatprep.subr.bf16.mxu0 0
  %1428 = vmatpush1.bf16.msra.mxu0 %v1308
  %1429 = vmatprep.subr.bf16.mxu0 0
  %1430 = vmatpush1.bf16.msra.mxu0 %v1309
  %1431 = vmatprep.subr.bf16.mxu0 0
  %1432 = vmatpush1.bf16.msra.mxu0 %v1310
  %1433 = vmatprep.subr.bf16.mxu0 0
  %1434 = vmatpush1.bf16.msra.mxu0 %v1327
  %1435 = vmatprep.subr.bf16.mxu0 0
  %1436 = vmatpush1.bf16.msra.mxu0 %v1328
  %1437 = vmatprep.subr.bf16.mxu0 0
  %1438 = vmatpush1.bf16.msra.mxu0 %v1345
  %1439 = vmatprep.subr.bf16.mxu0 0
  %1440 = vmatpush1.bf16.msra.mxu0 %v1346
  %1441 = vmatprep.subr.bf16.mxu0 0
  %1442 = vmatpush1.bf16.msra.mxu0 %v1363
  %1443 = vmatprep.subr.bf16.mxu0 0
  %1444 = vmatpush1.bf16.msra.mxu0 %v1364
  %1445 = vmatprep.mubr.bf16.mxu0 %v1406
  %1446 = vmatmul.mubr.bf16.gmra.mrb[0].mxu0 %v1405
  %v1447 = vpop.f32.mrb[0].mxu0
  %v1448 = vadd.f32 %v1388, %v1447
  %v1449 = vpop.f32.mrb[0].mxu0
  %v1450 = vpop.f32.mrb[0].mxu0
  %v1451 = vadd.f32 %v1393, %v1450
  %v1452 = vpop.f32.mrb[0].mxu0
  %1453 = vdwg.mxu0
  %1454 = vmatprep.subr.bf16.mxu0 0
  %1455 = vmatpush1.bf16.msra.mxu0 %v1381
  %1456 = vmatprep.subr.bf16.mxu0 0
  %1457 = vmatpush1.bf16.msra.mxu0 %v1382
  %1458 = vmatprep.subr.bf16.mxu0 0
  %1459 = vmatpush1.bf16.msra.mxu0 0
  %1460 = vmatprep.subr.bf16.mxu0 0
  %1461 = vmatpush1.bf16.msra.mxu0 0
  %1462 = vmatprep.subr.bf16.mxu0 0
  %1463 = vmatpush1.bf16.msra.mxu0 0
  %1464 = vmatprep.subr.bf16.mxu0 0
  %1465 = vmatpush1.bf16.msra.mxu0 0
  %1466 = vmatprep.subr.bf16.mxu0 0
  %1467 = vmatpush1.bf16.msra.mxu0 0
  %1468 = vmatprep.subr.bf16.mxu0 0
  %1469 = vmatpush1.bf16.msra.mxu0 0
  %1470 = vmatprep.subr.bf16.mxu0 0
  %1471 = vmatpush1.bf16.msra.mxu0 0
  %1472 = vmatprep.subr.bf16.mxu0 0
  %1473 = vmatpush1.bf16.msra.mxu0 0
  %1474 = vmatprep.subr.bf16.mxu0 0
  %1475 = vmatpush1.bf16.msra.mxu0 0
  %1476 = vmatprep.subr.bf16.mxu0 0
  %1477 = vmatpush1.bf16.msra.mxu0 0
  %1478 = vmatprep.subr.bf16.mxu0 0
  %1479 = vmatpush1.bf16.msra.mxu0 0
  %1480 = vmatprep.subr.bf16.mxu0 0
  %1481 = vmatpush1.bf16.msra.mxu0 0
  %1482 = vmatprep.subr.bf16.mxu0 0
  %1483 = vmatpush1.bf16.msra.mxu0 0
  %1484 = vmatprep.subr.bf16.mxu0 0
  %1485 = vmatpush1.bf16.msra.mxu0 0
  %1486 = vmatprep.mubr.bf16.mxu0 0
  %1487 = vmatmul.mubr.bf16.gmra.mrb[0].mxu0 %v1411
  %v1488 = vpop.f32.mrb[0].mxu0
  %v1489 = vadd.f32 %v1448, %v1488
  %v1490 = vpop.f32.mrb[0].mxu0
  %v1491 = vpop.f32.mrb[0].mxu0
  %v1492 = vadd.f32 %v1451, %v1491
  %v1493 = vpop.f32.mrb[0].mxu0
  %1494 = vdwg.mxu0
  %v1495 = vadd.f32 %v1489, 2.0
  %v1496 = vxor.u32 %v1495, 2147483648
  %v1497 = vmul.f32 %v1496, 1.442695
  %v1498 = vpow.pop %v1497
  %v1499 = vadd.f32 %v1498, 1.0
  %v1500 = vrcp.pop %v1499
  %v1501 = vmul.f32 1.0, %v1500
  %v1502 = vmin.f32 %v1495, 0.0
  %v1503 = vand.u32 2147483647, %v1495
  %v1504 = vsub.f32 0.0, %v1503
  %v1505 = vmul.f32 %v1504, 1.442695
  %v1506 = vpow.pop %v1505
  %v1507 = vadd.f32 %v1506, 1.0
  %v1508 = vlog2.pop %v1507
  %v1509 = vmul.f32 %v1508, 0.6931472
  %v1510 = vsub.f32 %v1502, %v1509
  %v1511 = vadd.f32 %v917, %v1489
  %v1512 = vadd.f32 %v920, %v1492
  %v1514 = vrot.slane %v1501, 2
  %v1516 = vmul.f32 %v1511, %v1514
  %v1517 = vmul.f32 %v1512, %v1514
  %v1518 = vsel %vm830, %v1510, 0.0
  %v1519 = vrot.slane %v1518, 4
  %v1520 = vadd.f32 %v1518, %v1519
  %v1521 = vrot.slane %v1520, 2
  %v1522 = vadd.f32 %v1520, %v1521
  %v1523 = vrot.slane %v1522, 1
  %v1524 = vadd.f32 %v1522, %v1523
  %v1525 = vadd.f32 %v838, %v1524
  %v1526 = vsel %vm132, %v917, %v1516
  %v1527 = vld [vmem:[%s5] sm:$0xf]
  %v1528 = vld [vmem:[%s5 + $0x4] sm:$0xf]
  %v1529 = vld [vmem:[%s5 + $0x8] sm:$0xf]
  %v1530 = vld [vmem:[%s1] sm:$0xf]
  %v1531 = vpack.c.bf16 %v1530, %v1530
  %1533 = vrot.lane.b32.xlu0 %v1531, 101
  %v1534 = vpop.permute.xlu0 %1533
  %1535 = vrot.lane.b32.xlu0 %v1531, 5
  %v1536 = vpop.permute.xlu0 %1535
  %v1539 = vsel %vm187, %v1534, %v1536
  %v1541 = vmul.bf16 %v1539, %v198
  %1542 = vrot.lane.b32.xlu0 %v1531, 100
  %v1543 = vpop.permute.xlu0 %1542
  %1544 = vrot.lane.b32.xlu0 %v1531, 4
  %v1545 = vpop.permute.xlu0 %1544
  %v1548 = vsel %vm204, %v1543, %v1545
  %v1550 = vmul.bf16 %v1548, %v215
  %1551 = vrot.lane.b32.xlu0 %v1531, 99
  %v1552 = vpop.permute.xlu0 %1551
  %1553 = vrot.lane.b32.xlu0 %v1531, 3
  %v1554 = vpop.permute.xlu0 %1553
  %v1557 = vsel %vm221, %v1552, %v1554
  %v1559 = vmul.bf16 %v1557, %v229
  %1560 = vrot.lane.b32.xlu0 %v1531, 97
  %v1561 = vpop.permute.xlu0 %1560
  %1562 = vrot.lane.b32.xlu0 %v1531, 1
  %v1563 = vpop.permute.xlu0 %1562
  %v1566 = vsel %vm235, %v1561, %v1563
  %v1568 = vmul.bf16 %v1566, %v243
  %v1569 = vmul.bf16 %v1531, %v248
  %1570 = vrot.lane.b32.xlu0 %v1531, 127
  %v1571 = vpop.permute.xlu0 %1570
  %1572 = vrot.lane.b32.xlu0 %v1531, 31
  %v1573 = vpop.permute.xlu0 %1572
  %v1576 = vsel %vm254, %v1571, %v1573
  %v1578 = vmul.bf16 %v1576, %v262
  %1579 = vrot.lane.b32.xlu0 %v1531, 125
  %v1580 = vpop.permute.xlu0 %1579
  %1581 = vrot.lane.b32.xlu0 %v1531, 29
  %v1582 = vpop.permute.xlu0 %1581
  %v1585 = vsel %vm268, %v1580, %v1582
  %v1587 = vmul.bf16 %v1585, %v276
  %1588 = vrot.lane.b32.xlu0 %v1531, 124
  %v1589 = vpop.permute.xlu0 %1588
  %1590 = vrot.lane.b32.xlu0 %v1531, 28
  %v1591 = vpop.permute.xlu0 %1590
  %v1594 = vsel %vm282, %v1589, %v1591
  %v1596 = vmul.bf16 %v1594, %v290
  %1597 = vrot.lane.b32.xlu0 %v1531, 123
  %v1598 = vpop.permute.xlu0 %1597
  %1599 = vrot.lane.b32.xlu0 %v1531, 27
  %v1600 = vpop.permute.xlu0 %1599
  %v1603 = vsel %vm296, %v1598, %v1600
  %v1605 = vmul.bf16 %v1603, %v304
  %v1607 = vrot.slane %v1550, 6
  %v1609 = vrot.slane %v1559, 4
  %v1611 = vrot.slane %v1568, 2
  %v1613 = vrot.slane %v1578, 6
  %v1615 = vrot.slane %v1587, 4
  %v1617 = vrot.slane %v1596, 2
  %v1620 = vsel %vm337, %v1541, %v1607
  %v1622 = vsel %vm330, %v1620, %v1609
  %v1624 = vsel %vm132, %v1622, %v1611
  %v1628 = vsel %vm337, %v1569, %v1613
  %v1630 = vsel %vm330, %v1628, %v1615
  %v1632 = vsel %vm132, %v1630, %v1617
  %v1634 = vld [vmem:[%s6] sm:$0xf]
  %v1635 = vld [vmem:[%s6 + $0x4] sm:$0xf]
  %v1636 = vld [vmem:[%s6 + $0x8] sm:$0xf]
  %v1637 = vld [vmem:[%s6 + $0xc] sm:$0xf]
  %v1638 = vld [vmem:[%s6 + $0x10] sm:$0xf]
  %v1639 = vld [vmem:[%s6 + $0x14] sm:$0xf]
  %v1640 = vld [vmem:[%s6 + $0x18] sm:$0xf]
  %v1641 = vld [vmem:[%s6 + $0x1c] sm:$0xf]
  %v1642 = vld [vmem:[%s6 + $0x20] sm:$0xf]
  %v1643 = vld [vmem:[%s6 + $0x24] sm:$0xf]
  %v1644 = vld [vmem:[%s6 + $0x28] sm:$0xf]
  %v1645 = vld [vmem:[%s6 + $0x2c] sm:$0xf]
  %v1646 = vld [vmem:[%s6 + $0x30] sm:$0xf]
  %v1647 = vld [vmem:[%s6 + $0x34] sm:$0xf]
  %v1648 = vld [vmem:[%s6 + $0x38] sm:$0xf]
  %v1649 = vld [vmem:[%s6 + $0x3c] sm:$0xf]
  %v1650 = vld [vmem:[%s6 + $0x40] sm:$0xf]
  %v1651 = vld [vmem:[%s6 + $0x44] sm:$0xf]
  %v1652 = vld [vmem:[%s6 + $0x48] sm:$0xf]
  %v1653 = vld [vmem:[%s6 + $0x4c] sm:$0xf]
  %v1654 = vld [vmem:[%s6 + $0x50] sm:$0xf]
  %v1655 = vld [vmem:[%s6 + $0x54] sm:$0xf]
  %v1656 = vld [vmem:[%s6 + $0x58] sm:$0xf]
  %v1657 = vld [vmem:[%s6 + $0x5c] sm:$0xf]
  %v1658 = vld [vmem:[%s6 + $0x60] sm:$0xf]
  %v1659 = vld [vmem:[%s6 + $0x64] sm:$0xf]
  %v1660 = vld [vmem:[%s6 + $0x68] sm:$0xf]
  %v1661 = vld [vmem:[%s2] sm:$0xff]
  %v1662 = vld [vmem:[%s2 + $0x8] sm:$0xff]
  %v1663 = vld [vmem:[%s2 + $0x10] sm:$0xff]
  %v1664 = vld [vmem:[%s2 + $0x18] sm:$0xff]
  %v1665 = vpack.c.bf16 %v1662, %v1661
  %v1666 = vpack.c.bf16 %v1664, %v1663
  %v1694 = vunpack.c.l.b16 %v1634
  %v1695 = vunpack.c.l.b16 %v1635
  %v1696 = vunpack.c.l.b16 %v1636
  %v1697 = vunpack.c.l.b16 %v1637
  %v1698 = vunpack.c.l.b16 %v1638
  %v1699 = vunpack.c.l.b16 %v1639
  %v1700 = vunpack.c.l.b16 %v1640
  %v1701 = vunpack.c.l.b16 %v1641
  %v1702 = vunpack.c.l.b16 %v1642
  %v1703 = vunpack.c.l.b16 %v1643
  %v1704 = vunpack.c.l.b16 %v1644
  %v1705 = vunpack.c.l.b16 %v1645
  %v1706 = vunpack.c.l.b16 %v1646
  %v1707 = vunpack.c.l.b16 %v1647
  %v1708 = vunpack.c.l.b16 %v1648
  %v1709 = vunpack.c.l.b16 %v1649
  %v1710 = vunpack.c.l.b16 %v1650
  %v1711 = vunpack.c.l.b16 %v1651
  %v1712 = vunpack.c.l.b16 %v1652
  %v1713 = vunpack.c.l.b16 %v1653
  %v1714 = vunpack.c.l.b16 %v1654
  %v1715 = vunpack.c.l.b16 %v1655
  %v1716 = vunpack.c.l.b16 %v1656
  %v1717 = vunpack.c.l.b16 %v1657
  %v1718 = vunpack.c.l.b16 %v1658
  %v1719 = vunpack.c.l.b16 %v1659
  %v1720 = vunpack.c.l.b16 %v1660
  %v1721 = vpack.c.b16 %v1695, %v1694
  %v1722 = vpack.c.b16 %v1697, %v1696
  %v1723 = vpack.c.b16 %v1699, %v1698
  %v1724 = vpack.c.b16 %v1701, %v1700
  %v1725 = vpack.c.b16 %v1703, %v1702
  %v1726 = vpack.c.b16 %v1705, %v1704
  %v1727 = vpack.c.b16 %v1707, %v1706
  %v1728 = vpack.c.b16 %v1709, %v1708
  %v1729 = vpack.c.b16 %v1711, %v1710
  %v1730 = vpack.c.b16 %v1713, %v1712
  %v1731 = vpack.c.b16 %v1715, %v1714
  %v1732 = vpack.c.b16 %v1717, %v1716
  %v1733 = vpack.c.b16 %v1719, %v1718
  %v1734 = vpack.c.b16 %v1720, %v1720
  %v1736 = vsel %vm481, %v1721, 0
  %v1739 = vsel %vm481, %v1722, 0
  %v1742 = vsel %vm481, %v1723, 0
  %v1745 = vsel %vm481, %v1724, 0
  %v1748 = vsel %vm481, %v1725, 0
  %v1751 = vsel %vm481, %v1726, 0
  %v1754 = vsel %vm481, %v1727, 0
  %v1757 = vsel %vm481, %v1728, 0
  %v1760 = vsel %vm481, %v1729, 0
  %v1763 = vsel %vm481, %v1730, 0
  %v1766 = vsel %vm481, %v1731, 0
  %v1769 = vsel %vm481, %v1732, 0
  %v1772 = vsel %vm481, %v1733, 0
  %v1775 = vsel %vm481, %v1734, 0
  %1777 = vmatprep.subr.bf16.mxu0 0
  %1778 = vmatpush1.bf16.msra.mxu0 %v1665
  %1779 = vmatprep.subr.bf16.mxu0 0
  %1780 = vmatpush1.bf16.msra.mxu0 %v1666
  %1781 = vmatprep.subr.bf16.mxu0 0
  %1782 = vmatpush1.bf16.msra.mxu0 0
  %1783 = vmatprep.subr.bf16.mxu0 0
  %1784 = vmatpush1.bf16.msra.mxu0 0
  %1785 = vmatprep.subr.bf16.mxu0 0
  %1786 = vmatpush1.bf16.msra.mxu0 0
  %1787 = vmatprep.subr.bf16.mxu0 0
  %1788 = vmatpush1.bf16.msra.mxu0 0
  %1789 = vmatprep.subr.bf16.mxu0 0
  %1790 = vmatpush1.bf16.msra.mxu0 0
  %1791 = vmatprep.subr.bf16.mxu0 0
  %1792 = vmatpush1.bf16.msra.mxu0 0
  %1793 = vmatprep.subr.bf16.mxu0 0
  %1794 = vmatpush1.bf16.msra.mxu0 0
  %1795 = vmatprep.subr.bf16.mxu0 0
  %1796 = vmatpush1.bf16.msra.mxu0 0
  %1797 = vmatprep.subr.bf16.mxu0 0
  %1798 = vmatpush1.bf16.msra.mxu0 0
  %1799 = vmatprep.subr.bf16.mxu0 0
  %1800 = vmatpush1.bf16.msra.mxu0 0
  %1801 = vmatprep.subr.bf16.mxu0 0
  %1802 = vmatpush1.bf16.msra.mxu0 0
  %1803 = vmatprep.subr.bf16.mxu0 0
  %1804 = vmatpush1.bf16.msra.mxu0 0
  %1805 = vmatprep.subr.bf16.mxu0 0
  %1806 = vmatpush1.bf16.msra.mxu0 0
  %1807 = vmatprep.subr.bf16.mxu0 0
  %1808 = vmatpush1.bf16.msra.mxu0 0
  %1809 = vmatprep.mubr.bf16.mxu0 0
  %1810 = vmatmul.mubr.bf16.gmra.mrb[0].mxu0 %v1736
  %v1811 = vpop.f32.mrb[0].mxu0
  %v1812 = vadd.f32 0.0, %v1811
  %v1813 = vpop.f32.mrb[0].mxu0
  %v1814 = vpop.f32.mrb[0].mxu0
  %v1815 = vadd.f32 0.0, %v1814
  %v1816 = vpop.f32.mrb[0].mxu0
  %1817 = vmatprep.mubr.bf16.mxu0 0
  %1818 = vmatmul.mubr.bf16.gmra.mrb[0].mxu0 %v1739
  %v1819 = vpop.f32.mrb[0].mxu0
  %v1820 = vadd.f32 0.0, %v1819
  %v1821 = vpop.f32.mrb[0].mxu0
  %v1822 = vpop.f32.mrb[0].mxu0
  %v1823 = vadd.f32 0.0, %v1822
  %v1824 = vpop.f32.mrb[0].mxu0
  %1825 = vmatprep.mubr.bf16.mxu0 0
  %1826 = vmatmul.mubr.bf16.gmra.mrb[0].mxu0 %v1742
  %v1827 = vpop.f32.mrb[0].mxu0
  %v1828 = vadd.f32 0.0, %v1827
  %v1829 = vpop.f32.mrb[0].mxu0
  %v1830 = vpop.f32.mrb[0].mxu0
  %v1831 = vadd.f32 0.0, %v1830
  %v1832 = vpop.f32.mrb[0].mxu0
  %1833 = vmatprep.mubr.bf16.mxu0 0
  %1834 = vmatmul.mubr.bf16.gmra.mrb[0].mxu0 %v1745
  %v1835 = vpop.f32.mrb[0].mxu0
  %v1836 = vadd.f32 0.0, %v1835
  %v1837 = vpop.f32.mrb[0].mxu0
  %v1838 = vpop.f32.mrb[0].mxu0
  %v1839 = vadd.f32 0.0, %v1838
  %v1840 = vpop.f32.mrb[0].mxu0
  %1841 = vmatprep.mubr.bf16.mxu0 0
  %1842 = vmatmul.mubr.bf16.gmra.mrb[0].mxu0 %v1748
  %v1843 = vpop.f32.mrb[0].mxu0
  %v1844 = vadd.f32 0.0, %v1843
  %v1845 = vpop.f32.mrb[0].mxu0
  %v1846 = vpop.f32.mrb[0].mxu0
  %v1847 = vadd.f32 0.0, %v1846
  %v1848 = vpop.f32.mrb[0].mxu0
  %1849 = vmatprep.mubr.bf16.mxu0 0
  %1850 = vmatmul.mubr.bf16.gmra.mrb[0].mxu0 %v1751
  %v1851 = vpop.f32.mrb[0].mxu0
  %v1852 = vadd.f32 0.0, %v1851
  %v1853 = vpop.f32.mrb[0].mxu0
  %v1854 = vpop.f32.mrb[0].mxu0
  %v1855 = vadd.f32 0.0, %v1854
  %v1856 = vpop.f32.mrb[0].mxu0
  %1857 = vmatprep.mubr.bf16.mxu0 0
  %1858 = vmatmul.mubr.bf16.gmra.mrb[0].mxu0 %v1754
  %v1859 = vpop.f32.mrb[0].mxu0
  %v1860 = vadd.f32 0.0, %v1859
  %v1861 = vpop.f32.mrb[0].mxu0
  %v1862 = vpop.f32.mrb[0].mxu0
  %v1863 = vadd.f32 0.0, %v1862
  %v1864 = vpop.f32.mrb[0].mxu0
  %1865 = vmatprep.mubr.bf16.mxu0 0
  %1866 = vmatmul.mubr.bf16.gmra.mrb[0].mxu0 %v1757
  %v1867 = vpop.f32.mrb[0].mxu0
  %v1868 = vadd.f32 0.0, %v1867
  %v1869 = vpop.f32.mrb[0].mxu0
  %v1870 = vpop.f32.mrb[0].mxu0
  %v1871 = vadd.f32 0.0, %v1870
  %v1872 = vpop.f32.mrb[0].mxu0
  %1873 = vmatprep.mubr.bf16.mxu0 0
  %1874 = vmatmul.mubr.bf16.gmra.mrb[0].mxu0 %v1760
  %v1875 = vpop.f32.mrb[0].mxu0
  %v1876 = vadd.f32 0.0, %v1875
  %v1877 = vpop.f32.mrb[0].mxu0
  %v1878 = vpop.f32.mrb[0].mxu0
  %v1879 = vadd.f32 0.0, %v1878
  %v1880 = vpop.f32.mrb[0].mxu0
  %1881 = vmatprep.mubr.bf16.mxu0 0
  %1882 = vmatmul.mubr.bf16.gmra.mrb[0].mxu0 %v1763
  %v1883 = vpop.f32.mrb[0].mxu0
  %v1884 = vadd.f32 0.0, %v1883
  %v1885 = vpop.f32.mrb[0].mxu0
  %v1886 = vpop.f32.mrb[0].mxu0
  %v1887 = vadd.f32 0.0, %v1886
  %v1888 = vpop.f32.mrb[0].mxu0
  %1889 = vmatprep.mubr.bf16.mxu0 0
  %1890 = vmatmul.mubr.bf16.gmra.mrb[0].mxu0 %v1766
  %v1891 = vpop.f32.mrb[0].mxu0
  %v1892 = vadd.f32 0.0, %v1891
  %v1893 = vpop.f32.mrb[0].mxu0
  %v1894 = vpop.f32.mrb[0].mxu0
  %v1895 = vadd.f32 0.0, %v1894
  %v1896 = vpop.f32.mrb[0].mxu0
  %1897 = vmatprep.mubr.bf16.mxu0 0
  %1898 = vmatmul.mubr.bf16.gmra.mrb[0].mxu0 %v1769
  %v1899 = vpop.f32.mrb[0].mxu0
  %v1900 = vadd.f32 0.0, %v1899
  %v1901 = vpop.f32.mrb[0].mxu0
  %v1902 = vpop.f32.mrb[0].mxu0
  %v1903 = vadd.f32 0.0, %v1902
  %v1904 = vpop.f32.mrb[0].mxu0
  %1905 = vmatprep.mubr.bf16.mxu0 0
  %1906 = vmatmul.mubr.bf16.gmra.mrb[0].mxu0 %v1772
  %v1907 = vpop.f32.mrb[0].mxu0
  %v1908 = vadd.f32 0.0, %v1907
  %v1909 = vpop.f32.mrb[0].mxu0
  %v1910 = vpop.f32.mrb[0].mxu0
  %v1911 = vadd.f32 0.0, %v1910
  %v1912 = vpop.f32.mrb[0].mxu0
  %1913 = vmatprep.mubr.bf16.mxu0 0
  %1914 = vmatmul.mubr.bf16.gmra.mrb[0].mxu0 %v1775
  %v1915 = vpop.f32.mrb[0].mxu0
  %v1916 = vadd.f32 0.0, %v1915
  %v1917 = vpop.f32.mrb[0].mxu0
  %v1918 = vpop.f32.mrb[0].mxu0
  %v1919 = vpop.f32.mrb[0].mxu0
  %1920 = vdwg.mxu0
  %v1921 = vpack.c.bf16 %v1815, %v1812
  %v1922 = vpack.c.bf16 %v1823, %v1820
  %v1923 = vpack.c.bf16 %v1831, %v1828
  %v1924 = vpack.c.bf16 %v1839, %v1836
  %v1925 = vpack.c.bf16 %v1847, %v1844
  %v1926 = vpack.c.bf16 %v1855, %v1852
  %v1927 = vpack.c.bf16 %v1863, %v1860
  %v1928 = vpack.c.bf16 %v1871, %v1868
  %v1929 = vpack.c.bf16 %v1879, %v1876
  %v1930 = vpack.c.bf16 %v1887, %v1884
  %v1931 = vpack.c.bf16 %v1895, %v1892
  %v1932 = vpack.c.bf16 %v1903, %v1900
  %v1933 = vpack.c.bf16 %v1911, %v1908
  %v1934 = vpack.c.bf16 %v1916, %v1916
  %v1935 = vld [vmem:[%s4] sm:$0x3]
  %v1936 = vpack.c.bf16 %v1935, %v1935
  %vm1937 = vcmask 15360
  %v1939 = vsel %vm1937, %v1921, 0
  %v1942 = vsel %vm1937, %v1922, 0
  %v1945 = vsel %vm1937, %v1923, 0
  %v1948 = vsel %vm1937, %v1924, 0
  %v1951 = vsel %vm1937, %v1925, 0
  %v1954 = vsel %vm1937, %v1926, 0
  %v1957 = vsel %vm1937, %v1927, 0
  %v1960 = vsel %vm1937, %v1928, 0
  %v1963 = vsel %vm1937, %v1929, 0
  %v1966 = vsel %vm1937, %v1930, 0
  %v1969 = vsel %vm1937, %v1931, 0
  %v1972 = vsel %vm1937, %v1932, 0
  %v1975 = vsel %vm1937, %v1933, 0
  %v1978 = vsel %vm1937, %v1934, 0
  %v1981 = vsel %vm327, %v1936, 0
  %1983 = vmatprep.subr.bf16.mxu0 0
  %1984 = vmatpush1.bf16.msra.mxu0 %v1981
  %1985 = vmatprep.subr.bf16.mxu0 0
  %1986 = vmatpush1.bf16.msra.mxu0 0
  %1987 = vmatprep.subr.bf16.mxu0 0
  %1988 = vmatpush1.bf16.msra.mxu0 0
  %1989 = vmatprep.subr.bf16.mxu0 0
  %1990 = vmatpush1.bf16.msra.mxu0 0
  %1991 = vmatprep.subr.bf16.mxu0 0
  %1992 = vmatpush1.bf16.msra.mxu0 0
  %1993 = vmatprep.subr.bf16.mxu0 0
  %1994 = vmatpush1.bf16.msra.mxu0 0
  %1995 = vmatprep.subr.bf16.mxu0 0
  %1996 = vmatpush1.bf16.msra.mxu0 0
  %1997 = vmatprep.subr.bf16.mxu0 0
  %1998 = vmatpush1.bf16.msra.mxu0 0
  %1999 = vmatprep.subr.bf16.mxu0 0
  %2000 = vmatpush1.bf16.msra.mxu0 0
  %2001 = vmatprep.subr.bf16.mxu0 0
  %2002 = vmatpush1.bf16.msra.mxu0 0
  %2003 = vmatprep.subr.bf16.mxu0 0
  %2004 = vmatpush1.bf16.msra.mxu0 0
  %2005 = vmatprep.subr.bf16.mxu0 0
  %2006 = vmatpush1.bf16.msra.mxu0 0
  %2007 = vmatprep.subr.bf16.mxu0 0
  %2008 = vmatpush1.bf16.msra.mxu0 0
  %2009 = vmatprep.subr.bf16.mxu0 0
  %2010 = vmatpush1.bf16.msra.mxu0 0
  %2011 = vmatprep.subr.bf16.mxu0 0
  %2012 = vmatpush1.bf16.msra.mxu0 0
  %2013 = vmatprep.subr.bf16.mxu0 0
  %2014 = vmatpush1.bf16.msra.mxu0 0
  %2015 = vmatprep.mubr.bf16.mxu0 0
  %2016 = vmatmul.mubr.bf16.gmra.mrb[0].mxu0 %v1939
  %v2017 = vpop.f32.mrb[0].mxu0
  %v2018 = vadd.f32 0.0, %v2017
  %v2019 = vpop.f32.mrb[0].mxu0
  %v2020 = vpop.f32.mrb[0].mxu0
  %v2021 = vadd.f32 0.0, %v2020
  %v2022 = vpop.f32.mrb[0].mxu0
  %2023 = vmatprep.mubr.bf16.mxu0 0
  %2024 = vmatmul.mubr.bf16.gmra.mrb[0].mxu0 %v1942
  %v2025 = vpop.f32.mrb[0].mxu0
  %v2026 = vadd.f32 0.0, %v2025
  %v2027 = vpop.f32.mrb[0].mxu0
  %v2028 = vpop.f32.mrb[0].mxu0
  %v2029 = vadd.f32 0.0, %v2028
  %v2030 = vpop.f32.mrb[0].mxu0
  %2031 = vmatprep.mubr.bf16.mxu0 0
  %2032 = vmatmul.mubr.bf16.gmra.mrb[0].mxu0 %v1945
  %v2033 = vpop.f32.mrb[0].mxu0
  %v2034 = vadd.f32 0.0, %v2033
  %v2035 = vpop.f32.mrb[0].mxu0
  %v2036 = vpop.f32.mrb[0].mxu0
  %v2037 = vadd.f32 0.0, %v2036
  %v2038 = vpop.f32.mrb[0].mxu0
  %2039 = vmatprep.mubr.bf16.mxu0 0
  %2040 = vmatmul.mubr.bf16.gmra.mrb[0].mxu0 %v1948
  %v2041 = vpop.f32.mrb[0].mxu0
  %v2042 = vadd.f32 0.0, %v2041
  %v2043 = vpop.f32.mrb[0].mxu0
  %v2044 = vpop.f32.mrb[0].mxu0
  %v2045 = vadd.f32 0.0, %v2044
  %v2046 = vpop.f32.mrb[0].mxu0
  %2047 = vmatprep.mubr.bf16.mxu0 0
  %2048 = vmatmul.mubr.bf16.gmra.mrb[0].mxu0 %v1951
  %v2049 = vpop.f32.mrb[0].mxu0
  %v2050 = vadd.f32 0.0, %v2049
  %v2051 = vpop.f32.mrb[0].mxu0
  %v2052 = vpop.f32.mrb[0].mxu0
  %v2053 = vadd.f32 0.0, %v2052
  %v2054 = vpop.f32.mrb[0].mxu0
  %2055 = vmatprep.mubr.bf16.mxu0 0
  %2056 = vmatmul.mubr.bf16.gmra.mrb[0].mxu0 %v1954
  %v2057 = vpop.f32.mrb[0].mxu0
  %v2058 = vadd.f32 0.0, %v2057
  %v2059 = vpop.f32.mrb[0].mxu0
  %v2060 = vpop.f32.mrb[0].mxu0
  %v2061 = vadd.f32 0.0, %v2060
  %v2062 = vpop.f32.mrb[0].mxu0
  %2063 = vmatprep.mubr.bf16.mxu0 0
  %2064 = vmatmul.mubr.bf16.gmra.mrb[0].mxu0 %v1957
  %v2065 = vpop.f32.mrb[0].mxu0
  %v2066 = vadd.f32 0.0, %v2065
  %v2067 = vpop.f32.mrb[0].mxu0
  %v2068 = vpop.f32.mrb[0].mxu0
  %v2069 = vadd.f32 0.0, %v2068
  %v2070 = vpop.f32.mrb[0].mxu0
  %2071 = vmatprep.mubr.bf16.mxu0 0
  %2072 = vmatmul.mubr.bf16.gmra.mrb[0].mxu0 %v1960
  %v2073 = vpop.f32.mrb[0].mxu0
  %v2074 = vadd.f32 0.0, %v2073
  %v2075 = vpop.f32.mrb[0].mxu0
  %v2076 = vpop.f32.mrb[0].mxu0
  %v2077 = vadd.f32 0.0, %v2076
  %v2078 = vpop.f32.mrb[0].mxu0
  %2079 = vmatprep.mubr.bf16.mxu0 0
  %2080 = vmatmul.mubr.bf16.gmra.mrb[0].mxu0 %v1963
  %v2081 = vpop.f32.mrb[0].mxu0
  %v2082 = vadd.f32 0.0, %v2081
  %v2083 = vpop.f32.mrb[0].mxu0
  %v2084 = vpop.f32.mrb[0].mxu0
  %v2085 = vadd.f32 0.0, %v2084
  %v2086 = vpop.f32.mrb[0].mxu0
  %2087 = vmatprep.mubr.bf16.mxu0 0
  %2088 = vmatmul.mubr.bf16.gmra.mrb[0].mxu0 %v1966
  %v2089 = vpop.f32.mrb[0].mxu0
  %v2090 = vadd.f32 0.0, %v2089
  %v2091 = vpop.f32.mrb[0].mxu0
  %v2092 = vpop.f32.mrb[0].mxu0
  %v2093 = vadd.f32 0.0, %v2092
  %v2094 = vpop.f32.mrb[0].mxu0
  %2095 = vmatprep.mubr.bf16.mxu0 0
  %2096 = vmatmul.mubr.bf16.gmra.mrb[0].mxu0 %v1969
  %v2097 = vpop.f32.mrb[0].mxu0
  %v2098 = vadd.f32 0.0, %v2097
  %v2099 = vpop.f32.mrb[0].mxu0
  %v2100 = vpop.f32.mrb[0].mxu0
  %v2101 = vadd.f32 0.0, %v2100
  %v2102 = vpop.f32.mrb[0].mxu0
  %2103 = vmatprep.mubr.bf16.mxu0 0
  %2104 = vmatmul.mubr.bf16.gmra.mrb[0].mxu0 %v1972
  %v2105 = vpop.f32.mrb[0].mxu0
  %v2106 = vadd.f32 0.0, %v2105
  %v2107 = vpop.f32.mrb[0].mxu0
  %v2108 = vpop.f32.mrb[0].mxu0
  %v2109 = vadd.f32 0.0, %v2108
  %v2110 = vpop.f32.mrb[0].mxu0
  %2111 = vmatprep.mubr.bf16.mxu0 0
  %2112 = vmatmul.mubr.bf16.gmra.mrb[0].mxu0 %v1975
  %v2113 = vpop.f32.mrb[0].mxu0
  %v2114 = vadd.f32 0.0, %v2113
  %v2115 = vpop.f32.mrb[0].mxu0
  %v2116 = vpop.f32.mrb[0].mxu0
  %v2117 = vadd.f32 0.0, %v2116
  %v2118 = vpop.f32.mrb[0].mxu0
  %2119 = vmatprep.mubr.bf16.mxu0 0
  %2120 = vmatmul.mubr.bf16.gmra.mrb[0].mxu0 %v1978
  %v2121 = vpop.f32.mrb[0].mxu0
  %v2122 = vadd.f32 0.0, %v2121
  %v2123 = vpop.f32.mrb[0].mxu0
  %v2124 = vpop.f32.mrb[0].mxu0
  %v2125 = vpop.f32.mrb[0].mxu0
  %2126 = vdwg.mxu0
  %v2127 = vlaneseq
  %v2128 = vshrl.u32 %v2127, 7
  %v2129 = vsub.s32 0, %v2128
  %v2130 = vrot.slane %v87, %v2129
  %v2131 = vmul.f32 %v2018, %v2130
  %v2132 = vmul.f32 %v2021, %v2130
  %v2133 = vmul.f32 %v2026, %v2130
  %v2134 = vadd.f32 %v2131, 0.0
  %v2135 = vadd.f32 %v2132, 0.0
  %v2136 = vadd.f32 %v2133, 0.0
  %v2137 = vlaneseq
  %v2138 = vshrl.u32 %v2137, 7
  %v2139 = vsub.s32 1, %v2138
  %v2140 = vrot.slane %v87, %v2139
  %v2141 = vmul.f32 %v2029, %v2140
  %v2142 = vmul.f32 %v2034, %v2140
  %v2143 = vmul.f32 %v2037, %v2140
  %v2144 = vadd.f32 %v2134, %v2141
  %v2145 = vadd.f32 %v2135, %v2142
  %v2146 = vadd.f32 %v2136, %v2143
  %v2147 = vlaneseq
  %v2148 = vshrl.u32 %v2147, 7
  %v2149 = vsub.s32 2, %v2148
  %v2150 = vrot.slane %v87, %v2149
  %v2151 = vmul.f32 %v2042, %v2150
  %v2152 = vmul.f32 %v2045, %v2150
  %v2153 = vmul.f32 %v2050, %v2150
  %v2154 = vadd.f32 %v2144, %v2151
  %v2155 = vadd.f32 %v2145, %v2152
  %v2156 = vadd.f32 %v2146, %v2153
  %v2157 = vlaneseq
  %v2158 = vshrl.u32 %v2157, 7
  %v2159 = vsub.s32 3, %v2158
  %v2160 = vrot.slane %v87, %v2159
  %v2161 = vmul.f32 %v2053, %v2160
  %v2162 = vmul.f32 %v2058, %v2160
  %v2163 = vmul.f32 %v2061, %v2160
  %v2164 = vadd.f32 %v2154, %v2161
  %v2165 = vadd.f32 %v2155, %v2162
  %v2166 = vadd.f32 %v2156, %v2163
  %v2167 = vlaneseq
  %v2168 = vshrl.u32 %v2167, 7
  %v2169 = vsub.s32 4, %v2168
  %v2170 = vrot.slane %v87, %v2169
  %v2171 = vmul.f32 %v2066, %v2170
  %v2172 = vmul.f32 %v2069, %v2170
  %v2173 = vmul.f32 %v2074, %v2170
  %v2174 = vadd.f32 %v2164, %v2171
  %v2175 = vadd.f32 %v2165, %v2172
  %v2176 = vadd.f32 %v2166, %v2173
  %v2177 = vlaneseq
  %v2178 = vshrl.u32 %v2177, 7
  %v2179 = vsub.s32 5, %v2178
  %v2180 = vrot.slane %v87, %v2179
  %v2181 = vmul.f32 %v2077, %v2180
  %v2182 = vmul.f32 %v2082, %v2180
  %v2183 = vmul.f32 %v2085, %v2180
  %v2184 = vadd.f32 %v2174, %v2181
  %v2185 = vadd.f32 %v2175, %v2182
  %v2186 = vadd.f32 %v2176, %v2183
  %v2187 = vlaneseq
  %v2188 = vshrl.u32 %v2187, 7
  %v2189 = vsub.s32 6, %v2188
  %v2190 = vrot.slane %v87, %v2189
  %v2191 = vmul.f32 %v2090, %v2190
  %v2192 = vmul.f32 %v2093, %v2190
  %v2193 = vmul.f32 %v2098, %v2190
  %v2194 = vadd.f32 %v2184, %v2191
  %v2195 = vadd.f32 %v2185, %v2192
  %v2196 = vadd.f32 %v2186, %v2193
  %v2197 = vlaneseq
  %v2198 = vshrl.u32 %v2197, 7
  %v2199 = vsub.s32 7, %v2198
  %v2200 = vrot.slane %v87, %v2199
  %v2201 = vmul.f32 %v2101, %v2200
  %v2202 = vmul.f32 %v2106, %v2200
  %v2203 = vmul.f32 %v2109, %v2200
  %v2204 = vadd.f32 %v2194, %v2201
  %v2205 = vadd.f32 %v2195, %v2202
  %v2206 = vadd.f32 %v2196, %v2203
  %v2207 = vlaneseq
  %v2208 = vshrl.u32 %v2207, 7
  %v2209 = vsub.s32 0, %v2208
  %v2210 = vrot.slane %v88, %v2209
  %v2211 = vmul.f32 %v2114, %v2210
  %v2212 = vmul.f32 %v2117, %v2210
  %v2213 = vmul.f32 %v2122, %v2210
  %v2214 = vadd.f32 %v2204, %v2211
  %v2215 = vadd.f32 %v2205, %v2212
  %v2216 = vadd.f32 %v2206, %v2213
  %v2220 = vunpack.c.l.b16 %v1527
  %v2221 = vunpack.c.l.b16 %v1528
  %v2222 = vunpack.c.l.b16 %v1529
  %v2223 = vpack.c.b16 %v2221, %v2220
  %v2224 = vpack.c.b16 %v2222, %v2222
  %vm2225 = vcmask 293888
  %v2227 = vsel %vm2225, %v2223, 0
  %v2230 = vsel %vm2225, %v2224, 0
  %v2233 = vsel %vm337, %v1605, 0
  %2235 = vmatprep.subr.bf16.mxu0 0
  %2236 = vmatpush1.bf16.msra.mxu0 %v1624
  %2237 = vmatprep.subr.bf16.mxu0 0
  %2238 = vmatpush1.bf16.msra.mxu0 %v1632
  %2239 = vmatprep.subr.bf16.mxu0 0
  %2240 = vmatpush1.bf16.msra.mxu0 %v2233
  %2241 = vmatprep.subr.bf16.mxu0 0
  %2242 = vmatpush1.bf16.msra.mxu0 0
  %2243 = vmatprep.subr.bf16.mxu0 0
  %2244 = vmatpush1.bf16.msra.mxu0 0
  %2245 = vmatprep.subr.bf16.mxu0 0
  %2246 = vmatpush1.bf16.msra.mxu0 0
  %2247 = vmatprep.subr.bf16.mxu0 0
  %2248 = vmatpush1.bf16.msra.mxu0 0
  %2249 = vmatprep.subr.bf16.mxu0 0
  %2250 = vmatpush1.bf16.msra.mxu0 0
  %2251 = vmatprep.subr.bf16.mxu0 0
  %2252 = vmatpush1.bf16.msra.mxu0 0
  %2253 = vmatprep.subr.bf16.mxu0 0
  %2254 = vmatpush1.bf16.msra.mxu0 0
  %2255 = vmatprep.subr.bf16.mxu0 0
  %2256 = vmatpush1.bf16.msra.mxu0 0
  %2257 = vmatprep.subr.bf16.mxu0 0
  %2258 = vmatpush1.bf16.msra.mxu0 0
  %2259 = vmatprep.subr.bf16.mxu0 0
  %2260 = vmatpush1.bf16.msra.mxu0 0
  %2261 = vmatprep.subr.bf16.mxu0 0
  %2262 = vmatpush1.bf16.msra.mxu0 0
  %2263 = vmatprep.subr.bf16.mxu0 0
  %2264 = vmatpush1.bf16.msra.mxu0 0
  %2265 = vmatprep.subr.bf16.mxu0 0
  %2266 = vmatpush1.bf16.msra.mxu0 0
  %2267 = vmatprep.mubr.bf16.mxu0 0
  %2268 = vmatmul.mubr.bf16.gmra.mrb[0].mxu0 %v2227
  %v2269 = vpop.f32.mrb[0].mxu0
  %v2270 = vadd.f32 %v2214, %v2269
  %v2271 = vpop.f32.mrb[0].mxu0
  %v2272 = vpop.f32.mrb[0].mxu0
  %v2273 = vadd.f32 %v2215, %v2272
  %v2274 = vpop.f32.mrb[0].mxu0
  %2275 = vmatprep.mubr.bf16.mxu0 0
  %2276 = vmatmul.mubr.bf16.gmra.mrb[0].mxu0 %v2230
  %v2277 = vpop.f32.mrb[0].mxu0
  %v2278 = vadd.f32 %v2216, %v2277
  %v2279 = vpop.f32.mrb[0].mxu0
  %v2280 = vpop.f32.mrb[0].mxu0
  %v2281 = vpop.f32.mrb[0].mxu0
  %2282 = vdwg.mxu0
  %v2283 = vld [vmem:[%s7] sm:$0xff]
  %v2284 = vld [vmem:[%s7 + $0x8] sm:$0xff]
  %v2285 = vld [vmem:[%s7 + $0x10] sm:$0xff]
  %2287 = vset.pattern.permute.xlu0 0
  %2288 = vperm.xlu0 %2287, %v2283
  %v2289 = vpop.permute.xlu0 %2288
  %2292 = vset.pattern.permute.xlu0 0
  %2293 = vperm.xlu0 %2292, %v2284
  %v2294 = vpop.permute.xlu0 %2293
  %2297 = vset.pattern.permute.xlu0 0
  %2298 = vperm.xlu0 %2297, %v2285
  %v2299 = vpop.permute.xlu0 %2298
  %v2301 = vadd.f32 %v2270, %v2289
  %v2302 = vadd.f32 %v2273, %v2294
  %v2303 = vadd.f32 %v2278, %v2299
  %v2304 = vsub.f32 %v1526, %v2301
  %v2305 = vsub.f32 %v1517, %v2302
  %v2306 = vsub.f32 -0.9189385, %v2302
  %v2307 = vsub.f32 -0.9189385, %v2303
  %v2308 = vmul.f32 %v2304, 0.5
  %v2309 = vmul.f32 %v2305, 0.5
  %v2310 = vmul.f32 %v2308, %v2304
  %v2311 = vmul.f32 %v2309, %v2305
  %v2312 = vmul.f32 %v2302, -2.0
  %v2313 = vmul.f32 %v2303, -2.0
  %v2314 = vmul.f32 %v2312, 1.442695
  %v2315 = vpow.pop %v2314
  %v2316 = vmul.f32 %v2313, 1.442695
  %v2317 = vpow.pop %v2316
  %v2320 = vrot.slane %v2315, 4
  %v2321 = vrot.slane %v2317, 4
  %v2322 = vsel %vm330, %v2320, %v2321
  %v2325 = vmul.f32 %v2310, %v2322
  %v2326 = vmul.f32 %v2311, %v2321
  %v2329 = vrot.slane %v2325, 4
  %v2330 = vrot.slane %v2326, 4
  %v2331 = vsel %vm330, %v2329, %v2330
  %v2334 = vsub.f32 %v2306, %v2329
  %v2335 = vsub.f32 %v2307, %v2331
  %2336 = vst.msk [vmem:[%s26] sm:$0xff] %vm481, %v1526
  %vm2337 = vcmask 257024
  %2338 = vst.msk [vmem:[%s26 + $0x8] sm:$0xf] %vm2337, %v1517
  %vm2339 = vcmask 253952
  %2340 = vst.msk [vmem:[%s27] sm:$0x1] %vm2339, %v1525
  %v2343 = vrot.slane %v2334, 4
  %v2344 = vrot.slane %v2335, 4
  %v2345 = vsel %vm330, %v2343, %v2344
  %v2348 = vsel %vm481, %v2345, 0.0
  %v2349 = vsel %vm2337, %v2344, 0.0
  %v2350 = vadd.f32 %v2348, %v2349
  %v2351 = vrot.slane %v2350, 4
  %v2352 = vadd.f32 %v2350, %v2351
  %v2353 = vrot.slane %v2352, 2
  %v2354 = vadd.f32 %v2352, %v2353
  %v2355 = vrot.slane %v2354, 1
  %v2356 = vadd.f32 %v2354, %v2355
  %2357 = vst.msk [vmem:[%s28] sm:$0x1] %vm2339, %v2356
  // Predicated region
  $region106: #{cond_proglow_mpn_forward.5} parent=0 // pred_check
    _
  $region107: #{cond_proglow_mpn_forward.5} parent=0 // pred_check_branch
    %2359 = sbr.rel (0) target = $region109
  $region108: #{cond_proglow_mpn_forward.5} parent=0 // pred_region
    _
  $region109: #{cond_proglow_mpn_forward.5} parent=0 // pred_fallthru
    _
  // Predicated region
  $region110: #{cond_proglow_mpn_forward.5} parent=0 // pred_check
    _
  $region111: #{cond_proglow_mpn_forward.5} parent=0 // pred_check_branch
    %2361 = sbr.rel (0) target = $region113
  $region112: #{cond_proglow_mpn_forward.5} parent=0 // pred_region
    _
  $region113: #{cond_proglow_mpn_forward.5} parent=0 // pred_fallthru
    _
  // Predicated region
  $region114: #{cond_proglow_mpn_forward.5} parent=0 // pred_check
    _
  $region115: #{cond_proglow_mpn_forward.5} parent=0 // pred_check_branch
    %2363 = sbr.rel (0) target = $region117
  $region116: #{cond_proglow_mpn_forward.5} parent=0 // pred_region
    _
  $region117: #{cond_proglow_mpn_forward.5} parent=0 // pred_fallthru
    _
  // Predicated region
  $region118: #{cond_proglow_mpn_forward.5} parent=0 // pred_check
    _
  $region119: #{cond_proglow_mpn_forward.5} parent=0 // pred_check_branch
    %2365 = sbr.rel (0) target = $region121
  $region120: #{cond_proglow_mpn_forward.5} parent=0 // pred_region
    _
  $region121: #{cond_proglow_mpn_forward.5} parent=0 // pred_fallthru
    _
  // Predicated region
  $region122: #{cond_proglow_mpn_forward.5} parent=0 // pred_check
    _
  $region123: #{cond_proglow_mpn_forward.5} parent=0 // pred_check_branch
    %2367 = sbr.rel (0) target = $region125
  $region124: #{cond_proglow_mpn_forward.5} parent=0 // pred_region
    _
  $region125: #{cond_proglow_mpn_forward.5} parent=0 // pred_fallthru
    _
  // Predicated region
  $region126: #{cond_proglow_mpn_forward.5} parent=0 // pred_check
    _
  $region127: #{cond_proglow_mpn_forward.5} parent=0 // pred_check_branch
    %2369 = sbr.rel (0) target = $region129
  $region128: #{cond_proglow_mpn_forward.5} parent=0 // pred_region
    _
  $region129: #{cond_proglow_mpn_forward.5} parent=0 // pred_fallthru
    _

</llo_original>
